<compile_context>
chip_gen: v6e
topology: v6e:2x2x1
jax: 0.10.0
libtpu: 0.0.40
codegen_flags: <defaults>
</compile_context>

<pallas_src>
import functools

import jax
import jax.numpy as jnp
from jax import lax
from jax.experimental import pallas as pl
from jax.experimental.pallas import tpu as pltpu


_VMEM_LIMIT = 32 * 1024 * 1024   # fits every generation (v7x has 64 MiB physical)


# ---------------------------------------------------------------------------
# Tile-size helpers (respect the (8, 128) block rule, fall back to full dims)
# ---------------------------------------------------------------------------

def _row_tile(n, pref=128):
    """Tile for a sublane (second-to-last) axis: multiple of 8, or the full dim."""
    if n % pref == 0:
        return pref
    for t in (64, 32, 16, 8):
        if n % t == 0 and n > t:
            return t
    return n


def _lane_tile(n, pref=128):
    """Tile for a lane (last) axis: multiple of 128, or the full dim."""
    return pref if n % pref == 0 else n


# ---------------------------------------------------------------------------
# Shared in-kernel math
# ---------------------------------------------------------------------------

def _student_t_q(z, mu, mu_sq, v):
    """Student-t soft assignment; ||z-mu||^2 via the MXU matmul identity."""
    zn = jnp.sum(z * z, axis=1, keepdims=True)                       # (tm, 1)
    cross = lax.dot_general(z, mu, (((1,), (1,)), ((), ())),
                            preferred_element_type=jnp.float32)      # (tm, K)
    dist2 = jnp.maximum(zn + mu_sq - 2.0 * cross, 0.0)
    q = 1.0 / (1.0 + dist2 / v)
    power = (v + 1.0) / 2.0
    if power != 1.0:
        q = q ** power
    return q / jnp.sum(q, axis=1, keepdims=True)


# ---------------------------------------------------------------------------
# Kernel 1: fused AE (6 linears) + q_dnn, row-tiled, weights resident in VMEM
# ---------------------------------------------------------------------------

def _ae_fused_kernel(x_ref,
                     w1_ref, b1_ref, w2_ref, b2_ref, wz_ref, bz_ref,
                     w4_ref, b4_ref, w5_ref, b5_ref, wx_ref, bx_ref,
                     mu_ref, musq_ref,
                     xbar_ref, dz_ref, q_ref, *, v):
    x = x_ref[...]
    h1 = jnp.maximum(
        jnp.dot(x, w1_ref[...], preferred_element_type=jnp.float32) + b1_ref[...], 0.0)
    h2 = jnp.maximum(
        jnp.dot(h1, w2_ref[...], preferred_element_type=jnp.float32) + b2_ref[...], 0.0)
    dz = jnp.dot(h2, wz_ref[...], preferred_element_type=jnp.float32) + bz_ref[...]
    d1 = jnp.maximum(
        jnp.dot(dz, w4_ref[...], preferred_element_type=jnp.float32) + b4_ref[...], 0.0)
    d2 = jnp.maximum(
        jnp.dot(d1, w5_ref[...], preferred_element_type=jnp.float32) + b5_ref[...], 0.0)
    xb = jnp.dot(d2, wx_ref[...], preferred_element_type=jnp.float32) + bx_ref[...]

    xbar_ref[...] = xb
    dz_ref[...] = dz
    q_ref[...] = _student_t_q(dz, mu_ref[...], musq_ref[...], v)


def ae_forward(x, p, v):
    n, n_in = x.shape
    n_z = p["z_w"].shape[1]
    k = p["dnn_cluster"].shape[0]
    tm = _row_tile(n)

    mu = p["dnn_cluster"]
    mu_sq = jnp.sum(mu * mu, axis=1)[None, :]        # (1, K), computed by XLA

    weights = [p["enc_1_w"], p["enc_1_b"], p["enc_2_w"], p["enc_2_b"],
               p["z_w"], p["z_b"], p["dec_1_w"], p["dec_1_b"],
               p["dec_2_w"], p["dec_2_b"], p["x_bar_w"], p["x_bar_b"],
               mu, mu_sq]

    def resident(arr):
        shape = arr.shape
        return pl.BlockSpec(shape, lambda i: (0,) * len(shape))

    in_specs = ([pl.BlockSpec((tm, n_in), lambda i: (i, 0))]
                + [resident(w) for w in weights])
    out_specs = [pl.BlockSpec((tm, n_in), lambda i: (i, 0)),
                 pl.BlockSpec((tm, n_z), lambda i: (i, 0)),
                 pl.BlockSpec((tm, k), lambda i: (i, 0))]
    out_shape = (jax.ShapeDtypeStruct((n, n_in), jnp.float32),
                 jax.ShapeDtypeStruct((n, n_z), jnp.float32),
                 jax.ShapeDtypeStruct((n, k), jnp.float32))

    return pl.pallas_call(
        functools.partial(_ae_fused_kernel, v=float(v)),
        grid=(n // tm,),
        in_specs=in_specs,
        out_specs=out_specs,
        out_shape=out_shape,
        compiler_params=pltpu.CompilerParams(
            dimension_semantics=("parallel",),
            vmem_limit_bytes=_VMEM_LIMIT),
    )(x, *weights)


# ---------------------------------------------------------------------------
# Kernel 2: generic tiled matmul (optional ReLU), f32 VMEM accumulator over k
# ---------------------------------------------------------------------------

def _matmul_kernel(a_ref, b_ref, o_ref, acc_ref, *, relu):
    @pl.when(pl.program_id(2) == 0)
    def _():
        acc_ref[...] = jnp.zeros_like(acc_ref)

    acc_ref[...] += jnp.dot(a_ref[...], b_ref[...],
                            preferred_element_type=jnp.float32)

    @pl.when(pl.program_id(2) == pl.num_programs(2) - 1)
    def _():
        y = acc_ref[...]
        if relu:
            y = jnp.maximum(y, 0.0)
        o_ref[...] = y.astype(o_ref.dtype)


def matmul(a, b, relu=False):
    m, k = a.shape
    kb, n = b.shape
    assert k == kb
    tm = _row_tile(m)
    tn = _lane_tile(n)
    tk = _lane_tile(k)
    grid = (m // tm, n // tn, k // tk)
    return pl.pallas_call(
        functools.partial(_matmul_kernel, relu=relu),
        grid=grid,
        in_specs=[pl.BlockSpec((tm, tk), lambda i, j, kk: (i, kk)),
                  pl.BlockSpec((tk, tn), lambda i, j, kk: (kk, j))],
        out_specs=pl.BlockSpec((tm, tn), lambda i, j, kk: (i, j)),
        out_shape=jax.ShapeDtypeStruct((m, n), jnp.float32),
        scratch_shapes=[pltpu.VMEM((tm, tn), jnp.float32)],
        compiler_params=pltpu.CompilerParams(
            dimension_semantics=("parallel", "parallel", "arbitrary"),
            vmem_limit_bytes=_VMEM_LIMIT),
    )(a, b)


# ---------------------------------------------------------------------------
# Kernel 3: inner-product decoder a_bar = sigmoid(z z^T), tiled over (row, col)
# ---------------------------------------------------------------------------

def _ipd_kernel(zi_ref, zj_ref, o_ref):
    logits = lax.dot_general(zi_ref[...], zj_ref[...],
                             (((1,), (1,)), ((), ())),          # contract last dims
                             preferred_element_type=jnp.float32)
    o_ref[...] = jax.nn.sigmoid(logits)


def inner_product_decoder(z):
    n, d = z.shape
    tm = _row_tile(n)
    tn = _lane_tile(n)
    return pl.pallas_call(
        _ipd_kernel,
        grid=(n // tm, n // tn),
        in_specs=[pl.BlockSpec((tm, d), lambda i, j: (i, 0)),
                  pl.BlockSpec((tn, d), lambda i, j: (j, 0))],
        out_specs=pl.BlockSpec((tm, tn), lambda i, j: (i, j)),
        out_shape=jax.ShapeDtypeStruct((n, n), jnp.float32),
        compiler_params=pltpu.CompilerParams(
            dimension_semantics=("parallel", "parallel"),
            vmem_limit_bytes=_VMEM_LIMIT),
    )(z, z)


# ---------------------------------------------------------------------------
# Kernel 4: Student-t soft assignment (row-tiled, cluster centers resident)
# ---------------------------------------------------------------------------

def _soft_assign_kernel(z_ref, mu_ref, musq_ref, q_ref, *, v):
    q_ref[...] = _student_t_q(z_ref[...], mu_ref[...], musq_ref[...], v)


def soft_assign(z, mu, v):
    n, d = z.shape
    k = mu.shape[0]
    tm = _row_tile(n)
    mu_sq = jnp.sum(mu * mu, axis=1)[None, :]        # (1, K)
    return pl.pallas_call(
        functools.partial(_soft_assign_kernel, v=float(v)),
        grid=(n // tm,),
        in_specs=[pl.BlockSpec((tm, d), lambda i: (i, 0)),
                  pl.BlockSpec((k, d), lambda i: (0, 0)),
                  pl.BlockSpec((1, k), lambda i: (0, 0))],
        out_specs=pl.BlockSpec((tm, k), lambda i: (i, 0)),
        out_shape=jax.ShapeDtypeStruct((n, k), jnp.float32),
        compiler_params=pltpu.CompilerParams(
            dimension_semantics=("parallel",),
            vmem_limit_bytes=_VMEM_LIMIT),
    )(z, mu, mu_sq)


# ---------------------------------------------------------------------------
# DCP_DEC forward
# ---------------------------------------------------------------------------

@functools.partial(jax.jit, static_argnames=("v",))
def dcp_dec_forward(params, x, adj, v=1.0):
    p = params

    # --- AE + q_dnn (single fused kernel) ---
    x_bar, dz, q_dnn = ae_forward(x, p, v)

    # --- GAE: GraphConvolution = adj @ (h @ W); support and adj-matmul split ---
    support1 = matmul(x, p["gc1_w"], relu=False)
    hidden1 = matmul(adj, support1, relu=True)
    support2 = matmul(hidden1, p["gc2_w"], relu=False)
    gz = matmul(adj, support2, relu=False)
    a_bar = inner_product_decoder(gz)

    # --- Student-t soft assignment for the GCN embedding ---
    q_gcn = soft_assign(gz, p["gcn_cluster"], v)

    return x_bar, q_dnn, a_bar, q_gcn, dz, gz


# ---------------------------------------------------------------------------
# Deterministic parameter construction
# ---------------------------------------------------------------------------

def _xavier_normal(key, shape):
    fan_in, fan_out = shape[1], shape[0]
    std = (2.0 / (fan_in + fan_out)) ** 0.5
    return std * jax.random.normal(key, shape, dtype=jnp.float32)


def make_params(key, n_enc_1, n_enc_2, n_dec_1, n_dec_2, n_input, n_z,
                n_clusters, hidden_dim1=256):
    ks = jax.random.split(key, 16)

    def lin(kw, kb, n_in, n_out):
        w = 0.1 * jax.random.normal(kw, (n_out, n_in), dtype=jnp.float32)
        b = 0.1 * jax.random.normal(kb, (n_out,), dtype=jnp.float32)
        return w.T, b.reshape(1, n_out)     # pass as (in, out) / (1, out)

    params = {}
    params["enc_1_w"], params["enc_1_b"] = lin(ks[0], ks[1], n_input, n_enc_1)
    params["enc_2_w"], params["enc_2_b"] = lin(ks[2], ks[3], n_enc_1, n_enc_2)
    params["z_w"],     params["z_b"]     = lin(ks[4], ks[5], n_enc_2, n_z)
    params["dec_1_w"], params["dec_1_b"] = lin(ks[6], ks[7], n_z, n_dec_1)
    params["dec_2_w"], params["dec_2_b"] = lin(ks[8], ks[9], n_dec_1, n_dec_2)
    params["x_bar_w"], params["x_bar_b"] = lin(ks[10], ks[11], n_dec_2, n_input)

    # GAE GraphConvolution weights (glorot-style), no bias.
    params["gc1_w"] = _xavier_normal(ks[12], (hidden_dim1, n_input)).T   # (n_input, 256)
    params["gc2_w"] = _xavier_normal(ks[13], (n_z, hidden_dim1)).T       # (256, n_z)

    # Cluster layers (xavier_normal_ like torch).
    params["dnn_cluster"] = _xavier_normal(ks[14], (n_clusters, n_z))
    params["gcn_cluster"] = _xavier_normal(ks[15], (n_clusters, n_z))
    return params


# ---------------------------------------------------------------------------
# Pure-JAX reference for a sanity check
# ---------------------------------------------------------------------------

def reference_forward(p, x, adj, v=1.0):
    def lin(h, w, b, relu):
        y = h @ w + b
        return jnp.maximum(y, 0.0) if relu else y

    enc_h1 = lin(x, p["enc_1_w"], p["enc_1_b"], True)
    enc_h2 = lin(enc_h1, p["enc_2_w"], p["enc_2_b"], True)
    dz = lin(enc_h2, p["z_w"], p["z_b"], False)
    dec_h1 = lin(dz, p["dec_1_w"], p["dec_1_b"], True)
    dec_h2 = lin(dec_h1, p["dec_2_w"], p["dec_2_b"], True)
    x_bar = lin(dec_h2, p["x_bar_w"], p["x_bar_b"], False)

    hidden1 = jnp.maximum(adj @ (x @ p["gc1_w"]), 0.0)
    gz = adj @ (hidden1 @ p["gc2_w"])
    a_bar = jax.nn.sigmoid(gz @ gz.T)

    def q_of(z, mu):
        d2 = jnp.sum((z[:, None, :] - mu[None, :, :]) ** 2, axis=2)
        q = 1.0 / (1.0 + d2 / v)
        q = q ** ((v + 1.0) / 2.0)
        return q / jnp.sum(q, axis=1, keepdims=True)

    return x_bar, q_of(dz, p["dnn_cluster"]), a_bar, q_of(gz, p["gcn_cluster"]), dz, gz


# ---------------------------------------------------------------------------
# Main
# ---------------------------------------------------------------------------

if __name__ == "__main__":
    # Small, module-consistent shapes (chosen so 128-aligned tiles divide evenly).
    N          = 256    # number of nodes / samples
    n_input    = 64
    n_enc_1    = 128
    n_enc_2    = 64
    n_z        = 16
    n_dec_1    = 64
    n_dec_2    = 128
    n_clusters = 4
    hidden_dim1 = 256   # fixed inside DCP_DEC.__init__

    key = jax.random.PRNGKey(0)
    k_x, k_a, k_p = jax.random.split(key, 3)

    x = jax.random.normal(k_x, (N, n_input), dtype=jnp.float32)

    # Build a normalized dense adjacency: D^{-1/2} (A + I) D^{-1/2}
    a_raw = (jax.random.uniform(k_a, (N, N)) > 0.9).astype(jnp.float32)
    a_sym = jnp.clip(a_raw + a_raw.T, 0.0, 1.0) + jnp.eye(N, dtype=jnp.float32)
    d_inv_sqrt = 1.0 / jnp.sqrt(jnp.sum(a_sym, axis=1))
    adj = a_sym * d_inv_sqrt[:, None] * d_inv_sqrt[None, :]

    params = make_params(k_p, n_enc_1, n_enc_2, n_dec_1, n_dec_2,
                         n_input, n_z, n_clusters, hidden_dim1)

    outs = dcp_dec_forward(params, x, adj, v=1.0)
    outs = jax.block_until_ready(outs)

    refs = reference_forward(params, x, adj, v=1.0)
    names = ["x_bar", "q_dnn", "a_bar", "q_gcn", "dz", "gz"]
    for name, o, r in zip(names, outs, refs):
        assert o.shape == r.shape, (name, o.shape, r.shape)
        assert jnp.allclose(o, r, atol=1e-3, rtol=1e-3), name

    print("KERNEL_OK")
</pallas_src>

<mosaic_0001>
module attributes {stable_mosaic.version = 11 : i64} {
  func.func @_matmul_kernel(%arg0: i32, %arg1: i32, %arg2: i32, %arg3: memref<128x64xf32, #tpu.memory_space<vmem>>, %arg4: memref<64x128xf32, #tpu.memory_space<vmem>>, %arg5: memref<128x128xf32, #tpu.memory_space<vmem>>, %arg6: memref<128x128xf32, #tpu.memory_space<vmem>>) attributes {dimension_semantics = [#tpu.dimension_semantics<parallel>, #tpu.dimension_semantics<parallel>, #tpu.dimension_semantics<arbitrary>], iteration_bounds = array<i64: 2, 2, 1>, scalar_prefetch = 0 : i64, scratch_operands = 1 : i64, tpu.core_type = #tpu.core_type<tc>, window_params = [{transform_indices = @transform_0, window_bounds = array<i64: 128, 64>}, {transform_indices = @transform_1, window_bounds = array<i64: 64, 128>}, {transform_indices = @transform_2, window_bounds = array<i64: 128, 128>}]} {
    %c0_i32 = arith.constant 0 : i32
    %0 = arith.cmpi eq, %arg2, %c0_i32 : i32
    %1 = arith.extui %0 : i1 to i32
    %c0_i32_0 = arith.constant 0 : i32
    %2 = arith.cmpi ne, %1, %c0_i32_0 : i32
    scf.if %2 {
      %cst_10 = arith.constant 0.000000e+00 : f32
      %12 = vector.broadcast %cst_10 : f32 to vector<128x128xf32>
      %c0_11 = arith.constant 0 : index
      %c0_12 = arith.constant 0 : index
      %13 = vector.load %arg6[%c0_11, %c0_12] : memref<128x128xf32, #tpu.memory_space<vmem>>, vector<128x128xf32>
      tpu.vector_store %arg6[%c0_11, %c0_12], %12 {strides = array<i32>} : memref<128x128xf32, #tpu.memory_space<vmem>>, vector<128x128xf32>,
    } else {
    }
    %c0 = arith.constant 0 : index
    %c0_1 = arith.constant 0 : index
    %3 = vector.load %arg6[%c0, %c0_1] : memref<128x128xf32, #tpu.memory_space<vmem>>, vector<128x128xf32>
    %c0_2 = arith.constant 0 : index
    %c0_3 = arith.constant 0 : index
    %4 = vector.load %arg3[%c0_2, %c0_3] : memref<128x64xf32, #tpu.memory_space<vmem>>, vector<128x64xf32>
    %c0_4 = arith.constant 0 : index
    %c0_5 = arith.constant 0 : index
    %5 = vector.load %arg4[%c0_4, %c0_5] : memref<64x128xf32, #tpu.memory_space<vmem>>, vector<64x128xf32>
    %cst = arith.constant dense<0.000000e+00> : vector<128x128xf32>
    %6 = tpu.matmul %4, %5, %cst {dimension_numbers = #tpu.dot_dimension_numbers<[1], [0], [0], [1], [0, 0, 1, 1], [], []>} : vector<128x64xf32>, vector<64x128xf32>, vector<128x128xf32> -> vector<128x128xf32>
    %7 = arith.addf %3, %6 : vector<128x128xf32>
    %c0_6 = arith.constant 0 : index
    %c0_7 = arith.constant 0 : index
    %8 = vector.load %arg6[%c0_6, %c0_7] : memref<128x128xf32, #tpu.memory_space<vmem>>, vector<128x128xf32>
    tpu.vector_store %arg6[%c0_6, %c0_7], %7 {strides = array<i32>} : memref<128x128xf32, #tpu.memory_space<vmem>>, vector<128x128xf32>,
    %c0_i32_8 = arith.constant 0 : i32
    %9 = arith.cmpi eq, %arg2, %c0_i32_8 : i32
    %10 = arith.extui %9 : i1 to i32
    %c0_i32_9 = arith.constant 0 : i32
    %11 = arith.cmpi ne, %10, %c0_i32_9 : i32
    scf.if %11 {
      %c0_10 = arith.constant 0 : index
      %c0_11 = arith.constant 0 : index
      %12 = vector.load %arg6[%c0_10, %c0_11] : memref<128x128xf32, #tpu.memory_space<vmem>>, vector<128x128xf32>
      %c0_12 = arith.constant 0 : index
      %c0_13 = arith.constant 0 : index
      %13 = vector.load %arg5[%c0_12, %c0_13] : memref<128x128xf32, #tpu.memory_space<vmem>>, vector<128x128xf32>
      tpu.vector_store %arg5[%c0_12, %c0_13], %12 {strides = array<i32>} : memref<128x128xf32, #tpu.memory_space<vmem>>, vector<128x128xf32>,
    } else {
    }
    return
  }
  func.func @transform_0(%arg0: i32, %arg1: i32, %arg2: i32) -> (i32, i32) {
    %c0_i32 = arith.constant 0 : i32
    return %arg0, %arg2 : i32, i32
  }
  func.func @transform_1(%arg0: i32, %arg1: i32, %arg2: i32) -> (i32, i32) {
    %c0_i32 = arith.constant 0 : i32
    return %arg2, %arg1 : i32, i32
  }
  func.func @transform_2(%arg0: i32, %arg1: i32, %arg2: i32) -> (i32, i32) {
    %c0_i32 = arith.constant 0 : i32
    return %arg0, %arg1 : i32, i32
  }
}

module attributes {stable_mosaic.version = 11 : i64} {
  func.func @_matmul_kernel(%arg0: i32, %arg1: i32, %arg2: i32, %arg3: memref<128x128xf32, #tpu.memory_space<vmem>>, %arg4: memref<128x128xf32, #tpu.memory_space<vmem>>, %arg5: memref<128x128xf32, #tpu.memory_space<vmem>>, %arg6: memref<128x128xf32, #tpu.memory_space<vmem>>) attributes {dimension_semantics = [#tpu.dimension_semantics<parallel>, #tpu.dimension_semantics<parallel>, #tpu.dimension_semantics<arbitrary>], iteration_bounds = array<i64: 2, 2, 2>, scalar_prefetch = 0 : i64, scratch_operands = 1 : i64, tpu.core_type = #tpu.core_type<tc>, window_params = [{transform_indices = @transform_0, window_bounds = array<i64: 128, 128>}, {transform_indices = @transform_1, window_bounds = array<i64: 128, 128>}, {transform_indices = @transform_2, window_bounds = array<i64: 128, 128>}]} {
    %c0_i32 = arith.constant 0 : i32
    %0 = arith.cmpi eq, %arg2, %c0_i32 : i32
    %1 = arith.extui %0 : i1 to i32
    %c0_i32_0 = arith.constant 0 : i32
    %2 = arith.cmpi ne, %1, %c0_i32_0 : i32
    scf.if %2 {
      %cst_9 = arith.constant 0.000000e+00 : f32
      %12 = vector.broadcast %cst_9 : f32 to vector<128x128xf32>
      %c0_10 = arith.constant 0 : index
      %c0_11 = arith.constant 0 : index
      %13 = vector.load %arg6[%c0_10, %c0_11] : memref<128x128xf32, #tpu.memory_space<vmem>>, vector<128x128xf32>
      tpu.vector_store %arg6[%c0_10, %c0_11], %12 {strides = array<i32>} : memref<128x128xf32, #tpu.memory_space<vmem>>, vector<128x128xf32>,
    } else {
    }
    %c0 = arith.constant 0 : index
    %c0_1 = arith.constant 0 : index
    %3 = vector.load %arg6[%c0, %c0_1] : memref<128x128xf32, #tpu.memory_space<vmem>>, vector<128x128xf32>
    %c0_2 = arith.constant 0 : index
    %c0_3 = arith.constant 0 : index
    %4 = vector.load %arg3[%c0_2, %c0_3] : memref<128x128xf32, #tpu.memory_space<vmem>>, vector<128x128xf32>
    %c0_4 = arith.constant 0 : index
    %c0_5 = arith.constant 0 : index
    %5 = vector.load %arg4[%c0_4, %c0_5] : memref<128x128xf32, #tpu.memory_space<vmem>>, vector<128x128xf32>
    %cst = arith.constant dense<0.000000e+00> : vector<128x128xf32>
    %6 = tpu.matmul %4, %5, %cst {dimension_numbers = #tpu.dot_dimension_numbers<[1], [0], [0], [1], [0, 0, 1, 1], [], []>} : vector<128x128xf32>, vector<128x128xf32>, vector<128x128xf32> -> vector<128x128xf32>
    %7 = arith.addf %3, %6 : vector<128x128xf32>
    %c0_6 = arith.constant 0 : index
    %c0_7 = arith.constant 0 : index
    %8 = vector.load %arg6[%c0_6, %c0_7] : memref<128x128xf32, #tpu.memory_space<vmem>>, vector<128x128xf32>
    tpu.vector_store %arg6[%c0_6, %c0_7], %7 {strides = array<i32>} : memref<128x128xf32, #tpu.memory_space<vmem>>, vector<128x128xf32>,
    %c1_i32 = arith.constant 1 : i32
    %9 = arith.cmpi eq, %arg2, %c1_i32 : i32
    %10 = arith.extui %9 : i1 to i32
    %c0_i32_8 = arith.constant 0 : i32
    %11 = arith.cmpi ne, %10, %c0_i32_8 : i32
    scf.if %11 {
      %c0_9 = arith.constant 0 : index
      %c0_10 = arith.constant 0 : index
      %12 = vector.load %arg6[%c0_9, %c0_10] : memref<128x128xf32, #tpu.memory_space<vmem>>, vector<128x128xf32>
      %cst_11 = arith.constant 0.000000e+00 : f32
      %13 = vector.broadcast %cst_11 : f32 to vector<128x128xf32>
      %14 = arith.maximumf %12, %13 : vector<128x128xf32>
      %c0_12 = arith.constant 0 : index
      %c0_13 = arith.constant 0 : index
      %15 = vector.load %arg5[%c0_12, %c0_13] : memref<128x128xf32, #tpu.memory_space<vmem>>, vector<128x128xf32>
      tpu.vector_store %arg5[%c0_12, %c0_13], %14 {strides = array<i32>} : memref<128x128xf32, #tpu.memory_space<vmem>>, vector<128x128xf32>,
    } else {
    }
    return
  }
  func.func @transform_0(%arg0: i32, %arg1: i32, %arg2: i32) -> (i32, i32) {
    %c0_i32 = arith.constant 0 : i32
    return %arg0, %arg2 : i32, i32
  }
  func.func @transform_1(%arg0: i32, %arg1: i32, %arg2: i32) -> (i32, i32) {
    %c0_i32 = arith.constant 0 : i32
    return %arg2, %arg1 : i32, i32
  }
  func.func @transform_2(%arg0: i32, %arg1: i32, %arg2: i32) -> (i32, i32) {
    %c0_i32 = arith.constant 0 : i32
    return %arg0, %arg1 : i32, i32
  }
}

module attributes {stable_mosaic.version = 11 : i64} {
  func.func @_ae_fused_kernel(%arg0: i32, %arg1: memref<128x64xf32, #tpu.memory_space<vmem>>, %arg2: memref<64x128xf32, #tpu.memory_space<vmem>>, %arg3: memref<1x128xf32, #tpu.memory_space<vmem>>, %arg4: memref<128x64xf32, #tpu.memory_space<vmem>>, %arg5: memref<1x64xf32, #tpu.memory_space<vmem>>, %arg6: memref<64x16xf32, #tpu.memory_space<vmem>>, %arg7: memref<1x16xf32, #tpu.memory_space<vmem>>, %arg8: memref<16x64xf32, #tpu.memory_space<vmem>>, %arg9: memref<1x64xf32, #tpu.memory_space<vmem>>, %arg10: memref<64x128xf32, #tpu.memory_space<vmem>>, %arg11: memref<1x128xf32, #tpu.memory_space<vmem>>, %arg12: memref<128x64xf32, #tpu.memory_space<vmem>>, %arg13: memref<1x64xf32, #tpu.memory_space<vmem>>, %arg14: memref<4x16xf32, #tpu.memory_space<vmem>>, %arg15: memref<1x4xf32, #tpu.memory_space<vmem>>, %arg16: memref<128x64xf32, #tpu.memory_space<vmem>>, %arg17: memref<128x16xf32, #tpu.memory_space<vmem>>, %arg18: memref<128x4xf32, #tpu.memory_space<vmem>>) attributes {dimension_semantics = [#tpu.dimension_semantics<parallel>], iteration_bounds = array<i64: 2>, scalar_prefetch = 0 : i64, scratch_operands = 0 : i64, tpu.core_type = #tpu.core_type<tc>, window_params = [{transform_indices = @transform_0, window_bounds = array<i64: 128, 64>}, {pipeline_mode = #tpu.pipeline_mode<synchronous>, transform_indices = @transform_1, window_bounds = array<i64: 64, 128>}, {pipeline_mode = #tpu.pipeline_mode<synchronous>, transform_indices = @transform_2, window_bounds = array<i64: 1, 128>}, {pipeline_mode = #tpu.pipeline_mode<synchronous>, transform_indices = @transform_3, window_bounds = array<i64: 128, 64>}, {pipeline_mode = #tpu.pipeline_mode<synchronous>, transform_indices = @transform_4, window_bounds = array<i64: 1, 64>}, {pipeline_mode = #tpu.pipeline_mode<synchronous>, transform_indices = @transform_5, window_bounds = array<i64: 64, 16>}, {pipeline_mode = #tpu.pipeline_mode<synchronous>, transform_indices = @transform_6, window_bounds = array<i64: 1, 16>}, {pipeline_mode = #tpu.pipeline_mode<synchronous>, transform_indices = @transform_7, window_bounds = array<i64: 16, 64>}, {pipeline_mode = #tpu.pipeline_mode<synchronous>, transform_indices = @transform_8, window_bounds = array<i64: 1, 64>}, {pipeline_mode = #tpu.pipeline_mode<synchronous>, transform_indices = @transform_9, window_bounds = array<i64: 64, 128>}, {pipeline_mode = #tpu.pipeline_mode<synchronous>, transform_indices = @transform_10, window_bounds = array<i64: 1, 128>}, {pipeline_mode = #tpu.pipeline_mode<synchronous>, transform_indices = @transform_11, window_bounds = array<i64: 128, 64>}, {pipeline_mode = #tpu.pipeline_mode<synchronous>, transform_indices = @transform_12, window_bounds = array<i64: 1, 64>}, {pipeline_mode = #tpu.pipeline_mode<synchronous>, transform_indices = @transform_13, window_bounds = array<i64: 4, 16>}, {pipeline_mode = #tpu.pipeline_mode<synchronous>, transform_indices = @transform_14, window_bounds = array<i64: 1, 4>}, {transform_indices = @transform_15, window_bounds = array<i64: 128, 64>}, {transform_indices = @transform_16, window_bounds = array<i64: 128, 16>}, {transform_indices = @transform_17, window_bounds = array<i64: 128, 4>}]} {
    %c0 = arith.constant 0 : index
    %c0_0 = arith.constant 0 : index
    %0 = vector.load %arg1[%c0, %c0_0] : memref<128x64xf32, #tpu.memory_space<vmem>>, vector<128x64xf32>
    %c0_1 = arith.constant 0 : index
    %c0_2 = arith.constant 0 : index
    %1 = vector.load %arg2[%c0_1, %c0_2] : memref<64x128xf32, #tpu.memory_space<vmem>>, vector<64x128xf32>
    %cst = arith.constant dense<0.000000e+00> : vector<128x128xf32>
    %2 = tpu.matmul %0, %1, %cst {dimension_numbers = #tpu.dot_dimension_numbers<[1], [0], [0], [1], [0, 0, 1, 1], [], []>} : vector<128x64xf32>, vector<64x128xf32>, vector<128x128xf32> -> vector<128x128xf32>
    %c0_3 = arith.constant 0 : index
    %c0_4 = arith.constant 0 : index
    %3 = vector.load %arg3[%c0_3, %c0_4] : memref<1x128xf32, #tpu.memory_space<vmem>>, vector<1x128xf32>
    %4 = vector.broadcast %3 : vector<1x128xf32> to vector<128x128xf32>
    %5 = arith.addf %2, %4 : vector<128x128xf32>
    %cst_5 = arith.constant 0.000000e+00 : f32
    %6 = vector.broadcast %cst_5 : f32 to vector<128x128xf32>
    %7 = arith.maximumf %5, %6 : vector<128x128xf32>
    %c0_6 = arith.constant 0 : index
    %c0_7 = arith.constant 0 : index
    %8 = vector.load %arg4[%c0_6, %c0_7] : memref<128x64xf32, #tpu.memory_space<vmem>>, vector<128x64xf32>
    %cst_8 = arith.constant dense<0.000000e+00> : vector<128x64xf32>
    %9 = tpu.matmul %7, %8, %cst_8 {dimension_numbers = #tpu.dot_dimension_numbers<[1], [0], [0], [1], [0, 0, 1, 1], [], []>} : vector<128x128xf32>, vector<128x64xf32>, vector<128x64xf32> -> vector<128x64xf32>
    %c0_9 = arith.constant 0 : index
    %c0_10 = arith.constant 0 : index
    %10 = vector.load %arg5[%c0_9, %c0_10] : memref<1x64xf32, #tpu.memory_space<vmem>>, vector<1x64xf32>
    %11 = vector.broadcast %10 : vector<1x64xf32> to vector<128x64xf32>
    %12 = arith.addf %9, %11 : vector<128x64xf32>
    %cst_11 = arith.constant 0.000000e+00 : f32
    %13 = vector.broadcast %cst_11 : f32 to vector<128x64xf32>
    %14 = arith.maximumf %12, %13 : vector<128x64xf32>
    %c0_12 = arith.constant 0 : index
    %c0_13 = arith.constant 0 : index
    %15 = vector.load %arg6[%c0_12, %c0_13] : memref<64x16xf32, #tpu.memory_space<vmem>>, vector<64x16xf32>
    %cst_14 = arith.constant dense<0.000000e+00> : vector<128x16xf32>
    %16 = tpu.matmul %14, %15, %cst_14 {dimension_numbers = #tpu.dot_dimension_numbers<[1], [0], [0], [1], [0, 0, 1, 1], [], []>} : vector<128x64xf32>, vector<64x16xf32>, vector<128x16xf32> -> vector<128x16xf32>
    %c0_15 = arith.constant 0 : index
    %c0_16 = arith.constant 0 : index
    %17 = vector.load %arg7[%c0_15, %c0_16] : memref<1x16xf32, #tpu.memory_space<vmem>>, vector<1x16xf32>
    %18 = vector.broadcast %17 : vector<1x16xf32> to vector<128x16xf32>
    %19 = arith.addf %16, %18 : vector<128x16xf32>
    %c0_17 = arith.constant 0 : index
    %c0_18 = arith.constant 0 : index
    %20 = vector.load %arg8[%c0_17, %c0_18] : memref<16x64xf32, #tpu.memory_space<vmem>>, vector<16x64xf32>
    %cst_19 = arith.constant dense<0.000000e+00> : vector<128x64xf32>
    %21 = tpu.matmul %19, %20, %cst_19 {dimension_numbers = #tpu.dot_dimension_numbers<[1], [0], [0], [1], [0, 0, 1, 1], [], []>} : vector<128x16xf32>, vector<16x64xf32>, vector<128x64xf32> -> vector<128x64xf32>
    %c0_20 = arith.constant 0 : index
    %c0_21 = arith.constant 0 : index
    %22 = vector.load %arg9[%c0_20, %c0_21] : memref<1x64xf32, #tpu.memory_space<vmem>>, vector<1x64xf32>
    %23 = vector.broadcast %22 : vector<1x64xf32> to vector<128x64xf32>
    %24 = arith.addf %21, %23 : vector<128x64xf32>
    %cst_22 = arith.constant 0.000000e+00 : f32
    %25 = vector.broadcast %cst_22 : f32 to vector<128x64xf32>
    %26 = arith.maximumf %24, %25 : vector<128x64xf32>
    %c0_23 = arith.constant 0 : index
    %c0_24 = arith.constant 0 : index
    %27 = vector.load %arg10[%c0_23, %c0_24] : memref<64x128xf32, #tpu.memory_space<vmem>>, vector<64x128xf32>
    %cst_25 = arith.constant dense<0.000000e+00> : vector<128x128xf32>
    %28 = tpu.matmul %26, %27, %cst_25 {dimension_numbers = #tpu.dot_dimension_numbers<[1], [0], [0], [1], [0, 0, 1, 1], [], []>} : vector<128x64xf32>, vector<64x128xf32>, vector<128x128xf32> -> vector<128x128xf32>
    %c0_26 = arith.constant 0 : index
    %c0_27 = arith.constant 0 : index
    %29 = vector.load %arg11[%c0_26, %c0_27] : memref<1x128xf32, #tpu.memory_space<vmem>>, vector<1x128xf32>
    %30 = vector.broadcast %29 : vector<1x128xf32> to vector<128x128xf32>
    %31 = arith.addf %28, %30 : vector<128x128xf32>
    %cst_28 = arith.constant 0.000000e+00 : f32
    %32 = vector.broadcast %cst_28 : f32 to vector<128x128xf32>
    %33 = arith.maximumf %31, %32 : vector<128x128xf32>
    %c0_29 = arith.constant 0 : index
    %c0_30 = arith.constant 0 : index
    %34 = vector.load %arg12[%c0_29, %c0_30] : memref<128x64xf32, #tpu.memory_space<vmem>>, vector<128x64xf32>
    %cst_31 = arith.constant dense<0.000000e+00> : vector<128x64xf32>
    %35 = tpu.matmul %33, %34, %cst_31 {dimension_numbers = #tpu.dot_dimension_numbers<[1], [0], [0], [1], [0, 0, 1, 1], [], []>} : vector<128x128xf32>, vector<128x64xf32>, vector<128x64xf32> -> vector<128x64xf32>
    %c0_32 = arith.constant 0 : index
    %c0_33 = arith.constant 0 : index
    %36 = vector.load %arg13[%c0_32, %c0_33] : memref<1x64xf32, #tpu.memory_space<vmem>>, vector<1x64xf32>
    %37 = vector.broadcast %36 : vector<1x64xf32> to vector<128x64xf32>
    %38 = arith.addf %35, %37 : vector<128x64xf32>
    %c0_34 = arith.constant 0 : index
    %c0_35 = arith.constant 0 : index
    %39 = vector.load %arg16[%c0_34, %c0_35] : memref<128x64xf32, #tpu.memory_space<vmem>>, vector<128x64xf32>
    tpu.vector_store %arg16[%c0_34, %c0_35], %38 {strides = array<i32>} : memref<128x64xf32, #tpu.memory_space<vmem>>, vector<128x64xf32>,
    %c0_36 = arith.constant 0 : index
    %c0_37 = arith.constant 0 : index
    %40 = vector.load %arg17[%c0_36, %c0_37] : memref<128x16xf32, #tpu.memory_space<vmem>>, vector<128x16xf32>
    tpu.vector_store %arg17[%c0_36, %c0_37], %19 {strides = array<i32>} : memref<128x16xf32, #tpu.memory_space<vmem>>, vector<128x16xf32>,
    %c0_38 = arith.constant 0 : index
    %c0_39 = arith.constant 0 : index
    %41 = vector.load %arg14[%c0_38, %c0_39] : memref<4x16xf32, #tpu.memory_space<vmem>>, vector<4x16xf32>
    %c0_40 = arith.constant 0 : index
    %c0_41 = arith.constant 0 : index
    %42 = vector.load %arg15[%c0_40, %c0_41] : memref<1x4xf32, #tpu.memory_space<vmem>>, vector<1x4xf32>
    %43 = arith.mulf %19, %19 : vector<128x16xf32>
    %cst_42 = arith.constant dense<0.000000e+00> : vector<128xf32>
    %44 = vector.multi_reduction <add>, %43, %cst_42 [1] : vector<128x16xf32> to vector<128xf32>
    %45 = vector.shape_cast %44 : vector<128xf32> to vector<128x1xf32>
    %cst_43 = arith.constant dense<0.000000e+00> : vector<128x4xf32>
    %46 = tpu.matmul %19, %41, %cst_43 {dimension_numbers = #tpu.dot_dimension_numbers<[1], [1], [0], [0], [0, 0, 1, 0], [], []>} : vector<128x16xf32>, vector<4x16xf32>, vector<128x4xf32> -> vector<128x4xf32>
    %47 = vector.broadcast %45 : vector<128x1xf32> to vector<128x4xf32>
    %48 = vector.broadcast %42 : vector<1x4xf32> to vector<128x4xf32>
    %49 = arith.addf %47, %48 : vector<128x4xf32>
    %cst_44 = arith.constant 2.000000e+00 : f32
    %50 = vector.broadcast %cst_44 : f32 to vector<128x4xf32>
    %51 = arith.mulf %50, %46 : vector<128x4xf32>
    %52 = arith.subf %49, %51 : vector<128x4xf32>
    %cst_45 = arith.constant 0.000000e+00 : f32
    %53 = vector.broadcast %cst_45 : f32 to vector<128x4xf32>
    %54 = arith.maximumf %52, %53 : vector<128x4xf32>
    %cst_46 = arith.constant 1.000000e+00 : f32
    %55 = vector.broadcast %cst_46 : f32 to vector<128x4xf32>
    %56 = arith.divf %54, %55 : vector<128x4xf32>
    %cst_47 = arith.constant 1.000000e+00 : f32
    %57 = vector.broadcast %cst_47 : f32 to vector<128x4xf32>
    %58 = arith.addf %57, %56 : vector<128x4xf32>
    %cst_48 = arith.constant 1.000000e+00 : f32
    %59 = vector.broadcast %cst_48 : f32 to vector<128x4xf32>
    %60 = arith.divf %59, %58 : vector<128x4xf32>
    %cst_49 = arith.constant dense<0.000000e+00> : vector<128xf32>
    %61 = vector.multi_reduction <add>, %60, %cst_49 [1] : vector<128x4xf32> to vector<128xf32>
    %62 = vector.shape_cast %61 : vector<128xf32> to vector<128x1xf32>
    %63 = vector.broadcast %62 : vector<128x1xf32> to vector<128x4xf32>
    %64 = arith.divf %60, %63 : vector<128x4xf32>
    %c0_50 = arith.constant 0 : index
    %c0_51 = arith.constant 0 : index
    %65 = vector.load %arg18[%c0_50, %c0_51] : memref<128x4xf32, #tpu.memory_space<vmem>>, vector<128x4xf32>
    tpu.vector_store %arg18[%c0_50, %c0_51], %64 {strides = array<i32>} : memref<128x4xf32, #tpu.memory_space<vmem>>, vector<128x4xf32>,
    return
  }
  func.func @transform_0(%arg0: i32) -> (i32, i32) {
    %c0_i32 = arith.constant 0 : i32
    %c0_i32_0 = arith.constant 0 : i32
    return %arg0, %c0_i32 : i32, i32
  }
  func.func @transform_1(%arg0: i32) -> (i32, i32) {
    %c0_i32 = arith.constant 0 : i32
    %c0_i32_0 = arith.constant 0 : i32
    %c0_i32_1 = arith.constant 0 : i32
    return %c0_i32, %c0_i32_0 : i32, i32
  }
  func.func @transform_2(%arg0: i32) -> (i32, i32) {
    %c0_i32 = arith.constant 0 : i32
    %c0_i32_0 = arith.constant 0 : i32
    %c0_i32_1 = arith.constant 0 : i32
    return %c0_i32, %c0_i32_0 : i32, i32
  }
  func.func @transform_3(%arg0: i32) -> (i32, i32) {
    %c0_i32 = arith.constant 0 : i32
    %c0_i32_0 = arith.constant 0 : i32
    %c0_i32_1 = arith.constant 0 : i32
    return %c0_i32, %c0_i32_0 : i32, i32
  }
  func.func @transform_4(%arg0: i32) -> (i32, i32) {
    %c0_i32 = arith.constant 0 : i32
    %c0_i32_0 = arith.constant 0 : i32
    %c0_i32_1 = arith.constant 0 : i32
    return %c0_i32, %c0_i32_0 : i32, i32
  }
  func.func @transform_5(%arg0: i32) -> (i32, i32) {
    %c0_i32 = arith.constant 0 : i32
    %c0_i32_0 = arith.constant 0 : i32
    %c0_i32_1 = arith.constant 0 : i32
    return %c0_i32, %c0_i32_0 : i32, i32
  }
  func.func @transform_6(%arg0: i32) -> (i32, i32) {
    %c0_i32 = arith.constant 0 : i32
    %c0_i32_0 = arith.constant 0 : i32
    %c0_i32_1 = arith.constant 0 : i32
    return %c0_i32, %c0_i32_0 : i32, i32
  }
  func.func @transform_7(%arg0: i32) -> (i32, i32) {
    %c0_i32 = arith.constant 0 : i32
    %c0_i32_0 = arith.constant 0 : i32
    %c0_i32_1 = arith.constant 0 : i32
    return %c0_i32, %c0_i32_0 : i32, i32
  }
  func.func @transform_8(%arg0: i32) -> (i32, i32) {
    %c0_i32 = arith.constant 0 : i32
    %c0_i32_0 = arith.constant 0 : i32
    %c0_i32_1 = arith.constant 0 : i32
    return %c0_i32, %c0_i32_0 : i32, i32
  }
  func.func @transform_9(%arg0: i32) -> (i32, i32) {
    %c0_i32 = arith.constant 0 : i32
    %c0_i32_0 = arith.constant 0 : i32
    %c0_i32_1 = arith.constant 0 : i32
    return %c0_i32, %c0_i32_0 : i32, i32
  }
  func.func @transform_10(%arg0: i32) -> (i32, i32) {
    %c0_i32 = arith.constant 0 : i32
    %c0_i32_0 = arith.constant 0 : i32
    %c0_i32_1 = arith.constant 0 : i32
    return %c0_i32, %c0_i32_0 : i32, i32
  }
  func.func @transform_11(%arg0: i32) -> (i32, i32) {
    %c0_i32 = arith.constant 0 : i32
    %c0_i32_0 = arith.constant 0 : i32
    %c0_i32_1 = arith.constant 0 : i32
    return %c0_i32, %c0_i32_0 : i32, i32
  }
  func.func @transform_12(%arg0: i32) -> (i32, i32) {
    %c0_i32 = arith.constant 0 : i32
    %c0_i32_0 = arith.constant 0 : i32
    %c0_i32_1 = arith.constant 0 : i32
    return %c0_i32, %c0_i32_0 : i32, i32
  }
  func.func @transform_13(%arg0: i32) -> (i32, i32) {
    %c0_i32 = arith.constant 0 : i32
    %c0_i32_0 = arith.constant 0 : i32
    %c0_i32_1 = arith.constant 0 : i32
    return %c0_i32, %c0_i32_0 : i32, i32
  }
  func.func @transform_14(%arg0: i32) -> (i32, i32) {
    %c0_i32 = arith.constant 0 : i32
    %c0_i32_0 = arith.constant 0 : i32
    %c0_i32_1 = arith.constant 0 : i32
    return %c0_i32, %c0_i32_0 : i32, i32
  }
  func.func @transform_15(%arg0: i32) -> (i32, i32) {
    %c0_i32 = arith.constant 0 : i32
    %c0_i32_0 = arith.constant 0 : i32
    return %arg0, %c0_i32 : i32, i32
  }
  func.func @transform_16(%arg0: i32) -> (i32, i32) {
    %c0_i32 = arith.constant 0 : i32
    %c0_i32_0 = arith.constant 0 : i32
    return %arg0, %c0_i32 : i32, i32
  }
  func.func @transform_17(%arg0: i32) -> (i32, i32) {
    %c0_i32 = arith.constant 0 : i32
    %c0_i32_0 = arith.constant 0 : i32
    return %arg0, %c0_i32 : i32, i32
  }
}

module attributes {stable_mosaic.version = 11 : i64} {
  func.func @_matmul_kernel(%arg0: i32, %arg1: i32, %arg2: i32, %arg3: memref<128x128xf32, #tpu.memory_space<vmem>>, %arg4: memref<128x16xf32, #tpu.memory_space<vmem>>, %arg5: memref<128x16xf32, #tpu.memory_space<vmem>>, %arg6: memref<128x16xf32, #tpu.memory_space<vmem>>) attributes {dimension_semantics = [#tpu.dimension_semantics<parallel>, #tpu.dimension_semantics<parallel>, #tpu.dimension_semantics<arbitrary>], iteration_bounds = array<i64: 2, 1, 2>, scalar_prefetch = 0 : i64, scratch_operands = 1 : i64, tpu.core_type = #tpu.core_type<tc>, window_params = [{transform_indices = @transform_0, window_bounds = array<i64: 128, 128>}, {transform_indices = @transform_1, window_bounds = array<i64: 128, 16>}, {transform_indices = @transform_2, window_bounds = array<i64: 128, 16>}]} {
    %c0_i32 = arith.constant 0 : i32
    %0 = arith.cmpi eq, %arg2, %c0_i32 : i32
    %1 = arith.extui %0 : i1 to i32
    %c0_i32_0 = arith.constant 0 : i32
    %2 = arith.cmpi ne, %1, %c0_i32_0 : i32
    scf.if %2 {
      %cst_9 = arith.constant 0.000000e+00 : f32
      %12 = vector.broadcast %cst_9 : f32 to vector<128x16xf32>
      %c0_10 = arith.constant 0 : index
      %c0_11 = arith.constant 0 : index
      %13 = vector.load %arg6[%c0_10, %c0_11] : memref<128x16xf32, #tpu.memory_space<vmem>>, vector<128x16xf32>
      tpu.vector_store %arg6[%c0_10, %c0_11], %12 {strides = array<i32>} : memref<128x16xf32, #tpu.memory_space<vmem>>, vector<128x16xf32>,
    } else {
    }
    %c0 = arith.constant 0 : index
    %c0_1 = arith.constant 0 : index
    %3 = vector.load %arg6[%c0, %c0_1] : memref<128x16xf32, #tpu.memory_space<vmem>>, vector<128x16xf32>
    %c0_2 = arith.constant 0 : index
    %c0_3 = arith.constant 0 : index
    %4 = vector.load %arg3[%c0_2, %c0_3] : memref<128x128xf32, #tpu.memory_space<vmem>>, vector<128x128xf32>
    %c0_4 = arith.constant 0 : index
    %c0_5 = arith.constant 0 : index
    %5 = vector.load %arg4[%c0_4, %c0_5] : memref<128x16xf32, #tpu.memory_space<vmem>>, vector<128x16xf32>
    %cst = arith.constant dense<0.000000e+00> : vector<128x16xf32>
    %6 = tpu.matmul %4, %5, %cst {dimension_numbers = #tpu.dot_dimension_numbers<[1], [0], [0], [1], [0, 0, 1, 1], [], []>} : vector<128x128xf32>, vector<128x16xf32>, vector<128x16xf32> -> vector<128x16xf32>
    %7 = arith.addf %3, %6 : vector<128x16xf32>
    %c0_6 = arith.constant 0 : index
    %c0_7 = arith.constant 0 : index
    %8 = vector.load %arg6[%c0_6, %c0_7] : memref<128x16xf32, #tpu.memory_space<vmem>>, vector<128x16xf32>
    tpu.vector_store %arg6[%c0_6, %c0_7], %7 {strides = array<i32>} : memref<128x16xf32, #tpu.memory_space<vmem>>, vector<128x16xf32>,
    %c1_i32 = arith.constant 1 : i32
    %9 = arith.cmpi eq, %arg2, %c1_i32 : i32
    %10 = arith.extui %9 : i1 to i32
    %c0_i32_8 = arith.constant 0 : i32
    %11 = arith.cmpi ne, %10, %c0_i32_8 : i32
    scf.if %11 {
      %c0_9 = arith.constant 0 : index
      %c0_10 = arith.constant 0 : index
      %12 = vector.load %arg6[%c0_9, %c0_10] : memref<128x16xf32, #tpu.memory_space<vmem>>, vector<128x16xf32>
      %c0_11 = arith.constant 0 : index
      %c0_12 = arith.constant 0 : index
      %13 = vector.load %arg5[%c0_11, %c0_12] : memref<128x16xf32, #tpu.memory_space<vmem>>, vector<128x16xf32>
      tpu.vector_store %arg5[%c0_11, %c0_12], %12 {strides = array<i32>} : memref<128x16xf32, #tpu.memory_space<vmem>>, vector<128x16xf32>,
    } else {
    }
    return
  }
  func.func @transform_0(%arg0: i32, %arg1: i32, %arg2: i32) -> (i32, i32) {
    %c0_i32 = arith.constant 0 : i32
    return %arg0, %arg2 : i32, i32
  }
  func.func @transform_1(%arg0: i32, %arg1: i32, %arg2: i32) -> (i32, i32) {
    %c0_i32 = arith.constant 0 : i32
    return %arg2, %arg1 : i32, i32
  }
  func.func @transform_2(%arg0: i32, %arg1: i32, %arg2: i32) -> (i32, i32) {
    %c0_i32 = arith.constant 0 : i32
    return %arg0, %arg1 : i32, i32
  }
}

module attributes {stable_mosaic.version = 11 : i64} {
  func.func @_ipd_kernel(%arg0: i32, %arg1: i32, %arg2: memref<128x16xf32, #tpu.memory_space<vmem>>, %arg3: memref<128x16xf32, #tpu.memory_space<vmem>>, %arg4: memref<128x128xf32, #tpu.memory_space<vmem>>) attributes {dimension_semantics = [#tpu.dimension_semantics<parallel>, #tpu.dimension_semantics<parallel>], iteration_bounds = array<i64: 2, 2>, scalar_prefetch = 0 : i64, scratch_operands = 0 : i64, tpu.core_type = #tpu.core_type<tc>, window_params = [{transform_indices = @transform_0, window_bounds = array<i64: 128, 16>}, {transform_indices = @transform_1, window_bounds = array<i64: 128, 16>}, {transform_indices = @transform_2, window_bounds = array<i64: 128, 128>}]} {
    %c0 = arith.constant 0 : index
    %c0_0 = arith.constant 0 : index
    %0 = vector.load %arg2[%c0, %c0_0] : memref<128x16xf32, #tpu.memory_space<vmem>>, vector<128x16xf32>
    %c0_1 = arith.constant 0 : index
    %c0_2 = arith.constant 0 : index
    %1 = vector.load %arg3[%c0_1, %c0_2] : memref<128x16xf32, #tpu.memory_space<vmem>>, vector<128x16xf32>
    %cst = arith.constant dense<0.000000e+00> : vector<128x128xf32>
    %2 = tpu.matmul %0, %1, %cst {dimension_numbers = #tpu.dot_dimension_numbers<[1], [1], [0], [0], [0, 0, 1, 0], [], []>} : vector<128x16xf32>, vector<128x16xf32>, vector<128x128xf32> -> vector<128x128xf32>
    %3 = arith.negf %2 : vector<128x128xf32>
    %4 = math.exp %3 : vector<128x128xf32>
    %cst_3 = arith.constant 1.000000e+00 : f32
    %5 = vector.broadcast %cst_3 : f32 to vector<128x128xf32>
    %6 = arith.addf %5, %4 : vector<128x128xf32>
    %7 = arith.divf %5, %6 : vector<128x128xf32>
    %c0_4 = arith.constant 0 : index
    %c0_5 = arith.constant 0 : index
    %8 = vector.load %arg4[%c0_4, %c0_5] : memref<128x128xf32, #tpu.memory_space<vmem>>, vector<128x128xf32>
    tpu.vector_store %arg4[%c0_4, %c0_5], %7 {strides = array<i32>} : memref<128x128xf32, #tpu.memory_space<vmem>>, vector<128x128xf32>,
    return
  }
  func.func @transform_0(%arg0: i32, %arg1: i32) -> (i32, i32) {
    %c0_i32 = arith.constant 0 : i32
    %c0_i32_0 = arith.constant 0 : i32
    return %arg0, %c0_i32 : i32, i32
  }
  func.func @transform_1(%arg0: i32, %arg1: i32) -> (i32, i32) {
    %c0_i32 = arith.constant 0 : i32
    %c0_i32_0 = arith.constant 0 : i32
    return %arg1, %c0_i32 : i32, i32
  }
  func.func @transform_2(%arg0: i32, %arg1: i32) -> (i32, i32) {
    %c0_i32 = arith.constant 0 : i32
    return %arg0, %arg1 : i32, i32
  }
}

module attributes {stable_mosaic.version = 11 : i64} {
  func.func @_soft_assign_kernel(%arg0: i32, %arg1: memref<128x16xf32, #tpu.memory_space<vmem>>, %arg2: memref<4x16xf32, #tpu.memory_space<vmem>>, %arg3: memref<1x4xf32, #tpu.memory_space<vmem>>, %arg4: memref<128x4xf32, #tpu.memory_space<vmem>>) attributes {dimension_semantics = [#tpu.dimension_semantics<parallel>], iteration_bounds = array<i64: 2>, scalar_prefetch = 0 : i64, scratch_operands = 0 : i64, tpu.core_type = #tpu.core_type<tc>, window_params = [{transform_indices = @transform_0, window_bounds = array<i64: 128, 16>}, {pipeline_mode = #tpu.pipeline_mode<synchronous>, transform_indices = @transform_1, window_bounds = array<i64: 4, 16>}, {pipeline_mode = #tpu.pipeline_mode<synchronous>, transform_indices = @transform_2, window_bounds = array<i64: 1, 4>}, {transform_indices = @transform_3, window_bounds = array<i64: 128, 4>}]} {
    %c0 = arith.constant 0 : index
    %c0_0 = arith.constant 0 : index
    %0 = vector.load %arg1[%c0, %c0_0] : memref<128x16xf32, #tpu.memory_space<vmem>>, vector<128x16xf32>
    %c0_1 = arith.constant 0 : index
    %c0_2 = arith.constant 0 : index
    %1 = vector.load %arg2[%c0_1, %c0_2] : memref<4x16xf32, #tpu.memory_space<vmem>>, vector<4x16xf32>
    %c0_3 = arith.constant 0 : index
    %c0_4 = arith.constant 0 : index
    %2 = vector.load %arg3[%c0_3, %c0_4] : memref<1x4xf32, #tpu.memory_space<vmem>>, vector<1x4xf32>
    %3 = arith.mulf %0, %0 : vector<128x16xf32>
    %cst = arith.constant dense<0.000000e+00> : vector<128xf32>
    %4 = vector.multi_reduction <add>, %3, %cst [1] : vector<128x16xf32> to vector<128xf32>
    %5 = vector.shape_cast %4 : vector<128xf32> to vector<128x1xf32>
    %cst_5 = arith.constant dense<0.000000e+00> : vector<128x4xf32>
    %6 = tpu.matmul %0, %1, %cst_5 {dimension_numbers = #tpu.dot_dimension_numbers<[1], [1], [0], [0], [0, 0, 1, 0], [], []>} : vector<128x16xf32>, vector<4x16xf32>, vector<128x4xf32> -> vector<128x4xf32>
    %7 = vector.broadcast %5 : vector<128x1xf32> to vector<128x4xf32>
    %8 = vector.broadcast %2 : vector<1x4xf32> to vector<128x4xf32>
    %9 = arith.addf %7, %8 : vector<128x4xf32>
    %cst_6 = arith.constant 2.000000e+00 : f32
    %10 = vector.broadcast %cst_6 : f32 to vector<128x4xf32>
    %11 = arith.mulf %10, %6 : vector<128x4xf32>
    %12 = arith.subf %9, %11 : vector<128x4xf32>
    %cst_7 = arith.constant 0.000000e+00 : f32
    %13 = vector.broadcast %cst_7 : f32 to vector<128x4xf32>
    %14 = arith.maximumf %12, %13 : vector<128x4xf32>
    %cst_8 = arith.constant 1.000000e+00 : f32
    %15 = vector.broadcast %cst_8 : f32 to vector<128x4xf32>
    %16 = arith.divf %14, %15 : vector<128x4xf32>
    %cst_9 = arith.constant 1.000000e+00 : f32
    %17 = vector.broadcast %cst_9 : f32 to vector<128x4xf32>
    %18 = arith.addf %17, %16 : vector<128x4xf32>
    %cst_10 = arith.constant 1.000000e+00 : f32
    %19 = vector.broadcast %cst_10 : f32 to vector<128x4xf32>
    %20 = arith.divf %19, %18 : vector<128x4xf32>
    %cst_11 = arith.constant dense<0.000000e+00> : vector<128xf32>
    %21 = vector.multi_reduction <add>, %20, %cst_11 [1] : vector<128x4xf32> to vector<128xf32>
    %22 = vector.shape_cast %21 : vector<128xf32> to vector<128x1xf32>
    %23 = vector.broadcast %22 : vector<128x1xf32> to vector<128x4xf32>
    %24 = arith.divf %20, %23 : vector<128x4xf32>
    %c0_12 = arith.constant 0 : index
    %c0_13 = arith.constant 0 : index
    %25 = vector.load %arg4[%c0_12, %c0_13] : memref<128x4xf32, #tpu.memory_space<vmem>>, vector<128x4xf32>
    tpu.vector_store %arg4[%c0_12, %c0_13], %24 {strides = array<i32>} : memref<128x4xf32, #tpu.memory_space<vmem>>, vector<128x4xf32>,
    return
  }
  func.func @transform_0(%arg0: i32) -> (i32, i32) {
    %c0_i32 = arith.constant 0 : i32
    %c0_i32_0 = arith.constant 0 : i32
    return %arg0, %c0_i32 : i32, i32
  }
  func.func @transform_1(%arg0: i32) -> (i32, i32) {
    %c0_i32 = arith.constant 0 : i32
    %c0_i32_0 = arith.constant 0 : i32
    %c0_i32_1 = arith.constant 0 : i32
    return %c0_i32, %c0_i32_0 : i32, i32
  }
  func.func @transform_2(%arg0: i32) -> (i32, i32) {
    %c0_i32 = arith.constant 0 : i32
    %c0_i32_0 = arith.constant 0 : i32
    %c0_i32_1 = arith.constant 0 : i32
    return %c0_i32, %c0_i32_0 : i32, i32
  }
  func.func @transform_3(%arg0: i32) -> (i32, i32) {
    %c0_i32 = arith.constant 0 : i32
    %c0_i32_0 = arith.constant 0 : i32
    return %arg0, %c0_i32 : i32, i32
  }
}

</mosaic_0001>

<llo_original>
// kernel: dcp_dec_forward.8
$region0: #{dcp_dec_forward.8}
  #allocation0 [shape = 'u32[]', space=smem, size = 0x4, offset = 0x4, fixed_abs, tag = 'smem constant byte address 0x4 - core index']
  #allocation1 [shape = 'u32[144,128]{1,0:T(1,128)}', space=vmem, size = 0x12000, scoped, tag = 'internal scratch']
  #allocation2 [shape = 'f32[128,128]{1,0:T(8,128)}', space=vmem, size = 0x10000, scoped, tag = 'scratch operand']
  %s0 = inlined_call_operand.vmem [shape: f32[256,64], index: 0, kind: input, shape index: {}]
  %s1 = inlined_call_operand.vmem [shape: f32[64,256], index: 1, kind: input, shape index: {}]
  %s2 = inlined_call_operand.vmem [shape: f32[256,256], index: 2, kind: output, shape index: {}]
  %s3 = sld [smem:[#allocation0]]
  $region121: #{dcp_dec_forward.8} parent=0
    _
  %s5 = ssub.s32 1, %s3
  %s6 = scalar_select 0, %s5, %s3
  $region1: #{dcp_dec_forward.8} parent=0
    #allocation3 [shape = 'u8[65536]{0}', space=vmem, size = 0x10000, scoped, tag = 'input window, operand 1']
    #allocation4 [shape = 'u8[131072]{0}', space=vmem, size = 0x20000, scoped, tag = 'output window, operand 0']
    loop: start=0, step=1, limit=6
    $region2: #{dcp_dec_forward.8} parent=1 // loop_pre_header
      _
    $region3: #{dcp_dec_forward.8} parent=1 // loop_header
      %s8 = sphi 0, %s12
      %p9 = scmp.ge.s32.totalorder %s8, 6
      %s15 = sphi 0, %s34
      %s16 = sphi 0, %s30
      %s17 = sphi 0, %s26
      %s18 = sphi 0, %s15
      %s19 = sphi 0, %s16
      %s20 = sphi 0, %s17
      %s21 = sphi 0, %s18
      %s22 = sphi 0, %s19
      %s23 = sphi 0, %s20
      %s39 = sphi 0, %s41
      %s42 = sphi 0, %s39
      %s43 = sphi 0, %s42
      %s59 = sphi 0, %s43
      %s67 = sphi 0, %s69
      %s70 = sphi 0, %s67
      %s71 = sphi 0, %s70
      %s87 = sphi 0, %s71
      %s95 = sphi 0, %s97
      %s98 = sphi 0, %s95
      %s99 = sphi 0, %s98
      %s115 = sphi 0, %s99
    $region4: #{dcp_dec_forward.8} parent=1 // loop_header_branch
      %11 = sbr.rel (%p9) target = $region8
    $region5: #{dcp_dec_forward.8} parent=1 // loop_body
      %s13 = ssub.s32 %s8, 1
      %s14 = ssub.s32 %s8, 2
      %s24 = sadd.s32 1, %s17
      %p25 = scmp.ge.s32.totalorder %s24, 1
      %s26 = scalar_select %p25, 0, %s24
      %s27 = sadd.s32 1, %s16
      %s28 = scalar_select %p25, %s27, %s16
      %p29 = scmp.ge.s32.totalorder %s28, 2
      %s30 = scalar_select %p29, 0, %s28
      %s31 = sadd.s32 1, %s15
      %s32 = scalar_select %p29, %s31, %s15
      %p33 = scmp.ge.s32.totalorder %s32, 2
      %s34 = scalar_select %p33, 0, %s32
      %s35 = ssub.s32 %s15, %s34
      %s36 = ssub.s32 %s17, %s26
      %s37 = sor.u32 %s35, %s36
      %p38 = scmp.eq.s32.totalorder %s37, 0
      %s40 = sadd.s32 %s39, 1
      %s41 = scalar_select %p38, %s39, %s40
      %p44 = pneg %p38
      %p45 = scmp.eq.s32.totalorder %s8, 3
      %p46 = por %p44, %p45
      %p47 = scmp.ne.s32.totalorder %s39, %s42
      %p48 = scmp.eq.s32.totalorder %s8, 0
      %p49 = por %p47, %p48
      %p50 = scmp.ne.s32.totalorder %s39, %s42
      %p51 = scmp.eq.s32.totalorder %s13, 3
      %p52 = por %p50, %p51
      %p53 = scmp.ne.s32.totalorder %s42, %s43
      %p54 = scmp.eq.s32.totalorder %s13, 0
      %p55 = por %p53, %p54
      %p56 = scmp.ne.s32.totalorder %s42, %s43
      %p57 = scmp.eq.s32.totalorder %s14, 3
      %p58 = por %p56, %p57
      %p60 = scmp.ne.s32.totalorder %s43, %s59
      %p61 = scmp.eq.s32.totalorder %s14, 0
      %p62 = por %p60, %p61
      %s63 = ssub.s32 %s17, %s26
      %s64 = ssub.s32 %s16, %s30
      %s65 = sor.u32 %s63, %s64
      %p66 = scmp.eq.s32.totalorder %s65, 0
      %s68 = sadd.s32 %s67, 1
      %s69 = scalar_select %p66, %s67, %s68
      %p72 = pneg %p66
      %p73 = scmp.eq.s32.totalorder %s8, 3
      %p74 = por %p72, %p73
      %p75 = scmp.ne.s32.totalorder %s67, %s70
      %p76 = scmp.eq.s32.totalorder %s8, 0
      %p77 = por %p75, %p76
      %p78 = scmp.ne.s32.totalorder %s67, %s70
      %p79 = scmp.eq.s32.totalorder %s13, 3
      %p80 = por %p78, %p79
      %p81 = scmp.ne.s32.totalorder %s70, %s71
      %p82 = scmp.eq.s32.totalorder %s13, 0
      %p83 = por %p81, %p82
      %p84 = scmp.ne.s32.totalorder %s70, %s71
      %p85 = scmp.eq.s32.totalorder %s14, 3
      %p86 = por %p84, %p85
      %p88 = scmp.ne.s32.totalorder %s71, %s87
      %p89 = scmp.eq.s32.totalorder %s14, 0
      %p90 = por %p88, %p89
      %s91 = ssub.s32 %s15, %s34
      %s92 = ssub.s32 %s16, %s30
      %s93 = sor.u32 %s91, %s92
      %p94 = scmp.eq.s32.totalorder %s93, 0
      %s96 = sadd.s32 %s95, 1
      %s97 = scalar_select %p94, %s95, %s96
      %p100 = pneg %p94
      %p101 = scmp.eq.s32.totalorder %s8, 3
      %p102 = por %p100, %p101
      %p103 = scmp.ne.s32.totalorder %s95, %s98
      %p104 = scmp.eq.s32.totalorder %s8, 0
      %p105 = por %p103, %p104
      %p106 = scmp.ne.s32.totalorder %s95, %s98
      %p107 = scmp.eq.s32.totalorder %s13, 3
      %p108 = por %p106, %p107
      %p109 = scmp.ne.s32.totalorder %s98, %s99
      %p110 = scmp.eq.s32.totalorder %s13, 0
      %p111 = por %p109, %p110
      %p112 = scmp.ne.s32.totalorder %s98, %s99
      %p113 = scmp.eq.s32.totalorder %s14, 3
      %p114 = por %p112, %p113
      %p116 = scmp.ne.s32.totalorder %s99, %s115
      %p117 = scmp.eq.s32.totalorder %s14, 0
      %p118 = por %p116, %p117
      %p119 = scmp.le.s32.totalorder 1, %s8
      %p120 = scmp.lt.s32.totalorder %s8, 5
      %p121 = pnand %p119, %p120
      %p122 = pneg %p121
      // Predicated region
      $region9: #{dcp_dec_forward.8} parent=5 // pred_check
        _
      $region10: #{dcp_dec_forward.8} parent=5 // pred_check_branch
        %124 = sbr.rel (%p121) target = $region12
      $region11: #{dcp_dec_forward.8} parent=5 // pred_region
        %s125 = ssub.s32 %s8, 1
      $region12: #{dcp_dec_forward.8} parent=5 // pred_fallthru
        _
      %p126 = scmp.lt.s32.totalorder %s8, 4
      // Predicated region
      $region13: #{dcp_dec_forward.8} parent=5 // pred_check
        %p127 = pneg %p126
      $region14: #{dcp_dec_forward.8} parent=5 // pred_check_branch
        %129 = sbr.rel (%p127) target = $region16
      $region15: #{dcp_dec_forward.8} parent=5 // pred_region
        // Predicated region
        $region17: #{dcp_dec_forward.8} parent=15 // pred_check
          %p130 = pneg %p49
        $region18: #{dcp_dec_forward.8} parent=15 // pred_check_branch
          %132 = sbr.rel (%p130) target = $region20
        $region19: #{dcp_dec_forward.8} parent=15 // pred_region
          %s133 = smul.u32 16, %s15
          %p134 = scmp.lt.s32.totalorder %s133, 31
          %s135 = scalar_select %p134, %s133, 31
          %p136 = scmp.lt.s32.totalorder %s17, 0
          %s137 = scalar_select %p136, %s17, 0
          %s138 = sadd.s32 %s137, %s135
          %s139 = smul.addr %s138, 8
          %s140 = scalar_lea.vmem %s0, %s139
          %s141 = smul.u32 16, %s15
        $region20: #{dcp_dec_forward.8} parent=15 // pred_fallthru
          _
        // Predicated region
        $region21: #{dcp_dec_forward.8} parent=15 // pred_check
          %p142 = pneg %p77
        $region22: #{dcp_dec_forward.8} parent=15 // pred_check_branch
          %144 = sbr.rel (%p142) target = $region24
        $region23: #{dcp_dec_forward.8} parent=15 // pred_region
          %s145 = sand.u32 %s67, 1
          %s146 = sand.u32 %s67, 1
          %s147 = smul.addr %s146, 64
          %s148 = scalar_lea.vmem [#allocation3], %s147
          %s149 = smul.u32 8, %s17
          %s150 = smul.addr %s149, 2
          %s151 = sadd.s32 %s16, %s150
          %s152 = smul.addr %s151, 8
          %s153 = scalar_lea.vmem %s1, %s152
          // Predicated region
          $region25: #{dcp_dec_forward.8} parent=23 // pred_check
            _
          $region26: #{dcp_dec_forward.8} parent=23 // pred_check_branch
            %155 = sbr.rel (0) target = $region28
          $region27: #{dcp_dec_forward.8} parent=23 // pred_region
            // Predicated region
            $region29: #{dcp_dec_forward.8} parent=27 // pred_check
              _
            $region30: #{dcp_dec_forward.8} parent=27 // pred_check_branch
              %157 = sbr.rel (0) target = $region32
            $region31: #{dcp_dec_forward.8} parent=27 // pred_region
              // Predicated region
              $region44: #{dcp_dec_forward.8} parent=31 // pred_check
                _
              $region45: #{dcp_dec_forward.8} parent=31 // pred_check_branch
                %187 = sbr.rel (0) target = $region47
              $region46: #{dcp_dec_forward.8} parent=31 // pred_region
                loop: start=0, step=1, limit=1
                $region48: #{dcp_dec_forward.8} parent=46 // loop_pre_header
                  _
                $region49: #{dcp_dec_forward.8} parent=46 // loop_header
                  %s189 = sphi 0, %s193
                  %p190 = scmp.ge.s32.totalorder %s189, 1
                  %s194 = sphi %s153, %s153
                  %s195 = sphi %s148, %s148
                $region50: #{dcp_dec_forward.8} parent=46 // loop_header_branch
                  %192 = sbr.rel (%p190) target = $region54
                $region51: #{dcp_dec_forward.8} parent=46 // loop_body
                  %v196 = vld [vmem:[%s194] sm:$0xff]
                  %197 = vst [vmem:[%s195] sm:$0xff] %v196
                  %v198 = vld [vmem:[%s194 + $0x10] sm:$0xff]
                  %199 = vst [vmem:[%s195 + $0x8] sm:$0xff] %v198
                  %v200 = vld [vmem:[%s194 + $0x20] sm:$0xff]
                  %201 = vst [vmem:[%s195 + $0x10] sm:$0xff] %v200
                  %v202 = vld [vmem:[%s194 + $0x30] sm:$0xff]
                  %203 = vst [vmem:[%s195 + $0x18] sm:$0xff] %v202
                  %v204 = vld [vmem:[%s194 + $0x40] sm:$0xff]
                  %205 = vst [vmem:[%s195 + $0x20] sm:$0xff] %v204
                  %v206 = vld [vmem:[%s194 + $0x50] sm:$0xff]
                  %207 = vst [vmem:[%s195 + $0x28] sm:$0xff] %v206
                  %v208 = vld [vmem:[%s194 + $0x60] sm:$0xff]
                  %209 = vst [vmem:[%s195 + $0x30] sm:$0xff] %v208
                  %v210 = vld [vmem:[%s194 + $0x70] sm:$0xff]
                  %211 = vst [vmem:[%s195 + $0x38] sm:$0xff] %v210
                $region52: #{dcp_dec_forward.8} parent=46 // loop_footer
                  %s193 = sadd.s32 1, %s189
                $region53: #{dcp_dec_forward.8} parent=46 // loop_footer_branch
                  %188 = sbr.rel target = $region49
                $region54: #{dcp_dec_forward.8} parent=46 // loop_exit
                  _
              $region47: #{dcp_dec_forward.8} parent=31 // pred_fallthru
                _
              // Predicated region
              $region55: #{dcp_dec_forward.8} parent=31 // pred_check
                _
              $region56: #{dcp_dec_forward.8} parent=31 // pred_check_branch
                %213 = sbr.rel target = $region58
              $region57: #{dcp_dec_forward.8} parent=31 // pred_region
                _
              $region58: #{dcp_dec_forward.8} parent=31 // pred_fallthru
                _
            $region32: #{dcp_dec_forward.8} parent=27 // pred_fallthru
              _
            // Predicated region
            $region33: #{dcp_dec_forward.8} parent=27 // pred_check
              _
            $region34: #{dcp_dec_forward.8} parent=27 // pred_check_branch
              %159 = sbr.rel target = $region36
            $region35: #{dcp_dec_forward.8} parent=27 // pred_region
              %s161 = ssub.s32 256, 1
              loop: start=0, step=1, limit=1
              $region37: #{dcp_dec_forward.8} parent=35 // loop_pre_header
                _
              $region38: #{dcp_dec_forward.8} parent=35 // loop_header
                %s163 = sphi 0, %s167
                %p164 = scmp.ge.s32.totalorder %s163, 1
                %s168 = sphi %s153, %s153
                %s169 = sphi %s148, %s148
              $region39: #{dcp_dec_forward.8} parent=35 // loop_header_branch
                %166 = sbr.rel (%p164) target = $region43
              $region40: #{dcp_dec_forward.8} parent=35 // loop_body
                %v170 = vld [vmem:[%s168] sm:%s161]
                %171 = vst [vmem:[%s169] sm:%s161] %v170
                %v172 = vld [vmem:[%s168 + $0x10] sm:%s161]
                %173 = vst [vmem:[%s169 + $0x8] sm:%s161] %v172
                %v174 = vld [vmem:[%s168 + $0x20] sm:%s161]
                %175 = vst [vmem:[%s169 + $0x10] sm:%s161] %v174
                %v176 = vld [vmem:[%s168 + $0x30] sm:%s161]
                %177 = vst [vmem:[%s169 + $0x18] sm:%s161] %v176
                %v178 = vld [vmem:[%s168 + $0x40] sm:%s161]
                %179 = vst [vmem:[%s169 + $0x20] sm:%s161] %v178
                %v180 = vld [vmem:[%s168 + $0x50] sm:%s161]
                %181 = vst [vmem:[%s169 + $0x28] sm:%s161] %v180
                %v182 = vld [vmem:[%s168 + $0x60] sm:%s161]
                %183 = vst [vmem:[%s169 + $0x30] sm:%s161] %v182
                %v184 = vld [vmem:[%s168 + $0x70] sm:%s161]
                %185 = vst [vmem:[%s169 + $0x38] sm:%s161] %v184
              $region41: #{dcp_dec_forward.8} parent=35 // loop_footer
                %s167 = sadd.s32 1, %s163
              $region42: #{dcp_dec_forward.8} parent=35 // loop_footer_branch
                %162 = sbr.rel target = $region38
              $region43: #{dcp_dec_forward.8} parent=35 // loop_exit
                _
            $region36: #{dcp_dec_forward.8} parent=27 // pred_fallthru
              _
          $region28: #{dcp_dec_forward.8} parent=23 // pred_fallthru
            _
          %214 = vnop
        $region24: #{dcp_dec_forward.8} parent=15 // pred_fallthru
          _
      $region16: #{dcp_dec_forward.8} parent=5 // pred_fallthru
        _
      %p215 = scmp.le.s32.totalorder 1, %s8
      %p216 = scmp.lt.s32.totalorder %s8, 5
      %p217 = pnand %p215, %p216
      %p218 = pneg %p217
      // Predicated region
      $region59: #{dcp_dec_forward.8} parent=5 // pred_check
        _
      $region60: #{dcp_dec_forward.8} parent=5 // pred_check_branch
        %220 = sbr.rel (%p217) target = $region62
      $region61: #{dcp_dec_forward.8} parent=5 // pred_region
        %s221 = ssub.s32 %s8, 1
        %s222 = sand.u32 %s70, 1
        %s223 = sand.u32 %s70, 1
        %s224 = smul.addr %s223, 64
        %s225 = scalar_lea.vmem [#allocation3], %s224
        // Predicated region
        $region63: #{dcp_dec_forward.8} parent=61 // pred_check
          %p226 = pneg %p83
        $region64: #{dcp_dec_forward.8} parent=61 // pred_check_branch
          %228 = sbr.rel (%p226) target = $region66
        $region65: #{dcp_dec_forward.8} parent=61 // pred_region
          _
        $region66: #{dcp_dec_forward.8} parent=61 // pred_fallthru
          _
        %s229 = smul.u32 16, %s18
        %p230 = scmp.lt.s32.totalorder %s229, 31
        %s231 = scalar_select %p230, %s229, 31
        %p232 = scmp.lt.s32.totalorder %s20, 0
        %s233 = scalar_select %p232, %s20, 0
        %s234 = sadd.s32 %s233, %s231
        %s235 = smul.addr %s234, 8
        %s236 = scalar_lea.vmem %s0, %s235
        %p237 = pneg %p55
        %p238 = pneg %p52
        %s239 = sand.u32 %s70, 1
        %s240 = sand.u32 %s70, 1
        %s241 = smul.addr %s240, 64
        %s242 = scalar_lea.vmem [#allocation3], %s241
        %p243 = pneg %p83
        %p244 = pneg %p80
        %p245 = pneg %p111
        %p246 = pneg %p108
        %s247 = sand.u32 %s98, 1
        %s248 = sand.u32 %s98, 1
        %s249 = smul.addr %s248, 128
        %s250 = scalar_lea.vmem [#allocation4], %s249
        %s251 = smul.u32 16, %s18
        %p252 = scmp.lt.s32.totalorder %s251, 31
        %s253 = scalar_select %p252, %s251, 31
        %p254 = scmp.lt.s32.totalorder %s20, 0
        %s255 = scalar_select %p254, %s20, 0
        %s256 = sadd.s32 %s255, %s253
        %s257 = smul.addr %s256, 8
        %s258 = scalar_lea.vmem %s0, %s257
        %s259 = smul.u32 16, %s18
        %s260 = smul.u32 8, %s20
        %s261 = smul.u32 16, %s18
        %p262 = scmp.eq.s32.totalorder %s20, 0
        // Predicated region
        $region67: #{dcp_dec_forward.8} parent=61 // pred_check
          %p263 = pneg %p262
        $region68: #{dcp_dec_forward.8} parent=61 // pred_check_branch
          %265 = sbr.rel (%p263) target = $region70
        $region69: #{dcp_dec_forward.8} parent=61 // pred_region
          %266 = vst [vmem:[#allocation2] sm:$0xff] 0.0
          %267 = vst [vmem:[#allocation2 + $0x8] sm:$0xff] 0.0
          %268 = vst [vmem:[#allocation2 + $0x10] sm:$0xff] 0.0
          %269 = vst [vmem:[#allocation2 + $0x18] sm:$0xff] 0.0
          %270 = vst [vmem:[#allocation2 + $0x20] sm:$0xff] 0.0
          %271 = vst [vmem:[#allocation2 + $0x28] sm:$0xff] 0.0
          %272 = vst [vmem:[#allocation2 + $0x30] sm:$0xff] 0.0
          %273 = vst [vmem:[#allocation2 + $0x38] sm:$0xff] 0.0
          %274 = vst [vmem:[#allocation2 + $0x40] sm:$0xff] 0.0
          %275 = vst [vmem:[#allocation2 + $0x48] sm:$0xff] 0.0
          %276 = vst [vmem:[#allocation2 + $0x50] sm:$0xff] 0.0
          %277 = vst [vmem:[#allocation2 + $0x58] sm:$0xff] 0.0
          %278 = vst [vmem:[#allocation2 + $0x60] sm:$0xff] 0.0
          %279 = vst [vmem:[#allocation2 + $0x68] sm:$0xff] 0.0
          %280 = vst [vmem:[#allocation2 + $0x70] sm:$0xff] 0.0
          %281 = vst [vmem:[#allocation2 + $0x78] sm:$0xff] 0.0
        $region70: #{dcp_dec_forward.8} parent=61 // pred_fallthru
          _
        %v282 = vld [vmem:[#allocation2] sm:$0xff]
        %v283 = vld [vmem:[#allocation2 + $0x8] sm:$0xff]
        %v284 = vld [vmem:[#allocation2 + $0x10] sm:$0xff]
        %v285 = vld [vmem:[#allocation2 + $0x18] sm:$0xff]
        %v286 = vld [vmem:[#allocation2 + $0x20] sm:$0xff]
        %v287 = vld [vmem:[#allocation2 + $0x28] sm:$0xff]
        %v288 = vld [vmem:[#allocation2 + $0x30] sm:$0xff]
        %v289 = vld [vmem:[#allocation2 + $0x38] sm:$0xff]
        %v290 = vld [vmem:[#allocation2 + $0x40] sm:$0xff]
        %v291 = vld [vmem:[#allocation2 + $0x48] sm:$0xff]
        %v292 = vld [vmem:[#allocation2 + $0x50] sm:$0xff]
        %v293 = vld [vmem:[#allocation2 + $0x58] sm:$0xff]
        %v294 = vld [vmem:[#allocation2 + $0x60] sm:$0xff]
        %v295 = vld [vmem:[#allocation2 + $0x68] sm:$0xff]
        %v296 = vld [vmem:[#allocation2 + $0x70] sm:$0xff]
        %v297 = vld [vmem:[#allocation2 + $0x78] sm:$0xff]
        %v298 = vld [vmem:[%s258] sm:$0xff]
        %v299 = vld [vmem:[%s258 + $0x8] sm:$0xff]
        %v300 = vld [vmem:[%s258 + $0x10] sm:$0xff]
        %v301 = vld [vmem:[%s258 + $0x18] sm:$0xff]
        %v302 = vld [vmem:[%s258 + $0x20] sm:$0xff]
        %v303 = vld [vmem:[%s258 + $0x28] sm:$0xff]
        %v304 = vld [vmem:[%s258 + $0x30] sm:$0xff]
        %v305 = vld [vmem:[%s258 + $0x38] sm:$0xff]
        %v306 = vld [vmem:[%s258 + $0x40] sm:$0xff]
        %v307 = vld [vmem:[%s258 + $0x48] sm:$0xff]
        %v308 = vld [vmem:[%s258 + $0x50] sm:$0xff]
        %v309 = vld [vmem:[%s258 + $0x58] sm:$0xff]
        %v310 = vld [vmem:[%s258 + $0x60] sm:$0xff]
        %v311 = vld [vmem:[%s258 + $0x68] sm:$0xff]
        %v312 = vld [vmem:[%s258 + $0x70] sm:$0xff]
        %v313 = vld [vmem:[%s258 + $0x78] sm:$0xff]
        %v314 = vld [vmem:[%s225] sm:$0xff]
        %v315 = vld [vmem:[%s225 + $0x8] sm:$0xff]
        %v316 = vld [vmem:[%s225 + $0x10] sm:$0xff]
        %v317 = vld [vmem:[%s225 + $0x18] sm:$0xff]
        %v318 = vld [vmem:[%s225 + $0x20] sm:$0xff]
        %v319 = vld [vmem:[%s225 + $0x28] sm:$0xff]
        %v320 = vld [vmem:[%s225 + $0x30] sm:$0xff]
        %v321 = vld [vmem:[%s225 + $0x38] sm:$0xff]
        %vm322 = vcmask 523264
        %v324 = vsel %vm322, %v298, 0
        %v327 = vsel %vm322, %v299, 0
        %v330 = vsel %vm322, %v300, 0
        %v333 = vsel %vm322, %v301, 0
        %v336 = vsel %vm322, %v302, 0
        %v339 = vsel %vm322, %v303, 0
        %v342 = vsel %vm322, %v304, 0
        %v345 = vsel %vm322, %v305, 0
        %v348 = vsel %vm322, %v306, 0
        %v351 = vsel %vm322, %v307, 0
        %v354 = vsel %vm322, %v308, 0
        %v357 = vsel %vm322, %v309, 0
        %v360 = vsel %vm322, %v310, 0
        %v363 = vsel %vm322, %v311, 0
        %v366 = vsel %vm322, %v312, 0
        %v369 = vsel %vm322, %v313, 0
        %371 = vmatprep.subr.mxu0 0.0
        %372 = vmatpush1.msra.mxu0 0.0
        %373 = vmatprep.subr.mxu0 0.0
        %374 = vmatpush1.msra.mxu0 0.0
        %375 = vmatprep.subr.mxu0 0.0
        %376 = vmatpush1.msra.mxu0 0.0
        %377 = vmatprep.subr.mxu0 0.0
        %378 = vmatpush1.msra.mxu0 0.0
        %379 = vmatprep.subr.mxu0 0.0
        %380 = vmatpush1.msra.mxu0 0.0
        %381 = vmatprep.subr.mxu0 0.0
        %382 = vmatpush1.msra.mxu0 0.0
        %383 = vmatprep.subr.mxu0 0.0
        %384 = vmatpush1.msra.mxu0 0.0
        %385 = vmatprep.subr.mxu0 0.0
        %386 = vmatpush1.msra.mxu0 0.0
        %387 = vmatprep.subr.mxu0 0.0
        %388 = vmatpush1.msra.mxu0 %v321
        %389 = vmatprep.subr.mxu0 0.0
        %390 = vmatpush1.msra.mxu0 %v320
        %391 = vmatprep.subr.mxu0 0.0
        %392 = vmatpush1.msra.mxu0 %v319
        %393 = vmatprep.subr.mxu0 0.0
        %394 = vmatpush1.msra.mxu0 %v318
        %395 = vmatprep.subr.mxu0 0.0
        %396 = vmatpush1.msra.mxu0 %v317
        %397 = vmatprep.subr.mxu0 0.0
        %398 = vmatpush1.msra.mxu0 %v316
        %399 = vmatprep.subr.mxu0 0.0
        %400 = vmatpush1.msra.mxu0 %v315
        %401 = vmatprep.subr.mxu0 0.0
        %402 = vmatpush1.msra.mxu0 %v314
        %403 = vmatprep.subr.mxu0 0.0
        %404 = vmatpush2.msra.mxu0 0.0
        %405 = vmatprep.subr.mxu0 0.0
        %406 = vmatpush2.msra.mxu0 0.0
        %407 = vmatprep.subr.mxu0 0.0
        %408 = vmatpush2.msra.mxu0 0.0
        %409 = vmatprep.subr.mxu0 0.0
        %410 = vmatpush2.msra.mxu0 0.0
        %411 = vmatprep.subr.mxu0 0.0
        %412 = vmatpush2.msra.mxu0 0.0
        %413 = vmatprep.subr.mxu0 0.0
        %414 = vmatpush2.msra.mxu0 0.0
        %415 = vmatprep.subr.mxu0 0.0
        %416 = vmatpush2.msra.mxu0 0.0
        %417 = vmatprep.subr.mxu0 0.0
        %418 = vmatpush2.msra.mxu0 0.0
        %419 = vmatprep.subr.mxu0 0.0
        %420 = vmatpush2.msra.mxu0 0.0
        %421 = vmatprep.subr.mxu0 0.0
        %422 = vmatpush2.msra.mxu0 0.0
        %423 = vmatprep.subr.mxu0 0.0
        %424 = vmatpush2.msra.mxu0 0.0
        %425 = vmatprep.subr.mxu0 0.0
        %426 = vmatpush2.msra.mxu0 0.0
        %427 = vmatprep.subr.mxu0 0.0
        %428 = vmatpush2.msra.mxu0 0.0
        %429 = vmatprep.subr.mxu0 0.0
        %430 = vmatpush2.msra.mxu0 0.0
        %431 = vmatprep.subr.mxu0 0.0
        %432 = vmatpush2.msra.mxu0 0.0
        %433 = vmatprep.subr.mxu0 0.0
        %434 = vmatpush2.msra.mxu0 0.0
        %435 = vmatprep.mubr.f32.mxu0 0.0
        %436 = vmatmul.mubr.f32.gmra.mxu0 %v324
        %v437 = vpop.f32.mrf.mxu0
        %v438 = vadd.f32 0.0, %v437
        %v439 = vpop.f32.mrf.mxu0
        %440 = vmatprep.mubr.f32.mxu0 0.0
        %441 = vmatmul.mubr.f32.gmra.mxu0 %v327
        %v442 = vpop.f32.mrf.mxu0
        %v443 = vadd.f32 0.0, %v442
        %v444 = vpop.f32.mrf.mxu0
        %445 = vmatprep.mubr.f32.mxu0 0.0
        %446 = vmatmul.mubr.f32.gmra.mxu0 %v330
        %v447 = vpop.f32.mrf.mxu0
        %v448 = vadd.f32 0.0, %v447
        %v449 = vpop.f32.mrf.mxu0
        %450 = vmatprep.mubr.f32.mxu0 0.0
        %451 = vmatmul.mubr.f32.gmra.mxu0 %v333
        %v452 = vpop.f32.mrf.mxu0
        %v453 = vadd.f32 0.0, %v452
        %v454 = vpop.f32.mrf.mxu0
        %455 = vmatprep.mubr.f32.mxu0 0.0
        %456 = vmatmul.mubr.f32.gmra.mxu0 %v336
        %v457 = vpop.f32.mrf.mxu0
        %v458 = vadd.f32 0.0, %v457
        %v459 = vpop.f32.mrf.mxu0
        %460 = vmatprep.mubr.f32.mxu0 0.0
        %461 = vmatmul.mubr.f32.gmra.mxu0 %v339
        %v462 = vpop.f32.mrf.mxu0
        %v463 = vadd.f32 0.0, %v462
        %v464 = vpop.f32.mrf.mxu0
        %465 = vmatprep.mubr.f32.mxu0 0.0
        %466 = vmatmul.mubr.f32.gmra.mxu0 %v342
        %v467 = vpop.f32.mrf.mxu0
        %v468 = vadd.f32 0.0, %v467
        %v469 = vpop.f32.mrf.mxu0
        %470 = vmatprep.mubr.f32.mxu0 0.0
        %471 = vmatmul.mubr.f32.gmra.mxu0 %v345
        %v472 = vpop.f32.mrf.mxu0
        %v473 = vadd.f32 0.0, %v472
        %v474 = vpop.f32.mrf.mxu0
        %475 = vmatprep.mubr.f32.mxu0 0.0
        %476 = vmatmul.mubr.f32.gmra.mxu0 %v348
        %v477 = vpop.f32.mrf.mxu0
        %v478 = vadd.f32 0.0, %v477
        %v479 = vpop.f32.mrf.mxu0
        %480 = vmatprep.mubr.f32.mxu0 0.0
        %481 = vmatmul.mubr.f32.gmra.mxu0 %v351
        %v482 = vpop.f32.mrf.mxu0
        %v483 = vadd.f32 0.0, %v482
        %v484 = vpop.f32.mrf.mxu0
        %485 = vmatprep.mubr.f32.mxu0 0.0
        %486 = vmatmul.mubr.f32.gmra.mxu0 %v354
        %v487 = vpop.f32.mrf.mxu0
        %v488 = vadd.f32 0.0, %v487
        %v489 = vpop.f32.mrf.mxu0
        %490 = vmatprep.mubr.f32.mxu0 0.0
        %491 = vmatmul.mubr.f32.gmra.mxu0 %v357
        %v492 = vpop.f32.mrf.mxu0
        %v493 = vadd.f32 0.0, %v492
        %v494 = vpop.f32.mrf.mxu0
        %495 = vmatprep.mubr.f32.mxu0 0.0
        %496 = vmatmul.mubr.f32.gmra.mxu0 %v360
        %v497 = vpop.f32.mrf.mxu0
        %v498 = vadd.f32 0.0, %v497
        %v499 = vpop.f32.mrf.mxu0
        %500 = vmatprep.mubr.f32.mxu0 0.0
        %501 = vmatmul.mubr.f32.gmra.mxu0 %v363
        %v502 = vpop.f32.mrf.mxu0
        %v503 = vadd.f32 0.0, %v502
        %v504 = vpop.f32.mrf.mxu0
        %505 = vmatprep.mubr.f32.mxu0 0.0
        %506 = vmatmul.mubr.f32.gmra.mxu0 %v366
        %v507 = vpop.f32.mrf.mxu0
        %v508 = vadd.f32 0.0, %v507
        %v509 = vpop.f32.mrf.mxu0
        %510 = vmatprep.mubr.f32.mxu0 0.0
        %511 = vmatmul.mubr.f32.gmra.mxu0 %v369
        %v512 = vpop.f32.mrf.mxu0
        %v513 = vadd.f32 0.0, %v512
        %v514 = vpop.f32.mrf.mxu0
        %515 = vdwg.mxu0
        %v516 = vadd.f32 %v282, %v438
        %v517 = vadd.f32 %v283, %v443
        %v518 = vadd.f32 %v284, %v448
        %v519 = vadd.f32 %v285, %v453
        %v520 = vadd.f32 %v286, %v458
        %v521 = vadd.f32 %v287, %v463
        %v522 = vadd.f32 %v288, %v468
        %v523 = vadd.f32 %v289, %v473
        %v524 = vadd.f32 %v290, %v478
        %v525 = vadd.f32 %v291, %v483
        %v526 = vadd.f32 %v292, %v488
        %v527 = vadd.f32 %v293, %v493
        %v528 = vadd.f32 %v294, %v498
        %v529 = vadd.f32 %v295, %v503
        %v530 = vadd.f32 %v296, %v508
        %v531 = vadd.f32 %v297, %v513
        %532 = vst [vmem:[#allocation2] sm:$0xff] %v516
        %533 = vst [vmem:[#allocation2 + $0x8] sm:$0xff] %v517
        %534 = vst [vmem:[#allocation2 + $0x10] sm:$0xff] %v518
        %535 = vst [vmem:[#allocation2 + $0x18] sm:$0xff] %v519
        %536 = vst [vmem:[#allocation2 + $0x20] sm:$0xff] %v520
        %537 = vst [vmem:[#allocation2 + $0x28] sm:$0xff] %v521
        %538 = vst [vmem:[#allocation2 + $0x30] sm:$0xff] %v522
        %539 = vst [vmem:[#allocation2 + $0x38] sm:$0xff] %v523
        %540 = vst [vmem:[#allocation2 + $0x40] sm:$0xff] %v524
        %541 = vst [vmem:[#allocation2 + $0x48] sm:$0xff] %v525
        %542 = vst [vmem:[#allocation2 + $0x50] sm:$0xff] %v526
        %543 = vst [vmem:[#allocation2 + $0x58] sm:$0xff] %v527
        %544 = vst [vmem:[#allocation2 + $0x60] sm:$0xff] %v528
        %545 = vst [vmem:[#allocation2 + $0x68] sm:$0xff] %v529
        %546 = vst [vmem:[#allocation2 + $0x70] sm:$0xff] %v530
        %547 = vst [vmem:[#allocation2 + $0x78] sm:$0xff] %v531
        // Predicated region
        $region71: #{dcp_dec_forward.8} parent=61 // pred_check
          %p548 = pneg %p262
        $region72: #{dcp_dec_forward.8} parent=61 // pred_check_branch
          %550 = sbr.rel (%p548) target = $region74
        $region73: #{dcp_dec_forward.8} parent=61 // pred_region
          %v551 = vld [vmem:[#allocation2] sm:$0xff]
          %v552 = vld [vmem:[#allocation2 + $0x8] sm:$0xff]
          %v553 = vld [vmem:[#allocation2 + $0x10] sm:$0xff]
          %v554 = vld [vmem:[#allocation2 + $0x18] sm:$0xff]
          %v555 = vld [vmem:[#allocation2 + $0x20] sm:$0xff]
          %v556 = vld [vmem:[#allocation2 + $0x28] sm:$0xff]
          %v557 = vld [vmem:[#allocation2 + $0x30] sm:$0xff]
          %v558 = vld [vmem:[#allocation2 + $0x38] sm:$0xff]
          %v559 = vld [vmem:[#allocation2 + $0x40] sm:$0xff]
          %v560 = vld [vmem:[#allocation2 + $0x48] sm:$0xff]
          %v561 = vld [vmem:[#allocation2 + $0x50] sm:$0xff]
          %v562 = vld [vmem:[#allocation2 + $0x58] sm:$0xff]
          %v563 = vld [vmem:[#allocation2 + $0x60] sm:$0xff]
          %v564 = vld [vmem:[#allocation2 + $0x68] sm:$0xff]
          %v565 = vld [vmem:[#allocation2 + $0x70] sm:$0xff]
          %v566 = vld [vmem:[#allocation2 + $0x78] sm:$0xff]
          %567 = vst [vmem:[%s250] sm:$0xff] %v551
          %568 = vst [vmem:[%s250 + $0x8] sm:$0xff] %v552
          %569 = vst [vmem:[%s250 + $0x10] sm:$0xff] %v553
          %570 = vst [vmem:[%s250 + $0x18] sm:$0xff] %v554
          %571 = vst [vmem:[%s250 + $0x20] sm:$0xff] %v555
          %572 = vst [vmem:[%s250 + $0x28] sm:$0xff] %v556
          %573 = vst [vmem:[%s250 + $0x30] sm:$0xff] %v557
          %574 = vst [vmem:[%s250 + $0x38] sm:$0xff] %v558
          %575 = vst [vmem:[%s250 + $0x40] sm:$0xff] %v559
          %576 = vst [vmem:[%s250 + $0x48] sm:$0xff] %v560
          %577 = vst [vmem:[%s250 + $0x50] sm:$0xff] %v561
          %578 = vst [vmem:[%s250 + $0x58] sm:$0xff] %v562
          %579 = vst [vmem:[%s250 + $0x60] sm:$0xff] %v563
          %580 = vst [vmem:[%s250 + $0x68] sm:$0xff] %v564
          %581 = vst [vmem:[%s250 + $0x70] sm:$0xff] %v565
          %582 = vst [vmem:[%s250 + $0x78] sm:$0xff] %v566
        $region74: #{dcp_dec_forward.8} parent=61 // pred_fallthru
          _
        %s583 = sand.u32 %s98, 1
        %s584 = sand.u32 %s98, 1
        %s585 = smul.addr %s584, 128
        %s586 = scalar_lea.vmem [#allocation4], %s585
        // Predicated region
        $region75: #{dcp_dec_forward.8} parent=61 // pred_check
          %p587 = pneg %p108
        $region76: #{dcp_dec_forward.8} parent=61 // pred_check_branch
          %589 = sbr.rel (%p587) target = $region78
        $region77: #{dcp_dec_forward.8} parent=61 // pred_region
          %s590 = smul.u32 16, %s18
          %s591 = smul.addr %s590, 2
          %s592 = sadd.s32 %s19, %s591
          %s593 = smul.addr %s592, 8
          %s594 = scalar_lea.vmem %s2, %s593
          // Predicated region
          $region79: #{dcp_dec_forward.8} parent=77 // pred_check
            _
          $region80: #{dcp_dec_forward.8} parent=77 // pred_check_branch
            %596 = sbr.rel (0) target = $region82
          $region81: #{dcp_dec_forward.8} parent=77 // pred_region
            // Predicated region
            $region83: #{dcp_dec_forward.8} parent=81 // pred_check
              _
            $region84: #{dcp_dec_forward.8} parent=81 // pred_check_branch
              %598 = sbr.rel (0) target = $region86
            $region85: #{dcp_dec_forward.8} parent=81 // pred_region
              // Predicated region
              $region98: #{dcp_dec_forward.8} parent=85 // pred_check
                _
              $region99: #{dcp_dec_forward.8} parent=85 // pred_check_branch
                %644 = sbr.rel (0) target = $region101
              $region100: #{dcp_dec_forward.8} parent=85 // pred_region
                loop: start=0, step=1, limit=1
                $region102: #{dcp_dec_forward.8} parent=100 // loop_pre_header
                  _
                $region103: #{dcp_dec_forward.8} parent=100 // loop_header
                  %s646 = sphi 0, %s650
                  %p647 = scmp.ge.s32.totalorder %s646, 1
                  %s651 = sphi %s586, %s586
                  %s652 = sphi %s594, %s594
                $region104: #{dcp_dec_forward.8} parent=100 // loop_header_branch
                  %649 = sbr.rel (%p647) target = $region108
                $region105: #{dcp_dec_forward.8} parent=100 // loop_body
                  %v653 = vld [vmem:[%s651] sm:$0xff]
                  %654 = vst [vmem:[%s652] sm:$0xff] %v653
                  %v655 = vld [vmem:[%s651 + $0x8] sm:$0xff]
                  %656 = vst [vmem:[%s652 + $0x10] sm:$0xff] %v655
                  %v657 = vld [vmem:[%s651 + $0x10] sm:$0xff]
                  %658 = vst [vmem:[%s652 + $0x20] sm:$0xff] %v657
                  %v659 = vld [vmem:[%s651 + $0x18] sm:$0xff]
                  %660 = vst [vmem:[%s652 + $0x30] sm:$0xff] %v659
                  %v661 = vld [vmem:[%s651 + $0x20] sm:$0xff]
                  %662 = vst [vmem:[%s652 + $0x40] sm:$0xff] %v661
                  %v663 = vld [vmem:[%s651 + $0x28] sm:$0xff]
                  %664 = vst [vmem:[%s652 + $0x50] sm:$0xff] %v663
                  %v665 = vld [vmem:[%s651 + $0x30] sm:$0xff]
                  %666 = vst [vmem:[%s652 + $0x60] sm:$0xff] %v665
                  %v667 = vld [vmem:[%s651 + $0x38] sm:$0xff]
                  %668 = vst [vmem:[%s652 + $0x70] sm:$0xff] %v667
                  %v669 = vld [vmem:[%s651 + $0x40] sm:$0xff]
                  %670 = vst [vmem:[%s652 + $0x80] sm:$0xff] %v669
                  %v671 = vld [vmem:[%s651 + $0x48] sm:$0xff]
                  %672 = vst [vmem:[%s652 + $0x90] sm:$0xff] %v671
                  %v673 = vld [vmem:[%s651 + $0x50] sm:$0xff]
                  %674 = vst [vmem:[%s652 + $0xa0] sm:$0xff] %v673
                  %v675 = vld [vmem:[%s651 + $0x58] sm:$0xff]
                  %676 = vst [vmem:[%s652 + $0xb0] sm:$0xff] %v675
                  %v677 = vld [vmem:[%s651 + $0x60] sm:$0xff]
                  %678 = vst [vmem:[%s652 + $0xc0] sm:$0xff] %v677
                  %v679 = vld [vmem:[%s651 + $0x68] sm:$0xff]
                  %680 = vst [vmem:[%s652 + $0xd0] sm:$0xff] %v679
                  %v681 = vld [vmem:[%s651 + $0x70] sm:$0xff]
                  %682 = vst [vmem:[%s652 + $0xe0] sm:$0xff] %v681
                  %v683 = vld [vmem:[%s651 + $0x78] sm:$0xff]
                  %684 = vst [vmem:[%s652 + $0xf0] sm:$0xff] %v683
                $region106: #{dcp_dec_forward.8} parent=100 // loop_footer
                  %s650 = sadd.s32 1, %s646
                $region107: #{dcp_dec_forward.8} parent=100 // loop_footer_branch
                  %645 = sbr.rel target = $region103
                $region108: #{dcp_dec_forward.8} parent=100 // loop_exit
                  _
              $region101: #{dcp_dec_forward.8} parent=85 // pred_fallthru
                _
              // Predicated region
              $region109: #{dcp_dec_forward.8} parent=85 // pred_check
                _
              $region110: #{dcp_dec_forward.8} parent=85 // pred_check_branch
                %686 = sbr.rel target = $region112
              $region111: #{dcp_dec_forward.8} parent=85 // pred_region
                _
              $region112: #{dcp_dec_forward.8} parent=85 // pred_fallthru
                _
            $region86: #{dcp_dec_forward.8} parent=81 // pred_fallthru
              _
            // Predicated region
            $region87: #{dcp_dec_forward.8} parent=81 // pred_check
              _
            $region88: #{dcp_dec_forward.8} parent=81 // pred_check_branch
              %600 = sbr.rel target = $region90
            $region89: #{dcp_dec_forward.8} parent=81 // pred_region
              %s602 = ssub.s32 256, 1
              loop: start=0, step=1, limit=1
              $region91: #{dcp_dec_forward.8} parent=89 // loop_pre_header
                _
              $region92: #{dcp_dec_forward.8} parent=89 // loop_header
                %s604 = sphi 0, %s608
                %p605 = scmp.ge.s32.totalorder %s604, 1
                %s609 = sphi %s586, %s586
                %s610 = sphi %s594, %s594
              $region93: #{dcp_dec_forward.8} parent=89 // loop_header_branch
                %607 = sbr.rel (%p605) target = $region97
              $region94: #{dcp_dec_forward.8} parent=89 // loop_body
                %v611 = vld [vmem:[%s609] sm:%s602]
                %612 = vst [vmem:[%s610] sm:%s602] %v611
                %v613 = vld [vmem:[%s609 + $0x8] sm:%s602]
                %614 = vst [vmem:[%s610 + $0x10] sm:%s602] %v613
                %v615 = vld [vmem:[%s609 + $0x10] sm:%s602]
                %616 = vst [vmem:[%s610 + $0x20] sm:%s602] %v615
                %v617 = vld [vmem:[%s609 + $0x18] sm:%s602]
                %618 = vst [vmem:[%s610 + $0x30] sm:%s602] %v617
                %v619 = vld [vmem:[%s609 + $0x20] sm:%s602]
                %620 = vst [vmem:[%s610 + $0x40] sm:%s602] %v619
                %v621 = vld [vmem:[%s609 + $0x28] sm:%s602]
                %622 = vst [vmem:[%s610 + $0x50] sm:%s602] %v621
                %v623 = vld [vmem:[%s609 + $0x30] sm:%s602]
                %624 = vst [vmem:[%s610 + $0x60] sm:%s602] %v623
                %v625 = vld [vmem:[%s609 + $0x38] sm:%s602]
                %626 = vst [vmem:[%s610 + $0x70] sm:%s602] %v625
                %v627 = vld [vmem:[%s609 + $0x40] sm:%s602]
                %628 = vst [vmem:[%s610 + $0x80] sm:%s602] %v627
                %v629 = vld [vmem:[%s609 + $0x48] sm:%s602]
                %630 = vst [vmem:[%s610 + $0x90] sm:%s602] %v629
                %v631 = vld [vmem:[%s609 + $0x50] sm:%s602]
                %632 = vst [vmem:[%s610 + $0xa0] sm:%s602] %v631
                %v633 = vld [vmem:[%s609 + $0x58] sm:%s602]
                %634 = vst [vmem:[%s610 + $0xb0] sm:%s602] %v633
                %v635 = vld [vmem:[%s609 + $0x60] sm:%s602]
                %636 = vst [vmem:[%s610 + $0xc0] sm:%s602] %v635
                %v637 = vld [vmem:[%s609 + $0x68] sm:%s602]
                %638 = vst [vmem:[%s610 + $0xd0] sm:%s602] %v637
                %v639 = vld [vmem:[%s609 + $0x70] sm:%s602]
                %640 = vst [vmem:[%s610 + $0xe0] sm:%s602] %v639
                %v641 = vld [vmem:[%s609 + $0x78] sm:%s602]
                %642 = vst [vmem:[%s610 + $0xf0] sm:%s602] %v641
              $region95: #{dcp_dec_forward.8} parent=89 // loop_footer
                %s608 = sadd.s32 1, %s604
              $region96: #{dcp_dec_forward.8} parent=89 // loop_footer_branch
                %603 = sbr.rel target = $region92
              $region97: #{dcp_dec_forward.8} parent=89 // loop_exit
                _
            $region90: #{dcp_dec_forward.8} parent=81 // pred_fallthru
              _
          $region82: #{dcp_dec_forward.8} parent=77 // pred_fallthru
            _
          %687 = vnop
        $region78: #{dcp_dec_forward.8} parent=61 // pred_fallthru
          _
      $region62: #{dcp_dec_forward.8} parent=5 // pred_fallthru
        _
      %p688 = scmp.le.s32.totalorder 2, %s8
      // Predicated region
      $region113: #{dcp_dec_forward.8} parent=5 // pred_check
        %p689 = pneg %p688
      $region114: #{dcp_dec_forward.8} parent=5 // pred_check_branch
        %691 = sbr.rel (%p689) target = $region116
      $region115: #{dcp_dec_forward.8} parent=5 // pred_region
        %s692 = ssub.s32 %s8, 2
        // Predicated region
        $region117: #{dcp_dec_forward.8} parent=115 // pred_check
          %p693 = pneg %p114
        $region118: #{dcp_dec_forward.8} parent=115 // pred_check_branch
          %695 = sbr.rel (%p693) target = $region120
        $region119: #{dcp_dec_forward.8} parent=115 // pred_region
          %s696 = sand.u32 %s99, 1
          %s697 = sand.u32 %s99, 1
          %s698 = smul.addr %s697, 128
          %s699 = scalar_lea.vmem [#allocation4], %s698
        $region120: #{dcp_dec_forward.8} parent=115 // pred_fallthru
          _
      $region116: #{dcp_dec_forward.8} parent=5 // pred_fallthru
        _
    $region6: #{dcp_dec_forward.8} parent=1 // loop_footer
      %s12 = sadd.s32 1, %s8
    $region7: #{dcp_dec_forward.8} parent=1 // loop_footer_branch
      %7 = sbr.rel target = $region3
    $region8: #{dcp_dec_forward.8} parent=1 // loop_exit
      _

// kernel: dcp_dec_forward.9
$region0: #{dcp_dec_forward.9}
  #allocation0 [shape = 'u32[]', space=smem, size = 0x4, offset = 0x4, fixed_abs, tag = 'smem constant byte address 0x4 - core index']
  #allocation1 [shape = 'u32[144,128]{1,0:T(1,128)}', space=vmem, size = 0x12000, scoped, tag = 'internal scratch']
  #allocation2 [shape = 'f32[128,128]{1,0:T(8,128)}', space=vmem, size = 0x10000, scoped, tag = 'scratch operand']
  %s0 = inlined_call_operand.vmem [shape: f32[256,256], index: 0, kind: input, shape index: {}]
  %s1 = inlined_call_operand.vmem [shape: f32[256,256], index: 1, kind: input, shape index: {}]
  %s2 = inlined_call_operand.vmem [shape: f32[256,256], index: 2, kind: output, shape index: {}]
  %s3 = sld [smem:[#allocation0]]
  $region159: #{dcp_dec_forward.9} parent=0
    _
  %s5 = ssub.s32 1, %s3
  %s6 = scalar_select 0, %s5, %s3
  $region1: #{dcp_dec_forward.9} parent=0
    #allocation3 [shape = 'u8[131072]{0}', space=vmem, size = 0x20000, scoped, tag = 'input window, operand 0']
    #allocation4 [shape = 'u8[131072]{0}', space=vmem, size = 0x20000, scoped, tag = 'input window, operand 1']
    #allocation5 [shape = 'u8[131072]{0}', space=vmem, size = 0x20000, scoped, tag = 'output window, operand 0']
    loop: start=0, step=1, limit=10
    $region2: #{dcp_dec_forward.9} parent=1 // loop_pre_header
      _
    $region3: #{dcp_dec_forward.9} parent=1 // loop_header
      %s8 = sphi 0, %s12
      %p9 = scmp.ge.s32.totalorder %s8, 10
      %s15 = sphi 0, %s34
      %s16 = sphi 0, %s30
      %s17 = sphi 0, %s26
      %s18 = sphi 0, %s15
      %s19 = sphi 0, %s16
      %s20 = sphi 0, %s17
      %s21 = sphi 0, %s18
      %s22 = sphi 0, %s19
      %s23 = sphi 0, %s20
      %s39 = sphi 0, %s41
      %s42 = sphi 0, %s39
      %s43 = sphi 0, %s42
      %s59 = sphi 0, %s43
      %s67 = sphi 0, %s69
      %s70 = sphi 0, %s67
      %s71 = sphi 0, %s70
      %s87 = sphi 0, %s71
      %s95 = sphi 0, %s97
      %s98 = sphi 0, %s95
      %s99 = sphi 0, %s98
      %s115 = sphi 0, %s99
    $region4: #{dcp_dec_forward.9} parent=1 // loop_header_branch
      %11 = sbr.rel (%p9) target = $region8
    $region5: #{dcp_dec_forward.9} parent=1 // loop_body
      %s13 = ssub.s32 %s8, 1
      %s14 = ssub.s32 %s8, 2
      %s24 = sadd.s32 1, %s17
      %p25 = scmp.ge.s32.totalorder %s24, 2
      %s26 = scalar_select %p25, 0, %s24
      %s27 = sadd.s32 1, %s16
      %s28 = scalar_select %p25, %s27, %s16
      %p29 = scmp.ge.s32.totalorder %s28, 2
      %s30 = scalar_select %p29, 0, %s28
      %s31 = sadd.s32 1, %s15
      %s32 = scalar_select %p29, %s31, %s15
      %p33 = scmp.ge.s32.totalorder %s32, 2
      %s34 = scalar_select %p33, 0, %s32
      %s35 = ssub.s32 %s15, %s34
      %s36 = ssub.s32 %s17, %s26
      %s37 = sor.u32 %s35, %s36
      %p38 = scmp.eq.s32.totalorder %s37, 0
      %s40 = sadd.s32 %s39, 1
      %s41 = scalar_select %p38, %s39, %s40
      %p44 = pneg %p38
      %p45 = scmp.eq.s32.totalorder %s8, 7
      %p46 = por %p44, %p45
      %p47 = scmp.ne.s32.totalorder %s39, %s42
      %p48 = scmp.eq.s32.totalorder %s8, 0
      %p49 = por %p47, %p48
      %p50 = scmp.ne.s32.totalorder %s39, %s42
      %p51 = scmp.eq.s32.totalorder %s13, 7
      %p52 = por %p50, %p51
      %p53 = scmp.ne.s32.totalorder %s42, %s43
      %p54 = scmp.eq.s32.totalorder %s13, 0
      %p55 = por %p53, %p54
      %p56 = scmp.ne.s32.totalorder %s42, %s43
      %p57 = scmp.eq.s32.totalorder %s14, 7
      %p58 = por %p56, %p57
      %p60 = scmp.ne.s32.totalorder %s43, %s59
      %p61 = scmp.eq.s32.totalorder %s14, 0
      %p62 = por %p60, %p61
      %s63 = ssub.s32 %s17, %s26
      %s64 = ssub.s32 %s16, %s30
      %s65 = sor.u32 %s63, %s64
      %p66 = scmp.eq.s32.totalorder %s65, 0
      %s68 = sadd.s32 %s67, 1
      %s69 = scalar_select %p66, %s67, %s68
      %p72 = pneg %p66
      %p73 = scmp.eq.s32.totalorder %s8, 7
      %p74 = por %p72, %p73
      %p75 = scmp.ne.s32.totalorder %s67, %s70
      %p76 = scmp.eq.s32.totalorder %s8, 0
      %p77 = por %p75, %p76
      %p78 = scmp.ne.s32.totalorder %s67, %s70
      %p79 = scmp.eq.s32.totalorder %s13, 7
      %p80 = por %p78, %p79
      %p81 = scmp.ne.s32.totalorder %s70, %s71
      %p82 = scmp.eq.s32.totalorder %s13, 0
      %p83 = por %p81, %p82
      %p84 = scmp.ne.s32.totalorder %s70, %s71
      %p85 = scmp.eq.s32.totalorder %s14, 7
      %p86 = por %p84, %p85
      %p88 = scmp.ne.s32.totalorder %s71, %s87
      %p89 = scmp.eq.s32.totalorder %s14, 0
      %p90 = por %p88, %p89
      %s91 = ssub.s32 %s15, %s34
      %s92 = ssub.s32 %s16, %s30
      %s93 = sor.u32 %s91, %s92
      %p94 = scmp.eq.s32.totalorder %s93, 0
      %s96 = sadd.s32 %s95, 1
      %s97 = scalar_select %p94, %s95, %s96
      %p100 = pneg %p94
      %p101 = scmp.eq.s32.totalorder %s8, 7
      %p102 = por %p100, %p101
      %p103 = scmp.ne.s32.totalorder %s95, %s98
      %p104 = scmp.eq.s32.totalorder %s8, 0
      %p105 = por %p103, %p104
      %p106 = scmp.ne.s32.totalorder %s95, %s98
      %p107 = scmp.eq.s32.totalorder %s13, 7
      %p108 = por %p106, %p107
      %p109 = scmp.ne.s32.totalorder %s98, %s99
      %p110 = scmp.eq.s32.totalorder %s13, 0
      %p111 = por %p109, %p110
      %p112 = scmp.ne.s32.totalorder %s98, %s99
      %p113 = scmp.eq.s32.totalorder %s14, 7
      %p114 = por %p112, %p113
      %p116 = scmp.ne.s32.totalorder %s99, %s115
      %p117 = scmp.eq.s32.totalorder %s14, 0
      %p118 = por %p116, %p117
      %p119 = scmp.le.s32.totalorder 1, %s8
      %p120 = scmp.lt.s32.totalorder %s8, 9
      %p121 = pnand %p119, %p120
      %p122 = pneg %p121
      // Predicated region
      $region9: #{dcp_dec_forward.9} parent=5 // pred_check
        _
      $region10: #{dcp_dec_forward.9} parent=5 // pred_check_branch
        %124 = sbr.rel (%p121) target = $region12
      $region11: #{dcp_dec_forward.9} parent=5 // pred_region
        %s125 = ssub.s32 %s8, 1
      $region12: #{dcp_dec_forward.9} parent=5 // pred_fallthru
        _
      %p126 = scmp.lt.s32.totalorder %s8, 8
      // Predicated region
      $region13: #{dcp_dec_forward.9} parent=5 // pred_check
        %p127 = pneg %p126
      $region14: #{dcp_dec_forward.9} parent=5 // pred_check_branch
        %129 = sbr.rel (%p127) target = $region16
      $region15: #{dcp_dec_forward.9} parent=5 // pred_region
        // Predicated region
        $region17: #{dcp_dec_forward.9} parent=15 // pred_check
          %p130 = pneg %p49
        $region18: #{dcp_dec_forward.9} parent=15 // pred_check_branch
          %132 = sbr.rel (%p130) target = $region20
        $region19: #{dcp_dec_forward.9} parent=15 // pred_region
          %s133 = sand.u32 %s39, 1
          %s134 = sand.u32 %s39, 1
          %s135 = smul.addr %s134, 128
          %s136 = scalar_lea.vmem [#allocation3], %s135
          %s137 = smul.u32 16, %s15
          %s138 = smul.addr %s137, 2
          %s139 = sadd.s32 %s17, %s138
          %s140 = smul.addr %s139, 8
          %s141 = scalar_lea.vmem %s0, %s140
          // Predicated region
          $region21: #{dcp_dec_forward.9} parent=19 // pred_check
            _
          $region22: #{dcp_dec_forward.9} parent=19 // pred_check_branch
            %143 = sbr.rel (0) target = $region24
          $region23: #{dcp_dec_forward.9} parent=19 // pred_region
            // Predicated region
            $region25: #{dcp_dec_forward.9} parent=23 // pred_check
              _
            $region26: #{dcp_dec_forward.9} parent=23 // pred_check_branch
              %145 = sbr.rel (0) target = $region28
            $region27: #{dcp_dec_forward.9} parent=23 // pred_region
              // Predicated region
              $region40: #{dcp_dec_forward.9} parent=27 // pred_check
                _
              $region41: #{dcp_dec_forward.9} parent=27 // pred_check_branch
                %191 = sbr.rel (0) target = $region43
              $region42: #{dcp_dec_forward.9} parent=27 // pred_region
                loop: start=0, step=1, limit=1
                $region44: #{dcp_dec_forward.9} parent=42 // loop_pre_header
                  _
                $region45: #{dcp_dec_forward.9} parent=42 // loop_header
                  %s193 = sphi 0, %s197
                  %p194 = scmp.ge.s32.totalorder %s193, 1
                  %s198 = sphi %s141, %s141
                  %s199 = sphi %s136, %s136
                $region46: #{dcp_dec_forward.9} parent=42 // loop_header_branch
                  %196 = sbr.rel (%p194) target = $region50
                $region47: #{dcp_dec_forward.9} parent=42 // loop_body
                  %v200 = vld [vmem:[%s198] sm:$0xff]
                  %201 = vst [vmem:[%s199] sm:$0xff] %v200
                  %v202 = vld [vmem:[%s198 + $0x10] sm:$0xff]
                  %203 = vst [vmem:[%s199 + $0x8] sm:$0xff] %v202
                  %v204 = vld [vmem:[%s198 + $0x20] sm:$0xff]
                  %205 = vst [vmem:[%s199 + $0x10] sm:$0xff] %v204
                  %v206 = vld [vmem:[%s198 + $0x30] sm:$0xff]
                  %207 = vst [vmem:[%s199 + $0x18] sm:$0xff] %v206
                  %v208 = vld [vmem:[%s198 + $0x40] sm:$0xff]
                  %209 = vst [vmem:[%s199 + $0x20] sm:$0xff] %v208
                  %v210 = vld [vmem:[%s198 + $0x50] sm:$0xff]
                  %211 = vst [vmem:[%s199 + $0x28] sm:$0xff] %v210
                  %v212 = vld [vmem:[%s198 + $0x60] sm:$0xff]
                  %213 = vst [vmem:[%s199 + $0x30] sm:$0xff] %v212
                  %v214 = vld [vmem:[%s198 + $0x70] sm:$0xff]
                  %215 = vst [vmem:[%s199 + $0x38] sm:$0xff] %v214
                  %v216 = vld [vmem:[%s198 + $0x80] sm:$0xff]
                  %217 = vst [vmem:[%s199 + $0x40] sm:$0xff] %v216
                  %v218 = vld [vmem:[%s198 + $0x90] sm:$0xff]
                  %219 = vst [vmem:[%s199 + $0x48] sm:$0xff] %v218
                  %v220 = vld [vmem:[%s198 + $0xa0] sm:$0xff]
                  %221 = vst [vmem:[%s199 + $0x50] sm:$0xff] %v220
                  %v222 = vld [vmem:[%s198 + $0xb0] sm:$0xff]
                  %223 = vst [vmem:[%s199 + $0x58] sm:$0xff] %v222
                  %v224 = vld [vmem:[%s198 + $0xc0] sm:$0xff]
                  %225 = vst [vmem:[%s199 + $0x60] sm:$0xff] %v224
                  %v226 = vld [vmem:[%s198 + $0xd0] sm:$0xff]
                  %227 = vst [vmem:[%s199 + $0x68] sm:$0xff] %v226
                  %v228 = vld [vmem:[%s198 + $0xe0] sm:$0xff]
                  %229 = vst [vmem:[%s199 + $0x70] sm:$0xff] %v228
                  %v230 = vld [vmem:[%s198 + $0xf0] sm:$0xff]
                  %231 = vst [vmem:[%s199 + $0x78] sm:$0xff] %v230
                $region48: #{dcp_dec_forward.9} parent=42 // loop_footer
                  %s197 = sadd.s32 1, %s193
                $region49: #{dcp_dec_forward.9} parent=42 // loop_footer_branch
                  %192 = sbr.rel target = $region45
                $region50: #{dcp_dec_forward.9} parent=42 // loop_exit
                  _
              $region43: #{dcp_dec_forward.9} parent=27 // pred_fallthru
                _
              // Predicated region
              $region51: #{dcp_dec_forward.9} parent=27 // pred_check
                _
              $region52: #{dcp_dec_forward.9} parent=27 // pred_check_branch
                %233 = sbr.rel target = $region54
              $region53: #{dcp_dec_forward.9} parent=27 // pred_region
                _
              $region54: #{dcp_dec_forward.9} parent=27 // pred_fallthru
                _
            $region28: #{dcp_dec_forward.9} parent=23 // pred_fallthru
              _
            // Predicated region
            $region29: #{dcp_dec_forward.9} parent=23 // pred_check
              _
            $region30: #{dcp_dec_forward.9} parent=23 // pred_check_branch
              %147 = sbr.rel target = $region32
            $region31: #{dcp_dec_forward.9} parent=23 // pred_region
              %s149 = ssub.s32 256, 1
              loop: start=0, step=1, limit=1
              $region33: #{dcp_dec_forward.9} parent=31 // loop_pre_header
                _
              $region34: #{dcp_dec_forward.9} parent=31 // loop_header
                %s151 = sphi 0, %s155
                %p152 = scmp.ge.s32.totalorder %s151, 1
                %s156 = sphi %s141, %s141
                %s157 = sphi %s136, %s136
              $region35: #{dcp_dec_forward.9} parent=31 // loop_header_branch
                %154 = sbr.rel (%p152) target = $region39
              $region36: #{dcp_dec_forward.9} parent=31 // loop_body
                %v158 = vld [vmem:[%s156] sm:%s149]
                %159 = vst [vmem:[%s157] sm:%s149] %v158
                %v160 = vld [vmem:[%s156 + $0x10] sm:%s149]
                %161 = vst [vmem:[%s157 + $0x8] sm:%s149] %v160
                %v162 = vld [vmem:[%s156 + $0x20] sm:%s149]
                %163 = vst [vmem:[%s157 + $0x10] sm:%s149] %v162
                %v164 = vld [vmem:[%s156 + $0x30] sm:%s149]
                %165 = vst [vmem:[%s157 + $0x18] sm:%s149] %v164
                %v166 = vld [vmem:[%s156 + $0x40] sm:%s149]
                %167 = vst [vmem:[%s157 + $0x20] sm:%s149] %v166
                %v168 = vld [vmem:[%s156 + $0x50] sm:%s149]
                %169 = vst [vmem:[%s157 + $0x28] sm:%s149] %v168
                %v170 = vld [vmem:[%s156 + $0x60] sm:%s149]
                %171 = vst [vmem:[%s157 + $0x30] sm:%s149] %v170
                %v172 = vld [vmem:[%s156 + $0x70] sm:%s149]
                %173 = vst [vmem:[%s157 + $0x38] sm:%s149] %v172
                %v174 = vld [vmem:[%s156 + $0x80] sm:%s149]
                %175 = vst [vmem:[%s157 + $0x40] sm:%s149] %v174
                %v176 = vld [vmem:[%s156 + $0x90] sm:%s149]
                %177 = vst [vmem:[%s157 + $0x48] sm:%s149] %v176
                %v178 = vld [vmem:[%s156 + $0xa0] sm:%s149]
                %179 = vst [vmem:[%s157 + $0x50] sm:%s149] %v178
                %v180 = vld [vmem:[%s156 + $0xb0] sm:%s149]
                %181 = vst [vmem:[%s157 + $0x58] sm:%s149] %v180
                %v182 = vld [vmem:[%s156 + $0xc0] sm:%s149]
                %183 = vst [vmem:[%s157 + $0x60] sm:%s149] %v182
                %v184 = vld [vmem:[%s156 + $0xd0] sm:%s149]
                %185 = vst [vmem:[%s157 + $0x68] sm:%s149] %v184
                %v186 = vld [vmem:[%s156 + $0xe0] sm:%s149]
                %187 = vst [vmem:[%s157 + $0x70] sm:%s149] %v186
                %v188 = vld [vmem:[%s156 + $0xf0] sm:%s149]
                %189 = vst [vmem:[%s157 + $0x78] sm:%s149] %v188
              $region37: #{dcp_dec_forward.9} parent=31 // loop_footer
                %s155 = sadd.s32 1, %s151
              $region38: #{dcp_dec_forward.9} parent=31 // loop_footer_branch
                %150 = sbr.rel target = $region34
              $region39: #{dcp_dec_forward.9} parent=31 // loop_exit
                _
            $region32: #{dcp_dec_forward.9} parent=23 // pred_fallthru
              _
          $region24: #{dcp_dec_forward.9} parent=19 // pred_fallthru
            _
          %234 = vnop
        $region20: #{dcp_dec_forward.9} parent=15 // pred_fallthru
          _
        // Predicated region
        $region55: #{dcp_dec_forward.9} parent=15 // pred_check
          %p235 = pneg %p77
        $region56: #{dcp_dec_forward.9} parent=15 // pred_check_branch
          %237 = sbr.rel (%p235) target = $region58
        $region57: #{dcp_dec_forward.9} parent=15 // pred_region
          %s238 = sand.u32 %s67, 1
          %s239 = sand.u32 %s67, 1
          %s240 = smul.addr %s239, 128
          %s241 = scalar_lea.vmem [#allocation4], %s240
          %s242 = smul.u32 16, %s17
          %s243 = smul.addr %s242, 2
          %s244 = sadd.s32 %s16, %s243
          %s245 = smul.addr %s244, 8
          %s246 = scalar_lea.vmem %s1, %s245
          // Predicated region
          $region59: #{dcp_dec_forward.9} parent=57 // pred_check
            _
          $region60: #{dcp_dec_forward.9} parent=57 // pred_check_branch
            %248 = sbr.rel (0) target = $region62
          $region61: #{dcp_dec_forward.9} parent=57 // pred_region
            // Predicated region
            $region63: #{dcp_dec_forward.9} parent=61 // pred_check
              _
            $region64: #{dcp_dec_forward.9} parent=61 // pred_check_branch
              %250 = sbr.rel (0) target = $region66
            $region65: #{dcp_dec_forward.9} parent=61 // pred_region
              // Predicated region
              $region78: #{dcp_dec_forward.9} parent=65 // pred_check
                _
              $region79: #{dcp_dec_forward.9} parent=65 // pred_check_branch
                %296 = sbr.rel (0) target = $region81
              $region80: #{dcp_dec_forward.9} parent=65 // pred_region
                loop: start=0, step=1, limit=1
                $region82: #{dcp_dec_forward.9} parent=80 // loop_pre_header
                  _
                $region83: #{dcp_dec_forward.9} parent=80 // loop_header
                  %s298 = sphi 0, %s302
                  %p299 = scmp.ge.s32.totalorder %s298, 1
                  %s303 = sphi %s246, %s246
                  %s304 = sphi %s241, %s241
                $region84: #{dcp_dec_forward.9} parent=80 // loop_header_branch
                  %301 = sbr.rel (%p299) target = $region88
                $region85: #{dcp_dec_forward.9} parent=80 // loop_body
                  %v305 = vld [vmem:[%s303] sm:$0xff]
                  %306 = vst [vmem:[%s304] sm:$0xff] %v305
                  %v307 = vld [vmem:[%s303 + $0x10] sm:$0xff]
                  %308 = vst [vmem:[%s304 + $0x8] sm:$0xff] %v307
                  %v309 = vld [vmem:[%s303 + $0x20] sm:$0xff]
                  %310 = vst [vmem:[%s304 + $0x10] sm:$0xff] %v309
                  %v311 = vld [vmem:[%s303 + $0x30] sm:$0xff]
                  %312 = vst [vmem:[%s304 + $0x18] sm:$0xff] %v311
                  %v313 = vld [vmem:[%s303 + $0x40] sm:$0xff]
                  %314 = vst [vmem:[%s304 + $0x20] sm:$0xff] %v313
                  %v315 = vld [vmem:[%s303 + $0x50] sm:$0xff]
                  %316 = vst [vmem:[%s304 + $0x28] sm:$0xff] %v315
                  %v317 = vld [vmem:[%s303 + $0x60] sm:$0xff]
                  %318 = vst [vmem:[%s304 + $0x30] sm:$0xff] %v317
                  %v319 = vld [vmem:[%s303 + $0x70] sm:$0xff]
                  %320 = vst [vmem:[%s304 + $0x38] sm:$0xff] %v319
                  %v321 = vld [vmem:[%s303 + $0x80] sm:$0xff]
                  %322 = vst [vmem:[%s304 + $0x40] sm:$0xff] %v321
                  %v323 = vld [vmem:[%s303 + $0x90] sm:$0xff]
                  %324 = vst [vmem:[%s304 + $0x48] sm:$0xff] %v323
                  %v325 = vld [vmem:[%s303 + $0xa0] sm:$0xff]
                  %326 = vst [vmem:[%s304 + $0x50] sm:$0xff] %v325
                  %v327 = vld [vmem:[%s303 + $0xb0] sm:$0xff]
                  %328 = vst [vmem:[%s304 + $0x58] sm:$0xff] %v327
                  %v329 = vld [vmem:[%s303 + $0xc0] sm:$0xff]
                  %330 = vst [vmem:[%s304 + $0x60] sm:$0xff] %v329
                  %v331 = vld [vmem:[%s303 + $0xd0] sm:$0xff]
                  %332 = vst [vmem:[%s304 + $0x68] sm:$0xff] %v331
                  %v333 = vld [vmem:[%s303 + $0xe0] sm:$0xff]
                  %334 = vst [vmem:[%s304 + $0x70] sm:$0xff] %v333
                  %v335 = vld [vmem:[%s303 + $0xf0] sm:$0xff]
                  %336 = vst [vmem:[%s304 + $0x78] sm:$0xff] %v335
                $region86: #{dcp_dec_forward.9} parent=80 // loop_footer
                  %s302 = sadd.s32 1, %s298
                $region87: #{dcp_dec_forward.9} parent=80 // loop_footer_branch
                  %297 = sbr.rel target = $region83
                $region88: #{dcp_dec_forward.9} parent=80 // loop_exit
                  _
              $region81: #{dcp_dec_forward.9} parent=65 // pred_fallthru
                _
              // Predicated region
              $region89: #{dcp_dec_forward.9} parent=65 // pred_check
                _
              $region90: #{dcp_dec_forward.9} parent=65 // pred_check_branch
                %338 = sbr.rel target = $region92
              $region91: #{dcp_dec_forward.9} parent=65 // pred_region
                _
              $region92: #{dcp_dec_forward.9} parent=65 // pred_fallthru
                _
            $region66: #{dcp_dec_forward.9} parent=61 // pred_fallthru
              _
            // Predicated region
            $region67: #{dcp_dec_forward.9} parent=61 // pred_check
              _
            $region68: #{dcp_dec_forward.9} parent=61 // pred_check_branch
              %252 = sbr.rel target = $region70
            $region69: #{dcp_dec_forward.9} parent=61 // pred_region
              %s254 = ssub.s32 256, 1
              loop: start=0, step=1, limit=1
              $region71: #{dcp_dec_forward.9} parent=69 // loop_pre_header
                _
              $region72: #{dcp_dec_forward.9} parent=69 // loop_header
                %s256 = sphi 0, %s260
                %p257 = scmp.ge.s32.totalorder %s256, 1
                %s261 = sphi %s246, %s246
                %s262 = sphi %s241, %s241
              $region73: #{dcp_dec_forward.9} parent=69 // loop_header_branch
                %259 = sbr.rel (%p257) target = $region77
              $region74: #{dcp_dec_forward.9} parent=69 // loop_body
                %v263 = vld [vmem:[%s261] sm:%s254]
                %264 = vst [vmem:[%s262] sm:%s254] %v263
                %v265 = vld [vmem:[%s261 + $0x10] sm:%s254]
                %266 = vst [vmem:[%s262 + $0x8] sm:%s254] %v265
                %v267 = vld [vmem:[%s261 + $0x20] sm:%s254]
                %268 = vst [vmem:[%s262 + $0x10] sm:%s254] %v267
                %v269 = vld [vmem:[%s261 + $0x30] sm:%s254]
                %270 = vst [vmem:[%s262 + $0x18] sm:%s254] %v269
                %v271 = vld [vmem:[%s261 + $0x40] sm:%s254]
                %272 = vst [vmem:[%s262 + $0x20] sm:%s254] %v271
                %v273 = vld [vmem:[%s261 + $0x50] sm:%s254]
                %274 = vst [vmem:[%s262 + $0x28] sm:%s254] %v273
                %v275 = vld [vmem:[%s261 + $0x60] sm:%s254]
                %276 = vst [vmem:[%s262 + $0x30] sm:%s254] %v275
                %v277 = vld [vmem:[%s261 + $0x70] sm:%s254]
                %278 = vst [vmem:[%s262 + $0x38] sm:%s254] %v277
                %v279 = vld [vmem:[%s261 + $0x80] sm:%s254]
                %280 = vst [vmem:[%s262 + $0x40] sm:%s254] %v279
                %v281 = vld [vmem:[%s261 + $0x90] sm:%s254]
                %282 = vst [vmem:[%s262 + $0x48] sm:%s254] %v281
                %v283 = vld [vmem:[%s261 + $0xa0] sm:%s254]
                %284 = vst [vmem:[%s262 + $0x50] sm:%s254] %v283
                %v285 = vld [vmem:[%s261 + $0xb0] sm:%s254]
                %286 = vst [vmem:[%s262 + $0x58] sm:%s254] %v285
                %v287 = vld [vmem:[%s261 + $0xc0] sm:%s254]
                %288 = vst [vmem:[%s262 + $0x60] sm:%s254] %v287
                %v289 = vld [vmem:[%s261 + $0xd0] sm:%s254]
                %290 = vst [vmem:[%s262 + $0x68] sm:%s254] %v289
                %v291 = vld [vmem:[%s261 + $0xe0] sm:%s254]
                %292 = vst [vmem:[%s262 + $0x70] sm:%s254] %v291
                %v293 = vld [vmem:[%s261 + $0xf0] sm:%s254]
                %294 = vst [vmem:[%s262 + $0x78] sm:%s254] %v293
              $region75: #{dcp_dec_forward.9} parent=69 // loop_footer
                %s260 = sadd.s32 1, %s256
              $region76: #{dcp_dec_forward.9} parent=69 // loop_footer_branch
                %255 = sbr.rel target = $region72
              $region77: #{dcp_dec_forward.9} parent=69 // loop_exit
                _
            $region70: #{dcp_dec_forward.9} parent=61 // pred_fallthru
              _
          $region62: #{dcp_dec_forward.9} parent=57 // pred_fallthru
            _
          %339 = vnop
        $region58: #{dcp_dec_forward.9} parent=15 // pred_fallthru
          _
      $region16: #{dcp_dec_forward.9} parent=5 // pred_fallthru
        _
      %p340 = scmp.le.s32.totalorder 1, %s8
      %p341 = scmp.lt.s32.totalorder %s8, 9
      %p342 = pnand %p340, %p341
      %p343 = pneg %p342
      // Predicated region
      $region93: #{dcp_dec_forward.9} parent=5 // pred_check
        _
      $region94: #{dcp_dec_forward.9} parent=5 // pred_check_branch
        %345 = sbr.rel (%p342) target = $region96
      $region95: #{dcp_dec_forward.9} parent=5 // pred_region
        %s346 = ssub.s32 %s8, 1
        %s347 = sand.u32 %s42, 1
        %s348 = sand.u32 %s42, 1
        %s349 = smul.addr %s348, 128
        %s350 = scalar_lea.vmem [#allocation3], %s349
        // Predicated region
        $region97: #{dcp_dec_forward.9} parent=95 // pred_check
          %p351 = pneg %p55
        $region98: #{dcp_dec_forward.9} parent=95 // pred_check_branch
          %353 = sbr.rel (%p351) target = $region100
        $region99: #{dcp_dec_forward.9} parent=95 // pred_region
          _
        $region100: #{dcp_dec_forward.9} parent=95 // pred_fallthru
          _
        %s354 = sand.u32 %s70, 1
        %s355 = sand.u32 %s70, 1
        %s356 = smul.addr %s355, 128
        %s357 = scalar_lea.vmem [#allocation4], %s356
        // Predicated region
        $region101: #{dcp_dec_forward.9} parent=95 // pred_check
          %p358 = pneg %p83
        $region102: #{dcp_dec_forward.9} parent=95 // pred_check_branch
          %360 = sbr.rel (%p358) target = $region104
        $region103: #{dcp_dec_forward.9} parent=95 // pred_region
          _
        $region104: #{dcp_dec_forward.9} parent=95 // pred_fallthru
          _
        %s361 = sand.u32 %s42, 1
        %s362 = sand.u32 %s42, 1
        %s363 = smul.addr %s362, 128
        %s364 = scalar_lea.vmem [#allocation3], %s363
        %p365 = pneg %p55
        %p366 = pneg %p52
        %s367 = sand.u32 %s70, 1
        %s368 = sand.u32 %s70, 1
        %s369 = smul.addr %s368, 128
        %s370 = scalar_lea.vmem [#allocation4], %s369
        %p371 = pneg %p83
        %p372 = pneg %p80
        %p373 = pneg %p111
        %p374 = pneg %p108
        %s375 = sand.u32 %s98, 1
        %s376 = sand.u32 %s98, 1
        %s377 = smul.addr %s376, 128
        %s378 = scalar_lea.vmem [#allocation5], %s377
        %s379 = smul.u32 16, %s18
        %s380 = smul.u32 16, %s20
        %s381 = smul.u32 16, %s18
        %p382 = scmp.eq.s32.totalorder %s20, 0
        // Predicated region
        $region105: #{dcp_dec_forward.9} parent=95 // pred_check
          %p383 = pneg %p382
        $region106: #{dcp_dec_forward.9} parent=95 // pred_check_branch
          %385 = sbr.rel (%p383) target = $region108
        $region107: #{dcp_dec_forward.9} parent=95 // pred_region
          %386 = vst [vmem:[#allocation2] sm:$0xff] 0.0
          %387 = vst [vmem:[#allocation2 + $0x8] sm:$0xff] 0.0
          %388 = vst [vmem:[#allocation2 + $0x10] sm:$0xff] 0.0
          %389 = vst [vmem:[#allocation2 + $0x18] sm:$0xff] 0.0
          %390 = vst [vmem:[#allocation2 + $0x20] sm:$0xff] 0.0
          %391 = vst [vmem:[#allocation2 + $0x28] sm:$0xff] 0.0
          %392 = vst [vmem:[#allocation2 + $0x30] sm:$0xff] 0.0
          %393 = vst [vmem:[#allocation2 + $0x38] sm:$0xff] 0.0
          %394 = vst [vmem:[#allocation2 + $0x40] sm:$0xff] 0.0
          %395 = vst [vmem:[#allocation2 + $0x48] sm:$0xff] 0.0
          %396 = vst [vmem:[#allocation2 + $0x50] sm:$0xff] 0.0
          %397 = vst [vmem:[#allocation2 + $0x58] sm:$0xff] 0.0
          %398 = vst [vmem:[#allocation2 + $0x60] sm:$0xff] 0.0
          %399 = vst [vmem:[#allocation2 + $0x68] sm:$0xff] 0.0
          %400 = vst [vmem:[#allocation2 + $0x70] sm:$0xff] 0.0
          %401 = vst [vmem:[#allocation2 + $0x78] sm:$0xff] 0.0
        $region108: #{dcp_dec_forward.9} parent=95 // pred_fallthru
          _
        %v402 = vld [vmem:[#allocation2] sm:$0xff]
        %v403 = vld [vmem:[#allocation2 + $0x8] sm:$0xff]
        %v404 = vld [vmem:[#allocation2 + $0x10] sm:$0xff]
        %v405 = vld [vmem:[#allocation2 + $0x18] sm:$0xff]
        %v406 = vld [vmem:[#allocation2 + $0x20] sm:$0xff]
        %v407 = vld [vmem:[#allocation2 + $0x28] sm:$0xff]
        %v408 = vld [vmem:[#allocation2 + $0x30] sm:$0xff]
        %v409 = vld [vmem:[#allocation2 + $0x38] sm:$0xff]
        %v410 = vld [vmem:[#allocation2 + $0x40] sm:$0xff]
        %v411 = vld [vmem:[#allocation2 + $0x48] sm:$0xff]
        %v412 = vld [vmem:[#allocation2 + $0x50] sm:$0xff]
        %v413 = vld [vmem:[#allocation2 + $0x58] sm:$0xff]
        %v414 = vld [vmem:[#allocation2 + $0x60] sm:$0xff]
        %v415 = vld [vmem:[#allocation2 + $0x68] sm:$0xff]
        %v416 = vld [vmem:[#allocation2 + $0x70] sm:$0xff]
        %v417 = vld [vmem:[#allocation2 + $0x78] sm:$0xff]
        %v418 = vld [vmem:[%s350] sm:$0xff]
        %v419 = vld [vmem:[%s350 + $0x8] sm:$0xff]
        %v420 = vld [vmem:[%s350 + $0x10] sm:$0xff]
        %v421 = vld [vmem:[%s350 + $0x18] sm:$0xff]
        %v422 = vld [vmem:[%s350 + $0x20] sm:$0xff]
        %v423 = vld [vmem:[%s350 + $0x28] sm:$0xff]
        %v424 = vld [vmem:[%s350 + $0x30] sm:$0xff]
        %v425 = vld [vmem:[%s350 + $0x38] sm:$0xff]
        %v426 = vld [vmem:[%s350 + $0x40] sm:$0xff]
        %v427 = vld [vmem:[%s350 + $0x48] sm:$0xff]
        %v428 = vld [vmem:[%s350 + $0x50] sm:$0xff]
        %v429 = vld [vmem:[%s350 + $0x58] sm:$0xff]
        %v430 = vld [vmem:[%s350 + $0x60] sm:$0xff]
        %v431 = vld [vmem:[%s350 + $0x68] sm:$0xff]
        %v432 = vld [vmem:[%s350 + $0x70] sm:$0xff]
        %v433 = vld [vmem:[%s350 + $0x78] sm:$0xff]
        %v434 = vld [vmem:[%s357] sm:$0xff]
        %v435 = vld [vmem:[%s357 + $0x8] sm:$0xff]
        %v436 = vld [vmem:[%s357 + $0x10] sm:$0xff]
        %v437 = vld [vmem:[%s357 + $0x18] sm:$0xff]
        %v438 = vld [vmem:[%s357 + $0x20] sm:$0xff]
        %v439 = vld [vmem:[%s357 + $0x28] sm:$0xff]
        %v440 = vld [vmem:[%s357 + $0x30] sm:$0xff]
        %v441 = vld [vmem:[%s357 + $0x38] sm:$0xff]
        %v442 = vld [vmem:[%s357 + $0x40] sm:$0xff]
        %v443 = vld [vmem:[%s357 + $0x48] sm:$0xff]
        %v444 = vld [vmem:[%s357 + $0x50] sm:$0xff]
        %v445 = vld [vmem:[%s357 + $0x58] sm:$0xff]
        %v446 = vld [vmem:[%s357 + $0x60] sm:$0xff]
        %v447 = vld [vmem:[%s357 + $0x68] sm:$0xff]
        %v448 = vld [vmem:[%s357 + $0x70] sm:$0xff]
        %v449 = vld [vmem:[%s357 + $0x78] sm:$0xff]
        %450 = vmatprep.subr.mxu0 0.0
        %451 = vmatpush1.msra.mxu0 %v449
        %452 = vmatprep.subr.mxu0 0.0
        %453 = vmatpush1.msra.mxu0 %v448
        %454 = vmatprep.subr.mxu0 0.0
        %455 = vmatpush1.msra.mxu0 %v447
        %456 = vmatprep.subr.mxu0 0.0
        %457 = vmatpush1.msra.mxu0 %v446
        %458 = vmatprep.subr.mxu0 0.0
        %459 = vmatpush1.msra.mxu0 %v445
        %460 = vmatprep.subr.mxu0 0.0
        %461 = vmatpush1.msra.mxu0 %v444
        %462 = vmatprep.subr.mxu0 0.0
        %463 = vmatpush1.msra.mxu0 %v443
        %464 = vmatprep.subr.mxu0 0.0
        %465 = vmatpush1.msra.mxu0 %v442
        %466 = vmatprep.subr.mxu0 0.0
        %467 = vmatpush1.msra.mxu0 %v441
        %468 = vmatprep.subr.mxu0 0.0
        %469 = vmatpush1.msra.mxu0 %v440
        %470 = vmatprep.subr.mxu0 0.0
        %471 = vmatpush1.msra.mxu0 %v439
        %472 = vmatprep.subr.mxu0 0.0
        %473 = vmatpush1.msra.mxu0 %v438
        %474 = vmatprep.subr.mxu0 0.0
        %475 = vmatpush1.msra.mxu0 %v437
        %476 = vmatprep.subr.mxu0 0.0
        %477 = vmatpush1.msra.mxu0 %v436
        %478 = vmatprep.subr.mxu0 0.0
        %479 = vmatpush1.msra.mxu0 %v435
        %480 = vmatprep.subr.mxu0 0.0
        %481 = vmatpush1.msra.mxu0 %v434
        %482 = vmatprep.subr.mxu0 0.0
        %483 = vmatpush2.msra.mxu0 0.0
        %484 = vmatprep.subr.mxu0 0.0
        %485 = vmatpush2.msra.mxu0 0.0
        %486 = vmatprep.subr.mxu0 0.0
        %487 = vmatpush2.msra.mxu0 0.0
        %488 = vmatprep.subr.mxu0 0.0
        %489 = vmatpush2.msra.mxu0 0.0
        %490 = vmatprep.subr.mxu0 0.0
        %491 = vmatpush2.msra.mxu0 0.0
        %492 = vmatprep.subr.mxu0 0.0
        %493 = vmatpush2.msra.mxu0 0.0
        %494 = vmatprep.subr.mxu0 0.0
        %495 = vmatpush2.msra.mxu0 0.0
        %496 = vmatprep.subr.mxu0 0.0
        %497 = vmatpush2.msra.mxu0 0.0
        %498 = vmatprep.subr.mxu0 0.0
        %499 = vmatpush2.msra.mxu0 0.0
        %500 = vmatprep.subr.mxu0 0.0
        %501 = vmatpush2.msra.mxu0 0.0
        %502 = vmatprep.subr.mxu0 0.0
        %503 = vmatpush2.msra.mxu0 0.0
        %504 = vmatprep.subr.mxu0 0.0
        %505 = vmatpush2.msra.mxu0 0.0
        %506 = vmatprep.subr.mxu0 0.0
        %507 = vmatpush2.msra.mxu0 0.0
        %508 = vmatprep.subr.mxu0 0.0
        %509 = vmatpush2.msra.mxu0 0.0
        %510 = vmatprep.subr.mxu0 0.0
        %511 = vmatpush2.msra.mxu0 0.0
        %512 = vmatprep.subr.mxu0 0.0
        %513 = vmatpush2.msra.mxu0 0.0
        %514 = vmatprep.mubr.f32.mxu0 0.0
        %515 = vmatmul.mubr.f32.gmra.mxu0 %v418
        %v516 = vpop.f32.mrf.mxu0
        %v517 = vadd.f32 0.0, %v516
        %v518 = vpop.f32.mrf.mxu0
        %519 = vmatprep.mubr.f32.mxu0 0.0
        %520 = vmatmul.mubr.f32.gmra.mxu0 %v419
        %v521 = vpop.f32.mrf.mxu0
        %v522 = vadd.f32 0.0, %v521
        %v523 = vpop.f32.mrf.mxu0
        %524 = vmatprep.mubr.f32.mxu0 0.0
        %525 = vmatmul.mubr.f32.gmra.mxu0 %v420
        %v526 = vpop.f32.mrf.mxu0
        %v527 = vadd.f32 0.0, %v526
        %v528 = vpop.f32.mrf.mxu0
        %529 = vmatprep.mubr.f32.mxu0 0.0
        %530 = vmatmul.mubr.f32.gmra.mxu0 %v421
        %v531 = vpop.f32.mrf.mxu0
        %v532 = vadd.f32 0.0, %v531
        %v533 = vpop.f32.mrf.mxu0
        %534 = vmatprep.mubr.f32.mxu0 0.0
        %535 = vmatmul.mubr.f32.gmra.mxu0 %v422
        %v536 = vpop.f32.mrf.mxu0
        %v537 = vadd.f32 0.0, %v536
        %v538 = vpop.f32.mrf.mxu0
        %539 = vmatprep.mubr.f32.mxu0 0.0
        %540 = vmatmul.mubr.f32.gmra.mxu0 %v423
        %v541 = vpop.f32.mrf.mxu0
        %v542 = vadd.f32 0.0, %v541
        %v543 = vpop.f32.mrf.mxu0
        %544 = vmatprep.mubr.f32.mxu0 0.0
        %545 = vmatmul.mubr.f32.gmra.mxu0 %v424
        %v546 = vpop.f32.mrf.mxu0
        %v547 = vadd.f32 0.0, %v546
        %v548 = vpop.f32.mrf.mxu0
        %549 = vmatprep.mubr.f32.mxu0 0.0
        %550 = vmatmul.mubr.f32.gmra.mxu0 %v425
        %v551 = vpop.f32.mrf.mxu0
        %v552 = vadd.f32 0.0, %v551
        %v553 = vpop.f32.mrf.mxu0
        %554 = vmatprep.mubr.f32.mxu0 0.0
        %555 = vmatmul.mubr.f32.gmra.mxu0 %v426
        %v556 = vpop.f32.mrf.mxu0
        %v557 = vadd.f32 0.0, %v556
        %v558 = vpop.f32.mrf.mxu0
        %559 = vmatprep.mubr.f32.mxu0 0.0
        %560 = vmatmul.mubr.f32.gmra.mxu0 %v427
        %v561 = vpop.f32.mrf.mxu0
        %v562 = vadd.f32 0.0, %v561
        %v563 = vpop.f32.mrf.mxu0
        %564 = vmatprep.mubr.f32.mxu0 0.0
        %565 = vmatmul.mubr.f32.gmra.mxu0 %v428
        %v566 = vpop.f32.mrf.mxu0
        %v567 = vadd.f32 0.0, %v566
        %v568 = vpop.f32.mrf.mxu0
        %569 = vmatprep.mubr.f32.mxu0 0.0
        %570 = vmatmul.mubr.f32.gmra.mxu0 %v429
        %v571 = vpop.f32.mrf.mxu0
        %v572 = vadd.f32 0.0, %v571
        %v573 = vpop.f32.mrf.mxu0
        %574 = vmatprep.mubr.f32.mxu0 0.0
        %575 = vmatmul.mubr.f32.gmra.mxu0 %v430
        %v576 = vpop.f32.mrf.mxu0
        %v577 = vadd.f32 0.0, %v576
        %v578 = vpop.f32.mrf.mxu0
        %579 = vmatprep.mubr.f32.mxu0 0.0
        %580 = vmatmul.mubr.f32.gmra.mxu0 %v431
        %v581 = vpop.f32.mrf.mxu0
        %v582 = vadd.f32 0.0, %v581
        %v583 = vpop.f32.mrf.mxu0
        %584 = vmatprep.mubr.f32.mxu0 0.0
        %585 = vmatmul.mubr.f32.gmra.mxu0 %v432
        %v586 = vpop.f32.mrf.mxu0
        %v587 = vadd.f32 0.0, %v586
        %v588 = vpop.f32.mrf.mxu0
        %589 = vmatprep.mubr.f32.mxu0 0.0
        %590 = vmatmul.mubr.f32.gmra.mxu0 %v433
        %v591 = vpop.f32.mrf.mxu0
        %v592 = vadd.f32 0.0, %v591
        %v593 = vpop.f32.mrf.mxu0
        %594 = vdwg.mxu0
        %v595 = vadd.f32 %v402, %v517
        %v596 = vadd.f32 %v403, %v522
        %v597 = vadd.f32 %v404, %v527
        %v598 = vadd.f32 %v405, %v532
        %v599 = vadd.f32 %v406, %v537
        %v600 = vadd.f32 %v407, %v542
        %v601 = vadd.f32 %v408, %v547
        %v602 = vadd.f32 %v409, %v552
        %v603 = vadd.f32 %v410, %v557
        %v604 = vadd.f32 %v411, %v562
        %v605 = vadd.f32 %v412, %v567
        %v606 = vadd.f32 %v413, %v572
        %v607 = vadd.f32 %v414, %v577
        %v608 = vadd.f32 %v415, %v582
        %v609 = vadd.f32 %v416, %v587
        %v610 = vadd.f32 %v417, %v592
        %611 = vst [vmem:[#allocation2] sm:$0xff] %v595
        %612 = vst [vmem:[#allocation2 + $0x8] sm:$0xff] %v596
        %613 = vst [vmem:[#allocation2 + $0x10] sm:$0xff] %v597
        %614 = vst [vmem:[#allocation2 + $0x18] sm:$0xff] %v598
        %615 = vst [vmem:[#allocation2 + $0x20] sm:$0xff] %v599
        %616 = vst [vmem:[#allocation2 + $0x28] sm:$0xff] %v600
        %617 = vst [vmem:[#allocation2 + $0x30] sm:$0xff] %v601
        %618 = vst [vmem:[#allocation2 + $0x38] sm:$0xff] %v602
        %619 = vst [vmem:[#allocation2 + $0x40] sm:$0xff] %v603
        %620 = vst [vmem:[#allocation2 + $0x48] sm:$0xff] %v604
        %621 = vst [vmem:[#allocation2 + $0x50] sm:$0xff] %v605
        %622 = vst [vmem:[#allocation2 + $0x58] sm:$0xff] %v606
        %623 = vst [vmem:[#allocation2 + $0x60] sm:$0xff] %v607
        %624 = vst [vmem:[#allocation2 + $0x68] sm:$0xff] %v608
        %625 = vst [vmem:[#allocation2 + $0x70] sm:$0xff] %v609
        %626 = vst [vmem:[#allocation2 + $0x78] sm:$0xff] %v610
        %p627 = scmp.eq.s32.totalorder %s20, 1
        // Predicated region
        $region109: #{dcp_dec_forward.9} parent=95 // pred_check
          %p628 = pneg %p627
        $region110: #{dcp_dec_forward.9} parent=95 // pred_check_branch
          %630 = sbr.rel (%p628) target = $region112
        $region111: #{dcp_dec_forward.9} parent=95 // pred_region
          %v631 = vld [vmem:[#allocation2] sm:$0xff]
          %v632 = vld [vmem:[#allocation2 + $0x8] sm:$0xff]
          %v633 = vld [vmem:[#allocation2 + $0x10] sm:$0xff]
          %v634 = vld [vmem:[#allocation2 + $0x18] sm:$0xff]
          %v635 = vld [vmem:[#allocation2 + $0x20] sm:$0xff]
          %v636 = vld [vmem:[#allocation2 + $0x28] sm:$0xff]
          %v637 = vld [vmem:[#allocation2 + $0x30] sm:$0xff]
          %v638 = vld [vmem:[#allocation2 + $0x38] sm:$0xff]
          %v639 = vld [vmem:[#allocation2 + $0x40] sm:$0xff]
          %v640 = vld [vmem:[#allocation2 + $0x48] sm:$0xff]
          %v641 = vld [vmem:[#allocation2 + $0x50] sm:$0xff]
          %v642 = vld [vmem:[#allocation2 + $0x58] sm:$0xff]
          %v643 = vld [vmem:[#allocation2 + $0x60] sm:$0xff]
          %v644 = vld [vmem:[#allocation2 + $0x68] sm:$0xff]
          %v645 = vld [vmem:[#allocation2 + $0x70] sm:$0xff]
          %v646 = vld [vmem:[#allocation2 + $0x78] sm:$0xff]
          %v647 = vmax.f32 %v631, 0.0
          %v648 = vmax.f32 %v632, 0.0
          %v649 = vmax.f32 %v633, 0.0
          %v650 = vmax.f32 %v634, 0.0
          %v651 = vmax.f32 %v635, 0.0
          %v652 = vmax.f32 %v636, 0.0
          %v653 = vmax.f32 %v637, 0.0
          %v654 = vmax.f32 %v638, 0.0
          %v655 = vmax.f32 %v639, 0.0
          %v656 = vmax.f32 %v640, 0.0
          %v657 = vmax.f32 %v641, 0.0
          %v658 = vmax.f32 %v642, 0.0
          %v659 = vmax.f32 %v643, 0.0
          %v660 = vmax.f32 %v644, 0.0
          %v661 = vmax.f32 %v645, 0.0
          %v662 = vmax.f32 %v646, 0.0
          %663 = vst [vmem:[%s378] sm:$0xff] %v647
          %664 = vst [vmem:[%s378 + $0x8] sm:$0xff] %v648
          %665 = vst [vmem:[%s378 + $0x10] sm:$0xff] %v649
          %666 = vst [vmem:[%s378 + $0x18] sm:$0xff] %v650
          %667 = vst [vmem:[%s378 + $0x20] sm:$0xff] %v651
          %668 = vst [vmem:[%s378 + $0x28] sm:$0xff] %v652
          %669 = vst [vmem:[%s378 + $0x30] sm:$0xff] %v653
          %670 = vst [vmem:[%s378 + $0x38] sm:$0xff] %v654
          %671 = vst [vmem:[%s378 + $0x40] sm:$0xff] %v655
          %672 = vst [vmem:[%s378 + $0x48] sm:$0xff] %v656
          %673 = vst [vmem:[%s378 + $0x50] sm:$0xff] %v657
          %674 = vst [vmem:[%s378 + $0x58] sm:$0xff] %v658
          %675 = vst [vmem:[%s378 + $0x60] sm:$0xff] %v659
          %676 = vst [vmem:[%s378 + $0x68] sm:$0xff] %v660
          %677 = vst [vmem:[%s378 + $0x70] sm:$0xff] %v661
          %678 = vst [vmem:[%s378 + $0x78] sm:$0xff] %v662
        $region112: #{dcp_dec_forward.9} parent=95 // pred_fallthru
          _
        %s679 = sand.u32 %s98, 1
        %s680 = sand.u32 %s98, 1
        %s681 = smul.addr %s680, 128
        %s682 = scalar_lea.vmem [#allocation5], %s681
        // Predicated region
        $region113: #{dcp_dec_forward.9} parent=95 // pred_check
          %p683 = pneg %p108
        $region114: #{dcp_dec_forward.9} parent=95 // pred_check_branch
          %685 = sbr.rel (%p683) target = $region116
        $region115: #{dcp_dec_forward.9} parent=95 // pred_region
          %s686 = smul.u32 16, %s18
          %s687 = smul.addr %s686, 2
          %s688 = sadd.s32 %s19, %s687
          %s689 = smul.addr %s688, 8
          %s690 = scalar_lea.vmem %s2, %s689
          // Predicated region
          $region117: #{dcp_dec_forward.9} parent=115 // pred_check
            _
          $region118: #{dcp_dec_forward.9} parent=115 // pred_check_branch
            %692 = sbr.rel (0) target = $region120
          $region119: #{dcp_dec_forward.9} parent=115 // pred_region
            // Predicated region
            $region121: #{dcp_dec_forward.9} parent=119 // pred_check
              _
            $region122: #{dcp_dec_forward.9} parent=119 // pred_check_branch
              %694 = sbr.rel (0) target = $region124
            $region123: #{dcp_dec_forward.9} parent=119 // pred_region
              // Predicated region
              $region136: #{dcp_dec_forward.9} parent=123 // pred_check
                _
              $region137: #{dcp_dec_forward.9} parent=123 // pred_check_branch
                %740 = sbr.rel (0) target = $region139
              $region138: #{dcp_dec_forward.9} parent=123 // pred_region
                loop: start=0, step=1, limit=1
                $region140: #{dcp_dec_forward.9} parent=138 // loop_pre_header
                  _
                $region141: #{dcp_dec_forward.9} parent=138 // loop_header
                  %s742 = sphi 0, %s746
                  %p743 = scmp.ge.s32.totalorder %s742, 1
                  %s747 = sphi %s682, %s682
                  %s748 = sphi %s690, %s690
                $region142: #{dcp_dec_forward.9} parent=138 // loop_header_branch
                  %745 = sbr.rel (%p743) target = $region146
                $region143: #{dcp_dec_forward.9} parent=138 // loop_body
                  %v749 = vld [vmem:[%s747] sm:$0xff]
                  %750 = vst [vmem:[%s748] sm:$0xff] %v749
                  %v751 = vld [vmem:[%s747 + $0x8] sm:$0xff]
                  %752 = vst [vmem:[%s748 + $0x10] sm:$0xff] %v751
                  %v753 = vld [vmem:[%s747 + $0x10] sm:$0xff]
                  %754 = vst [vmem:[%s748 + $0x20] sm:$0xff] %v753
                  %v755 = vld [vmem:[%s747 + $0x18] sm:$0xff]
                  %756 = vst [vmem:[%s748 + $0x30] sm:$0xff] %v755
                  %v757 = vld [vmem:[%s747 + $0x20] sm:$0xff]
                  %758 = vst [vmem:[%s748 + $0x40] sm:$0xff] %v757
                  %v759 = vld [vmem:[%s747 + $0x28] sm:$0xff]
                  %760 = vst [vmem:[%s748 + $0x50] sm:$0xff] %v759
                  %v761 = vld [vmem:[%s747 + $0x30] sm:$0xff]
                  %762 = vst [vmem:[%s748 + $0x60] sm:$0xff] %v761
                  %v763 = vld [vmem:[%s747 + $0x38] sm:$0xff]
                  %764 = vst [vmem:[%s748 + $0x70] sm:$0xff] %v763
                  %v765 = vld [vmem:[%s747 + $0x40] sm:$0xff]
                  %766 = vst [vmem:[%s748 + $0x80] sm:$0xff] %v765
                  %v767 = vld [vmem:[%s747 + $0x48] sm:$0xff]
                  %768 = vst [vmem:[%s748 + $0x90] sm:$0xff] %v767
                  %v769 = vld [vmem:[%s747 + $0x50] sm:$0xff]
                  %770 = vst [vmem:[%s748 + $0xa0] sm:$0xff] %v769
                  %v771 = vld [vmem:[%s747 + $0x58] sm:$0xff]
                  %772 = vst [vmem:[%s748 + $0xb0] sm:$0xff] %v771
                  %v773 = vld [vmem:[%s747 + $0x60] sm:$0xff]
                  %774 = vst [vmem:[%s748 + $0xc0] sm:$0xff] %v773
                  %v775 = vld [vmem:[%s747 + $0x68] sm:$0xff]
                  %776 = vst [vmem:[%s748 + $0xd0] sm:$0xff] %v775
                  %v777 = vld [vmem:[%s747 + $0x70] sm:$0xff]
                  %778 = vst [vmem:[%s748 + $0xe0] sm:$0xff] %v777
                  %v779 = vld [vmem:[%s747 + $0x78] sm:$0xff]
                  %780 = vst [vmem:[%s748 + $0xf0] sm:$0xff] %v779
                $region144: #{dcp_dec_forward.9} parent=138 // loop_footer
                  %s746 = sadd.s32 1, %s742
                $region145: #{dcp_dec_forward.9} parent=138 // loop_footer_branch
                  %741 = sbr.rel target = $region141
                $region146: #{dcp_dec_forward.9} parent=138 // loop_exit
                  _
              $region139: #{dcp_dec_forward.9} parent=123 // pred_fallthru
                _
              // Predicated region
              $region147: #{dcp_dec_forward.9} parent=123 // pred_check
                _
              $region148: #{dcp_dec_forward.9} parent=123 // pred_check_branch
                %782 = sbr.rel target = $region150
              $region149: #{dcp_dec_forward.9} parent=123 // pred_region
                _
              $region150: #{dcp_dec_forward.9} parent=123 // pred_fallthru
                _
            $region124: #{dcp_dec_forward.9} parent=119 // pred_fallthru
              _
            // Predicated region
            $region125: #{dcp_dec_forward.9} parent=119 // pred_check
              _
            $region126: #{dcp_dec_forward.9} parent=119 // pred_check_branch
              %696 = sbr.rel target = $region128
            $region127: #{dcp_dec_forward.9} parent=119 // pred_region
              %s698 = ssub.s32 256, 1
              loop: start=0, step=1, limit=1
              $region129: #{dcp_dec_forward.9} parent=127 // loop_pre_header
                _
              $region130: #{dcp_dec_forward.9} parent=127 // loop_header
                %s700 = sphi 0, %s704
                %p701 = scmp.ge.s32.totalorder %s700, 1
                %s705 = sphi %s682, %s682
                %s706 = sphi %s690, %s690
              $region131: #{dcp_dec_forward.9} parent=127 // loop_header_branch
                %703 = sbr.rel (%p701) target = $region135
              $region132: #{dcp_dec_forward.9} parent=127 // loop_body
                %v707 = vld [vmem:[%s705] sm:%s698]
                %708 = vst [vmem:[%s706] sm:%s698] %v707
                %v709 = vld [vmem:[%s705 + $0x8] sm:%s698]
                %710 = vst [vmem:[%s706 + $0x10] sm:%s698] %v709
                %v711 = vld [vmem:[%s705 + $0x10] sm:%s698]
                %712 = vst [vmem:[%s706 + $0x20] sm:%s698] %v711
                %v713 = vld [vmem:[%s705 + $0x18] sm:%s698]
                %714 = vst [vmem:[%s706 + $0x30] sm:%s698] %v713
                %v715 = vld [vmem:[%s705 + $0x20] sm:%s698]
                %716 = vst [vmem:[%s706 + $0x40] sm:%s698] %v715
                %v717 = vld [vmem:[%s705 + $0x28] sm:%s698]
                %718 = vst [vmem:[%s706 + $0x50] sm:%s698] %v717
                %v719 = vld [vmem:[%s705 + $0x30] sm:%s698]
                %720 = vst [vmem:[%s706 + $0x60] sm:%s698] %v719
                %v721 = vld [vmem:[%s705 + $0x38] sm:%s698]
                %722 = vst [vmem:[%s706 + $0x70] sm:%s698] %v721
                %v723 = vld [vmem:[%s705 + $0x40] sm:%s698]
                %724 = vst [vmem:[%s706 + $0x80] sm:%s698] %v723
                %v725 = vld [vmem:[%s705 + $0x48] sm:%s698]
                %726 = vst [vmem:[%s706 + $0x90] sm:%s698] %v725
                %v727 = vld [vmem:[%s705 + $0x50] sm:%s698]
                %728 = vst [vmem:[%s706 + $0xa0] sm:%s698] %v727
                %v729 = vld [vmem:[%s705 + $0x58] sm:%s698]
                %730 = vst [vmem:[%s706 + $0xb0] sm:%s698] %v729
                %v731 = vld [vmem:[%s705 + $0x60] sm:%s698]
                %732 = vst [vmem:[%s706 + $0xc0] sm:%s698] %v731
                %v733 = vld [vmem:[%s705 + $0x68] sm:%s698]
                %734 = vst [vmem:[%s706 + $0xd0] sm:%s698] %v733
                %v735 = vld [vmem:[%s705 + $0x70] sm:%s698]
                %736 = vst [vmem:[%s706 + $0xe0] sm:%s698] %v735
                %v737 = vld [vmem:[%s705 + $0x78] sm:%s698]
                %738 = vst [vmem:[%s706 + $0xf0] sm:%s698] %v737
              $region133: #{dcp_dec_forward.9} parent=127 // loop_footer
                %s704 = sadd.s32 1, %s700
              $region134: #{dcp_dec_forward.9} parent=127 // loop_footer_branch
                %699 = sbr.rel target = $region130
              $region135: #{dcp_dec_forward.9} parent=127 // loop_exit
                _
            $region128: #{dcp_dec_forward.9} parent=119 // pred_fallthru
              _
          $region120: #{dcp_dec_forward.9} parent=115 // pred_fallthru
            _
          %783 = vnop
        $region116: #{dcp_dec_forward.9} parent=95 // pred_fallthru
          _
      $region96: #{dcp_dec_forward.9} parent=5 // pred_fallthru
        _
      %p784 = scmp.le.s32.totalorder 2, %s8
      // Predicated region
      $region151: #{dcp_dec_forward.9} parent=5 // pred_check
        %p785 = pneg %p784
      $region152: #{dcp_dec_forward.9} parent=5 // pred_check_branch
        %787 = sbr.rel (%p785) target = $region154
      $region153: #{dcp_dec_forward.9} parent=5 // pred_region
        %s788 = ssub.s32 %s8, 2
        // Predicated region
        $region155: #{dcp_dec_forward.9} parent=153 // pred_check
          %p789 = pneg %p114
        $region156: #{dcp_dec_forward.9} parent=153 // pred_check_branch
          %791 = sbr.rel (%p789) target = $region158
        $region157: #{dcp_dec_forward.9} parent=153 // pred_region
          %s792 = sand.u32 %s99, 1
          %s793 = sand.u32 %s99, 1
          %s794 = smul.addr %s793, 128
          %s795 = scalar_lea.vmem [#allocation5], %s794
        $region158: #{dcp_dec_forward.9} parent=153 // pred_fallthru
          _
      $region154: #{dcp_dec_forward.9} parent=5 // pred_fallthru
        _
    $region6: #{dcp_dec_forward.9} parent=1 // loop_footer
      %s12 = sadd.s32 1, %s8
    $region7: #{dcp_dec_forward.9} parent=1 // loop_footer_branch
      %7 = sbr.rel target = $region3
    $region8: #{dcp_dec_forward.9} parent=1 // loop_exit
      _

// kernel: dcp_dec_forward.10
$region0: #{dcp_dec_forward.10}
  #allocation0 [shape = 'u32[]', space=smem, size = 0x4, offset = 0x4, fixed_abs, tag = 'smem constant byte address 0x4 - core index']
  #allocation1 [shape = 'u32[144,128]{1,0:T(1,128)}', space=vmem, size = 0x12000, scoped, tag = 'internal scratch']
  #allocation2 [shape = 'f32[128,16]{1,0:T(8,128)}', space=vmem, size = 0x10000, scoped, tag = 'scratch operand']
  %s0 = inlined_call_operand.vmem [shape: f32[256,256], index: 0, kind: input, shape index: {}]
  %s1 = inlined_call_operand.vmem [shape: f32[256,16], index: 1, kind: input, shape index: {}]
  %s2 = inlined_call_operand.vmem [shape: f32[256,16], index: 2, kind: output, shape index: {}]
  %s3 = sld [smem:[#allocation0]]
  $region87: #{dcp_dec_forward.10} parent=0
    _
  %s5 = ssub.s32 1, %s3
  %s6 = scalar_select 0, %s5, %s3
  $region1: #{dcp_dec_forward.10} parent=0
    #allocation3 [shape = 'u8[131072]{0}', space=vmem, size = 0x20000, scoped, tag = 'input window, operand 0']
    loop: start=0, step=1, limit=6
    $region2: #{dcp_dec_forward.10} parent=1 // loop_pre_header
      _
    $region3: #{dcp_dec_forward.10} parent=1 // loop_header
      %s8 = sphi 0, %s12
      %p9 = scmp.ge.s32.totalorder %s8, 6
      %s15 = sphi 0, %s34
      %s16 = sphi 0, %s30
      %s17 = sphi 0, %s26
      %s18 = sphi 0, %s15
      %s19 = sphi 0, %s16
      %s20 = sphi 0, %s17
      %s21 = sphi 0, %s18
      %s22 = sphi 0, %s19
      %s23 = sphi 0, %s20
      %s39 = sphi 0, %s41
      %s42 = sphi 0, %s39
      %s43 = sphi 0, %s42
      %s59 = sphi 0, %s43
      %s67 = sphi 0, %s69
      %s70 = sphi 0, %s67
      %s71 = sphi 0, %s70
      %s87 = sphi 0, %s71
      %s95 = sphi 0, %s97
      %s98 = sphi 0, %s95
      %s99 = sphi 0, %s98
      %s115 = sphi 0, %s99
    $region4: #{dcp_dec_forward.10} parent=1 // loop_header_branch
      %11 = sbr.rel (%p9) target = $region8
    $region5: #{dcp_dec_forward.10} parent=1 // loop_body
      %s13 = ssub.s32 %s8, 1
      %s14 = ssub.s32 %s8, 2
      %s24 = sadd.s32 1, %s17
      %p25 = scmp.ge.s32.totalorder %s24, 2
      %s26 = scalar_select %p25, 0, %s24
      %s27 = sadd.s32 1, %s16
      %s28 = scalar_select %p25, %s27, %s16
      %p29 = scmp.ge.s32.totalorder %s28, 1
      %s30 = scalar_select %p29, 0, %s28
      %s31 = sadd.s32 1, %s15
      %s32 = scalar_select %p29, %s31, %s15
      %p33 = scmp.ge.s32.totalorder %s32, 2
      %s34 = scalar_select %p33, 0, %s32
      %s35 = ssub.s32 %s15, %s34
      %s36 = ssub.s32 %s17, %s26
      %s37 = sor.u32 %s35, %s36
      %p38 = scmp.eq.s32.totalorder %s37, 0
      %s40 = sadd.s32 %s39, 1
      %s41 = scalar_select %p38, %s39, %s40
      %p44 = pneg %p38
      %p45 = scmp.eq.s32.totalorder %s8, 3
      %p46 = por %p44, %p45
      %p47 = scmp.ne.s32.totalorder %s39, %s42
      %p48 = scmp.eq.s32.totalorder %s8, 0
      %p49 = por %p47, %p48
      %p50 = scmp.ne.s32.totalorder %s39, %s42
      %p51 = scmp.eq.s32.totalorder %s13, 3
      %p52 = por %p50, %p51
      %p53 = scmp.ne.s32.totalorder %s42, %s43
      %p54 = scmp.eq.s32.totalorder %s13, 0
      %p55 = por %p53, %p54
      %p56 = scmp.ne.s32.totalorder %s42, %s43
      %p57 = scmp.eq.s32.totalorder %s14, 3
      %p58 = por %p56, %p57
      %p60 = scmp.ne.s32.totalorder %s43, %s59
      %p61 = scmp.eq.s32.totalorder %s14, 0
      %p62 = por %p60, %p61
      %s63 = ssub.s32 %s17, %s26
      %s64 = ssub.s32 %s16, %s30
      %s65 = sor.u32 %s63, %s64
      %p66 = scmp.eq.s32.totalorder %s65, 0
      %s68 = sadd.s32 %s67, 1
      %s69 = scalar_select %p66, %s67, %s68
      %p72 = pneg %p66
      %p73 = scmp.eq.s32.totalorder %s8, 3
      %p74 = por %p72, %p73
      %p75 = scmp.ne.s32.totalorder %s67, %s70
      %p76 = scmp.eq.s32.totalorder %s8, 0
      %p77 = por %p75, %p76
      %p78 = scmp.ne.s32.totalorder %s67, %s70
      %p79 = scmp.eq.s32.totalorder %s13, 3
      %p80 = por %p78, %p79
      %p81 = scmp.ne.s32.totalorder %s70, %s71
      %p82 = scmp.eq.s32.totalorder %s13, 0
      %p83 = por %p81, %p82
      %p84 = scmp.ne.s32.totalorder %s70, %s71
      %p85 = scmp.eq.s32.totalorder %s14, 3
      %p86 = por %p84, %p85
      %p88 = scmp.ne.s32.totalorder %s71, %s87
      %p89 = scmp.eq.s32.totalorder %s14, 0
      %p90 = por %p88, %p89
      %s91 = ssub.s32 %s15, %s34
      %s92 = ssub.s32 %s16, %s30
      %s93 = sor.u32 %s91, %s92
      %p94 = scmp.eq.s32.totalorder %s93, 0
      %s96 = sadd.s32 %s95, 1
      %s97 = scalar_select %p94, %s95, %s96
      %p100 = pneg %p94
      %p101 = scmp.eq.s32.totalorder %s8, 3
      %p102 = por %p100, %p101
      %p103 = scmp.ne.s32.totalorder %s95, %s98
      %p104 = scmp.eq.s32.totalorder %s8, 0
      %p105 = por %p103, %p104
      %p106 = scmp.ne.s32.totalorder %s95, %s98
      %p107 = scmp.eq.s32.totalorder %s13, 3
      %p108 = por %p106, %p107
      %p109 = scmp.ne.s32.totalorder %s98, %s99
      %p110 = scmp.eq.s32.totalorder %s13, 0
      %p111 = por %p109, %p110
      %p112 = scmp.ne.s32.totalorder %s98, %s99
      %p113 = scmp.eq.s32.totalorder %s14, 3
      %p114 = por %p112, %p113
      %p116 = scmp.ne.s32.totalorder %s99, %s115
      %p117 = scmp.eq.s32.totalorder %s14, 0
      %p118 = por %p116, %p117
      %p119 = scmp.le.s32.totalorder 1, %s8
      %p120 = scmp.lt.s32.totalorder %s8, 5
      %p121 = pnand %p119, %p120
      %p122 = pneg %p121
      // Predicated region
      $region9: #{dcp_dec_forward.10} parent=5 // pred_check
        _
      $region10: #{dcp_dec_forward.10} parent=5 // pred_check_branch
        %124 = sbr.rel (%p121) target = $region12
      $region11: #{dcp_dec_forward.10} parent=5 // pred_region
        %s125 = ssub.s32 %s8, 1
      $region12: #{dcp_dec_forward.10} parent=5 // pred_fallthru
        _
      %p126 = scmp.lt.s32.totalorder %s8, 4
      // Predicated region
      $region13: #{dcp_dec_forward.10} parent=5 // pred_check
        %p127 = pneg %p126
      $region14: #{dcp_dec_forward.10} parent=5 // pred_check_branch
        %129 = sbr.rel (%p127) target = $region16
      $region15: #{dcp_dec_forward.10} parent=5 // pred_region
        // Predicated region
        $region17: #{dcp_dec_forward.10} parent=15 // pred_check
          %p130 = pneg %p49
        $region18: #{dcp_dec_forward.10} parent=15 // pred_check_branch
          %132 = sbr.rel (%p130) target = $region20
        $region19: #{dcp_dec_forward.10} parent=15 // pred_region
          %s133 = sand.u32 %s39, 1
          %s134 = sand.u32 %s39, 1
          %s135 = smul.addr %s134, 128
          %s136 = scalar_lea.vmem [#allocation3], %s135
          %s137 = smul.u32 16, %s15
          %s138 = smul.addr %s137, 2
          %s139 = sadd.s32 %s17, %s138
          %s140 = smul.addr %s139, 8
          %s141 = scalar_lea.vmem %s0, %s140
          // Predicated region
          $region21: #{dcp_dec_forward.10} parent=19 // pred_check
            _
          $region22: #{dcp_dec_forward.10} parent=19 // pred_check_branch
            %143 = sbr.rel (0) target = $region24
          $region23: #{dcp_dec_forward.10} parent=19 // pred_region
            // Predicated region
            $region25: #{dcp_dec_forward.10} parent=23 // pred_check
              _
            $region26: #{dcp_dec_forward.10} parent=23 // pred_check_branch
              %145 = sbr.rel (0) target = $region28
            $region27: #{dcp_dec_forward.10} parent=23 // pred_region
              // Predicated region
              $region40: #{dcp_dec_forward.10} parent=27 // pred_check
                _
              $region41: #{dcp_dec_forward.10} parent=27 // pred_check_branch
                %191 = sbr.rel (0) target = $region43
              $region42: #{dcp_dec_forward.10} parent=27 // pred_region
                loop: start=0, step=1, limit=1
                $region44: #{dcp_dec_forward.10} parent=42 // loop_pre_header
                  _
                $region45: #{dcp_dec_forward.10} parent=42 // loop_header
                  %s193 = sphi 0, %s197
                  %p194 = scmp.ge.s32.totalorder %s193, 1
                  %s198 = sphi %s141, %s141
                  %s199 = sphi %s136, %s136
                $region46: #{dcp_dec_forward.10} parent=42 // loop_header_branch
                  %196 = sbr.rel (%p194) target = $region50
                $region47: #{dcp_dec_forward.10} parent=42 // loop_body
                  %v200 = vld [vmem:[%s198] sm:$0xff]
                  %201 = vst [vmem:[%s199] sm:$0xff] %v200
                  %v202 = vld [vmem:[%s198 + $0x10] sm:$0xff]
                  %203 = vst [vmem:[%s199 + $0x8] sm:$0xff] %v202
                  %v204 = vld [vmem:[%s198 + $0x20] sm:$0xff]
                  %205 = vst [vmem:[%s199 + $0x10] sm:$0xff] %v204
                  %v206 = vld [vmem:[%s198 + $0x30] sm:$0xff]
                  %207 = vst [vmem:[%s199 + $0x18] sm:$0xff] %v206
                  %v208 = vld [vmem:[%s198 + $0x40] sm:$0xff]
                  %209 = vst [vmem:[%s199 + $0x20] sm:$0xff] %v208
                  %v210 = vld [vmem:[%s198 + $0x50] sm:$0xff]
                  %211 = vst [vmem:[%s199 + $0x28] sm:$0xff] %v210
                  %v212 = vld [vmem:[%s198 + $0x60] sm:$0xff]
                  %213 = vst [vmem:[%s199 + $0x30] sm:$0xff] %v212
                  %v214 = vld [vmem:[%s198 + $0x70] sm:$0xff]
                  %215 = vst [vmem:[%s199 + $0x38] sm:$0xff] %v214
                  %v216 = vld [vmem:[%s198 + $0x80] sm:$0xff]
                  %217 = vst [vmem:[%s199 + $0x40] sm:$0xff] %v216
                  %v218 = vld [vmem:[%s198 + $0x90] sm:$0xff]
                  %219 = vst [vmem:[%s199 + $0x48] sm:$0xff] %v218
                  %v220 = vld [vmem:[%s198 + $0xa0] sm:$0xff]
                  %221 = vst [vmem:[%s199 + $0x50] sm:$0xff] %v220
                  %v222 = vld [vmem:[%s198 + $0xb0] sm:$0xff]
                  %223 = vst [vmem:[%s199 + $0x58] sm:$0xff] %v222
                  %v224 = vld [vmem:[%s198 + $0xc0] sm:$0xff]
                  %225 = vst [vmem:[%s199 + $0x60] sm:$0xff] %v224
                  %v226 = vld [vmem:[%s198 + $0xd0] sm:$0xff]
                  %227 = vst [vmem:[%s199 + $0x68] sm:$0xff] %v226
                  %v228 = vld [vmem:[%s198 + $0xe0] sm:$0xff]
                  %229 = vst [vmem:[%s199 + $0x70] sm:$0xff] %v228
                  %v230 = vld [vmem:[%s198 + $0xf0] sm:$0xff]
                  %231 = vst [vmem:[%s199 + $0x78] sm:$0xff] %v230
                $region48: #{dcp_dec_forward.10} parent=42 // loop_footer
                  %s197 = sadd.s32 1, %s193
                $region49: #{dcp_dec_forward.10} parent=42 // loop_footer_branch
                  %192 = sbr.rel target = $region45
                $region50: #{dcp_dec_forward.10} parent=42 // loop_exit
                  _
              $region43: #{dcp_dec_forward.10} parent=27 // pred_fallthru
                _
              // Predicated region
              $region51: #{dcp_dec_forward.10} parent=27 // pred_check
                _
              $region52: #{dcp_dec_forward.10} parent=27 // pred_check_branch
                %233 = sbr.rel target = $region54
              $region53: #{dcp_dec_forward.10} parent=27 // pred_region
                _
              $region54: #{dcp_dec_forward.10} parent=27 // pred_fallthru
                _
            $region28: #{dcp_dec_forward.10} parent=23 // pred_fallthru
              _
            // Predicated region
            $region29: #{dcp_dec_forward.10} parent=23 // pred_check
              _
            $region30: #{dcp_dec_forward.10} parent=23 // pred_check_branch
              %147 = sbr.rel target = $region32
            $region31: #{dcp_dec_forward.10} parent=23 // pred_region
              %s149 = ssub.s32 256, 1
              loop: start=0, step=1, limit=1
              $region33: #{dcp_dec_forward.10} parent=31 // loop_pre_header
                _
              $region34: #{dcp_dec_forward.10} parent=31 // loop_header
                %s151 = sphi 0, %s155
                %p152 = scmp.ge.s32.totalorder %s151, 1
                %s156 = sphi %s141, %s141
                %s157 = sphi %s136, %s136
              $region35: #{dcp_dec_forward.10} parent=31 // loop_header_branch
                %154 = sbr.rel (%p152) target = $region39
              $region36: #{dcp_dec_forward.10} parent=31 // loop_body
                %v158 = vld [vmem:[%s156] sm:%s149]
                %159 = vst [vmem:[%s157] sm:%s149] %v158
                %v160 = vld [vmem:[%s156 + $0x10] sm:%s149]
                %161 = vst [vmem:[%s157 + $0x8] sm:%s149] %v160
                %v162 = vld [vmem:[%s156 + $0x20] sm:%s149]
                %163 = vst [vmem:[%s157 + $0x10] sm:%s149] %v162
                %v164 = vld [vmem:[%s156 + $0x30] sm:%s149]
                %165 = vst [vmem:[%s157 + $0x18] sm:%s149] %v164
                %v166 = vld [vmem:[%s156 + $0x40] sm:%s149]
                %167 = vst [vmem:[%s157 + $0x20] sm:%s149] %v166
                %v168 = vld [vmem:[%s156 + $0x50] sm:%s149]
                %169 = vst [vmem:[%s157 + $0x28] sm:%s149] %v168
                %v170 = vld [vmem:[%s156 + $0x60] sm:%s149]
                %171 = vst [vmem:[%s157 + $0x30] sm:%s149] %v170
                %v172 = vld [vmem:[%s156 + $0x70] sm:%s149]
                %173 = vst [vmem:[%s157 + $0x38] sm:%s149] %v172
                %v174 = vld [vmem:[%s156 + $0x80] sm:%s149]
                %175 = vst [vmem:[%s157 + $0x40] sm:%s149] %v174
                %v176 = vld [vmem:[%s156 + $0x90] sm:%s149]
                %177 = vst [vmem:[%s157 + $0x48] sm:%s149] %v176
                %v178 = vld [vmem:[%s156 + $0xa0] sm:%s149]
                %179 = vst [vmem:[%s157 + $0x50] sm:%s149] %v178
                %v180 = vld [vmem:[%s156 + $0xb0] sm:%s149]
                %181 = vst [vmem:[%s157 + $0x58] sm:%s149] %v180
                %v182 = vld [vmem:[%s156 + $0xc0] sm:%s149]
                %183 = vst [vmem:[%s157 + $0x60] sm:%s149] %v182
                %v184 = vld [vmem:[%s156 + $0xd0] sm:%s149]
                %185 = vst [vmem:[%s157 + $0x68] sm:%s149] %v184
                %v186 = vld [vmem:[%s156 + $0xe0] sm:%s149]
                %187 = vst [vmem:[%s157 + $0x70] sm:%s149] %v186
                %v188 = vld [vmem:[%s156 + $0xf0] sm:%s149]
                %189 = vst [vmem:[%s157 + $0x78] sm:%s149] %v188
              $region37: #{dcp_dec_forward.10} parent=31 // loop_footer
                %s155 = sadd.s32 1, %s151
              $region38: #{dcp_dec_forward.10} parent=31 // loop_footer_branch
                %150 = sbr.rel target = $region34
              $region39: #{dcp_dec_forward.10} parent=31 // loop_exit
                _
            $region32: #{dcp_dec_forward.10} parent=23 // pred_fallthru
              _
          $region24: #{dcp_dec_forward.10} parent=19 // pred_fallthru
            _
          %234 = vnop
        $region20: #{dcp_dec_forward.10} parent=15 // pred_fallthru
          _
        // Predicated region
        $region55: #{dcp_dec_forward.10} parent=15 // pred_check
          %p235 = pneg %p77
        $region56: #{dcp_dec_forward.10} parent=15 // pred_check_branch
          %237 = sbr.rel (%p235) target = $region58
        $region57: #{dcp_dec_forward.10} parent=15 // pred_region
          %s238 = smul.u32 16, %s17
          %p239 = scmp.lt.s32.totalorder %s238, 31
          %s240 = scalar_select %p239, %s238, 31
          %p241 = scmp.lt.s32.totalorder %s16, 0
          %s242 = scalar_select %p241, %s16, 0
          %s243 = sadd.s32 %s242, %s240
          %s244 = smul.addr %s243, 8
          %s245 = scalar_lea.vmem %s1, %s244
          %s246 = smul.u32 16, %s17
        $region58: #{dcp_dec_forward.10} parent=15 // pred_fallthru
          _
      $region16: #{dcp_dec_forward.10} parent=5 // pred_fallthru
        _
      %p247 = scmp.le.s32.totalorder 1, %s8
      %p248 = scmp.lt.s32.totalorder %s8, 5
      %p249 = pnand %p247, %p248
      %p250 = pneg %p249
      // Predicated region
      $region59: #{dcp_dec_forward.10} parent=5 // pred_check
        _
      $region60: #{dcp_dec_forward.10} parent=5 // pred_check_branch
        %252 = sbr.rel (%p249) target = $region62
      $region61: #{dcp_dec_forward.10} parent=5 // pred_region
        %s253 = ssub.s32 %s8, 1
        %s254 = sand.u32 %s42, 1
        %s255 = sand.u32 %s42, 1
        %s256 = smul.addr %s255, 128
        %s257 = scalar_lea.vmem [#allocation3], %s256
        // Predicated region
        $region63: #{dcp_dec_forward.10} parent=61 // pred_check
          %p258 = pneg %p55
        $region64: #{dcp_dec_forward.10} parent=61 // pred_check_branch
          %260 = sbr.rel (%p258) target = $region66
        $region65: #{dcp_dec_forward.10} parent=61 // pred_region
          _
        $region66: #{dcp_dec_forward.10} parent=61 // pred_fallthru
          _
        %s261 = sand.u32 %s42, 1
        %s262 = sand.u32 %s42, 1
        %s263 = smul.addr %s262, 128
        %s264 = scalar_lea.vmem [#allocation3], %s263
        %p265 = pneg %p55
        %p266 = pneg %p52
        %s267 = smul.u32 16, %s20
        %p268 = scmp.lt.s32.totalorder %s267, 31
        %s269 = scalar_select %p268, %s267, 31
        %p270 = scmp.lt.s32.totalorder %s19, 0
        %s271 = scalar_select %p270, %s19, 0
        %s272 = sadd.s32 %s271, %s269
        %s273 = smul.addr %s272, 8
        %s274 = scalar_lea.vmem %s1, %s273
        %p275 = pneg %p83
        %p276 = pneg %p80
        %p277 = pneg %p111
        %p278 = pneg %p108
        %s279 = smul.u32 16, %s18
        %p280 = scmp.lt.s32.totalorder %s279, 31
        %s281 = scalar_select %p280, %s279, 31
        %p282 = scmp.lt.s32.totalorder %s19, 0
        %s283 = scalar_select %p282, %s19, 0
        %s284 = sadd.s32 %s283, %s281
        %s285 = smul.addr %s284, 8
        %s286 = scalar_lea.vmem %s2, %s285
        %s287 = smul.u32 16, %s18
        %s288 = smul.u32 16, %s20
        %p289 = scmp.lt.s32.totalorder %s288, 31
        %s290 = scalar_select %p289, %s288, 31
        %p291 = scmp.lt.s32.totalorder %s19, 0
        %s292 = scalar_select %p291, %s19, 0
        %s293 = sadd.s32 %s292, %s290
        %s294 = smul.addr %s293, 8
        %s295 = scalar_lea.vmem %s1, %s294
        %s296 = smul.u32 16, %s20
        %s297 = smul.u32 16, %s18
        %p298 = scmp.lt.s32.totalorder %s297, 31
        %s299 = scalar_select %p298, %s297, 31
        %p300 = scmp.lt.s32.totalorder %s19, 0
        %s301 = scalar_select %p300, %s19, 0
        %s302 = sadd.s32 %s301, %s299
        %s303 = smul.addr %s302, 8
        %s304 = scalar_lea.vmem %s2, %s303
        %s305 = smul.u32 16, %s18
        %p306 = scmp.eq.s32.totalorder %s20, 0
        // Predicated region
        $region67: #{dcp_dec_forward.10} parent=61 // pred_check
          %p307 = pneg %p306
        $region68: #{dcp_dec_forward.10} parent=61 // pred_check_branch
          %309 = sbr.rel (%p307) target = $region70
        $region69: #{dcp_dec_forward.10} parent=61 // pred_region
          %vm310 = vcmask 130048
          %311 = vst.msk [vmem:[#allocation2] sm:$0xff] %vm310, 0.0
          %312 = vst.msk [vmem:[#allocation2 + $0x8] sm:$0xff] %vm310, 0.0
          %313 = vst.msk [vmem:[#allocation2 + $0x10] sm:$0xff] %vm310, 0.0
          %314 = vst.msk [vmem:[#allocation2 + $0x18] sm:$0xff] %vm310, 0.0
          %315 = vst.msk [vmem:[#allocation2 + $0x20] sm:$0xff] %vm310, 0.0
          %316 = vst.msk [vmem:[#allocation2 + $0x28] sm:$0xff] %vm310, 0.0
          %317 = vst.msk [vmem:[#allocation2 + $0x30] sm:$0xff] %vm310, 0.0
          %318 = vst.msk [vmem:[#allocation2 + $0x38] sm:$0xff] %vm310, 0.0
          %319 = vst.msk [vmem:[#allocation2 + $0x40] sm:$0xff] %vm310, 0.0
          %320 = vst.msk [vmem:[#allocation2 + $0x48] sm:$0xff] %vm310, 0.0
          %321 = vst.msk [vmem:[#allocation2 + $0x50] sm:$0xff] %vm310, 0.0
          %322 = vst.msk [vmem:[#allocation2 + $0x58] sm:$0xff] %vm310, 0.0
          %323 = vst.msk [vmem:[#allocation2 + $0x60] sm:$0xff] %vm310, 0.0
          %324 = vst.msk [vmem:[#allocation2 + $0x68] sm:$0xff] %vm310, 0.0
          %325 = vst.msk [vmem:[#allocation2 + $0x70] sm:$0xff] %vm310, 0.0
          %326 = vst.msk [vmem:[#allocation2 + $0x78] sm:$0xff] %vm310, 0.0
        $region70: #{dcp_dec_forward.10} parent=61 // pred_fallthru
          _
        %v327 = vld [vmem:[#allocation2] sm:$0xff]
        %v328 = vld [vmem:[#allocation2 + $0x8] sm:$0xff]
        %v329 = vld [vmem:[#allocation2 + $0x10] sm:$0xff]
        %v330 = vld [vmem:[#allocation2 + $0x18] sm:$0xff]
        %v331 = vld [vmem:[#allocation2 + $0x20] sm:$0xff]
        %v332 = vld [vmem:[#allocation2 + $0x28] sm:$0xff]
        %v333 = vld [vmem:[#allocation2 + $0x30] sm:$0xff]
        %v334 = vld [vmem:[#allocation2 + $0x38] sm:$0xff]
        %v335 = vld [vmem:[#allocation2 + $0x40] sm:$0xff]
        %v336 = vld [vmem:[#allocation2 + $0x48] sm:$0xff]
        %v337 = vld [vmem:[#allocation2 + $0x50] sm:$0xff]
        %v338 = vld [vmem:[#allocation2 + $0x58] sm:$0xff]
        %v339 = vld [vmem:[#allocation2 + $0x60] sm:$0xff]
        %v340 = vld [vmem:[#allocation2 + $0x68] sm:$0xff]
        %v341 = vld [vmem:[#allocation2 + $0x70] sm:$0xff]
        %v342 = vld [vmem:[#allocation2 + $0x78] sm:$0xff]
        %v343 = vld [vmem:[%s257] sm:$0xff]
        %v344 = vld [vmem:[%s257 + $0x8] sm:$0xff]
        %v345 = vld [vmem:[%s257 + $0x10] sm:$0xff]
        %v346 = vld [vmem:[%s257 + $0x18] sm:$0xff]
        %v347 = vld [vmem:[%s257 + $0x20] sm:$0xff]
        %v348 = vld [vmem:[%s257 + $0x28] sm:$0xff]
        %v349 = vld [vmem:[%s257 + $0x30] sm:$0xff]
        %v350 = vld [vmem:[%s257 + $0x38] sm:$0xff]
        %v351 = vld [vmem:[%s257 + $0x40] sm:$0xff]
        %v352 = vld [vmem:[%s257 + $0x48] sm:$0xff]
        %v353 = vld [vmem:[%s257 + $0x50] sm:$0xff]
        %v354 = vld [vmem:[%s257 + $0x58] sm:$0xff]
        %v355 = vld [vmem:[%s257 + $0x60] sm:$0xff]
        %v356 = vld [vmem:[%s257 + $0x68] sm:$0xff]
        %v357 = vld [vmem:[%s257 + $0x70] sm:$0xff]
        %v358 = vld [vmem:[%s257 + $0x78] sm:$0xff]
        %v359 = vld [vmem:[%s295] sm:$0xff]
        %v360 = vld [vmem:[%s295 + $0x8] sm:$0xff]
        %v361 = vld [vmem:[%s295 + $0x10] sm:$0xff]
        %v362 = vld [vmem:[%s295 + $0x18] sm:$0xff]
        %v363 = vld [vmem:[%s295 + $0x20] sm:$0xff]
        %v364 = vld [vmem:[%s295 + $0x28] sm:$0xff]
        %v365 = vld [vmem:[%s295 + $0x30] sm:$0xff]
        %v366 = vld [vmem:[%s295 + $0x38] sm:$0xff]
        %v367 = vld [vmem:[%s295 + $0x40] sm:$0xff]
        %v368 = vld [vmem:[%s295 + $0x48] sm:$0xff]
        %v369 = vld [vmem:[%s295 + $0x50] sm:$0xff]
        %v370 = vld [vmem:[%s295 + $0x58] sm:$0xff]
        %v371 = vld [vmem:[%s295 + $0x60] sm:$0xff]
        %v372 = vld [vmem:[%s295 + $0x68] sm:$0xff]
        %v373 = vld [vmem:[%s295 + $0x70] sm:$0xff]
        %v374 = vld [vmem:[%s295 + $0x78] sm:$0xff]
        %375 = vmatprep.subr.mxu0 0.0
        %376 = vmatpush1.msra.mxu0 %v374
        %377 = vmatprep.subr.mxu0 0.0
        %378 = vmatpush1.msra.mxu0 %v373
        %379 = vmatprep.subr.mxu0 0.0
        %380 = vmatpush1.msra.mxu0 %v372
        %381 = vmatprep.subr.mxu0 0.0
        %382 = vmatpush1.msra.mxu0 %v371
        %383 = vmatprep.subr.mxu0 0.0
        %384 = vmatpush1.msra.mxu0 %v370
        %385 = vmatprep.subr.mxu0 0.0
        %386 = vmatpush1.msra.mxu0 %v369
        %387 = vmatprep.subr.mxu0 0.0
        %388 = vmatpush1.msra.mxu0 %v368
        %389 = vmatprep.subr.mxu0 0.0
        %390 = vmatpush1.msra.mxu0 %v367
        %391 = vmatprep.subr.mxu0 0.0
        %392 = vmatpush1.msra.mxu0 %v366
        %393 = vmatprep.subr.mxu0 0.0
        %394 = vmatpush1.msra.mxu0 %v365
        %395 = vmatprep.subr.mxu0 0.0
        %396 = vmatpush1.msra.mxu0 %v364
        %397 = vmatprep.subr.mxu0 0.0
        %398 = vmatpush1.msra.mxu0 %v363
        %399 = vmatprep.subr.mxu0 0.0
        %400 = vmatpush1.msra.mxu0 %v362
        %401 = vmatprep.subr.mxu0 0.0
        %402 = vmatpush1.msra.mxu0 %v361
        %403 = vmatprep.subr.mxu0 0.0
        %404 = vmatpush1.msra.mxu0 %v360
        %405 = vmatprep.subr.mxu0 0.0
        %406 = vmatpush1.msra.mxu0 %v359
        %407 = vmatprep.subr.mxu0 0.0
        %408 = vmatpush2.msra.mxu0 0.0
        %409 = vmatprep.subr.mxu0 0.0
        %410 = vmatpush2.msra.mxu0 0.0
        %411 = vmatprep.subr.mxu0 0.0
        %412 = vmatpush2.msra.mxu0 0.0
        %413 = vmatprep.subr.mxu0 0.0
        %414 = vmatpush2.msra.mxu0 0.0
        %415 = vmatprep.subr.mxu0 0.0
        %416 = vmatpush2.msra.mxu0 0.0
        %417 = vmatprep.subr.mxu0 0.0
        %418 = vmatpush2.msra.mxu0 0.0
        %419 = vmatprep.subr.mxu0 0.0
        %420 = vmatpush2.msra.mxu0 0.0
        %421 = vmatprep.subr.mxu0 0.0
        %422 = vmatpush2.msra.mxu0 0.0
        %423 = vmatprep.subr.mxu0 0.0
        %424 = vmatpush2.msra.mxu0 0.0
        %425 = vmatprep.subr.mxu0 0.0
        %426 = vmatpush2.msra.mxu0 0.0
        %427 = vmatprep.subr.mxu0 0.0
        %428 = vmatpush2.msra.mxu0 0.0
        %429 = vmatprep.subr.mxu0 0.0
        %430 = vmatpush2.msra.mxu0 0.0
        %431 = vmatprep.subr.mxu0 0.0
        %432 = vmatpush2.msra.mxu0 0.0
        %433 = vmatprep.subr.mxu0 0.0
        %434 = vmatpush2.msra.mxu0 0.0
        %435 = vmatprep.subr.mxu0 0.0
        %436 = vmatpush2.msra.mxu0 0.0
        %437 = vmatprep.subr.mxu0 0.0
        %438 = vmatpush2.msra.mxu0 0.0
        %439 = vmatprep.mubr.f32.mxu0 0.0
        %440 = vmatmul.mubr.f32.gmra.mxu0 %v343
        %v441 = vpop.f32.mrf.mxu0
        %v442 = vadd.f32 0.0, %v441
        %v443 = vpop.f32.mrf.mxu0
        %444 = vmatprep.mubr.f32.mxu0 0.0
        %445 = vmatmul.mubr.f32.gmra.mxu0 %v344
        %v446 = vpop.f32.mrf.mxu0
        %v447 = vadd.f32 0.0, %v446
        %v448 = vpop.f32.mrf.mxu0
        %449 = vmatprep.mubr.f32.mxu0 0.0
        %450 = vmatmul.mubr.f32.gmra.mxu0 %v345
        %v451 = vpop.f32.mrf.mxu0
        %v452 = vadd.f32 0.0, %v451
        %v453 = vpop.f32.mrf.mxu0
        %454 = vmatprep.mubr.f32.mxu0 0.0
        %455 = vmatmul.mubr.f32.gmra.mxu0 %v346
        %v456 = vpop.f32.mrf.mxu0
        %v457 = vadd.f32 0.0, %v456
        %v458 = vpop.f32.mrf.mxu0
        %459 = vmatprep.mubr.f32.mxu0 0.0
        %460 = vmatmul.mubr.f32.gmra.mxu0 %v347
        %v461 = vpop.f32.mrf.mxu0
        %v462 = vadd.f32 0.0, %v461
        %v463 = vpop.f32.mrf.mxu0
        %464 = vmatprep.mubr.f32.mxu0 0.0
        %465 = vmatmul.mubr.f32.gmra.mxu0 %v348
        %v466 = vpop.f32.mrf.mxu0
        %v467 = vadd.f32 0.0, %v466
        %v468 = vpop.f32.mrf.mxu0
        %469 = vmatprep.mubr.f32.mxu0 0.0
        %470 = vmatmul.mubr.f32.gmra.mxu0 %v349
        %v471 = vpop.f32.mrf.mxu0
        %v472 = vadd.f32 0.0, %v471
        %v473 = vpop.f32.mrf.mxu0
        %474 = vmatprep.mubr.f32.mxu0 0.0
        %475 = vmatmul.mubr.f32.gmra.mxu0 %v350
        %v476 = vpop.f32.mrf.mxu0
        %v477 = vadd.f32 0.0, %v476
        %v478 = vpop.f32.mrf.mxu0
        %479 = vmatprep.mubr.f32.mxu0 0.0
        %480 = vmatmul.mubr.f32.gmra.mxu0 %v351
        %v481 = vpop.f32.mrf.mxu0
        %v482 = vadd.f32 0.0, %v481
        %v483 = vpop.f32.mrf.mxu0
        %484 = vmatprep.mubr.f32.mxu0 0.0
        %485 = vmatmul.mubr.f32.gmra.mxu0 %v352
        %v486 = vpop.f32.mrf.mxu0
        %v487 = vadd.f32 0.0, %v486
        %v488 = vpop.f32.mrf.mxu0
        %489 = vmatprep.mubr.f32.mxu0 0.0
        %490 = vmatmul.mubr.f32.gmra.mxu0 %v353
        %v491 = vpop.f32.mrf.mxu0
        %v492 = vadd.f32 0.0, %v491
        %v493 = vpop.f32.mrf.mxu0
        %494 = vmatprep.mubr.f32.mxu0 0.0
        %495 = vmatmul.mubr.f32.gmra.mxu0 %v354
        %v496 = vpop.f32.mrf.mxu0
        %v497 = vadd.f32 0.0, %v496
        %v498 = vpop.f32.mrf.mxu0
        %499 = vmatprep.mubr.f32.mxu0 0.0
        %500 = vmatmul.mubr.f32.gmra.mxu0 %v355
        %v501 = vpop.f32.mrf.mxu0
        %v502 = vadd.f32 0.0, %v501
        %v503 = vpop.f32.mrf.mxu0
        %504 = vmatprep.mubr.f32.mxu0 0.0
        %505 = vmatmul.mubr.f32.gmra.mxu0 %v356
        %v506 = vpop.f32.mrf.mxu0
        %v507 = vadd.f32 0.0, %v506
        %v508 = vpop.f32.mrf.mxu0
        %509 = vmatprep.mubr.f32.mxu0 0.0
        %510 = vmatmul.mubr.f32.gmra.mxu0 %v357
        %v511 = vpop.f32.mrf.mxu0
        %v512 = vadd.f32 0.0, %v511
        %v513 = vpop.f32.mrf.mxu0
        %514 = vmatprep.mubr.f32.mxu0 0.0
        %515 = vmatmul.mubr.f32.gmra.mxu0 %v358
        %v516 = vpop.f32.mrf.mxu0
        %v517 = vadd.f32 0.0, %v516
        %v518 = vpop.f32.mrf.mxu0
        %519 = vdwg.mxu0
        %v520 = vadd.f32 %v327, %v442
        %v521 = vadd.f32 %v328, %v447
        %v522 = vadd.f32 %v329, %v452
        %v523 = vadd.f32 %v330, %v457
        %v524 = vadd.f32 %v331, %v462
        %v525 = vadd.f32 %v332, %v467
        %v526 = vadd.f32 %v333, %v472
        %v527 = vadd.f32 %v334, %v477
        %v528 = vadd.f32 %v335, %v482
        %v529 = vadd.f32 %v336, %v487
        %v530 = vadd.f32 %v337, %v492
        %v531 = vadd.f32 %v338, %v497
        %v532 = vadd.f32 %v339, %v502
        %v533 = vadd.f32 %v340, %v507
        %v534 = vadd.f32 %v341, %v512
        %v535 = vadd.f32 %v342, %v517
        %vm536 = vcmask 130048
        %537 = vst.msk [vmem:[#allocation2] sm:$0xff] %vm536, %v520
        %538 = vst.msk [vmem:[#allocation2 + $0x8] sm:$0xff] %vm536, %v521
        %539 = vst.msk [vmem:[#allocation2 + $0x10] sm:$0xff] %vm536, %v522
        %540 = vst.msk [vmem:[#allocation2 + $0x18] sm:$0xff] %vm536, %v523
        %541 = vst.msk [vmem:[#allocation2 + $0x20] sm:$0xff] %vm536, %v524
        %542 = vst.msk [vmem:[#allocation2 + $0x28] sm:$0xff] %vm536, %v525
        %543 = vst.msk [vmem:[#allocation2 + $0x30] sm:$0xff] %vm536, %v526
        %544 = vst.msk [vmem:[#allocation2 + $0x38] sm:$0xff] %vm536, %v527
        %545 = vst.msk [vmem:[#allocation2 + $0x40] sm:$0xff] %vm536, %v528
        %546 = vst.msk [vmem:[#allocation2 + $0x48] sm:$0xff] %vm536, %v529
        %547 = vst.msk [vmem:[#allocation2 + $0x50] sm:$0xff] %vm536, %v530
        %548 = vst.msk [vmem:[#allocation2 + $0x58] sm:$0xff] %vm536, %v531
        %549 = vst.msk [vmem:[#allocation2 + $0x60] sm:$0xff] %vm536, %v532
        %550 = vst.msk [vmem:[#allocation2 + $0x68] sm:$0xff] %vm536, %v533
        %551 = vst.msk [vmem:[#allocation2 + $0x70] sm:$0xff] %vm536, %v534
        %552 = vst.msk [vmem:[#allocation2 + $0x78] sm:$0xff] %vm536, %v535
        %p553 = scmp.eq.s32.totalorder %s20, 1
        // Predicated region
        $region71: #{dcp_dec_forward.10} parent=61 // pred_check
          %p554 = pneg %p553
        $region72: #{dcp_dec_forward.10} parent=61 // pred_check_branch
          %556 = sbr.rel (%p554) target = $region74
        $region73: #{dcp_dec_forward.10} parent=61 // pred_region
          %v557 = vld [vmem:[#allocation2] sm:$0xff]
          %v558 = vld [vmem:[#allocation2 + $0x8] sm:$0xff]
          %v559 = vld [vmem:[#allocation2 + $0x10] sm:$0xff]
          %v560 = vld [vmem:[#allocation2 + $0x18] sm:$0xff]
          %v561 = vld [vmem:[#allocation2 + $0x20] sm:$0xff]
          %v562 = vld [vmem:[#allocation2 + $0x28] sm:$0xff]
          %v563 = vld [vmem:[#allocation2 + $0x30] sm:$0xff]
          %v564 = vld [vmem:[#allocation2 + $0x38] sm:$0xff]
          %v565 = vld [vmem:[#allocation2 + $0x40] sm:$0xff]
          %v566 = vld [vmem:[#allocation2 + $0x48] sm:$0xff]
          %v567 = vld [vmem:[#allocation2 + $0x50] sm:$0xff]
          %v568 = vld [vmem:[#allocation2 + $0x58] sm:$0xff]
          %v569 = vld [vmem:[#allocation2 + $0x60] sm:$0xff]
          %v570 = vld [vmem:[#allocation2 + $0x68] sm:$0xff]
          %v571 = vld [vmem:[#allocation2 + $0x70] sm:$0xff]
          %v572 = vld [vmem:[#allocation2 + $0x78] sm:$0xff]
          %573 = vst.msk [vmem:[%s304] sm:$0xff] %vm536, %v557
          %574 = vst.msk [vmem:[%s304 + $0x8] sm:$0xff] %vm536, %v558
          %575 = vst.msk [vmem:[%s304 + $0x10] sm:$0xff] %vm536, %v559
          %576 = vst.msk [vmem:[%s304 + $0x18] sm:$0xff] %vm536, %v560
          %577 = vst.msk [vmem:[%s304 + $0x20] sm:$0xff] %vm536, %v561
          %578 = vst.msk [vmem:[%s304 + $0x28] sm:$0xff] %vm536, %v562
          %579 = vst.msk [vmem:[%s304 + $0x30] sm:$0xff] %vm536, %v563
          %580 = vst.msk [vmem:[%s304 + $0x38] sm:$0xff] %vm536, %v564
          %581 = vst.msk [vmem:[%s304 + $0x40] sm:$0xff] %vm536, %v565
          %582 = vst.msk [vmem:[%s304 + $0x48] sm:$0xff] %vm536, %v566
          %583 = vst.msk [vmem:[%s304 + $0x50] sm:$0xff] %vm536, %v567
          %584 = vst.msk [vmem:[%s304 + $0x58] sm:$0xff] %vm536, %v568
          %585 = vst.msk [vmem:[%s304 + $0x60] sm:$0xff] %vm536, %v569
          %586 = vst.msk [vmem:[%s304 + $0x68] sm:$0xff] %vm536, %v570
          %587 = vst.msk [vmem:[%s304 + $0x70] sm:$0xff] %vm536, %v571
          %588 = vst.msk [vmem:[%s304 + $0x78] sm:$0xff] %vm536, %v572
        $region74: #{dcp_dec_forward.10} parent=61 // pred_fallthru
          _
        %s589 = smul.u32 16, %s18
        %p590 = scmp.lt.s32.totalorder %s589, 31
        %s591 = scalar_select %p590, %s589, 31
        %p592 = scmp.lt.s32.totalorder %s19, 0
        %s593 = scalar_select %p592, %s19, 0
        %s594 = sadd.s32 %s593, %s591
        %s595 = smul.addr %s594, 8
        %s596 = scalar_lea.vmem %s2, %s595
        // Predicated region
        $region75: #{dcp_dec_forward.10} parent=61 // pred_check
          %p597 = pneg %p108
        $region76: #{dcp_dec_forward.10} parent=61 // pred_check_branch
          %599 = sbr.rel (%p597) target = $region78
        $region77: #{dcp_dec_forward.10} parent=61 // pred_region
          %s600 = smul.u32 16, %s18
        $region78: #{dcp_dec_forward.10} parent=61 // pred_fallthru
          _
      $region62: #{dcp_dec_forward.10} parent=5 // pred_fallthru
        _
      %p601 = scmp.le.s32.totalorder 2, %s8
      // Predicated region
      $region79: #{dcp_dec_forward.10} parent=5 // pred_check
        %p602 = pneg %p601
      $region80: #{dcp_dec_forward.10} parent=5 // pred_check_branch
        %604 = sbr.rel (%p602) target = $region82
      $region81: #{dcp_dec_forward.10} parent=5 // pred_region
        %s605 = ssub.s32 %s8, 2
        // Predicated region
        $region83: #{dcp_dec_forward.10} parent=81 // pred_check
          %p606 = pneg %p114
        $region84: #{dcp_dec_forward.10} parent=81 // pred_check_branch
          %608 = sbr.rel (%p606) target = $region86
        $region85: #{dcp_dec_forward.10} parent=81 // pred_region
          %s609 = smul.u32 16, %s21
          %p610 = scmp.lt.s32.totalorder %s609, 31
          %s611 = scalar_select %p610, %s609, 31
          %p612 = scmp.lt.s32.totalorder %s22, 0
          %s613 = scalar_select %p612, %s22, 0
          %s614 = sadd.s32 %s613, %s611
          %s615 = smul.addr %s614, 8
          %s616 = scalar_lea.vmem %s2, %s615
        $region86: #{dcp_dec_forward.10} parent=81 // pred_fallthru
          _
      $region82: #{dcp_dec_forward.10} parent=5 // pred_fallthru
        _
    $region6: #{dcp_dec_forward.10} parent=1 // loop_footer
      %s12 = sadd.s32 1, %s8
    $region7: #{dcp_dec_forward.10} parent=1 // loop_footer_branch
      %7 = sbr.rel target = $region3
    $region8: #{dcp_dec_forward.10} parent=1 // loop_exit
      _

// kernel: dcp_dec_forward.7
$region0: #{dcp_dec_forward.7}
  #allocation0 [shape = 'u32[]', space=smem, size = 0x4, offset = 0x4, fixed_abs, tag = 'smem constant byte address 0x4 - core index']
  #allocation1 [shape = 'u32[144,128]{1,0:T(1,128)}', space=vmem, size = 0x12000, scoped, tag = 'internal scratch']
  %s0 = inlined_call_operand.vmem [shape: f32[256,64], index: 0, kind: input, shape index: {}]
  %s1 = inlined_call_operand.vmem [shape: f32[64,128], index: 1, kind: input, shape index: {}]
  %s2 = inlined_call_operand.vmem [shape: f32[1,128], index: 2, kind: input, shape index: {}]
  %s3 = inlined_call_operand.vmem [shape: f32[128,64], index: 3, kind: input, shape index: {}]
  %s4 = inlined_call_operand.vmem [shape: f32[1,64], index: 4, kind: input, shape index: {}]
  %s5 = inlined_call_operand.vmem [shape: f32[64,16], index: 5, kind: input, shape index: {}]
  %s6 = inlined_call_operand.vmem [shape: f32[1,16], index: 6, kind: input, shape index: {}]
  %s7 = inlined_call_operand.vmem [shape: f32[16,64], index: 7, kind: input, shape index: {}]
  %s8 = inlined_call_operand.vmem [shape: f32[1,64], index: 8, kind: input, shape index: {}]
  %s9 = inlined_call_operand.vmem [shape: f32[64,128], index: 9, kind: input, shape index: {}]
  %s10 = inlined_call_operand.vmem [shape: f32[1,128], index: 10, kind: input, shape index: {}]
  %s11 = inlined_call_operand.vmem [shape: f32[128,64], index: 11, kind: input, shape index: {}]
  %s12 = inlined_call_operand.vmem [shape: f32[1,64], index: 12, kind: input, shape index: {}]
  %s13 = inlined_call_operand.vmem [shape: f32[4,16], index: 13, kind: input, shape index: {}]
  %s14 = inlined_call_operand.vmem [shape: f32[1,4], index: 14, kind: input, shape index: {}]
  %s15 = inlined_call_operand.vmem [shape: f32[256,64], index: 15, kind: output, shape index: {0}]
  %s16 = inlined_call_operand.vmem [shape: f32[256,16], index: 16, kind: output, shape index: {1}]
  %s17 = inlined_call_operand.vmem [shape: f32[256,4], index: 17, kind: output, shape index: {2}]
  %18 = xla_tuple %s15, %s16, %s17
  %s19 = sld [smem:[#allocation0]]
  $region109: #{dcp_dec_forward.7} parent=0
    _
  %s21 = ssub.s32 1, %s19
  %s22 = scalar_select 0, %s21, %s19
  loop: start=0, step=1, limit=4
  $region2: #{dcp_dec_forward.7} parent=0 // loop_pre_header
    _
  $region3: #{dcp_dec_forward.7} parent=0 // loop_header
    %s24 = sphi 0, %s28
    %p25 = scmp.ge.s32.totalorder %s24, 4
    %s34 = sphi 0, %s36
    %s37 = sphi 0, %s34
    %s38 = sphi 0, %s37
    %s54 = sphi 0, %s38
    %s58 = sphi 0, %s58
    %s60 = sphi 0, %s58
    %s61 = sphi 0, %s60
    %s75 = sphi 0, %s61
    %s79 = sphi 0, %s79
    %s81 = sphi 0, %s79
    %s82 = sphi 0, %s81
    %s96 = sphi 0, %s82
    %s100 = sphi 0, %s100
    %s102 = sphi 0, %s100
    %s103 = sphi 0, %s102
    %s117 = sphi 0, %s103
    %s121 = sphi 0, %s121
    %s123 = sphi 0, %s121
    %s124 = sphi 0, %s123
    %s138 = sphi 0, %s124
    %s142 = sphi 0, %s142
    %s144 = sphi 0, %s142
    %s145 = sphi 0, %s144
    %s159 = sphi 0, %s145
    %s163 = sphi 0, %s163
    %s165 = sphi 0, %s163
    %s166 = sphi 0, %s165
    %s180 = sphi 0, %s166
    %s184 = sphi 0, %s184
    %s186 = sphi 0, %s184
    %s187 = sphi 0, %s186
    %s201 = sphi 0, %s187
    %s205 = sphi 0, %s205
    %s207 = sphi 0, %s205
    %s208 = sphi 0, %s207
    %s222 = sphi 0, %s208
    %s226 = sphi 0, %s226
    %s228 = sphi 0, %s226
    %s229 = sphi 0, %s228
    %s243 = sphi 0, %s229
    %s247 = sphi 0, %s247
    %s249 = sphi 0, %s247
    %s250 = sphi 0, %s249
    %s264 = sphi 0, %s250
    %s268 = sphi 0, %s268
    %s270 = sphi 0, %s268
    %s271 = sphi 0, %s270
    %s285 = sphi 0, %s271
    %s289 = sphi 0, %s289
    %s291 = sphi 0, %s289
    %s292 = sphi 0, %s291
    %s306 = sphi 0, %s292
    %s310 = sphi 0, %s310
    %s312 = sphi 0, %s310
    %s313 = sphi 0, %s312
    %s327 = sphi 0, %s313
    %s331 = sphi 0, %s331
    %s333 = sphi 0, %s331
    %s334 = sphi 0, %s333
    %s348 = sphi 0, %s334
    %s354 = sphi 0, %s356
    %s357 = sphi 0, %s354
    %s358 = sphi 0, %s357
    %s374 = sphi 0, %s358
    %s380 = sphi 0, %s382
    %s383 = sphi 0, %s380
    %s384 = sphi 0, %s383
    %s400 = sphi 0, %s384
    %s406 = sphi 0, %s408
    %s409 = sphi 0, %s406
    %s410 = sphi 0, %s409
    %s426 = sphi 0, %s410
  $region4: #{dcp_dec_forward.7} parent=0 // loop_header_branch
    %27 = sbr.rel (%p25) target = $region8
  $region5: #{dcp_dec_forward.7} parent=0 // loop_body
    %s29 = ssub.s32 %s24, 1
    %s30 = ssub.s32 %s24, 2
    %s31 = sadd.s32 %s24, 1
    %s32 = ssub.s32 %s24, %s31
    %p33 = scmp.eq.s32.totalorder %s32, 0
    %s35 = sadd.s32 %s34, 1
    %s36 = scalar_select %p33, %s34, %s35
    %p39 = pneg %p33
    %p40 = scmp.eq.s32.totalorder %s24, 1
    %p41 = por %p39, %p40
    %p42 = scmp.ne.s32.totalorder %s34, %s37
    %p43 = scmp.eq.s32.totalorder %s24, 0
    %p44 = por %p42, %p43
    %p45 = scmp.ne.s32.totalorder %s34, %s37
    %p46 = scmp.eq.s32.totalorder %s29, 1
    %p47 = por %p45, %p46
    %p48 = scmp.ne.s32.totalorder %s37, %s38
    %p49 = scmp.eq.s32.totalorder %s29, 0
    %p50 = por %p48, %p49
    %p51 = scmp.ne.s32.totalorder %s37, %s38
    %p52 = scmp.eq.s32.totalorder %s30, 1
    %p53 = por %p51, %p52
    %p55 = scmp.ne.s32.totalorder %s38, %s54
    %p56 = scmp.eq.s32.totalorder %s30, 0
    %p57 = por %p55, %p56
    %s59 = sadd.s32 %s58, 1
    %p62 = scmp.eq.s32.totalorder %s24, 1
    %p63 = scmp.ne.s32.totalorder %s58, %s60
    %p64 = scmp.eq.s32.totalorder %s24, 0
    %p65 = por %p63, %p64
    %p66 = scmp.ne.s32.totalorder %s58, %s60
    %p67 = scmp.eq.s32.totalorder %s29, 1
    %p68 = por %p66, %p67
    %p69 = scmp.ne.s32.totalorder %s60, %s61
    %p70 = scmp.eq.s32.totalorder %s29, 0
    %p71 = por %p69, %p70
    %p72 = scmp.ne.s32.totalorder %s60, %s61
    %p73 = scmp.eq.s32.totalorder %s30, 1
    %p74 = por %p72, %p73
    %p76 = scmp.ne.s32.totalorder %s61, %s75
    %p77 = scmp.eq.s32.totalorder %s30, 0
    %p78 = por %p76, %p77
    %s80 = sadd.s32 %s79, 1
    %p83 = scmp.eq.s32.totalorder %s24, 1
    %p84 = scmp.ne.s32.totalorder %s79, %s81
    %p85 = scmp.eq.s32.totalorder %s24, 0
    %p86 = por %p84, %p85
    %p87 = scmp.ne.s32.totalorder %s79, %s81
    %p88 = scmp.eq.s32.totalorder %s29, 1
    %p89 = por %p87, %p88
    %p90 = scmp.ne.s32.totalorder %s81, %s82
    %p91 = scmp.eq.s32.totalorder %s29, 0
    %p92 = por %p90, %p91
    %p93 = scmp.ne.s32.totalorder %s81, %s82
    %p94 = scmp.eq.s32.totalorder %s30, 1
    %p95 = por %p93, %p94
    %p97 = scmp.ne.s32.totalorder %s82, %s96
    %p98 = scmp.eq.s32.totalorder %s30, 0
    %p99 = por %p97, %p98
    %s101 = sadd.s32 %s100, 1
    %p104 = scmp.eq.s32.totalorder %s24, 1
    %p105 = scmp.ne.s32.totalorder %s100, %s102
    %p106 = scmp.eq.s32.totalorder %s24, 0
    %p107 = por %p105, %p106
    %p108 = scmp.ne.s32.totalorder %s100, %s102
    %p109 = scmp.eq.s32.totalorder %s29, 1
    %p110 = por %p108, %p109
    %p111 = scmp.ne.s32.totalorder %s102, %s103
    %p112 = scmp.eq.s32.totalorder %s29, 0
    %p113 = por %p111, %p112
    %p114 = scmp.ne.s32.totalorder %s102, %s103
    %p115 = scmp.eq.s32.totalorder %s30, 1
    %p116 = por %p114, %p115
    %p118 = scmp.ne.s32.totalorder %s103, %s117
    %p119 = scmp.eq.s32.totalorder %s30, 0
    %p120 = por %p118, %p119
    %s122 = sadd.s32 %s121, 1
    %p125 = scmp.eq.s32.totalorder %s24, 1
    %p126 = scmp.ne.s32.totalorder %s121, %s123
    %p127 = scmp.eq.s32.totalorder %s24, 0
    %p128 = por %p126, %p127
    %p129 = scmp.ne.s32.totalorder %s121, %s123
    %p130 = scmp.eq.s32.totalorder %s29, 1
    %p131 = por %p129, %p130
    %p132 = scmp.ne.s32.totalorder %s123, %s124
    %p133 = scmp.eq.s32.totalorder %s29, 0
    %p134 = por %p132, %p133
    %p135 = scmp.ne.s32.totalorder %s123, %s124
    %p136 = scmp.eq.s32.totalorder %s30, 1
    %p137 = por %p135, %p136
    %p139 = scmp.ne.s32.totalorder %s124, %s138
    %p140 = scmp.eq.s32.totalorder %s30, 0
    %p141 = por %p139, %p140
    %s143 = sadd.s32 %s142, 1
    %p146 = scmp.eq.s32.totalorder %s24, 1
    %p147 = scmp.ne.s32.totalorder %s142, %s144
    %p148 = scmp.eq.s32.totalorder %s24, 0
    %p149 = por %p147, %p148
    %p150 = scmp.ne.s32.totalorder %s142, %s144
    %p151 = scmp.eq.s32.totalorder %s29, 1
    %p152 = por %p150, %p151
    %p153 = scmp.ne.s32.totalorder %s144, %s145
    %p154 = scmp.eq.s32.totalorder %s29, 0
    %p155 = por %p153, %p154
    %p156 = scmp.ne.s32.totalorder %s144, %s145
    %p157 = scmp.eq.s32.totalorder %s30, 1
    %p158 = por %p156, %p157
    %p160 = scmp.ne.s32.totalorder %s145, %s159
    %p161 = scmp.eq.s32.totalorder %s30, 0
    %p162 = por %p160, %p161
    %s164 = sadd.s32 %s163, 1
    %p167 = scmp.eq.s32.totalorder %s24, 1
    %p168 = scmp.ne.s32.totalorder %s163, %s165
    %p169 = scmp.eq.s32.totalorder %s24, 0
    %p170 = por %p168, %p169
    %p171 = scmp.ne.s32.totalorder %s163, %s165
    %p172 = scmp.eq.s32.totalorder %s29, 1
    %p173 = por %p171, %p172
    %p174 = scmp.ne.s32.totalorder %s165, %s166
    %p175 = scmp.eq.s32.totalorder %s29, 0
    %p176 = por %p174, %p175
    %p177 = scmp.ne.s32.totalorder %s165, %s166
    %p178 = scmp.eq.s32.totalorder %s30, 1
    %p179 = por %p177, %p178
    %p181 = scmp.ne.s32.totalorder %s166, %s180
    %p182 = scmp.eq.s32.totalorder %s30, 0
    %p183 = por %p181, %p182
    %s185 = sadd.s32 %s184, 1
    %p188 = scmp.eq.s32.totalorder %s24, 1
    %p189 = scmp.ne.s32.totalorder %s184, %s186
    %p190 = scmp.eq.s32.totalorder %s24, 0
    %p191 = por %p189, %p190
    %p192 = scmp.ne.s32.totalorder %s184, %s186
    %p193 = scmp.eq.s32.totalorder %s29, 1
    %p194 = por %p192, %p193
    %p195 = scmp.ne.s32.totalorder %s186, %s187
    %p196 = scmp.eq.s32.totalorder %s29, 0
    %p197 = por %p195, %p196
    %p198 = scmp.ne.s32.totalorder %s186, %s187
    %p199 = scmp.eq.s32.totalorder %s30, 1
    %p200 = por %p198, %p199
    %p202 = scmp.ne.s32.totalorder %s187, %s201
    %p203 = scmp.eq.s32.totalorder %s30, 0
    %p204 = por %p202, %p203
    %s206 = sadd.s32 %s205, 1
    %p209 = scmp.eq.s32.totalorder %s24, 1
    %p210 = scmp.ne.s32.totalorder %s205, %s207
    %p211 = scmp.eq.s32.totalorder %s24, 0
    %p212 = por %p210, %p211
    %p213 = scmp.ne.s32.totalorder %s205, %s207
    %p214 = scmp.eq.s32.totalorder %s29, 1
    %p215 = por %p213, %p214
    %p216 = scmp.ne.s32.totalorder %s207, %s208
    %p217 = scmp.eq.s32.totalorder %s29, 0
    %p218 = por %p216, %p217
    %p219 = scmp.ne.s32.totalorder %s207, %s208
    %p220 = scmp.eq.s32.totalorder %s30, 1
    %p221 = por %p219, %p220
    %p223 = scmp.ne.s32.totalorder %s208, %s222
    %p224 = scmp.eq.s32.totalorder %s30, 0
    %p225 = por %p223, %p224
    %s227 = sadd.s32 %s226, 1
    %p230 = scmp.eq.s32.totalorder %s24, 1
    %p231 = scmp.ne.s32.totalorder %s226, %s228
    %p232 = scmp.eq.s32.totalorder %s24, 0
    %p233 = por %p231, %p232
    %p234 = scmp.ne.s32.totalorder %s226, %s228
    %p235 = scmp.eq.s32.totalorder %s29, 1
    %p236 = por %p234, %p235
    %p237 = scmp.ne.s32.totalorder %s228, %s229
    %p238 = scmp.eq.s32.totalorder %s29, 0
    %p239 = por %p237, %p238
    %p240 = scmp.ne.s32.totalorder %s228, %s229
    %p241 = scmp.eq.s32.totalorder %s30, 1
    %p242 = por %p240, %p241
    %p244 = scmp.ne.s32.totalorder %s229, %s243
    %p245 = scmp.eq.s32.totalorder %s30, 0
    %p246 = por %p244, %p245
    %s248 = sadd.s32 %s247, 1
    %p251 = scmp.eq.s32.totalorder %s24, 1
    %p252 = scmp.ne.s32.totalorder %s247, %s249
    %p253 = scmp.eq.s32.totalorder %s24, 0
    %p254 = por %p252, %p253
    %p255 = scmp.ne.s32.totalorder %s247, %s249
    %p256 = scmp.eq.s32.totalorder %s29, 1
    %p257 = por %p255, %p256
    %p258 = scmp.ne.s32.totalorder %s249, %s250
    %p259 = scmp.eq.s32.totalorder %s29, 0
    %p260 = por %p258, %p259
    %p261 = scmp.ne.s32.totalorder %s249, %s250
    %p262 = scmp.eq.s32.totalorder %s30, 1
    %p263 = por %p261, %p262
    %p265 = scmp.ne.s32.totalorder %s250, %s264
    %p266 = scmp.eq.s32.totalorder %s30, 0
    %p267 = por %p265, %p266
    %s269 = sadd.s32 %s268, 1
    %p272 = scmp.eq.s32.totalorder %s24, 1
    %p273 = scmp.ne.s32.totalorder %s268, %s270
    %p274 = scmp.eq.s32.totalorder %s24, 0
    %p275 = por %p273, %p274
    %p276 = scmp.ne.s32.totalorder %s268, %s270
    %p277 = scmp.eq.s32.totalorder %s29, 1
    %p278 = por %p276, %p277
    %p279 = scmp.ne.s32.totalorder %s270, %s271
    %p280 = scmp.eq.s32.totalorder %s29, 0
    %p281 = por %p279, %p280
    %p282 = scmp.ne.s32.totalorder %s270, %s271
    %p283 = scmp.eq.s32.totalorder %s30, 1
    %p284 = por %p282, %p283
    %p286 = scmp.ne.s32.totalorder %s271, %s285
    %p287 = scmp.eq.s32.totalorder %s30, 0
    %p288 = por %p286, %p287
    %s290 = sadd.s32 %s289, 1
    %p293 = scmp.eq.s32.totalorder %s24, 1
    %p294 = scmp.ne.s32.totalorder %s289, %s291
    %p295 = scmp.eq.s32.totalorder %s24, 0
    %p296 = por %p294, %p295
    %p297 = scmp.ne.s32.totalorder %s289, %s291
    %p298 = scmp.eq.s32.totalorder %s29, 1
    %p299 = por %p297, %p298
    %p300 = scmp.ne.s32.totalorder %s291, %s292
    %p301 = scmp.eq.s32.totalorder %s29, 0
    %p302 = por %p300, %p301
    %p303 = scmp.ne.s32.totalorder %s291, %s292
    %p304 = scmp.eq.s32.totalorder %s30, 1
    %p305 = por %p303, %p304
    %p307 = scmp.ne.s32.totalorder %s292, %s306
    %p308 = scmp.eq.s32.totalorder %s30, 0
    %p309 = por %p307, %p308
    %s311 = sadd.s32 %s310, 1
    %p314 = scmp.eq.s32.totalorder %s24, 1
    %p315 = scmp.ne.s32.totalorder %s310, %s312
    %p316 = scmp.eq.s32.totalorder %s24, 0
    %p317 = por %p315, %p316
    %p318 = scmp.ne.s32.totalorder %s310, %s312
    %p319 = scmp.eq.s32.totalorder %s29, 1
    %p320 = por %p318, %p319
    %p321 = scmp.ne.s32.totalorder %s312, %s313
    %p322 = scmp.eq.s32.totalorder %s29, 0
    %p323 = por %p321, %p322
    %p324 = scmp.ne.s32.totalorder %s312, %s313
    %p325 = scmp.eq.s32.totalorder %s30, 1
    %p326 = por %p324, %p325
    %p328 = scmp.ne.s32.totalorder %s313, %s327
    %p329 = scmp.eq.s32.totalorder %s30, 0
    %p330 = por %p328, %p329
    %s332 = sadd.s32 %s331, 1
    %p335 = scmp.eq.s32.totalorder %s24, 1
    %p336 = scmp.ne.s32.totalorder %s331, %s333
    %p337 = scmp.eq.s32.totalorder %s24, 0
    %p338 = por %p336, %p337
    %p339 = scmp.ne.s32.totalorder %s331, %s333
    %p340 = scmp.eq.s32.totalorder %s29, 1
    %p341 = por %p339, %p340
    %p342 = scmp.ne.s32.totalorder %s333, %s334
    %p343 = scmp.eq.s32.totalorder %s29, 0
    %p344 = por %p342, %p343
    %p345 = scmp.ne.s32.totalorder %s333, %s334
    %p346 = scmp.eq.s32.totalorder %s30, 1
    %p347 = por %p345, %p346
    %p349 = scmp.ne.s32.totalorder %s334, %s348
    %p350 = scmp.eq.s32.totalorder %s30, 0
    %p351 = por %p349, %p350
    %s352 = ssub.s32 %s24, %s31
    %p353 = scmp.eq.s32.totalorder %s352, 0
    %s355 = sadd.s32 %s354, 1
    %s356 = scalar_select %p353, %s354, %s355
    %p359 = pneg %p353
    %p360 = scmp.eq.s32.totalorder %s24, 1
    %p361 = por %p359, %p360
    %p362 = scmp.ne.s32.totalorder %s354, %s357
    %p363 = scmp.eq.s32.totalorder %s24, 0
    %p364 = por %p362, %p363
    %p365 = scmp.ne.s32.totalorder %s354, %s357
    %p366 = scmp.eq.s32.totalorder %s29, 1
    %p367 = por %p365, %p366
    %p368 = scmp.ne.s32.totalorder %s357, %s358
    %p369 = scmp.eq.s32.totalorder %s29, 0
    %p370 = por %p368, %p369
    %p371 = scmp.ne.s32.totalorder %s357, %s358
    %p372 = scmp.eq.s32.totalorder %s30, 1
    %p373 = por %p371, %p372
    %p375 = scmp.ne.s32.totalorder %s358, %s374
    %p376 = scmp.eq.s32.totalorder %s30, 0
    %p377 = por %p375, %p376
    %s378 = ssub.s32 %s24, %s31
    %p379 = scmp.eq.s32.totalorder %s378, 0
    %s381 = sadd.s32 %s380, 1
    %s382 = scalar_select %p379, %s380, %s381
    %p385 = pneg %p379
    %p386 = scmp.eq.s32.totalorder %s24, 1
    %p387 = por %p385, %p386
    %p388 = scmp.ne.s32.totalorder %s380, %s383
    %p389 = scmp.eq.s32.totalorder %s24, 0
    %p390 = por %p388, %p389
    %p391 = scmp.ne.s32.totalorder %s380, %s383
    %p392 = scmp.eq.s32.totalorder %s29, 1
    %p393 = por %p391, %p392
    %p394 = scmp.ne.s32.totalorder %s383, %s384
    %p395 = scmp.eq.s32.totalorder %s29, 0
    %p396 = por %p394, %p395
    %p397 = scmp.ne.s32.totalorder %s383, %s384
    %p398 = scmp.eq.s32.totalorder %s30, 1
    %p399 = por %p397, %p398
    %p401 = scmp.ne.s32.totalorder %s384, %s400
    %p402 = scmp.eq.s32.totalorder %s30, 0
    %p403 = por %p401, %p402
    %s404 = ssub.s32 %s24, %s31
    %p405 = scmp.eq.s32.totalorder %s404, 0
    %s407 = sadd.s32 %s406, 1
    %s408 = scalar_select %p405, %s406, %s407
    %p411 = pneg %p405
    %p412 = scmp.eq.s32.totalorder %s24, 1
    %p413 = por %p411, %p412
    %p414 = scmp.ne.s32.totalorder %s406, %s409
    %p415 = scmp.eq.s32.totalorder %s24, 0
    %p416 = por %p414, %p415
    %p417 = scmp.ne.s32.totalorder %s406, %s409
    %p418 = scmp.eq.s32.totalorder %s29, 1
    %p419 = por %p417, %p418
    %p420 = scmp.ne.s32.totalorder %s409, %s410
    %p421 = scmp.eq.s32.totalorder %s29, 0
    %p422 = por %p420, %p421
    %p423 = scmp.ne.s32.totalorder %s409, %s410
    %p424 = scmp.eq.s32.totalorder %s30, 1
    %p425 = por %p423, %p424
    %p427 = scmp.ne.s32.totalorder %s410, %s426
    %p428 = scmp.eq.s32.totalorder %s30, 0
    %p429 = por %p427, %p428
    %p430 = scmp.le.s32.totalorder 1, %s24
    %p431 = scmp.lt.s32.totalorder %s24, 3
    %p432 = pnand %p430, %p431
    %p433 = pneg %p432
    // Predicated region
    $region9: #{dcp_dec_forward.7} parent=5 // pred_check
      _
    $region10: #{dcp_dec_forward.7} parent=5 // pred_check_branch
      %435 = sbr.rel (%p432) target = $region12
    $region11: #{dcp_dec_forward.7} parent=5 // pred_region
      %s436 = ssub.s32 %s24, 1
      // Predicated region
      $region13: #{dcp_dec_forward.7} parent=11 // pred_check
        %p437 = pneg %p71
      $region14: #{dcp_dec_forward.7} parent=11 // pred_check_branch
        %439 = sbr.rel (%p437) target = $region16
      $region15: #{dcp_dec_forward.7} parent=11 // pred_region
        _
      $region16: #{dcp_dec_forward.7} parent=11 // pred_fallthru
        _
      // Predicated region
      $region17: #{dcp_dec_forward.7} parent=11 // pred_check
        %p440 = pneg %p92
      $region18: #{dcp_dec_forward.7} parent=11 // pred_check_branch
        %442 = sbr.rel (%p440) target = $region20
      $region19: #{dcp_dec_forward.7} parent=11 // pred_region
        _
      $region20: #{dcp_dec_forward.7} parent=11 // pred_fallthru
        _
      // Predicated region
      $region21: #{dcp_dec_forward.7} parent=11 // pred_check
        %p443 = pneg %p113
      $region22: #{dcp_dec_forward.7} parent=11 // pred_check_branch
        %445 = sbr.rel (%p443) target = $region24
      $region23: #{dcp_dec_forward.7} parent=11 // pred_region
        _
      $region24: #{dcp_dec_forward.7} parent=11 // pred_fallthru
        _
      // Predicated region
      $region25: #{dcp_dec_forward.7} parent=11 // pred_check
        %p446 = pneg %p134
      $region26: #{dcp_dec_forward.7} parent=11 // pred_check_branch
        %448 = sbr.rel (%p446) target = $region28
      $region27: #{dcp_dec_forward.7} parent=11 // pred_region
        _
      $region28: #{dcp_dec_forward.7} parent=11 // pred_fallthru
        _
      // Predicated region
      $region29: #{dcp_dec_forward.7} parent=11 // pred_check
        %p449 = pneg %p155
      $region30: #{dcp_dec_forward.7} parent=11 // pred_check_branch
        %451 = sbr.rel (%p449) target = $region32
      $region31: #{dcp_dec_forward.7} parent=11 // pred_region
        _
      $region32: #{dcp_dec_forward.7} parent=11 // pred_fallthru
        _
      // Predicated region
      $region33: #{dcp_dec_forward.7} parent=11 // pred_check
        %p452 = pneg %p176
      $region34: #{dcp_dec_forward.7} parent=11 // pred_check_branch
        %454 = sbr.rel (%p452) target = $region36
      $region35: #{dcp_dec_forward.7} parent=11 // pred_region
        _
      $region36: #{dcp_dec_forward.7} parent=11 // pred_fallthru
        _
      // Predicated region
      $region37: #{dcp_dec_forward.7} parent=11 // pred_check
        %p455 = pneg %p197
      $region38: #{dcp_dec_forward.7} parent=11 // pred_check_branch
        %457 = sbr.rel (%p455) target = $region40
      $region39: #{dcp_dec_forward.7} parent=11 // pred_region
        _
      $region40: #{dcp_dec_forward.7} parent=11 // pred_fallthru
        _
      // Predicated region
      $region41: #{dcp_dec_forward.7} parent=11 // pred_check
        %p458 = pneg %p218
      $region42: #{dcp_dec_forward.7} parent=11 // pred_check_branch
        %460 = sbr.rel (%p458) target = $region44
      $region43: #{dcp_dec_forward.7} parent=11 // pred_region
        _
      $region44: #{dcp_dec_forward.7} parent=11 // pred_fallthru
        _
      // Predicated region
      $region45: #{dcp_dec_forward.7} parent=11 // pred_check
        %p461 = pneg %p239
      $region46: #{dcp_dec_forward.7} parent=11 // pred_check_branch
        %463 = sbr.rel (%p461) target = $region48
      $region47: #{dcp_dec_forward.7} parent=11 // pred_region
        _
      $region48: #{dcp_dec_forward.7} parent=11 // pred_fallthru
        _
      // Predicated region
      $region49: #{dcp_dec_forward.7} parent=11 // pred_check
        %p464 = pneg %p260
      $region50: #{dcp_dec_forward.7} parent=11 // pred_check_branch
        %466 = sbr.rel (%p464) target = $region52
      $region51: #{dcp_dec_forward.7} parent=11 // pred_region
        _
      $region52: #{dcp_dec_forward.7} parent=11 // pred_fallthru
        _
      // Predicated region
      $region53: #{dcp_dec_forward.7} parent=11 // pred_check
        %p467 = pneg %p281
      $region54: #{dcp_dec_forward.7} parent=11 // pred_check_branch
        %469 = sbr.rel (%p467) target = $region56
      $region55: #{dcp_dec_forward.7} parent=11 // pred_region
        _
      $region56: #{dcp_dec_forward.7} parent=11 // pred_fallthru
        _
      // Predicated region
      $region57: #{dcp_dec_forward.7} parent=11 // pred_check
        %p470 = pneg %p302
      $region58: #{dcp_dec_forward.7} parent=11 // pred_check_branch
        %472 = sbr.rel (%p470) target = $region60
      $region59: #{dcp_dec_forward.7} parent=11 // pred_region
        _
      $region60: #{dcp_dec_forward.7} parent=11 // pred_fallthru
        _
      // Predicated region
      $region61: #{dcp_dec_forward.7} parent=11 // pred_check
        %p473 = pneg %p323
      $region62: #{dcp_dec_forward.7} parent=11 // pred_check_branch
        %475 = sbr.rel (%p473) target = $region64
      $region63: #{dcp_dec_forward.7} parent=11 // pred_region
        _
      $region64: #{dcp_dec_forward.7} parent=11 // pred_fallthru
        _
      // Predicated region
      $region65: #{dcp_dec_forward.7} parent=11 // pred_check
        %p476 = pneg %p344
      $region66: #{dcp_dec_forward.7} parent=11 // pred_check_branch
        %478 = sbr.rel (%p476) target = $region68
      $region67: #{dcp_dec_forward.7} parent=11 // pred_region
        _
      $region68: #{dcp_dec_forward.7} parent=11 // pred_fallthru
        _
    $region12: #{dcp_dec_forward.7} parent=5 // pred_fallthru
      _
    %p479 = scmp.lt.s32.totalorder %s24, 2
    // Predicated region
    $region69: #{dcp_dec_forward.7} parent=5 // pred_check
      %p480 = pneg %p479
    $region70: #{dcp_dec_forward.7} parent=5 // pred_check_branch
      %482 = sbr.rel (%p480) target = $region72
    $region71: #{dcp_dec_forward.7} parent=5 // pred_region
      // Predicated region
      $region73: #{dcp_dec_forward.7} parent=71 // pred_check
        %p483 = pneg %p44
      $region74: #{dcp_dec_forward.7} parent=71 // pred_check_branch
        %485 = sbr.rel (%p483) target = $region76
      $region75: #{dcp_dec_forward.7} parent=71 // pred_region
        %s486 = smul.u32 16, %s24
        %p487 = scmp.lt.s32.totalorder %s486, 31
        %s488 = scalar_select %p487, %s486, 31
        %s489 = smul.addr %s488, 8
        %s490 = scalar_lea.vmem %s0, %s489
        %s491 = smul.u32 16, %s24
      $region76: #{dcp_dec_forward.7} parent=71 // pred_fallthru
        _
    $region72: #{dcp_dec_forward.7} parent=5 // pred_fallthru
      _
    %p492 = scmp.le.s32.totalorder 1, %s24
    %p493 = scmp.lt.s32.totalorder %s24, 3
    %p494 = pnand %p492, %p493
    %p495 = pneg %p494
    // Predicated region
    $region77: #{dcp_dec_forward.7} parent=5 // pred_check
      _
    $region78: #{dcp_dec_forward.7} parent=5 // pred_check_branch
      %497 = sbr.rel (%p494) target = $region80
    $region79: #{dcp_dec_forward.7} parent=5 // pred_region
      %s498 = ssub.s32 %s24, 1
      %s499 = smul.u32 16, %s29
      %p500 = scmp.lt.s32.totalorder %s499, 31
      %s501 = scalar_select %p500, %s499, 31
      %s502 = smul.addr %s501, 8
      %s503 = scalar_lea.vmem %s0, %s502
      %p504 = pneg %p50
      %p505 = pneg %p47
      %p506 = pneg %p71
      %p507 = pneg %p68
      %p508 = pneg %p92
      %p509 = pneg %p89
      %p510 = pneg %p113
      %p511 = pneg %p110
      %p512 = pneg %p134
      %p513 = pneg %p131
      %p514 = pneg %p155
      %p515 = pneg %p152
      %p516 = pneg %p176
      %p517 = pneg %p173
      %p518 = pneg %p197
      %p519 = pneg %p194
      %p520 = pneg %p218
      %p521 = pneg %p215
      %p522 = pneg %p239
      %p523 = pneg %p236
      %p524 = pneg %p260
      %p525 = pneg %p257
      %p526 = pneg %p281
      %p527 = pneg %p278
      %p528 = pneg %p302
      %p529 = pneg %p299
      %p530 = pneg %p323
      %p531 = pneg %p320
      %p532 = pneg %p344
      %p533 = pneg %p341
      %p534 = pneg %p370
      %p535 = pneg %p367
      %s536 = smul.u32 16, %s29
      %p537 = scmp.lt.s32.totalorder %s536, 31
      %s538 = scalar_select %p537, %s536, 31
      %s539 = smul.addr %s538, 8
      %s540 = scalar_lea.vmem %s15, %s539
      %p541 = pneg %p396
      %p542 = pneg %p393
      %s543 = smul.u32 16, %s29
      %p544 = scmp.lt.s32.totalorder %s543, 31
      %s545 = scalar_select %p544, %s543, 31
      %s546 = smul.addr %s545, 8
      %s547 = scalar_lea.vmem %s16, %s546
      %p548 = pneg %p422
      %p549 = pneg %p419
      %s550 = smul.u32 16, %s29
      %p551 = scmp.lt.s32.totalorder %s550, 31
      %s552 = scalar_select %p551, %s550, 31
      %s553 = smul.addr %s552, 8
      %s554 = scalar_lea.vmem %s17, %s553
      %s555 = smul.u32 16, %s29
      %p556 = scmp.lt.s32.totalorder %s555, 31
      %s557 = scalar_select %p556, %s555, 31
      %s558 = smul.addr %s557, 8
      %s559 = scalar_lea.vmem %s0, %s558
      %s560 = smul.u32 16, %s29
      %s561 = smul.u32 16, %s29
      %p562 = scmp.lt.s32.totalorder %s561, 31
      %s563 = scalar_select %p562, %s561, 31
      %s564 = smul.addr %s563, 8
      %s565 = scalar_lea.vmem %s15, %s564
      %s566 = smul.u32 16, %s29
      %s567 = smul.u32 16, %s29
      %p568 = scmp.lt.s32.totalorder %s567, 31
      %s569 = scalar_select %p568, %s567, 31
      %s570 = smul.addr %s569, 8
      %s571 = scalar_lea.vmem %s16, %s570
      %s572 = smul.u32 16, %s29
      %s573 = smul.u32 16, %s29
      %p574 = scmp.lt.s32.totalorder %s573, 31
      %s575 = scalar_select %p574, %s573, 31
      %s576 = smul.addr %s575, 8
      %s577 = scalar_lea.vmem %s17, %s576
      %s578 = smul.u32 16, %s29
      %v579 = vld [vmem:[%s559] sm:$0xff]
      %v580 = vld [vmem:[%s559 + $0x8] sm:$0xff]
      %v581 = vld [vmem:[%s559 + $0x10] sm:$0xff]
      %v582 = vld [vmem:[%s559 + $0x18] sm:$0xff]
      %v583 = vld [vmem:[%s559 + $0x20] sm:$0xff]
      %v584 = vld [vmem:[%s559 + $0x28] sm:$0xff]
      %v585 = vld [vmem:[%s559 + $0x30] sm:$0xff]
      %v586 = vld [vmem:[%s559 + $0x38] sm:$0xff]
      %v587 = vld [vmem:[%s559 + $0x40] sm:$0xff]
      %v588 = vld [vmem:[%s559 + $0x48] sm:$0xff]
      %v589 = vld [vmem:[%s559 + $0x50] sm:$0xff]
      %v590 = vld [vmem:[%s559 + $0x58] sm:$0xff]
      %v591 = vld [vmem:[%s559 + $0x60] sm:$0xff]
      %v592 = vld [vmem:[%s559 + $0x68] sm:$0xff]
      %v593 = vld [vmem:[%s559 + $0x70] sm:$0xff]
      %v594 = vld [vmem:[%s559 + $0x78] sm:$0xff]
      %v595 = vld [vmem:[%s1] sm:$0xff]
      %v596 = vld [vmem:[%s1 + $0x8] sm:$0xff]
      %v597 = vld [vmem:[%s1 + $0x10] sm:$0xff]
      %v598 = vld [vmem:[%s1 + $0x18] sm:$0xff]
      %v599 = vld [vmem:[%s1 + $0x20] sm:$0xff]
      %v600 = vld [vmem:[%s1 + $0x28] sm:$0xff]
      %v601 = vld [vmem:[%s1 + $0x30] sm:$0xff]
      %v602 = vld [vmem:[%s1 + $0x38] sm:$0xff]
      %v603 = vld [vmem:[%s2] sm:$0x1]
      %v605 = vlaneseq
      %v606 = vshrl.u32 %v605, 7
      %v607 = vsub.s32 0, %v606
      %v608 = vrot.slane %v603, %v607
      %vm610 = vcmask 523264
      %v612 = vsel %vm610, %v579, 0
      %v615 = vsel %vm610, %v580, 0
      %v618 = vsel %vm610, %v581, 0
      %v621 = vsel %vm610, %v582, 0
      %v624 = vsel %vm610, %v583, 0
      %v627 = vsel %vm610, %v584, 0
      %v630 = vsel %vm610, %v585, 0
      %v633 = vsel %vm610, %v586, 0
      %v636 = vsel %vm610, %v587, 0
      %v639 = vsel %vm610, %v588, 0
      %v642 = vsel %vm610, %v589, 0
      %v645 = vsel %vm610, %v590, 0
      %v648 = vsel %vm610, %v591, 0
      %v651 = vsel %vm610, %v592, 0
      %v654 = vsel %vm610, %v593, 0
      %v657 = vsel %vm610, %v594, 0
      %659 = vmatprep.subr.mxu0 0.0
      %660 = vmatpush1.msra.mxu0 0.0
      %661 = vmatprep.subr.mxu0 0.0
      %662 = vmatpush1.msra.mxu0 0.0
      %663 = vmatprep.subr.mxu0 0.0
      %664 = vmatpush1.msra.mxu0 0.0
      %665 = vmatprep.subr.mxu0 0.0
      %666 = vmatpush1.msra.mxu0 0.0
      %667 = vmatprep.subr.mxu0 0.0
      %668 = vmatpush1.msra.mxu0 0.0
      %669 = vmatprep.subr.mxu0 0.0
      %670 = vmatpush1.msra.mxu0 0.0
      %671 = vmatprep.subr.mxu0 0.0
      %672 = vmatpush1.msra.mxu0 0.0
      %673 = vmatprep.subr.mxu0 0.0
      %674 = vmatpush1.msra.mxu0 0.0
      %675 = vmatprep.subr.mxu0 0.0
      %676 = vmatpush1.msra.mxu0 %v602
      %677 = vmatprep.subr.mxu0 0.0
      %678 = vmatpush1.msra.mxu0 %v601
      %679 = vmatprep.subr.mxu0 0.0
      %680 = vmatpush1.msra.mxu0 %v600
      %681 = vmatprep.subr.mxu0 0.0
      %682 = vmatpush1.msra.mxu0 %v599
      %683 = vmatprep.subr.mxu0 0.0
      %684 = vmatpush1.msra.mxu0 %v598
      %685 = vmatprep.subr.mxu0 0.0
      %686 = vmatpush1.msra.mxu0 %v597
      %687 = vmatprep.subr.mxu0 0.0
      %688 = vmatpush1.msra.mxu0 %v596
      %689 = vmatprep.subr.mxu0 0.0
      %690 = vmatpush1.msra.mxu0 %v595
      %691 = vmatprep.subr.mxu0 0.0
      %692 = vmatpush2.msra.mxu0 0.0
      %693 = vmatprep.subr.mxu0 0.0
      %694 = vmatpush2.msra.mxu0 0.0
      %695 = vmatprep.subr.mxu0 0.0
      %696 = vmatpush2.msra.mxu0 0.0
      %697 = vmatprep.subr.mxu0 0.0
      %698 = vmatpush2.msra.mxu0 0.0
      %699 = vmatprep.subr.mxu0 0.0
      %700 = vmatpush2.msra.mxu0 0.0
      %701 = vmatprep.subr.mxu0 0.0
      %702 = vmatpush2.msra.mxu0 0.0
      %703 = vmatprep.subr.mxu0 0.0
      %704 = vmatpush2.msra.mxu0 0.0
      %705 = vmatprep.subr.mxu0 0.0
      %706 = vmatpush2.msra.mxu0 0.0
      %707 = vmatprep.subr.mxu0 0.0
      %708 = vmatpush2.msra.mxu0 0.0
      %709 = vmatprep.subr.mxu0 0.0
      %710 = vmatpush2.msra.mxu0 0.0
      %711 = vmatprep.subr.mxu0 0.0
      %712 = vmatpush2.msra.mxu0 0.0
      %713 = vmatprep.subr.mxu0 0.0
      %714 = vmatpush2.msra.mxu0 0.0
      %715 = vmatprep.subr.mxu0 0.0
      %716 = vmatpush2.msra.mxu0 0.0
      %717 = vmatprep.subr.mxu0 0.0
      %718 = vmatpush2.msra.mxu0 0.0
      %719 = vmatprep.subr.mxu0 0.0
      %720 = vmatpush2.msra.mxu0 0.0
      %721 = vmatprep.subr.mxu0 0.0
      %722 = vmatpush2.msra.mxu0 0.0
      %723 = vmatprep.mubr.f32.mxu0 0.0
      %724 = vmatmul.mubr.f32.gmra.mxu0 %v612
      %v725 = vpop.f32.mrf.mxu0
      %v726 = vadd.f32 %v608, %v725
      %v727 = vpop.f32.mrf.mxu0
      %728 = vmatprep.mubr.f32.mxu0 0.0
      %729 = vmatmul.mubr.f32.gmra.mxu0 %v615
      %v730 = vpop.f32.mrf.mxu0
      %v731 = vadd.f32 %v608, %v730
      %v732 = vpop.f32.mrf.mxu0
      %733 = vmatprep.mubr.f32.mxu0 0.0
      %734 = vmatmul.mubr.f32.gmra.mxu0 %v618
      %v735 = vpop.f32.mrf.mxu0
      %v736 = vadd.f32 %v608, %v735
      %v737 = vpop.f32.mrf.mxu0
      %738 = vmatprep.mubr.f32.mxu0 0.0
      %739 = vmatmul.mubr.f32.gmra.mxu0 %v621
      %v740 = vpop.f32.mrf.mxu0
      %v741 = vadd.f32 %v608, %v740
      %v742 = vpop.f32.mrf.mxu0
      %743 = vmatprep.mubr.f32.mxu0 0.0
      %744 = vmatmul.mubr.f32.gmra.mxu0 %v624
      %v745 = vpop.f32.mrf.mxu0
      %v746 = vadd.f32 %v608, %v745
      %v747 = vpop.f32.mrf.mxu0
      %748 = vmatprep.mubr.f32.mxu0 0.0
      %749 = vmatmul.mubr.f32.gmra.mxu0 %v627
      %v750 = vpop.f32.mrf.mxu0
      %v751 = vadd.f32 %v608, %v750
      %v752 = vpop.f32.mrf.mxu0
      %753 = vmatprep.mubr.f32.mxu0 0.0
      %754 = vmatmul.mubr.f32.gmra.mxu0 %v630
      %v755 = vpop.f32.mrf.mxu0
      %v756 = vadd.f32 %v608, %v755
      %v757 = vpop.f32.mrf.mxu0
      %758 = vmatprep.mubr.f32.mxu0 0.0
      %759 = vmatmul.mubr.f32.gmra.mxu0 %v633
      %v760 = vpop.f32.mrf.mxu0
      %v761 = vadd.f32 %v608, %v760
      %v762 = vpop.f32.mrf.mxu0
      %763 = vmatprep.mubr.f32.mxu0 0.0
      %764 = vmatmul.mubr.f32.gmra.mxu0 %v636
      %v765 = vpop.f32.mrf.mxu0
      %v766 = vadd.f32 %v608, %v765
      %v767 = vpop.f32.mrf.mxu0
      %768 = vmatprep.mubr.f32.mxu0 0.0
      %769 = vmatmul.mubr.f32.gmra.mxu0 %v639
      %v770 = vpop.f32.mrf.mxu0
      %v771 = vadd.f32 %v608, %v770
      %v772 = vpop.f32.mrf.mxu0
      %773 = vmatprep.mubr.f32.mxu0 0.0
      %774 = vmatmul.mubr.f32.gmra.mxu0 %v642
      %v775 = vpop.f32.mrf.mxu0
      %v776 = vadd.f32 %v608, %v775
      %v777 = vpop.f32.mrf.mxu0
      %778 = vmatprep.mubr.f32.mxu0 0.0
      %779 = vmatmul.mubr.f32.gmra.mxu0 %v645
      %v780 = vpop.f32.mrf.mxu0
      %v781 = vadd.f32 %v608, %v780
      %v782 = vpop.f32.mrf.mxu0
      %783 = vmatprep.mubr.f32.mxu0 0.0
      %784 = vmatmul.mubr.f32.gmra.mxu0 %v648
      %v785 = vpop.f32.mrf.mxu0
      %v786 = vadd.f32 %v608, %v785
      %v787 = vpop.f32.mrf.mxu0
      %788 = vmatprep.mubr.f32.mxu0 0.0
      %789 = vmatmul.mubr.f32.gmra.mxu0 %v651
      %v790 = vpop.f32.mrf.mxu0
      %v791 = vadd.f32 %v608, %v790
      %v792 = vpop.f32.mrf.mxu0
      %793 = vmatprep.mubr.f32.mxu0 0.0
      %794 = vmatmul.mubr.f32.gmra.mxu0 %v654
      %v795 = vpop.f32.mrf.mxu0
      %v796 = vadd.f32 %v608, %v795
      %v797 = vpop.f32.mrf.mxu0
      %798 = vmatprep.mubr.f32.mxu0 0.0
      %799 = vmatmul.mubr.f32.gmra.mxu0 %v657
      %v800 = vpop.f32.mrf.mxu0
      %v801 = vadd.f32 %v608, %v800
      %v802 = vpop.f32.mrf.mxu0
      %803 = vdwg.mxu0
      %v804 = vmax.f32 %v726, 0.0
      %v805 = vmax.f32 %v731, 0.0
      %v806 = vmax.f32 %v736, 0.0
      %v807 = vmax.f32 %v741, 0.0
      %v808 = vmax.f32 %v746, 0.0
      %v809 = vmax.f32 %v751, 0.0
      %v810 = vmax.f32 %v756, 0.0
      %v811 = vmax.f32 %v761, 0.0
      %v812 = vmax.f32 %v766, 0.0
      %v813 = vmax.f32 %v771, 0.0
      %v814 = vmax.f32 %v776, 0.0
      %v815 = vmax.f32 %v781, 0.0
      %v816 = vmax.f32 %v786, 0.0
      %v817 = vmax.f32 %v791, 0.0
      %v818 = vmax.f32 %v796, 0.0
      %v819 = vmax.f32 %v801, 0.0
      %v820 = vld [vmem:[%s3] sm:$0xff]
      %v821 = vld [vmem:[%s3 + $0x8] sm:$0xff]
      %v822 = vld [vmem:[%s3 + $0x10] sm:$0xff]
      %v823 = vld [vmem:[%s3 + $0x18] sm:$0xff]
      %v824 = vld [vmem:[%s3 + $0x20] sm:$0xff]
      %v825 = vld [vmem:[%s3 + $0x28] sm:$0xff]
      %v826 = vld [vmem:[%s3 + $0x30] sm:$0xff]
      %v827 = vld [vmem:[%s3 + $0x38] sm:$0xff]
      %v828 = vld [vmem:[%s3 + $0x40] sm:$0xff]
      %v829 = vld [vmem:[%s3 + $0x48] sm:$0xff]
      %v830 = vld [vmem:[%s3 + $0x50] sm:$0xff]
      %v831 = vld [vmem:[%s3 + $0x58] sm:$0xff]
      %v832 = vld [vmem:[%s3 + $0x60] sm:$0xff]
      %v833 = vld [vmem:[%s3 + $0x68] sm:$0xff]
      %v834 = vld [vmem:[%s3 + $0x70] sm:$0xff]
      %v835 = vld [vmem:[%s3 + $0x78] sm:$0xff]
      %v836 = vld [vmem:[%s4] sm:$0x1]
      %v838 = vlaneseq
      %v839 = vshrl.u32 %v838, 7
      %v840 = vsub.s32 0, %v839
      %v841 = vrot.slane %v836, %v840
      %843 = vmatprep.subr.mxu0 0.0
      %844 = vmatpush1.msra.mxu0 %v835
      %845 = vmatprep.subr.mxu0 0.0
      %846 = vmatpush1.msra.mxu0 %v834
      %847 = vmatprep.subr.mxu0 0.0
      %848 = vmatpush1.msra.mxu0 %v833
      %849 = vmatprep.subr.mxu0 0.0
      %850 = vmatpush1.msra.mxu0 %v832
      %851 = vmatprep.subr.mxu0 0.0
      %852 = vmatpush1.msra.mxu0 %v831
      %853 = vmatprep.subr.mxu0 0.0
      %854 = vmatpush1.msra.mxu0 %v830
      %855 = vmatprep.subr.mxu0 0.0
      %856 = vmatpush1.msra.mxu0 %v829
      %857 = vmatprep.subr.mxu0 0.0
      %858 = vmatpush1.msra.mxu0 %v828
      %859 = vmatprep.subr.mxu0 0.0
      %860 = vmatpush1.msra.mxu0 %v827
      %861 = vmatprep.subr.mxu0 0.0
      %862 = vmatpush1.msra.mxu0 %v826
      %863 = vmatprep.subr.mxu0 0.0
      %864 = vmatpush1.msra.mxu0 %v825
      %865 = vmatprep.subr.mxu0 0.0
      %866 = vmatpush1.msra.mxu0 %v824
      %867 = vmatprep.subr.mxu0 0.0
      %868 = vmatpush1.msra.mxu0 %v823
      %869 = vmatprep.subr.mxu0 0.0
      %870 = vmatpush1.msra.mxu0 %v822
      %871 = vmatprep.subr.mxu0 0.0
      %872 = vmatpush1.msra.mxu0 %v821
      %873 = vmatprep.subr.mxu0 0.0
      %874 = vmatpush1.msra.mxu0 %v820
      %875 = vmatprep.subr.mxu0 0.0
      %876 = vmatpush2.msra.mxu0 0.0
      %877 = vmatprep.subr.mxu0 0.0
      %878 = vmatpush2.msra.mxu0 0.0
      %879 = vmatprep.subr.mxu0 0.0
      %880 = vmatpush2.msra.mxu0 0.0
      %881 = vmatprep.subr.mxu0 0.0
      %882 = vmatpush2.msra.mxu0 0.0
      %883 = vmatprep.subr.mxu0 0.0
      %884 = vmatpush2.msra.mxu0 0.0
      %885 = vmatprep.subr.mxu0 0.0
      %886 = vmatpush2.msra.mxu0 0.0
      %887 = vmatprep.subr.mxu0 0.0
      %888 = vmatpush2.msra.mxu0 0.0
      %889 = vmatprep.subr.mxu0 0.0
      %890 = vmatpush2.msra.mxu0 0.0
      %891 = vmatprep.subr.mxu0 0.0
      %892 = vmatpush2.msra.mxu0 0.0
      %893 = vmatprep.subr.mxu0 0.0
      %894 = vmatpush2.msra.mxu0 0.0
      %895 = vmatprep.subr.mxu0 0.0
      %896 = vmatpush2.msra.mxu0 0.0
      %897 = vmatprep.subr.mxu0 0.0
      %898 = vmatpush2.msra.mxu0 0.0
      %899 = vmatprep.subr.mxu0 0.0
      %900 = vmatpush2.msra.mxu0 0.0
      %901 = vmatprep.subr.mxu0 0.0
      %902 = vmatpush2.msra.mxu0 0.0
      %903 = vmatprep.subr.mxu0 0.0
      %904 = vmatpush2.msra.mxu0 0.0
      %905 = vmatprep.subr.mxu0 0.0
      %906 = vmatpush2.msra.mxu0 0.0
      %907 = vmatprep.mubr.f32.mxu0 0.0
      %908 = vmatmul.mubr.f32.gmra.mxu0 %v804
      %v909 = vpop.f32.mrf.mxu0
      %v910 = vadd.f32 %v841, %v909
      %v911 = vpop.f32.mrf.mxu0
      %912 = vmatprep.mubr.f32.mxu0 0.0
      %913 = vmatmul.mubr.f32.gmra.mxu0 %v805
      %v914 = vpop.f32.mrf.mxu0
      %v915 = vadd.f32 %v841, %v914
      %v916 = vpop.f32.mrf.mxu0
      %917 = vmatprep.mubr.f32.mxu0 0.0
      %918 = vmatmul.mubr.f32.gmra.mxu0 %v806
      %v919 = vpop.f32.mrf.mxu0
      %v920 = vadd.f32 %v841, %v919
      %v921 = vpop.f32.mrf.mxu0
      %922 = vmatprep.mubr.f32.mxu0 0.0
      %923 = vmatmul.mubr.f32.gmra.mxu0 %v807
      %v924 = vpop.f32.mrf.mxu0
      %v925 = vadd.f32 %v841, %v924
      %v926 = vpop.f32.mrf.mxu0
      %927 = vmatprep.mubr.f32.mxu0 0.0
      %928 = vmatmul.mubr.f32.gmra.mxu0 %v808
      %v929 = vpop.f32.mrf.mxu0
      %v930 = vadd.f32 %v841, %v929
      %v931 = vpop.f32.mrf.mxu0
      %932 = vmatprep.mubr.f32.mxu0 0.0
      %933 = vmatmul.mubr.f32.gmra.mxu0 %v809
      %v934 = vpop.f32.mrf.mxu0
      %v935 = vadd.f32 %v841, %v934
      %v936 = vpop.f32.mrf.mxu0
      %937 = vmatprep.mubr.f32.mxu0 0.0
      %938 = vmatmul.mubr.f32.gmra.mxu0 %v810
      %v939 = vpop.f32.mrf.mxu0
      %v940 = vadd.f32 %v841, %v939
      %v941 = vpop.f32.mrf.mxu0
      %942 = vmatprep.mubr.f32.mxu0 0.0
      %943 = vmatmul.mubr.f32.gmra.mxu0 %v811
      %v944 = vpop.f32.mrf.mxu0
      %v945 = vadd.f32 %v841, %v944
      %v946 = vpop.f32.mrf.mxu0
      %947 = vmatprep.mubr.f32.mxu0 0.0
      %948 = vmatmul.mubr.f32.gmra.mxu0 %v812
      %v949 = vpop.f32.mrf.mxu0
      %v950 = vadd.f32 %v841, %v949
      %v951 = vpop.f32.mrf.mxu0
      %952 = vmatprep.mubr.f32.mxu0 0.0
      %953 = vmatmul.mubr.f32.gmra.mxu0 %v813
      %v954 = vpop.f32.mrf.mxu0
      %v955 = vadd.f32 %v841, %v954
      %v956 = vpop.f32.mrf.mxu0
      %957 = vmatprep.mubr.f32.mxu0 0.0
      %958 = vmatmul.mubr.f32.gmra.mxu0 %v814
      %v959 = vpop.f32.mrf.mxu0
      %v960 = vadd.f32 %v841, %v959
      %v961 = vpop.f32.mrf.mxu0
      %962 = vmatprep.mubr.f32.mxu0 0.0
      %963 = vmatmul.mubr.f32.gmra.mxu0 %v815
      %v964 = vpop.f32.mrf.mxu0
      %v965 = vadd.f32 %v841, %v964
      %v966 = vpop.f32.mrf.mxu0
      %967 = vmatprep.mubr.f32.mxu0 0.0
      %968 = vmatmul.mubr.f32.gmra.mxu0 %v816
      %v969 = vpop.f32.mrf.mxu0
      %v970 = vadd.f32 %v841, %v969
      %v971 = vpop.f32.mrf.mxu0
      %972 = vmatprep.mubr.f32.mxu0 0.0
      %973 = vmatmul.mubr.f32.gmra.mxu0 %v817
      %v974 = vpop.f32.mrf.mxu0
      %v975 = vadd.f32 %v841, %v974
      %v976 = vpop.f32.mrf.mxu0
      %977 = vmatprep.mubr.f32.mxu0 0.0
      %978 = vmatmul.mubr.f32.gmra.mxu0 %v818
      %v979 = vpop.f32.mrf.mxu0
      %v980 = vadd.f32 %v841, %v979
      %v981 = vpop.f32.mrf.mxu0
      %982 = vmatprep.mubr.f32.mxu0 0.0
      %983 = vmatmul.mubr.f32.gmra.mxu0 %v819
      %v984 = vpop.f32.mrf.mxu0
      %v985 = vadd.f32 %v841, %v984
      %v986 = vpop.f32.mrf.mxu0
      %987 = vdwg.mxu0
      %v988 = vmax.f32 %v910, 0.0
      %v989 = vmax.f32 %v915, 0.0
      %v990 = vmax.f32 %v920, 0.0
      %v991 = vmax.f32 %v925, 0.0
      %v992 = vmax.f32 %v930, 0.0
      %v993 = vmax.f32 %v935, 0.0
      %v994 = vmax.f32 %v940, 0.0
      %v995 = vmax.f32 %v945, 0.0
      %v996 = vmax.f32 %v950, 0.0
      %v997 = vmax.f32 %v955, 0.0
      %v998 = vmax.f32 %v960, 0.0
      %v999 = vmax.f32 %v965, 0.0
      %v1000 = vmax.f32 %v970, 0.0
      %v1001 = vmax.f32 %v975, 0.0
      %v1002 = vmax.f32 %v980, 0.0
      %v1003 = vmax.f32 %v985, 0.0
      %v1004 = vld [vmem:[%s5] sm:$0xff]
      %v1005 = vld [vmem:[%s5 + $0x8] sm:$0xff]
      %v1006 = vld [vmem:[%s5 + $0x10] sm:$0xff]
      %v1007 = vld [vmem:[%s5 + $0x18] sm:$0xff]
      %v1008 = vld [vmem:[%s5 + $0x20] sm:$0xff]
      %v1009 = vld [vmem:[%s5 + $0x28] sm:$0xff]
      %v1010 = vld [vmem:[%s5 + $0x30] sm:$0xff]
      %v1011 = vld [vmem:[%s5 + $0x38] sm:$0xff]
      %v1012 = vld [vmem:[%s6] sm:$0x1]
      %v1014 = vlaneseq
      %v1015 = vshrl.u32 %v1014, 7
      %v1016 = vsub.s32 0, %v1015
      %v1017 = vrot.slane %v1012, %v1016
      %v1020 = vsel %vm610, %v988, 0
      %v1023 = vsel %vm610, %v989, 0
      %v1026 = vsel %vm610, %v990, 0
      %v1029 = vsel %vm610, %v991, 0
      %v1032 = vsel %vm610, %v992, 0
      %v1035 = vsel %vm610, %v993, 0
      %v1038 = vsel %vm610, %v994, 0
      %v1041 = vsel %vm610, %v995, 0
      %v1044 = vsel %vm610, %v996, 0
      %v1047 = vsel %vm610, %v997, 0
      %v1050 = vsel %vm610, %v998, 0
      %v1053 = vsel %vm610, %v999, 0
      %v1056 = vsel %vm610, %v1000, 0
      %v1059 = vsel %vm610, %v1001, 0
      %v1062 = vsel %vm610, %v1002, 0
      %v1065 = vsel %vm610, %v1003, 0
      %1067 = vmatprep.subr.mxu0 0.0
      %1068 = vmatpush1.msra.mxu0 0.0
      %1069 = vmatprep.subr.mxu0 0.0
      %1070 = vmatpush1.msra.mxu0 0.0
      %1071 = vmatprep.subr.mxu0 0.0
      %1072 = vmatpush1.msra.mxu0 0.0
      %1073 = vmatprep.subr.mxu0 0.0
      %1074 = vmatpush1.msra.mxu0 0.0
      %1075 = vmatprep.subr.mxu0 0.0
      %1076 = vmatpush1.msra.mxu0 0.0
      %1077 = vmatprep.subr.mxu0 0.0
      %1078 = vmatpush1.msra.mxu0 0.0
      %1079 = vmatprep.subr.mxu0 0.0
      %1080 = vmatpush1.msra.mxu0 0.0
      %1081 = vmatprep.subr.mxu0 0.0
      %1082 = vmatpush1.msra.mxu0 0.0
      %1083 = vmatprep.subr.mxu0 0.0
      %1084 = vmatpush1.msra.mxu0 %v1011
      %1085 = vmatprep.subr.mxu0 0.0
      %1086 = vmatpush1.msra.mxu0 %v1010
      %1087 = vmatprep.subr.mxu0 0.0
      %1088 = vmatpush1.msra.mxu0 %v1009
      %1089 = vmatprep.subr.mxu0 0.0
      %1090 = vmatpush1.msra.mxu0 %v1008
      %1091 = vmatprep.subr.mxu0 0.0
      %1092 = vmatpush1.msra.mxu0 %v1007
      %1093 = vmatprep.subr.mxu0 0.0
      %1094 = vmatpush1.msra.mxu0 %v1006
      %1095 = vmatprep.subr.mxu0 0.0
      %1096 = vmatpush1.msra.mxu0 %v1005
      %1097 = vmatprep.subr.mxu0 0.0
      %1098 = vmatpush1.msra.mxu0 %v1004
      %1099 = vmatprep.subr.mxu0 0.0
      %1100 = vmatpush2.msra.mxu0 0.0
      %1101 = vmatprep.subr.mxu0 0.0
      %1102 = vmatpush2.msra.mxu0 0.0
      %1103 = vmatprep.subr.mxu0 0.0
      %1104 = vmatpush2.msra.mxu0 0.0
      %1105 = vmatprep.subr.mxu0 0.0
      %1106 = vmatpush2.msra.mxu0 0.0
      %1107 = vmatprep.subr.mxu0 0.0
      %1108 = vmatpush2.msra.mxu0 0.0
      %1109 = vmatprep.subr.mxu0 0.0
      %1110 = vmatpush2.msra.mxu0 0.0
      %1111 = vmatprep.subr.mxu0 0.0
      %1112 = vmatpush2.msra.mxu0 0.0
      %1113 = vmatprep.subr.mxu0 0.0
      %1114 = vmatpush2.msra.mxu0 0.0
      %1115 = vmatprep.subr.mxu0 0.0
      %1116 = vmatpush2.msra.mxu0 0.0
      %1117 = vmatprep.subr.mxu0 0.0
      %1118 = vmatpush2.msra.mxu0 0.0
      %1119 = vmatprep.subr.mxu0 0.0
      %1120 = vmatpush2.msra.mxu0 0.0
      %1121 = vmatprep.subr.mxu0 0.0
      %1122 = vmatpush2.msra.mxu0 0.0
      %1123 = vmatprep.subr.mxu0 0.0
      %1124 = vmatpush2.msra.mxu0 0.0
      %1125 = vmatprep.subr.mxu0 0.0
      %1126 = vmatpush2.msra.mxu0 0.0
      %1127 = vmatprep.subr.mxu0 0.0
      %1128 = vmatpush2.msra.mxu0 0.0
      %1129 = vmatprep.subr.mxu0 0.0
      %1130 = vmatpush2.msra.mxu0 0.0
      %1131 = vmatprep.mubr.f32.mxu0 0.0
      %1132 = vmatmul.mubr.f32.gmra.mxu0 %v1020
      %v1133 = vpop.f32.mrf.mxu0
      %v1134 = vadd.f32 %v1017, %v1133
      %v1135 = vpop.f32.mrf.mxu0
      %1136 = vmatprep.mubr.f32.mxu0 0.0
      %1137 = vmatmul.mubr.f32.gmra.mxu0 %v1023
      %v1138 = vpop.f32.mrf.mxu0
      %v1139 = vadd.f32 %v1017, %v1138
      %v1140 = vpop.f32.mrf.mxu0
      %1141 = vmatprep.mubr.f32.mxu0 0.0
      %1142 = vmatmul.mubr.f32.gmra.mxu0 %v1026
      %v1143 = vpop.f32.mrf.mxu0
      %v1144 = vadd.f32 %v1017, %v1143
      %v1145 = vpop.f32.mrf.mxu0
      %1146 = vmatprep.mubr.f32.mxu0 0.0
      %1147 = vmatmul.mubr.f32.gmra.mxu0 %v1029
      %v1148 = vpop.f32.mrf.mxu0
      %v1149 = vadd.f32 %v1017, %v1148
      %v1150 = vpop.f32.mrf.mxu0
      %1151 = vmatprep.mubr.f32.mxu0 0.0
      %1152 = vmatmul.mubr.f32.gmra.mxu0 %v1032
      %v1153 = vpop.f32.mrf.mxu0
      %v1154 = vadd.f32 %v1017, %v1153
      %v1155 = vpop.f32.mrf.mxu0
      %1156 = vmatprep.mubr.f32.mxu0 0.0
      %1157 = vmatmul.mubr.f32.gmra.mxu0 %v1035
      %v1158 = vpop.f32.mrf.mxu0
      %v1159 = vadd.f32 %v1017, %v1158
      %v1160 = vpop.f32.mrf.mxu0
      %1161 = vmatprep.mubr.f32.mxu0 0.0
      %1162 = vmatmul.mubr.f32.gmra.mxu0 %v1038
      %v1163 = vpop.f32.mrf.mxu0
      %v1164 = vadd.f32 %v1017, %v1163
      %v1165 = vpop.f32.mrf.mxu0
      %1166 = vmatprep.mubr.f32.mxu0 0.0
      %1167 = vmatmul.mubr.f32.gmra.mxu0 %v1041
      %v1168 = vpop.f32.mrf.mxu0
      %v1169 = vadd.f32 %v1017, %v1168
      %v1170 = vpop.f32.mrf.mxu0
      %1171 = vmatprep.mubr.f32.mxu0 0.0
      %1172 = vmatmul.mubr.f32.gmra.mxu0 %v1044
      %v1173 = vpop.f32.mrf.mxu0
      %v1174 = vadd.f32 %v1017, %v1173
      %v1175 = vpop.f32.mrf.mxu0
      %1176 = vmatprep.mubr.f32.mxu0 0.0
      %1177 = vmatmul.mubr.f32.gmra.mxu0 %v1047
      %v1178 = vpop.f32.mrf.mxu0
      %v1179 = vadd.f32 %v1017, %v1178
      %v1180 = vpop.f32.mrf.mxu0
      %1181 = vmatprep.mubr.f32.mxu0 0.0
      %1182 = vmatmul.mubr.f32.gmra.mxu0 %v1050
      %v1183 = vpop.f32.mrf.mxu0
      %v1184 = vadd.f32 %v1017, %v1183
      %v1185 = vpop.f32.mrf.mxu0
      %1186 = vmatprep.mubr.f32.mxu0 0.0
      %1187 = vmatmul.mubr.f32.gmra.mxu0 %v1053
      %v1188 = vpop.f32.mrf.mxu0
      %v1189 = vadd.f32 %v1017, %v1188
      %v1190 = vpop.f32.mrf.mxu0
      %1191 = vmatprep.mubr.f32.mxu0 0.0
      %1192 = vmatmul.mubr.f32.gmra.mxu0 %v1056
      %v1193 = vpop.f32.mrf.mxu0
      %v1194 = vadd.f32 %v1017, %v1193
      %v1195 = vpop.f32.mrf.mxu0
      %1196 = vmatprep.mubr.f32.mxu0 0.0
      %1197 = vmatmul.mubr.f32.gmra.mxu0 %v1059
      %v1198 = vpop.f32.mrf.mxu0
      %v1199 = vadd.f32 %v1017, %v1198
      %v1200 = vpop.f32.mrf.mxu0
      %1201 = vmatprep.mubr.f32.mxu0 0.0
      %1202 = vmatmul.mubr.f32.gmra.mxu0 %v1062
      %v1203 = vpop.f32.mrf.mxu0
      %v1204 = vadd.f32 %v1017, %v1203
      %v1205 = vpop.f32.mrf.mxu0
      %1206 = vmatprep.mubr.f32.mxu0 0.0
      %1207 = vmatmul.mubr.f32.gmra.mxu0 %v1065
      %v1208 = vpop.f32.mrf.mxu0
      %v1209 = vadd.f32 %v1017, %v1208
      %v1210 = vpop.f32.mrf.mxu0
      %1211 = vdwg.mxu0
      %v1212 = vld [vmem:[%s7] sm:$0xff]
      %v1213 = vld [vmem:[%s7 + $0x8] sm:$0xff]
      %v1214 = vld [vmem:[%s8] sm:$0x1]
      %v1216 = vlaneseq
      %v1217 = vshrl.u32 %v1216, 7
      %v1218 = vsub.s32 0, %v1217
      %v1219 = vrot.slane %v1214, %v1218
      %vm1221 = vcmask 130048
      %v1223 = vsel %vm1221, %v1134, 0
      %v1226 = vsel %vm1221, %v1139, 0
      %v1229 = vsel %vm1221, %v1144, 0
      %v1232 = vsel %vm1221, %v1149, 0
      %v1235 = vsel %vm1221, %v1154, 0
      %v1238 = vsel %vm1221, %v1159, 0
      %v1241 = vsel %vm1221, %v1164, 0
      %v1244 = vsel %vm1221, %v1169, 0
      %v1247 = vsel %vm1221, %v1174, 0
      %v1250 = vsel %vm1221, %v1179, 0
      %v1253 = vsel %vm1221, %v1184, 0
      %v1256 = vsel %vm1221, %v1189, 0
      %v1259 = vsel %vm1221, %v1194, 0
      %v1262 = vsel %vm1221, %v1199, 0
      %v1265 = vsel %vm1221, %v1204, 0
      %v1268 = vsel %vm1221, %v1209, 0
      %1270 = vmatprep.subr.mxu0 0.0
      %1271 = vmatpush1.msra.mxu0 0.0
      %1272 = vmatprep.subr.mxu0 0.0
      %1273 = vmatpush1.msra.mxu0 0.0
      %1274 = vmatprep.subr.mxu0 0.0
      %1275 = vmatpush1.msra.mxu0 0.0
      %1276 = vmatprep.subr.mxu0 0.0
      %1277 = vmatpush1.msra.mxu0 0.0
      %1278 = vmatprep.subr.mxu0 0.0
      %1279 = vmatpush1.msra.mxu0 0.0
      %1280 = vmatprep.subr.mxu0 0.0
      %1281 = vmatpush1.msra.mxu0 0.0
      %1282 = vmatprep.subr.mxu0 0.0
      %1283 = vmatpush1.msra.mxu0 0.0
      %1284 = vmatprep.subr.mxu0 0.0
      %1285 = vmatpush1.msra.mxu0 0.0
      %1286 = vmatprep.subr.mxu0 0.0
      %1287 = vmatpush1.msra.mxu0 0.0
      %1288 = vmatprep.subr.mxu0 0.0
      %1289 = vmatpush1.msra.mxu0 0.0
      %1290 = vmatprep.subr.mxu0 0.0
      %1291 = vmatpush1.msra.mxu0 0.0
      %1292 = vmatprep.subr.mxu0 0.0
      %1293 = vmatpush1.msra.mxu0 0.0
      %1294 = vmatprep.subr.mxu0 0.0
      %1295 = vmatpush1.msra.mxu0 0.0
      %1296 = vmatprep.subr.mxu0 0.0
      %1297 = vmatpush1.msra.mxu0 0.0
      %1298 = vmatprep.subr.mxu0 0.0
      %1299 = vmatpush1.msra.mxu0 %v1213
      %1300 = vmatprep.subr.mxu0 0.0
      %1301 = vmatpush1.msra.mxu0 %v1212
      %1302 = vmatprep.subr.mxu0 0.0
      %1303 = vmatpush2.msra.mxu0 0.0
      %1304 = vmatprep.subr.mxu0 0.0
      %1305 = vmatpush2.msra.mxu0 0.0
      %1306 = vmatprep.subr.mxu0 0.0
      %1307 = vmatpush2.msra.mxu0 0.0
      %1308 = vmatprep.subr.mxu0 0.0
      %1309 = vmatpush2.msra.mxu0 0.0
      %1310 = vmatprep.subr.mxu0 0.0
      %1311 = vmatpush2.msra.mxu0 0.0
      %1312 = vmatprep.subr.mxu0 0.0
      %1313 = vmatpush2.msra.mxu0 0.0
      %1314 = vmatprep.subr.mxu0 0.0
      %1315 = vmatpush2.msra.mxu0 0.0
      %1316 = vmatprep.subr.mxu0 0.0
      %1317 = vmatpush2.msra.mxu0 0.0
      %1318 = vmatprep.subr.mxu0 0.0
      %1319 = vmatpush2.msra.mxu0 0.0
      %1320 = vmatprep.subr.mxu0 0.0
      %1321 = vmatpush2.msra.mxu0 0.0
      %1322 = vmatprep.subr.mxu0 0.0
      %1323 = vmatpush2.msra.mxu0 0.0
      %1324 = vmatprep.subr.mxu0 0.0
      %1325 = vmatpush2.msra.mxu0 0.0
      %1326 = vmatprep.subr.mxu0 0.0
      %1327 = vmatpush2.msra.mxu0 0.0
      %1328 = vmatprep.subr.mxu0 0.0
      %1329 = vmatpush2.msra.mxu0 0.0
      %1330 = vmatprep.subr.mxu0 0.0
      %1331 = vmatpush2.msra.mxu0 0.0
      %1332 = vmatprep.subr.mxu0 0.0
      %1333 = vmatpush2.msra.mxu0 0.0
      %1334 = vmatprep.mubr.f32.mxu0 0.0
      %1335 = vmatmul.mubr.f32.gmra.mxu0 %v1223
      %v1336 = vpop.f32.mrf.mxu0
      %v1337 = vadd.f32 %v1219, %v1336
      %v1338 = vpop.f32.mrf.mxu0
      %1339 = vmatprep.mubr.f32.mxu0 0.0
      %1340 = vmatmul.mubr.f32.gmra.mxu0 %v1226
      %v1341 = vpop.f32.mrf.mxu0
      %v1342 = vadd.f32 %v1219, %v1341
      %v1343 = vpop.f32.mrf.mxu0
      %1344 = vmatprep.mubr.f32.mxu0 0.0
      %1345 = vmatmul.mubr.f32.gmra.mxu0 %v1229
      %v1346 = vpop.f32.mrf.mxu0
      %v1347 = vadd.f32 %v1219, %v1346
      %v1348 = vpop.f32.mrf.mxu0
      %1349 = vmatprep.mubr.f32.mxu0 0.0
      %1350 = vmatmul.mubr.f32.gmra.mxu0 %v1232
      %v1351 = vpop.f32.mrf.mxu0
      %v1352 = vadd.f32 %v1219, %v1351
      %v1353 = vpop.f32.mrf.mxu0
      %1354 = vmatprep.mubr.f32.mxu0 0.0
      %1355 = vmatmul.mubr.f32.gmra.mxu0 %v1235
      %v1356 = vpop.f32.mrf.mxu0
      %v1357 = vadd.f32 %v1219, %v1356
      %v1358 = vpop.f32.mrf.mxu0
      %1359 = vmatprep.mubr.f32.mxu0 0.0
      %1360 = vmatmul.mubr.f32.gmra.mxu0 %v1238
      %v1361 = vpop.f32.mrf.mxu0
      %v1362 = vadd.f32 %v1219, %v1361
      %v1363 = vpop.f32.mrf.mxu0
      %1364 = vmatprep.mubr.f32.mxu0 0.0
      %1365 = vmatmul.mubr.f32.gmra.mxu0 %v1241
      %v1366 = vpop.f32.mrf.mxu0
      %v1367 = vadd.f32 %v1219, %v1366
      %v1368 = vpop.f32.mrf.mxu0
      %1369 = vmatprep.mubr.f32.mxu0 0.0
      %1370 = vmatmul.mubr.f32.gmra.mxu0 %v1244
      %v1371 = vpop.f32.mrf.mxu0
      %v1372 = vadd.f32 %v1219, %v1371
      %v1373 = vpop.f32.mrf.mxu0
      %1374 = vmatprep.mubr.f32.mxu0 0.0
      %1375 = vmatmul.mubr.f32.gmra.mxu0 %v1247
      %v1376 = vpop.f32.mrf.mxu0
      %v1377 = vadd.f32 %v1219, %v1376
      %v1378 = vpop.f32.mrf.mxu0
      %1379 = vmatprep.mubr.f32.mxu0 0.0
      %1380 = vmatmul.mubr.f32.gmra.mxu0 %v1250
      %v1381 = vpop.f32.mrf.mxu0
      %v1382 = vadd.f32 %v1219, %v1381
      %v1383 = vpop.f32.mrf.mxu0
      %1384 = vmatprep.mubr.f32.mxu0 0.0
      %1385 = vmatmul.mubr.f32.gmra.mxu0 %v1253
      %v1386 = vpop.f32.mrf.mxu0
      %v1387 = vadd.f32 %v1219, %v1386
      %v1388 = vpop.f32.mrf.mxu0
      %1389 = vmatprep.mubr.f32.mxu0 0.0
      %1390 = vmatmul.mubr.f32.gmra.mxu0 %v1256
      %v1391 = vpop.f32.mrf.mxu0
      %v1392 = vadd.f32 %v1219, %v1391
      %v1393 = vpop.f32.mrf.mxu0
      %1394 = vmatprep.mubr.f32.mxu0 0.0
      %1395 = vmatmul.mubr.f32.gmra.mxu0 %v1259
      %v1396 = vpop.f32.mrf.mxu0
      %v1397 = vadd.f32 %v1219, %v1396
      %v1398 = vpop.f32.mrf.mxu0
      %1399 = vmatprep.mubr.f32.mxu0 0.0
      %1400 = vmatmul.mubr.f32.gmra.mxu0 %v1262
      %v1401 = vpop.f32.mrf.mxu0
      %v1402 = vadd.f32 %v1219, %v1401
      %v1403 = vpop.f32.mrf.mxu0
      %1404 = vmatprep.mubr.f32.mxu0 0.0
      %1405 = vmatmul.mubr.f32.gmra.mxu0 %v1265
      %v1406 = vpop.f32.mrf.mxu0
      %v1407 = vadd.f32 %v1219, %v1406
      %v1408 = vpop.f32.mrf.mxu0
      %1409 = vmatprep.mubr.f32.mxu0 0.0
      %1410 = vmatmul.mubr.f32.gmra.mxu0 %v1268
      %v1411 = vpop.f32.mrf.mxu0
      %v1412 = vadd.f32 %v1219, %v1411
      %v1413 = vpop.f32.mrf.mxu0
      %1414 = vdwg.mxu0
      %v1415 = vmax.f32 %v1337, 0.0
      %v1416 = vmax.f32 %v1342, 0.0
      %v1417 = vmax.f32 %v1347, 0.0
      %v1418 = vmax.f32 %v1352, 0.0
      %v1419 = vmax.f32 %v1357, 0.0
      %v1420 = vmax.f32 %v1362, 0.0
      %v1421 = vmax.f32 %v1367, 0.0
      %v1422 = vmax.f32 %v1372, 0.0
      %v1423 = vmax.f32 %v1377, 0.0
      %v1424 = vmax.f32 %v1382, 0.0
      %v1425 = vmax.f32 %v1387, 0.0
      %v1426 = vmax.f32 %v1392, 0.0
      %v1427 = vmax.f32 %v1397, 0.0
      %v1428 = vmax.f32 %v1402, 0.0
      %v1429 = vmax.f32 %v1407, 0.0
      %v1430 = vmax.f32 %v1412, 0.0
      %v1431 = vld [vmem:[%s9] sm:$0xff]
      %v1432 = vld [vmem:[%s9 + $0x8] sm:$0xff]
      %v1433 = vld [vmem:[%s9 + $0x10] sm:$0xff]
      %v1434 = vld [vmem:[%s9 + $0x18] sm:$0xff]
      %v1435 = vld [vmem:[%s9 + $0x20] sm:$0xff]
      %v1436 = vld [vmem:[%s9 + $0x28] sm:$0xff]
      %v1437 = vld [vmem:[%s9 + $0x30] sm:$0xff]
      %v1438 = vld [vmem:[%s9 + $0x38] sm:$0xff]
      %v1439 = vld [vmem:[%s10] sm:$0x1]
      %v1441 = vlaneseq
      %v1442 = vshrl.u32 %v1441, 7
      %v1443 = vsub.s32 0, %v1442
      %v1444 = vrot.slane %v1439, %v1443
      %v1447 = vsel %vm610, %v1415, 0
      %v1450 = vsel %vm610, %v1416, 0
      %v1453 = vsel %vm610, %v1417, 0
      %v1456 = vsel %vm610, %v1418, 0
      %v1459 = vsel %vm610, %v1419, 0
      %v1462 = vsel %vm610, %v1420, 0
      %v1465 = vsel %vm610, %v1421, 0
      %v1468 = vsel %vm610, %v1422, 0
      %v1471 = vsel %vm610, %v1423, 0
      %v1474 = vsel %vm610, %v1424, 0
      %v1477 = vsel %vm610, %v1425, 0
      %v1480 = vsel %vm610, %v1426, 0
      %v1483 = vsel %vm610, %v1427, 0
      %v1486 = vsel %vm610, %v1428, 0
      %v1489 = vsel %vm610, %v1429, 0
      %v1492 = vsel %vm610, %v1430, 0
      %1494 = vmatprep.subr.mxu0 0.0
      %1495 = vmatpush1.msra.mxu0 0.0
      %1496 = vmatprep.subr.mxu0 0.0
      %1497 = vmatpush1.msra.mxu0 0.0
      %1498 = vmatprep.subr.mxu0 0.0
      %1499 = vmatpush1.msra.mxu0 0.0
      %1500 = vmatprep.subr.mxu0 0.0
      %1501 = vmatpush1.msra.mxu0 0.0
      %1502 = vmatprep.subr.mxu0 0.0
      %1503 = vmatpush1.msra.mxu0 0.0
      %1504 = vmatprep.subr.mxu0 0.0
      %1505 = vmatpush1.msra.mxu0 0.0
      %1506 = vmatprep.subr.mxu0 0.0
      %1507 = vmatpush1.msra.mxu0 0.0
      %1508 = vmatprep.subr.mxu0 0.0
      %1509 = vmatpush1.msra.mxu0 0.0
      %1510 = vmatprep.subr.mxu0 0.0
      %1511 = vmatpush1.msra.mxu0 %v1438
      %1512 = vmatprep.subr.mxu0 0.0
      %1513 = vmatpush1.msra.mxu0 %v1437
      %1514 = vmatprep.subr.mxu0 0.0
      %1515 = vmatpush1.msra.mxu0 %v1436
      %1516 = vmatprep.subr.mxu0 0.0
      %1517 = vmatpush1.msra.mxu0 %v1435
      %1518 = vmatprep.subr.mxu0 0.0
      %1519 = vmatpush1.msra.mxu0 %v1434
      %1520 = vmatprep.subr.mxu0 0.0
      %1521 = vmatpush1.msra.mxu0 %v1433
      %1522 = vmatprep.subr.mxu0 0.0
      %1523 = vmatpush1.msra.mxu0 %v1432
      %1524 = vmatprep.subr.mxu0 0.0
      %1525 = vmatpush1.msra.mxu0 %v1431
      %1526 = vmatprep.subr.mxu0 0.0
      %1527 = vmatpush2.msra.mxu0 0.0
      %1528 = vmatprep.subr.mxu0 0.0
      %1529 = vmatpush2.msra.mxu0 0.0
      %1530 = vmatprep.subr.mxu0 0.0
      %1531 = vmatpush2.msra.mxu0 0.0
      %1532 = vmatprep.subr.mxu0 0.0
      %1533 = vmatpush2.msra.mxu0 0.0
      %1534 = vmatprep.subr.mxu0 0.0
      %1535 = vmatpush2.msra.mxu0 0.0
      %1536 = vmatprep.subr.mxu0 0.0
      %1537 = vmatpush2.msra.mxu0 0.0
      %1538 = vmatprep.subr.mxu0 0.0
      %1539 = vmatpush2.msra.mxu0 0.0
      %1540 = vmatprep.subr.mxu0 0.0
      %1541 = vmatpush2.msra.mxu0 0.0
      %1542 = vmatprep.subr.mxu0 0.0
      %1543 = vmatpush2.msra.mxu0 0.0
      %1544 = vmatprep.subr.mxu0 0.0
      %1545 = vmatpush2.msra.mxu0 0.0
      %1546 = vmatprep.subr.mxu0 0.0
      %1547 = vmatpush2.msra.mxu0 0.0
      %1548 = vmatprep.subr.mxu0 0.0
      %1549 = vmatpush2.msra.mxu0 0.0
      %1550 = vmatprep.subr.mxu0 0.0
      %1551 = vmatpush2.msra.mxu0 0.0
      %1552 = vmatprep.subr.mxu0 0.0
      %1553 = vmatpush2.msra.mxu0 0.0
      %1554 = vmatprep.subr.mxu0 0.0
      %1555 = vmatpush2.msra.mxu0 0.0
      %1556 = vmatprep.subr.mxu0 0.0
      %1557 = vmatpush2.msra.mxu0 0.0
      %1558 = vmatprep.mubr.f32.mxu0 0.0
      %1559 = vmatmul.mubr.f32.gmra.mxu0 %v1447
      %v1560 = vpop.f32.mrf.mxu0
      %v1561 = vadd.f32 %v1444, %v1560
      %v1562 = vpop.f32.mrf.mxu0
      %1563 = vmatprep.mubr.f32.mxu0 0.0
      %1564 = vmatmul.mubr.f32.gmra.mxu0 %v1450
      %v1565 = vpop.f32.mrf.mxu0
      %v1566 = vadd.f32 %v1444, %v1565
      %v1567 = vpop.f32.mrf.mxu0
      %1568 = vmatprep.mubr.f32.mxu0 0.0
      %1569 = vmatmul.mubr.f32.gmra.mxu0 %v1453
      %v1570 = vpop.f32.mrf.mxu0
      %v1571 = vadd.f32 %v1444, %v1570
      %v1572 = vpop.f32.mrf.mxu0
      %1573 = vmatprep.mubr.f32.mxu0 0.0
      %1574 = vmatmul.mubr.f32.gmra.mxu0 %v1456
      %v1575 = vpop.f32.mrf.mxu0
      %v1576 = vadd.f32 %v1444, %v1575
      %v1577 = vpop.f32.mrf.mxu0
      %1578 = vmatprep.mubr.f32.mxu0 0.0
      %1579 = vmatmul.mubr.f32.gmra.mxu0 %v1459
      %v1580 = vpop.f32.mrf.mxu0
      %v1581 = vadd.f32 %v1444, %v1580
      %v1582 = vpop.f32.mrf.mxu0
      %1583 = vmatprep.mubr.f32.mxu0 0.0
      %1584 = vmatmul.mubr.f32.gmra.mxu0 %v1462
      %v1585 = vpop.f32.mrf.mxu0
      %v1586 = vadd.f32 %v1444, %v1585
      %v1587 = vpop.f32.mrf.mxu0
      %1588 = vmatprep.mubr.f32.mxu0 0.0
      %1589 = vmatmul.mubr.f32.gmra.mxu0 %v1465
      %v1590 = vpop.f32.mrf.mxu0
      %v1591 = vadd.f32 %v1444, %v1590
      %v1592 = vpop.f32.mrf.mxu0
      %1593 = vmatprep.mubr.f32.mxu0 0.0
      %1594 = vmatmul.mubr.f32.gmra.mxu0 %v1468
      %v1595 = vpop.f32.mrf.mxu0
      %v1596 = vadd.f32 %v1444, %v1595
      %v1597 = vpop.f32.mrf.mxu0
      %1598 = vmatprep.mubr.f32.mxu0 0.0
      %1599 = vmatmul.mubr.f32.gmra.mxu0 %v1471
      %v1600 = vpop.f32.mrf.mxu0
      %v1601 = vadd.f32 %v1444, %v1600
      %v1602 = vpop.f32.mrf.mxu0
      %1603 = vmatprep.mubr.f32.mxu0 0.0
      %1604 = vmatmul.mubr.f32.gmra.mxu0 %v1474
      %v1605 = vpop.f32.mrf.mxu0
      %v1606 = vadd.f32 %v1444, %v1605
      %v1607 = vpop.f32.mrf.mxu0
      %1608 = vmatprep.mubr.f32.mxu0 0.0
      %1609 = vmatmul.mubr.f32.gmra.mxu0 %v1477
      %v1610 = vpop.f32.mrf.mxu0
      %v1611 = vadd.f32 %v1444, %v1610
      %v1612 = vpop.f32.mrf.mxu0
      %1613 = vmatprep.mubr.f32.mxu0 0.0
      %1614 = vmatmul.mubr.f32.gmra.mxu0 %v1480
      %v1615 = vpop.f32.mrf.mxu0
      %v1616 = vadd.f32 %v1444, %v1615
      %v1617 = vpop.f32.mrf.mxu0
      %1618 = vmatprep.mubr.f32.mxu0 0.0
      %1619 = vmatmul.mubr.f32.gmra.mxu0 %v1483
      %v1620 = vpop.f32.mrf.mxu0
      %v1621 = vadd.f32 %v1444, %v1620
      %v1622 = vpop.f32.mrf.mxu0
      %1623 = vmatprep.mubr.f32.mxu0 0.0
      %1624 = vmatmul.mubr.f32.gmra.mxu0 %v1486
      %v1625 = vpop.f32.mrf.mxu0
      %v1626 = vadd.f32 %v1444, %v1625
      %v1627 = vpop.f32.mrf.mxu0
      %1628 = vmatprep.mubr.f32.mxu0 0.0
      %1629 = vmatmul.mubr.f32.gmra.mxu0 %v1489
      %v1630 = vpop.f32.mrf.mxu0
      %v1631 = vadd.f32 %v1444, %v1630
      %v1632 = vpop.f32.mrf.mxu0
      %1633 = vmatprep.mubr.f32.mxu0 0.0
      %1634 = vmatmul.mubr.f32.gmra.mxu0 %v1492
      %v1635 = vpop.f32.mrf.mxu0
      %v1636 = vadd.f32 %v1444, %v1635
      %v1637 = vpop.f32.mrf.mxu0
      %1638 = vdwg.mxu0
      %v1639 = vmax.f32 %v1561, 0.0
      %v1640 = vmax.f32 %v1566, 0.0
      %v1641 = vmax.f32 %v1571, 0.0
      %v1642 = vmax.f32 %v1576, 0.0
      %v1643 = vmax.f32 %v1581, 0.0
      %v1644 = vmax.f32 %v1586, 0.0
      %v1645 = vmax.f32 %v1591, 0.0
      %v1646 = vmax.f32 %v1596, 0.0
      %v1647 = vmax.f32 %v1601, 0.0
      %v1648 = vmax.f32 %v1606, 0.0
      %v1649 = vmax.f32 %v1611, 0.0
      %v1650 = vmax.f32 %v1616, 0.0
      %v1651 = vmax.f32 %v1621, 0.0
      %v1652 = vmax.f32 %v1626, 0.0
      %v1653 = vmax.f32 %v1631, 0.0
      %v1654 = vmax.f32 %v1636, 0.0
      %v1655 = vld [vmem:[%s11] sm:$0xff]
      %v1656 = vld [vmem:[%s11 + $0x8] sm:$0xff]
      %v1657 = vld [vmem:[%s11 + $0x10] sm:$0xff]
      %v1658 = vld [vmem:[%s11 + $0x18] sm:$0xff]
      %v1659 = vld [vmem:[%s11 + $0x20] sm:$0xff]
      %v1660 = vld [vmem:[%s11 + $0x28] sm:$0xff]
      %v1661 = vld [vmem:[%s11 + $0x30] sm:$0xff]
      %v1662 = vld [vmem:[%s11 + $0x38] sm:$0xff]
      %v1663 = vld [vmem:[%s11 + $0x40] sm:$0xff]
      %v1664 = vld [vmem:[%s11 + $0x48] sm:$0xff]
      %v1665 = vld [vmem:[%s11 + $0x50] sm:$0xff]
      %v1666 = vld [vmem:[%s11 + $0x58] sm:$0xff]
      %v1667 = vld [vmem:[%s11 + $0x60] sm:$0xff]
      %v1668 = vld [vmem:[%s11 + $0x68] sm:$0xff]
      %v1669 = vld [vmem:[%s11 + $0x70] sm:$0xff]
      %v1670 = vld [vmem:[%s11 + $0x78] sm:$0xff]
      %v1671 = vld [vmem:[%s12] sm:$0x1]
      %v1673 = vlaneseq
      %v1674 = vshrl.u32 %v1673, 7
      %v1675 = vsub.s32 0, %v1674
      %v1676 = vrot.slane %v1671, %v1675
      %1678 = vmatprep.subr.mxu0 0.0
      %1679 = vmatpush1.msra.mxu0 %v1670
      %1680 = vmatprep.subr.mxu0 0.0
      %1681 = vmatpush1.msra.mxu0 %v1669
      %1682 = vmatprep.subr.mxu0 0.0
      %1683 = vmatpush1.msra.mxu0 %v1668
      %1684 = vmatprep.subr.mxu0 0.0
      %1685 = vmatpush1.msra.mxu0 %v1667
      %1686 = vmatprep.subr.mxu0 0.0
      %1687 = vmatpush1.msra.mxu0 %v1666
      %1688 = vmatprep.subr.mxu0 0.0
      %1689 = vmatpush1.msra.mxu0 %v1665
      %1690 = vmatprep.subr.mxu0 0.0
      %1691 = vmatpush1.msra.mxu0 %v1664
      %1692 = vmatprep.subr.mxu0 0.0
      %1693 = vmatpush1.msra.mxu0 %v1663
      %1694 = vmatprep.subr.mxu0 0.0
      %1695 = vmatpush1.msra.mxu0 %v1662
      %1696 = vmatprep.subr.mxu0 0.0
      %1697 = vmatpush1.msra.mxu0 %v1661
      %1698 = vmatprep.subr.mxu0 0.0
      %1699 = vmatpush1.msra.mxu0 %v1660
      %1700 = vmatprep.subr.mxu0 0.0
      %1701 = vmatpush1.msra.mxu0 %v1659
      %1702 = vmatprep.subr.mxu0 0.0
      %1703 = vmatpush1.msra.mxu0 %v1658
      %1704 = vmatprep.subr.mxu0 0.0
      %1705 = vmatpush1.msra.mxu0 %v1657
      %1706 = vmatprep.subr.mxu0 0.0
      %1707 = vmatpush1.msra.mxu0 %v1656
      %1708 = vmatprep.subr.mxu0 0.0
      %1709 = vmatpush1.msra.mxu0 %v1655
      %1710 = vmatprep.subr.mxu0 0.0
      %1711 = vmatpush2.msra.mxu0 0.0
      %1712 = vmatprep.subr.mxu0 0.0
      %1713 = vmatpush2.msra.mxu0 0.0
      %1714 = vmatprep.subr.mxu0 0.0
      %1715 = vmatpush2.msra.mxu0 0.0
      %1716 = vmatprep.subr.mxu0 0.0
      %1717 = vmatpush2.msra.mxu0 0.0
      %1718 = vmatprep.subr.mxu0 0.0
      %1719 = vmatpush2.msra.mxu0 0.0
      %1720 = vmatprep.subr.mxu0 0.0
      %1721 = vmatpush2.msra.mxu0 0.0
      %1722 = vmatprep.subr.mxu0 0.0
      %1723 = vmatpush2.msra.mxu0 0.0
      %1724 = vmatprep.subr.mxu0 0.0
      %1725 = vmatpush2.msra.mxu0 0.0
      %1726 = vmatprep.subr.mxu0 0.0
      %1727 = vmatpush2.msra.mxu0 0.0
      %1728 = vmatprep.subr.mxu0 0.0
      %1729 = vmatpush2.msra.mxu0 0.0
      %1730 = vmatprep.subr.mxu0 0.0
      %1731 = vmatpush2.msra.mxu0 0.0
      %1732 = vmatprep.subr.mxu0 0.0
      %1733 = vmatpush2.msra.mxu0 0.0
      %1734 = vmatprep.subr.mxu0 0.0
      %1735 = vmatpush2.msra.mxu0 0.0
      %1736 = vmatprep.subr.mxu0 0.0
      %1737 = vmatpush2.msra.mxu0 0.0
      %1738 = vmatprep.subr.mxu0 0.0
      %1739 = vmatpush2.msra.mxu0 0.0
      %1740 = vmatprep.subr.mxu0 0.0
      %1741 = vmatpush2.msra.mxu0 0.0
      %1742 = vmatprep.mubr.f32.mxu0 0.0
      %1743 = vmatmul.mubr.f32.gmra.mxu0 %v1639
      %v1744 = vpop.f32.mrf.mxu0
      %v1745 = vadd.f32 %v1676, %v1744
      %v1746 = vpop.f32.mrf.mxu0
      %1747 = vmatprep.mubr.f32.mxu0 0.0
      %1748 = vmatmul.mubr.f32.gmra.mxu0 %v1640
      %v1749 = vpop.f32.mrf.mxu0
      %v1750 = vadd.f32 %v1676, %v1749
      %v1751 = vpop.f32.mrf.mxu0
      %1752 = vmatprep.mubr.f32.mxu0 0.0
      %1753 = vmatmul.mubr.f32.gmra.mxu0 %v1641
      %v1754 = vpop.f32.mrf.mxu0
      %v1755 = vadd.f32 %v1676, %v1754
      %v1756 = vpop.f32.mrf.mxu0
      %1757 = vmatprep.mubr.f32.mxu0 0.0
      %1758 = vmatmul.mubr.f32.gmra.mxu0 %v1642
      %v1759 = vpop.f32.mrf.mxu0
      %v1760 = vadd.f32 %v1676, %v1759
      %v1761 = vpop.f32.mrf.mxu0
      %1762 = vmatprep.mubr.f32.mxu0 0.0
      %1763 = vmatmul.mubr.f32.gmra.mxu0 %v1643
      %v1764 = vpop.f32.mrf.mxu0
      %v1765 = vadd.f32 %v1676, %v1764
      %v1766 = vpop.f32.mrf.mxu0
      %1767 = vmatprep.mubr.f32.mxu0 0.0
      %1768 = vmatmul.mubr.f32.gmra.mxu0 %v1644
      %v1769 = vpop.f32.mrf.mxu0
      %v1770 = vadd.f32 %v1676, %v1769
      %v1771 = vpop.f32.mrf.mxu0
      %1772 = vmatprep.mubr.f32.mxu0 0.0
      %1773 = vmatmul.mubr.f32.gmra.mxu0 %v1645
      %v1774 = vpop.f32.mrf.mxu0
      %v1775 = vadd.f32 %v1676, %v1774
      %v1776 = vpop.f32.mrf.mxu0
      %1777 = vmatprep.mubr.f32.mxu0 0.0
      %1778 = vmatmul.mubr.f32.gmra.mxu0 %v1646
      %v1779 = vpop.f32.mrf.mxu0
      %v1780 = vadd.f32 %v1676, %v1779
      %v1781 = vpop.f32.mrf.mxu0
      %1782 = vmatprep.mubr.f32.mxu0 0.0
      %1783 = vmatmul.mubr.f32.gmra.mxu0 %v1647
      %v1784 = vpop.f32.mrf.mxu0
      %v1785 = vadd.f32 %v1676, %v1784
      %v1786 = vpop.f32.mrf.mxu0
      %1787 = vmatprep.mubr.f32.mxu0 0.0
      %1788 = vmatmul.mubr.f32.gmra.mxu0 %v1648
      %v1789 = vpop.f32.mrf.mxu0
      %v1790 = vadd.f32 %v1676, %v1789
      %v1791 = vpop.f32.mrf.mxu0
      %1792 = vmatprep.mubr.f32.mxu0 0.0
      %1793 = vmatmul.mubr.f32.gmra.mxu0 %v1649
      %v1794 = vpop.f32.mrf.mxu0
      %v1795 = vadd.f32 %v1676, %v1794
      %v1796 = vpop.f32.mrf.mxu0
      %1797 = vmatprep.mubr.f32.mxu0 0.0
      %1798 = vmatmul.mubr.f32.gmra.mxu0 %v1650
      %v1799 = vpop.f32.mrf.mxu0
      %v1800 = vadd.f32 %v1676, %v1799
      %v1801 = vpop.f32.mrf.mxu0
      %1802 = vmatprep.mubr.f32.mxu0 0.0
      %1803 = vmatmul.mubr.f32.gmra.mxu0 %v1651
      %v1804 = vpop.f32.mrf.mxu0
      %v1805 = vadd.f32 %v1676, %v1804
      %v1806 = vpop.f32.mrf.mxu0
      %1807 = vmatprep.mubr.f32.mxu0 0.0
      %1808 = vmatmul.mubr.f32.gmra.mxu0 %v1652
      %v1809 = vpop.f32.mrf.mxu0
      %v1810 = vadd.f32 %v1676, %v1809
      %v1811 = vpop.f32.mrf.mxu0
      %1812 = vmatprep.mubr.f32.mxu0 0.0
      %1813 = vmatmul.mubr.f32.gmra.mxu0 %v1653
      %v1814 = vpop.f32.mrf.mxu0
      %v1815 = vadd.f32 %v1676, %v1814
      %v1816 = vpop.f32.mrf.mxu0
      %1817 = vmatprep.mubr.f32.mxu0 0.0
      %1818 = vmatmul.mubr.f32.gmra.mxu0 %v1654
      %v1819 = vpop.f32.mrf.mxu0
      %v1820 = vadd.f32 %v1676, %v1819
      %v1821 = vpop.f32.mrf.mxu0
      %1822 = vdwg.mxu0
      %1823 = vst.msk [vmem:[%s565] sm:$0xff] %vm610, %v1745
      %1824 = vst.msk [vmem:[%s565 + $0x8] sm:$0xff] %vm610, %v1750
      %1825 = vst.msk [vmem:[%s565 + $0x10] sm:$0xff] %vm610, %v1755
      %1826 = vst.msk [vmem:[%s565 + $0x18] sm:$0xff] %vm610, %v1760
      %1827 = vst.msk [vmem:[%s565 + $0x20] sm:$0xff] %vm610, %v1765
      %1828 = vst.msk [vmem:[%s565 + $0x28] sm:$0xff] %vm610, %v1770
      %1829 = vst.msk [vmem:[%s565 + $0x30] sm:$0xff] %vm610, %v1775
      %1830 = vst.msk [vmem:[%s565 + $0x38] sm:$0xff] %vm610, %v1780
      %1831 = vst.msk [vmem:[%s565 + $0x40] sm:$0xff] %vm610, %v1785
      %1832 = vst.msk [vmem:[%s565 + $0x48] sm:$0xff] %vm610, %v1790
      %1833 = vst.msk [vmem:[%s565 + $0x50] sm:$0xff] %vm610, %v1795
      %1834 = vst.msk [vmem:[%s565 + $0x58] sm:$0xff] %vm610, %v1800
      %1835 = vst.msk [vmem:[%s565 + $0x60] sm:$0xff] %vm610, %v1805
      %1836 = vst.msk [vmem:[%s565 + $0x68] sm:$0xff] %vm610, %v1810
      %1837 = vst.msk [vmem:[%s565 + $0x70] sm:$0xff] %vm610, %v1815
      %1838 = vst.msk [vmem:[%s565 + $0x78] sm:$0xff] %vm610, %v1820
      %1839 = vst.msk [vmem:[%s571] sm:$0xff] %vm1221, %v1134
      %1840 = vst.msk [vmem:[%s571 + $0x8] sm:$0xff] %vm1221, %v1139
      %1841 = vst.msk [vmem:[%s571 + $0x10] sm:$0xff] %vm1221, %v1144
      %1842 = vst.msk [vmem:[%s571 + $0x18] sm:$0xff] %vm1221, %v1149
      %1843 = vst.msk [vmem:[%s571 + $0x20] sm:$0xff] %vm1221, %v1154
      %1844 = vst.msk [vmem:[%s571 + $0x28] sm:$0xff] %vm1221, %v1159
      %1845 = vst.msk [vmem:[%s571 + $0x30] sm:$0xff] %vm1221, %v1164
      %1846 = vst.msk [vmem:[%s571 + $0x38] sm:$0xff] %vm1221, %v1169
      %1847 = vst.msk [vmem:[%s571 + $0x40] sm:$0xff] %vm1221, %v1174
      %1848 = vst.msk [vmem:[%s571 + $0x48] sm:$0xff] %vm1221, %v1179
      %1849 = vst.msk [vmem:[%s571 + $0x50] sm:$0xff] %vm1221, %v1184
      %1850 = vst.msk [vmem:[%s571 + $0x58] sm:$0xff] %vm1221, %v1189
      %1851 = vst.msk [vmem:[%s571 + $0x60] sm:$0xff] %vm1221, %v1194
      %1852 = vst.msk [vmem:[%s571 + $0x68] sm:$0xff] %vm1221, %v1199
      %1853 = vst.msk [vmem:[%s571 + $0x70] sm:$0xff] %vm1221, %v1204
      %1854 = vst.msk [vmem:[%s571 + $0x78] sm:$0xff] %vm1221, %v1209
      %v1855 = vld [vmem:[%s13] sm:$0xf]
      %v1856 = vld [vmem:[%s14] sm:$0x1]
      %v1857 = vmul.f32 %v1134, %v1134
      %v1858 = vmul.f32 %v1139, %v1139
      %v1859 = vmul.f32 %v1144, %v1144
      %v1860 = vmul.f32 %v1149, %v1149
      %v1861 = vmul.f32 %v1154, %v1154
      %v1862 = vmul.f32 %v1159, %v1159
      %v1863 = vmul.f32 %v1164, %v1164
      %v1864 = vmul.f32 %v1169, %v1169
      %v1865 = vmul.f32 %v1174, %v1174
      %v1866 = vmul.f32 %v1179, %v1179
      %v1867 = vmul.f32 %v1184, %v1184
      %v1868 = vmul.f32 %v1189, %v1189
      %v1869 = vmul.f32 %v1194, %v1194
      %v1870 = vmul.f32 %v1199, %v1199
      %v1871 = vmul.f32 %v1204, %v1204
      %v1872 = vmul.f32 %v1209, %v1209
      %v1873 = vsel %vm1221, %v1857, 0.0
      %1874 = vadd.xlane.f32.xlu0 %v1873
      %v1875 = vpop.xlane.xlu0 %1874
      %v1876 = vsel %vm1221, %v1858, 0.0
      %1877 = vadd.xlane.f32.xlu0 %v1876
      %v1878 = vpop.xlane.xlu0 %1877
      %v1879 = vsel %vm1221, %v1859, 0.0
      %1880 = vadd.xlane.f32.xlu0 %v1879
      %v1881 = vpop.xlane.xlu0 %1880
      %v1882 = vsel %vm1221, %v1860, 0.0
      %1883 = vadd.xlane.f32.xlu0 %v1882
      %v1884 = vpop.xlane.xlu0 %1883
      %v1885 = vsel %vm1221, %v1861, 0.0
      %1886 = vadd.xlane.f32.xlu0 %v1885
      %v1887 = vpop.xlane.xlu0 %1886
      %v1888 = vsel %vm1221, %v1862, 0.0
      %1889 = vadd.xlane.f32.xlu0 %v1888
      %v1890 = vpop.xlane.xlu0 %1889
      %v1891 = vsel %vm1221, %v1863, 0.0
      %1892 = vadd.xlane.f32.xlu0 %v1891
      %v1893 = vpop.xlane.xlu0 %1892
      %v1894 = vsel %vm1221, %v1864, 0.0
      %1895 = vadd.xlane.f32.xlu0 %v1894
      %v1896 = vpop.xlane.xlu0 %1895
      %v1897 = vsel %vm1221, %v1865, 0.0
      %1898 = vadd.xlane.f32.xlu0 %v1897
      %v1899 = vpop.xlane.xlu0 %1898
      %v1900 = vsel %vm1221, %v1866, 0.0
      %1901 = vadd.xlane.f32.xlu0 %v1900
      %v1902 = vpop.xlane.xlu0 %1901
      %v1903 = vsel %vm1221, %v1867, 0.0
      %1904 = vadd.xlane.f32.xlu0 %v1903
      %v1905 = vpop.xlane.xlu0 %1904
      %v1906 = vsel %vm1221, %v1868, 0.0
      %1907 = vadd.xlane.f32.xlu0 %v1906
      %v1908 = vpop.xlane.xlu0 %1907
      %v1909 = vsel %vm1221, %v1869, 0.0
      %1910 = vadd.xlane.f32.xlu0 %v1909
      %v1911 = vpop.xlane.xlu0 %1910
      %v1912 = vsel %vm1221, %v1870, 0.0
      %1913 = vadd.xlane.f32.xlu0 %v1912
      %v1914 = vpop.xlane.xlu0 %1913
      %v1915 = vsel %vm1221, %v1871, 0.0
      %1916 = vadd.xlane.f32.xlu0 %v1915
      %v1917 = vpop.xlane.xlu0 %1916
      %v1918 = vsel %vm1221, %v1872, 0.0
      %1919 = vadd.xlane.f32.xlu0 %v1918
      %v1920 = vpop.xlane.xlu0 %1919
      %v1922 = vsel %vm1221, %v1855, 0
      %1924 = vmatprep.subr.mxu0 0.0
      %1925 = vmatpush1.xpose.msra.mxu0 0.0
      %1926 = vmatprep.subr.mxu0 0.0
      %1927 = vmatpush1.xpose.msra.mxu0 0.0
      %1928 = vmatprep.subr.mxu0 0.0
      %1929 = vmatpush1.xpose.msra.mxu0 0.0
      %1930 = vmatprep.subr.mxu0 0.0
      %1931 = vmatpush1.xpose.msra.mxu0 0.0
      %1932 = vmatprep.subr.mxu0 0.0
      %1933 = vmatpush1.xpose.msra.mxu0 0.0
      %1934 = vmatprep.subr.mxu0 0.0
      %1935 = vmatpush1.xpose.msra.mxu0 0.0
      %1936 = vmatprep.subr.mxu0 0.0
      %1937 = vmatpush1.xpose.msra.mxu0 0.0
      %1938 = vmatprep.subr.mxu0 0.0
      %1939 = vmatpush1.xpose.msra.mxu0 0.0
      %1940 = vmatprep.subr.mxu0 0.0
      %1941 = vmatpush1.xpose.msra.mxu0 0.0
      %1942 = vmatprep.subr.mxu0 0.0
      %1943 = vmatpush1.xpose.msra.mxu0 0.0
      %1944 = vmatprep.subr.mxu0 0.0
      %1945 = vmatpush1.xpose.msra.mxu0 0.0
      %1946 = vmatprep.subr.mxu0 0.0
      %1947 = vmatpush1.xpose.msra.mxu0 0.0
      %1948 = vmatprep.subr.mxu0 0.0
      %1949 = vmatpush1.xpose.msra.mxu0 0.0
      %1950 = vmatprep.subr.mxu0 0.0
      %1951 = vmatpush1.xpose.msra.mxu0 0.0
      %1952 = vmatprep.subr.mxu0 0.0
      %1953 = vmatpush1.xpose.msra.mxu0 0.0
      %1954 = vmatprep.subr.mxu0 0.0
      %1955 = vmatpush1.xpose.msra.mxu0 %v1922
      %1956 = vmatprep.subr.mxu0 0.0
      %1957 = vmatpush2.xpose.msra.mxu0 0.0
      %1958 = vmatprep.subr.mxu0 0.0
      %1959 = vmatpush2.xpose.msra.mxu0 0.0
      %1960 = vmatprep.subr.mxu0 0.0
      %1961 = vmatpush2.xpose.msra.mxu0 0.0
      %1962 = vmatprep.subr.mxu0 0.0
      %1963 = vmatpush2.xpose.msra.mxu0 0.0
      %1964 = vmatprep.subr.mxu0 0.0
      %1965 = vmatpush2.xpose.msra.mxu0 0.0
      %1966 = vmatprep.subr.mxu0 0.0
      %1967 = vmatpush2.xpose.msra.mxu0 0.0
      %1968 = vmatprep.subr.mxu0 0.0
      %1969 = vmatpush2.xpose.msra.mxu0 0.0
      %1970 = vmatprep.subr.mxu0 0.0
      %1971 = vmatpush2.xpose.msra.mxu0 0.0
      %1972 = vmatprep.subr.mxu0 0.0
      %1973 = vmatpush2.xpose.msra.mxu0 0.0
      %1974 = vmatprep.subr.mxu0 0.0
      %1975 = vmatpush2.xpose.msra.mxu0 0.0
      %1976 = vmatprep.subr.mxu0 0.0
      %1977 = vmatpush2.xpose.msra.mxu0 0.0
      %1978 = vmatprep.subr.mxu0 0.0
      %1979 = vmatpush2.xpose.msra.mxu0 0.0
      %1980 = vmatprep.subr.mxu0 0.0
      %1981 = vmatpush2.xpose.msra.mxu0 0.0
      %1982 = vmatprep.subr.mxu0 0.0
      %1983 = vmatpush2.xpose.msra.mxu0 0.0
      %1984 = vmatprep.subr.mxu0 0.0
      %1985 = vmatpush2.xpose.msra.mxu0 0.0
      %1986 = vmatprep.subr.mxu0 0.0
      %1987 = vmatpush2.xpose.msra.mxu0 0.0
      %1988 = vmatprep.mubr.f32.mxu0 0.0
      %1989 = vmatmul.mubr.f32.gmra.mxu0 %v1223
      %v1990 = vpop.f32.mrf.mxu0
      %v1991 = vadd.f32 0.0, %v1990
      %v1992 = vpop.f32.mrf.mxu0
      %1993 = vmatprep.mubr.f32.mxu0 0.0
      %1994 = vmatmul.mubr.f32.gmra.mxu0 %v1226
      %v1995 = vpop.f32.mrf.mxu0
      %v1996 = vadd.f32 0.0, %v1995
      %v1997 = vpop.f32.mrf.mxu0
      %1998 = vmatprep.mubr.f32.mxu0 0.0
      %1999 = vmatmul.mubr.f32.gmra.mxu0 %v1229
      %v2000 = vpop.f32.mrf.mxu0
      %v2001 = vadd.f32 0.0, %v2000
      %v2002 = vpop.f32.mrf.mxu0
      %2003 = vmatprep.mubr.f32.mxu0 0.0
      %2004 = vmatmul.mubr.f32.gmra.mxu0 %v1232
      %v2005 = vpop.f32.mrf.mxu0
      %v2006 = vadd.f32 0.0, %v2005
      %v2007 = vpop.f32.mrf.mxu0
      %2008 = vmatprep.mubr.f32.mxu0 0.0
      %2009 = vmatmul.mubr.f32.gmra.mxu0 %v1235
      %v2010 = vpop.f32.mrf.mxu0
      %v2011 = vadd.f32 0.0, %v2010
      %v2012 = vpop.f32.mrf.mxu0
      %2013 = vmatprep.mubr.f32.mxu0 0.0
      %2014 = vmatmul.mubr.f32.gmra.mxu0 %v1238
      %v2015 = vpop.f32.mrf.mxu0
      %v2016 = vadd.f32 0.0, %v2015
      %v2017 = vpop.f32.mrf.mxu0
      %2018 = vmatprep.mubr.f32.mxu0 0.0
      %2019 = vmatmul.mubr.f32.gmra.mxu0 %v1241
      %v2020 = vpop.f32.mrf.mxu0
      %v2021 = vadd.f32 0.0, %v2020
      %v2022 = vpop.f32.mrf.mxu0
      %2023 = vmatprep.mubr.f32.mxu0 0.0
      %2024 = vmatmul.mubr.f32.gmra.mxu0 %v1244
      %v2025 = vpop.f32.mrf.mxu0
      %v2026 = vadd.f32 0.0, %v2025
      %v2027 = vpop.f32.mrf.mxu0
      %2028 = vmatprep.mubr.f32.mxu0 0.0
      %2029 = vmatmul.mubr.f32.gmra.mxu0 %v1247
      %v2030 = vpop.f32.mrf.mxu0
      %v2031 = vadd.f32 0.0, %v2030
      %v2032 = vpop.f32.mrf.mxu0
      %2033 = vmatprep.mubr.f32.mxu0 0.0
      %2034 = vmatmul.mubr.f32.gmra.mxu0 %v1250
      %v2035 = vpop.f32.mrf.mxu0
      %v2036 = vadd.f32 0.0, %v2035
      %v2037 = vpop.f32.mrf.mxu0
      %2038 = vmatprep.mubr.f32.mxu0 0.0
      %2039 = vmatmul.mubr.f32.gmra.mxu0 %v1253
      %v2040 = vpop.f32.mrf.mxu0
      %v2041 = vadd.f32 0.0, %v2040
      %v2042 = vpop.f32.mrf.mxu0
      %2043 = vmatprep.mubr.f32.mxu0 0.0
      %2044 = vmatmul.mubr.f32.gmra.mxu0 %v1256
      %v2045 = vpop.f32.mrf.mxu0
      %v2046 = vadd.f32 0.0, %v2045
      %v2047 = vpop.f32.mrf.mxu0
      %2048 = vmatprep.mubr.f32.mxu0 0.0
      %2049 = vmatmul.mubr.f32.gmra.mxu0 %v1259
      %v2050 = vpop.f32.mrf.mxu0
      %v2051 = vadd.f32 0.0, %v2050
      %v2052 = vpop.f32.mrf.mxu0
      %2053 = vmatprep.mubr.f32.mxu0 0.0
      %2054 = vmatmul.mubr.f32.gmra.mxu0 %v1262
      %v2055 = vpop.f32.mrf.mxu0
      %v2056 = vadd.f32 0.0, %v2055
      %v2057 = vpop.f32.mrf.mxu0
      %2058 = vmatprep.mubr.f32.mxu0 0.0
      %2059 = vmatmul.mubr.f32.gmra.mxu0 %v1265
      %v2060 = vpop.f32.mrf.mxu0
      %v2061 = vadd.f32 0.0, %v2060
      %v2062 = vpop.f32.mrf.mxu0
      %2063 = vmatprep.mubr.f32.mxu0 0.0
      %2064 = vmatmul.mubr.f32.gmra.mxu0 %v1268
      %v2065 = vpop.f32.mrf.mxu0
      %v2066 = vadd.f32 0.0, %v2065
      %v2067 = vpop.f32.mrf.mxu0
      %2068 = vdwg.mxu0
      %v2070 = vlaneseq
      %v2071 = vshrl.u32 %v2070, 7
      %v2072 = vsub.s32 0, %v2071
      %v2073 = vrot.slane %v1856, %v2072
      %v2075 = vadd.f32 %v1875, %v2073
      %v2076 = vadd.f32 %v1878, %v2073
      %v2077 = vadd.f32 %v1881, %v2073
      %v2078 = vadd.f32 %v1884, %v2073
      %v2079 = vadd.f32 %v1887, %v2073
      %v2080 = vadd.f32 %v1890, %v2073
      %v2081 = vadd.f32 %v1893, %v2073
      %v2082 = vadd.f32 %v1896, %v2073
      %v2083 = vadd.f32 %v1899, %v2073
      %v2084 = vadd.f32 %v1902, %v2073
      %v2085 = vadd.f32 %v1905, %v2073
      %v2086 = vadd.f32 %v1908, %v2073
      %v2087 = vadd.f32 %v1911, %v2073
      %v2088 = vadd.f32 %v1914, %v2073
      %v2089 = vadd.f32 %v1917, %v2073
      %v2090 = vadd.f32 %v1920, %v2073
      %v2091 = vmul.f32 %v1991, 2.0
      %v2092 = vmul.f32 %v1996, 2.0
      %v2093 = vmul.f32 %v2001, 2.0
      %v2094 = vmul.f32 %v2006, 2.0
      %v2095 = vmul.f32 %v2011, 2.0
      %v2096 = vmul.f32 %v2016, 2.0
      %v2097 = vmul.f32 %v2021, 2.0
      %v2098 = vmul.f32 %v2026, 2.0
      %v2099 = vmul.f32 %v2031, 2.0
      %v2100 = vmul.f32 %v2036, 2.0
      %v2101 = vmul.f32 %v2041, 2.0
      %v2102 = vmul.f32 %v2046, 2.0
      %v2103 = vmul.f32 %v2051, 2.0
      %v2104 = vmul.f32 %v2056, 2.0
      %v2105 = vmul.f32 %v2061, 2.0
      %v2106 = vmul.f32 %v2066, 2.0
      %v2107 = vsub.f32 %v2075, %v2091
      %v2108 = vsub.f32 %v2076, %v2092
      %v2109 = vsub.f32 %v2077, %v2093
      %v2110 = vsub.f32 %v2078, %v2094
      %v2111 = vsub.f32 %v2079, %v2095
      %v2112 = vsub.f32 %v2080, %v2096
      %v2113 = vsub.f32 %v2081, %v2097
      %v2114 = vsub.f32 %v2082, %v2098
      %v2115 = vsub.f32 %v2083, %v2099
      %v2116 = vsub.f32 %v2084, %v2100
      %v2117 = vsub.f32 %v2085, %v2101
      %v2118 = vsub.f32 %v2086, %v2102
      %v2119 = vsub.f32 %v2087, %v2103
      %v2120 = vsub.f32 %v2088, %v2104
      %v2121 = vsub.f32 %v2089, %v2105
      %v2122 = vsub.f32 %v2090, %v2106
      %v2123 = vmax.f32 %v2107, 0.0
      %v2124 = vmax.f32 %v2108, 0.0
      %v2125 = vmax.f32 %v2109, 0.0
      %v2126 = vmax.f32 %v2110, 0.0
      %v2127 = vmax.f32 %v2111, 0.0
      %v2128 = vmax.f32 %v2112, 0.0
      %v2129 = vmax.f32 %v2113, 0.0
      %v2130 = vmax.f32 %v2114, 0.0
      %v2131 = vmax.f32 %v2115, 0.0
      %v2132 = vmax.f32 %v2116, 0.0
      %v2133 = vmax.f32 %v2117, 0.0
      %v2134 = vmax.f32 %v2118, 0.0
      %v2135 = vmax.f32 %v2119, 0.0
      %v2136 = vmax.f32 %v2120, 0.0
      %v2137 = vmax.f32 %v2121, 0.0
      %v2138 = vmax.f32 %v2122, 0.0
      %v2139 = vadd.f32 %v2123, 1.0
      %v2140 = vadd.f32 %v2124, 1.0
      %v2141 = vadd.f32 %v2125, 1.0
      %v2142 = vadd.f32 %v2126, 1.0
      %v2143 = vadd.f32 %v2127, 1.0
      %v2144 = vadd.f32 %v2128, 1.0
      %v2145 = vadd.f32 %v2129, 1.0
      %v2146 = vadd.f32 %v2130, 1.0
      %v2147 = vadd.f32 %v2131, 1.0
      %v2148 = vadd.f32 %v2132, 1.0
      %v2149 = vadd.f32 %v2133, 1.0
      %v2150 = vadd.f32 %v2134, 1.0
      %v2151 = vadd.f32 %v2135, 1.0
      %v2152 = vadd.f32 %v2136, 1.0
      %v2153 = vadd.f32 %v2137, 1.0
      %v2154 = vadd.f32 %v2138, 1.0
      %v2155 = vrcp.pop %v2139
      %v2156 = vmul.f32 1.0, %v2155
      %v2157 = vrcp.pop %v2140
      %v2158 = vmul.f32 1.0, %v2157
      %v2159 = vrcp.pop %v2141
      %v2160 = vmul.f32 1.0, %v2159
      %v2161 = vrcp.pop %v2142
      %v2162 = vmul.f32 1.0, %v2161
      %v2163 = vrcp.pop %v2143
      %v2164 = vmul.f32 1.0, %v2163
      %v2165 = vrcp.pop %v2144
      %v2166 = vmul.f32 1.0, %v2165
      %v2167 = vrcp.pop %v2145
      %v2168 = vmul.f32 1.0, %v2167
      %v2169 = vrcp.pop %v2146
      %v2170 = vmul.f32 1.0, %v2169
      %v2171 = vrcp.pop %v2147
      %v2172 = vmul.f32 1.0, %v2171
      %v2173 = vrcp.pop %v2148
      %v2174 = vmul.f32 1.0, %v2173
      %v2175 = vrcp.pop %v2149
      %v2176 = vmul.f32 1.0, %v2175
      %v2177 = vrcp.pop %v2150
      %v2178 = vmul.f32 1.0, %v2177
      %v2179 = vrcp.pop %v2151
      %v2180 = vmul.f32 1.0, %v2179
      %v2181 = vrcp.pop %v2152
      %v2182 = vmul.f32 1.0, %v2181
      %v2183 = vrcp.pop %v2153
      %v2184 = vmul.f32 1.0, %v2183
      %v2185 = vrcp.pop %v2154
      %v2186 = vmul.f32 1.0, %v2185
      %vm2187 = vcmask 31744
      %v2188 = vsel %vm2187, %v2156, 0.0
      %2189 = vadd.xlane.f32.xlu0 %v2188
      %v2190 = vpop.xlane.xlu0 %2189
      %v2191 = vsel %vm2187, %v2158, 0.0
      %2192 = vadd.xlane.f32.xlu0 %v2191
      %v2193 = vpop.xlane.xlu0 %2192
      %v2194 = vsel %vm2187, %v2160, 0.0
      %2195 = vadd.xlane.f32.xlu0 %v2194
      %v2196 = vpop.xlane.xlu0 %2195
      %v2197 = vsel %vm2187, %v2162, 0.0
      %2198 = vadd.xlane.f32.xlu0 %v2197
      %v2199 = vpop.xlane.xlu0 %2198
      %v2200 = vsel %vm2187, %v2164, 0.0
      %2201 = vadd.xlane.f32.xlu0 %v2200
      %v2202 = vpop.xlane.xlu0 %2201
      %v2203 = vsel %vm2187, %v2166, 0.0
      %2204 = vadd.xlane.f32.xlu0 %v2203
      %v2205 = vpop.xlane.xlu0 %2204
      %v2206 = vsel %vm2187, %v2168, 0.0
      %2207 = vadd.xlane.f32.xlu0 %v2206
      %v2208 = vpop.xlane.xlu0 %2207
      %v2209 = vsel %vm2187, %v2170, 0.0
      %2210 = vadd.xlane.f32.xlu0 %v2209
      %v2211 = vpop.xlane.xlu0 %2210
      %v2212 = vsel %vm2187, %v2172, 0.0
      %2213 = vadd.xlane.f32.xlu0 %v2212
      %v2214 = vpop.xlane.xlu0 %2213
      %v2215 = vsel %vm2187, %v2174, 0.0
      %2216 = vadd.xlane.f32.xlu0 %v2215
      %v2217 = vpop.xlane.xlu0 %2216
      %v2218 = vsel %vm2187, %v2176, 0.0
      %2219 = vadd.xlane.f32.xlu0 %v2218
      %v2220 = vpop.xlane.xlu0 %2219
      %v2221 = vsel %vm2187, %v2178, 0.0
      %2222 = vadd.xlane.f32.xlu0 %v2221
      %v2223 = vpop.xlane.xlu0 %2222
      %v2224 = vsel %vm2187, %v2180, 0.0
      %2225 = vadd.xlane.f32.xlu0 %v2224
      %v2226 = vpop.xlane.xlu0 %2225
      %v2227 = vsel %vm2187, %v2182, 0.0
      %2228 = vadd.xlane.f32.xlu0 %v2227
      %v2229 = vpop.xlane.xlu0 %2228
      %v2230 = vsel %vm2187, %v2184, 0.0
      %2231 = vadd.xlane.f32.xlu0 %v2230
      %v2232 = vpop.xlane.xlu0 %2231
      %v2233 = vsel %vm2187, %v2186, 0.0
      %2234 = vadd.xlane.f32.xlu0 %v2233
      %v2235 = vpop.xlane.xlu0 %2234
      %v2236 = vrcp.pop %v2190
      %v2237 = vmul.f32 %v2156, %v2236
      %v2238 = vrcp.pop %v2193
      %v2239 = vmul.f32 %v2158, %v2238
      %v2240 = vrcp.pop %v2196
      %v2241 = vmul.f32 %v2160, %v2240
      %v2242 = vrcp.pop %v2199
      %v2243 = vmul.f32 %v2162, %v2242
      %v2244 = vrcp.pop %v2202
      %v2245 = vmul.f32 %v2164, %v2244
      %v2246 = vrcp.pop %v2205
      %v2247 = vmul.f32 %v2166, %v2246
      %v2248 = vrcp.pop %v2208
      %v2249 = vmul.f32 %v2168, %v2248
      %v2250 = vrcp.pop %v2211
      %v2251 = vmul.f32 %v2170, %v2250
      %v2252 = vrcp.pop %v2214
      %v2253 = vmul.f32 %v2172, %v2252
      %v2254 = vrcp.pop %v2217
      %v2255 = vmul.f32 %v2174, %v2254
      %v2256 = vrcp.pop %v2220
      %v2257 = vmul.f32 %v2176, %v2256
      %v2258 = vrcp.pop %v2223
      %v2259 = vmul.f32 %v2178, %v2258
      %v2260 = vrcp.pop %v2226
      %v2261 = vmul.f32 %v2180, %v2260
      %v2262 = vrcp.pop %v2229
      %v2263 = vmul.f32 %v2182, %v2262
      %v2264 = vrcp.pop %v2232
      %v2265 = vmul.f32 %v2184, %v2264
      %v2266 = vrcp.pop %v2235
      %v2267 = vmul.f32 %v2186, %v2266
      %2268 = vst.msk [vmem:[%s577] sm:$0xff] %vm2187, %v2237
      %2269 = vst.msk [vmem:[%s577 + $0x8] sm:$0xff] %vm2187, %v2239
      %2270 = vst.msk [vmem:[%s577 + $0x10] sm:$0xff] %vm2187, %v2241
      %2271 = vst.msk [vmem:[%s577 + $0x18] sm:$0xff] %vm2187, %v2243
      %2272 = vst.msk [vmem:[%s577 + $0x20] sm:$0xff] %vm2187, %v2245
      %2273 = vst.msk [vmem:[%s577 + $0x28] sm:$0xff] %vm2187, %v2247
      %2274 = vst.msk [vmem:[%s577 + $0x30] sm:$0xff] %vm2187, %v2249
      %2275 = vst.msk [vmem:[%s577 + $0x38] sm:$0xff] %vm2187, %v2251
      %2276 = vst.msk [vmem:[%s577 + $0x40] sm:$0xff] %vm2187, %v2253
      %2277 = vst.msk [vmem:[%s577 + $0x48] sm:$0xff] %vm2187, %v2255
      %2278 = vst.msk [vmem:[%s577 + $0x50] sm:$0xff] %vm2187, %v2257
      %2279 = vst.msk [vmem:[%s577 + $0x58] sm:$0xff] %vm2187, %v2259
      %2280 = vst.msk [vmem:[%s577 + $0x60] sm:$0xff] %vm2187, %v2261
      %2281 = vst.msk [vmem:[%s577 + $0x68] sm:$0xff] %vm2187, %v2263
      %2282 = vst.msk [vmem:[%s577 + $0x70] sm:$0xff] %vm2187, %v2265
      %2283 = vst.msk [vmem:[%s577 + $0x78] sm:$0xff] %vm2187, %v2267
      %s2284 = smul.u32 16, %s29
      %p2285 = scmp.lt.s32.totalorder %s2284, 31
      %s2286 = scalar_select %p2285, %s2284, 31
      %s2287 = smul.addr %s2286, 8
      %s2288 = scalar_lea.vmem %s15, %s2287
      %s2289 = smul.u32 16, %s29
      %p2290 = scmp.lt.s32.totalorder %s2289, 31
      %s2291 = scalar_select %p2290, %s2289, 31
      %s2292 = smul.addr %s2291, 8
      %s2293 = scalar_lea.vmem %s16, %s2292
      %s2294 = smul.u32 16, %s29
      %p2295 = scmp.lt.s32.totalorder %s2294, 31
      %s2296 = scalar_select %p2295, %s2294, 31
      %s2297 = smul.addr %s2296, 8
      %s2298 = scalar_lea.vmem %s17, %s2297
      // Predicated region
      $region81: #{dcp_dec_forward.7} parent=79 // pred_check
        %p2299 = pneg %p367
      $region82: #{dcp_dec_forward.7} parent=79 // pred_check_branch
        %2301 = sbr.rel (%p2299) target = $region84
      $region83: #{dcp_dec_forward.7} parent=79 // pred_region
        %s2302 = smul.u32 16, %s29
      $region84: #{dcp_dec_forward.7} parent=79 // pred_fallthru
        _
      // Predicated region
      $region85: #{dcp_dec_forward.7} parent=79 // pred_check
        %p2303 = pneg %p393
      $region86: #{dcp_dec_forward.7} parent=79 // pred_check_branch
        %2305 = sbr.rel (%p2303) target = $region88
      $region87: #{dcp_dec_forward.7} parent=79 // pred_region
        %s2306 = smul.u32 16, %s29
      $region88: #{dcp_dec_forward.7} parent=79 // pred_fallthru
        _
      // Predicated region
      $region89: #{dcp_dec_forward.7} parent=79 // pred_check
        %p2307 = pneg %p419
      $region90: #{dcp_dec_forward.7} parent=79 // pred_check_branch
        %2309 = sbr.rel (%p2307) target = $region92
      $region91: #{dcp_dec_forward.7} parent=79 // pred_region
        %s2310 = smul.u32 16, %s29
      $region92: #{dcp_dec_forward.7} parent=79 // pred_fallthru
        _
    $region80: #{dcp_dec_forward.7} parent=5 // pred_fallthru
      _
    %p2311 = scmp.le.s32.totalorder 2, %s24
    // Predicated region
    $region93: #{dcp_dec_forward.7} parent=5 // pred_check
      %p2312 = pneg %p2311
    $region94: #{dcp_dec_forward.7} parent=5 // pred_check_branch
      %2314 = sbr.rel (%p2312) target = $region96
    $region95: #{dcp_dec_forward.7} parent=5 // pred_region
      %s2315 = ssub.s32 %s24, 2
      // Predicated region
      $region97: #{dcp_dec_forward.7} parent=95 // pred_check
        %p2316 = pneg %p373
      $region98: #{dcp_dec_forward.7} parent=95 // pred_check_branch
        %2318 = sbr.rel (%p2316) target = $region100
      $region99: #{dcp_dec_forward.7} parent=95 // pred_region
        %s2319 = smul.u32 16, %s30
        %p2320 = scmp.lt.s32.totalorder %s2319, 31
        %s2321 = scalar_select %p2320, %s2319, 31
        %s2322 = smul.addr %s2321, 8
        %s2323 = scalar_lea.vmem %s15, %s2322
      $region100: #{dcp_dec_forward.7} parent=95 // pred_fallthru
        _
      // Predicated region
      $region101: #{dcp_dec_forward.7} parent=95 // pred_check
        %p2324 = pneg %p399
      $region102: #{dcp_dec_forward.7} parent=95 // pred_check_branch
        %2326 = sbr.rel (%p2324) target = $region104
      $region103: #{dcp_dec_forward.7} parent=95 // pred_region
        %s2327 = smul.u32 16, %s30
        %p2328 = scmp.lt.s32.totalorder %s2327, 31
        %s2329 = scalar_select %p2328, %s2327, 31
        %s2330 = smul.addr %s2329, 8
        %s2331 = scalar_lea.vmem %s16, %s2330
      $region104: #{dcp_dec_forward.7} parent=95 // pred_fallthru
        _
      // Predicated region
      $region105: #{dcp_dec_forward.7} parent=95 // pred_check
        %p2332 = pneg %p425
      $region106: #{dcp_dec_forward.7} parent=95 // pred_check_branch
        %2334 = sbr.rel (%p2332) target = $region108
      $region107: #{dcp_dec_forward.7} parent=95 // pred_region
        %s2335 = smul.u32 16, %s30
        %p2336 = scmp.lt.s32.totalorder %s2335, 31
        %s2337 = scalar_select %p2336, %s2335, 31
        %s2338 = smul.addr %s2337, 8
        %s2339 = scalar_lea.vmem %s17, %s2338
      $region108: #{dcp_dec_forward.7} parent=95 // pred_fallthru
        _
    $region96: #{dcp_dec_forward.7} parent=5 // pred_fallthru
      _
  $region6: #{dcp_dec_forward.7} parent=0 // loop_footer
    %s28 = sadd.s32 1, %s24
  $region7: #{dcp_dec_forward.7} parent=0 // loop_footer_branch
    %23 = sbr.rel target = $region3
  $region8: #{dcp_dec_forward.7} parent=0 // loop_exit
    _

// kernel: dcp_dec_forward.12
$region0: #{dcp_dec_forward.12}
  #allocation0 [shape = 'u32[]', space=smem, size = 0x4, offset = 0x4, fixed_abs, tag = 'smem constant byte address 0x4 - core index']
  #allocation1 [shape = 'u32[144,128]{1,0:T(1,128)}', space=vmem, size = 0x12000, scoped, tag = 'internal scratch']
  %s0 = inlined_call_operand.vmem [shape: f32[256,16], index: 0, kind: input, shape index: {}, may-alias: {0,1}]
  %s1 = inlined_call_operand.vmem [shape: f32[256,16], index: 1, kind: input, shape index: {}, may-alias: {0,1}]
  %s2 = inlined_call_operand.hbm [shape: f32[256,256], index: 2, kind: output, shape index: {}]
  %s3 = sld [smem:[#allocation0]]
  $region41: #{dcp_dec_forward.12} parent=0
    _
  %s5 = ssub.s32 1, %s3
  %s6 = scalar_select 0, %s5, %s3
  $region1: #{dcp_dec_forward.12} parent=0
    #allocation2 [shape = 'u8[131072]{0}', space=vmem, size = 0x20000, scoped, tag = 'output window, operand 0']
    #allocation3 [shape = 's32[2]{0}', space=sflag, size = 0x8, scoped, tag = 'scoped memory for dcp_dec_forward.12']
    %7 = vsyncpa [#allocation3], 0
    %s8 = scalar_lea.sflag [#allocation3], 1
    %9 = vsyncpa %s8, 0
    loop: start=0, step=1, limit=6
    $region2: #{dcp_dec_forward.12} parent=1 // loop_pre_header
      _
    $region3: #{dcp_dec_forward.12} parent=1 // loop_header
      %s11 = sphi 0, %s15
      %p12 = scmp.ge.s32.totalorder %s11, 6
      %s18 = sphi 0, %s30
      %s19 = sphi 0, %s26
      %s20 = sphi 0, %s18
      %s21 = sphi 0, %s19
      %s22 = sphi 0, %s20
      %s23 = sphi 0, %s21
      %s33 = sphi 0, %s35
      %s36 = sphi 0, %s33
      %s37 = sphi 0, %s36
      %s53 = sphi 0, %s37
      %s59 = sphi 0, %s61
      %s62 = sphi 0, %s59
      %s63 = sphi 0, %s62
      %s79 = sphi 0, %s63
      %s87 = sphi 0, %s89
      %s90 = sphi 0, %s87
      %s91 = sphi 0, %s90
      %s107 = sphi 0, %s91
    $region4: #{dcp_dec_forward.12} parent=1 // loop_header_branch
      %14 = sbr.rel (%p12) target = $region8
    $region5: #{dcp_dec_forward.12} parent=1 // loop_body
      %s16 = ssub.s32 %s11, 1
      %s17 = ssub.s32 %s11, 2
      %s24 = sadd.s32 1, %s19
      %p25 = scmp.ge.s32.totalorder %s24, 2
      %s26 = scalar_select %p25, 0, %s24
      %s27 = sadd.s32 1, %s18
      %s28 = scalar_select %p25, %s27, %s18
      %p29 = scmp.ge.s32.totalorder %s28, 2
      %s30 = scalar_select %p29, 0, %s28
      %s31 = ssub.s32 %s18, %s30
      %p32 = scmp.eq.s32.totalorder %s31, 0
      %s34 = sadd.s32 %s33, 1
      %s35 = scalar_select %p32, %s33, %s34
      %p38 = pneg %p32
      %p39 = scmp.eq.s32.totalorder %s11, 3
      %p40 = por %p38, %p39
      %p41 = scmp.ne.s32.totalorder %s33, %s36
      %p42 = scmp.eq.s32.totalorder %s11, 0
      %p43 = por %p41, %p42
      %p44 = scmp.ne.s32.totalorder %s33, %s36
      %p45 = scmp.eq.s32.totalorder %s16, 3
      %p46 = por %p44, %p45
      %p47 = scmp.ne.s32.totalorder %s36, %s37
      %p48 = scmp.eq.s32.totalorder %s16, 0
      %p49 = por %p47, %p48
      %p50 = scmp.ne.s32.totalorder %s36, %s37
      %p51 = scmp.eq.s32.totalorder %s17, 3
      %p52 = por %p50, %p51
      %p54 = scmp.ne.s32.totalorder %s37, %s53
      %p55 = scmp.eq.s32.totalorder %s17, 0
      %p56 = por %p54, %p55
      %s57 = ssub.s32 %s19, %s26
      %p58 = scmp.eq.s32.totalorder %s57, 0
      %s60 = sadd.s32 %s59, 1
      %s61 = scalar_select %p58, %s59, %s60
      %p64 = pneg %p58
      %p65 = scmp.eq.s32.totalorder %s11, 3
      %p66 = por %p64, %p65
      %p67 = scmp.ne.s32.totalorder %s59, %s62
      %p68 = scmp.eq.s32.totalorder %s11, 0
      %p69 = por %p67, %p68
      %p70 = scmp.ne.s32.totalorder %s59, %s62
      %p71 = scmp.eq.s32.totalorder %s16, 3
      %p72 = por %p70, %p71
      %p73 = scmp.ne.s32.totalorder %s62, %s63
      %p74 = scmp.eq.s32.totalorder %s16, 0
      %p75 = por %p73, %p74
      %p76 = scmp.ne.s32.totalorder %s62, %s63
      %p77 = scmp.eq.s32.totalorder %s17, 3
      %p78 = por %p76, %p77
      %p80 = scmp.ne.s32.totalorder %s63, %s79
      %p81 = scmp.eq.s32.totalorder %s17, 0
      %p82 = por %p80, %p81
      %s83 = ssub.s32 %s18, %s30
      %s84 = ssub.s32 %s19, %s26
      %s85 = sor.u32 %s83, %s84
      %p86 = scmp.eq.s32.totalorder %s85, 0
      %s88 = sadd.s32 %s87, 1
      %s89 = scalar_select %p86, %s87, %s88
      %p92 = pneg %p86
      %p93 = scmp.eq.s32.totalorder %s11, 3
      %p94 = por %p92, %p93
      %p95 = scmp.ne.s32.totalorder %s87, %s90
      %p96 = scmp.eq.s32.totalorder %s11, 0
      %p97 = por %p95, %p96
      %p98 = scmp.ne.s32.totalorder %s87, %s90
      %p99 = scmp.eq.s32.totalorder %s16, 3
      %p100 = por %p98, %p99
      %p101 = scmp.ne.s32.totalorder %s90, %s91
      %p102 = scmp.eq.s32.totalorder %s16, 0
      %p103 = por %p101, %p102
      %p104 = scmp.ne.s32.totalorder %s90, %s91
      %p105 = scmp.eq.s32.totalorder %s17, 3
      %p106 = por %p104, %p105
      %p108 = scmp.ne.s32.totalorder %s91, %s107
      %p109 = scmp.eq.s32.totalorder %s17, 0
      %p110 = por %p108, %p109
      %p111 = scmp.le.s32.totalorder 1, %s11
      %p112 = scmp.lt.s32.totalorder %s11, 5
      %p113 = pnand %p111, %p112
      %p114 = pneg %p113
      // Predicated region
      $region9: #{dcp_dec_forward.12} parent=5 // pred_check
        _
      $region10: #{dcp_dec_forward.12} parent=5 // pred_check_branch
        %116 = sbr.rel (%p113) target = $region12
      $region11: #{dcp_dec_forward.12} parent=5 // pred_region
        %s117 = ssub.s32 %s11, 1
      $region12: #{dcp_dec_forward.12} parent=5 // pred_fallthru
        _
      %p118 = scmp.lt.s32.totalorder %s11, 4
      // Predicated region
      $region13: #{dcp_dec_forward.12} parent=5 // pred_check
        %p119 = pneg %p118
      $region14: #{dcp_dec_forward.12} parent=5 // pred_check_branch
        %121 = sbr.rel (%p119) target = $region16
      $region15: #{dcp_dec_forward.12} parent=5 // pred_region
        // Predicated region
        $region17: #{dcp_dec_forward.12} parent=15 // pred_check
          %p122 = pneg %p43
        $region18: #{dcp_dec_forward.12} parent=15 // pred_check_branch
          %124 = sbr.rel (%p122) target = $region20
        $region19: #{dcp_dec_forward.12} parent=15 // pred_region
          %s125 = smul.u32 16, %s18
          %p126 = scmp.lt.s32.totalorder %s125, 31
          %s127 = scalar_select %p126, %s125, 31
          %s128 = smul.addr %s127, 8
          %s129 = scalar_lea.vmem %s0, %s128
          %s130 = smul.u32 16, %s18
        $region20: #{dcp_dec_forward.12} parent=15 // pred_fallthru
          _
        // Predicated region
        $region21: #{dcp_dec_forward.12} parent=15 // pred_check
          %p131 = pneg %p69
        $region22: #{dcp_dec_forward.12} parent=15 // pred_check_branch
          %133 = sbr.rel (%p131) target = $region24
        $region23: #{dcp_dec_forward.12} parent=15 // pred_region
          %s134 = smul.u32 16, %s19
          %p135 = scmp.lt.s32.totalorder %s134, 31
          %s136 = scalar_select %p135, %s134, 31
          %s137 = smul.addr %s136, 8
          %s138 = scalar_lea.vmem %s1, %s137
          %s139 = smul.u32 16, %s19
        $region24: #{dcp_dec_forward.12} parent=15 // pred_fallthru
          _
      $region16: #{dcp_dec_forward.12} parent=5 // pred_fallthru
        _
      %p140 = scmp.le.s32.totalorder 1, %s11
      %p141 = scmp.lt.s32.totalorder %s11, 5
      %p142 = pnand %p140, %p141
      %p143 = pneg %p142
      // Predicated region
      $region25: #{dcp_dec_forward.12} parent=5 // pred_check
        _
      $region26: #{dcp_dec_forward.12} parent=5 // pred_check_branch
        %145 = sbr.rel (%p142) target = $region28
      $region27: #{dcp_dec_forward.12} parent=5 // pred_region
        %s146 = ssub.s32 %s11, 1
        %s147 = smul.u32 16, %s20
        %p148 = scmp.lt.s32.totalorder %s147, 31
        %s149 = scalar_select %p148, %s147, 31
        %s150 = smul.addr %s149, 8
        %s151 = scalar_lea.vmem %s0, %s150
        %p152 = pneg %p49
        %p153 = pneg %p46
        %s154 = smul.u32 16, %s21
        %p155 = scmp.lt.s32.totalorder %s154, 31
        %s156 = scalar_select %p155, %s154, 31
        %s157 = smul.addr %s156, 8
        %s158 = scalar_lea.vmem %s1, %s157
        %p159 = pneg %p75
        %p160 = pneg %p72
        %p161 = pneg %p103
        %p162 = pneg %p100
        %s163 = sand.u32 %s90, 1
        %s164 = scalar_lea.sflag [#allocation3], %s163
        %s165 = sand.u32 %s90, 1
        %s166 = smul.addr %s165, 128
        %s167 = scalar_lea.vmem [#allocation2], %s166
        %s168 = smul.u32 16, %s20
        %p169 = scmp.lt.s32.totalorder %s168, 31
        %s170 = scalar_select %p169, %s168, 31
        %s171 = smul.addr %s170, 8
        %s172 = scalar_lea.vmem %s0, %s171
        %s173 = smul.u32 16, %s20
        %s174 = smul.u32 16, %s21
        %p175 = scmp.lt.s32.totalorder %s174, 31
        %s176 = scalar_select %p175, %s174, 31
        %s177 = smul.addr %s176, 8
        %s178 = scalar_lea.vmem %s1, %s177
        %s179 = smul.u32 16, %s21
        %s180 = smul.u32 16, %s20
        %v181 = vld [vmem:[%s172] sm:$0xff]
        %v182 = vld [vmem:[%s172 + $0x8] sm:$0xff]
        %v183 = vld [vmem:[%s172 + $0x10] sm:$0xff]
        %v184 = vld [vmem:[%s172 + $0x18] sm:$0xff]
        %v185 = vld [vmem:[%s172 + $0x20] sm:$0xff]
        %v186 = vld [vmem:[%s172 + $0x28] sm:$0xff]
        %v187 = vld [vmem:[%s172 + $0x30] sm:$0xff]
        %v188 = vld [vmem:[%s172 + $0x38] sm:$0xff]
        %v189 = vld [vmem:[%s172 + $0x40] sm:$0xff]
        %v190 = vld [vmem:[%s172 + $0x48] sm:$0xff]
        %v191 = vld [vmem:[%s172 + $0x50] sm:$0xff]
        %v192 = vld [vmem:[%s172 + $0x58] sm:$0xff]
        %v193 = vld [vmem:[%s172 + $0x60] sm:$0xff]
        %v194 = vld [vmem:[%s172 + $0x68] sm:$0xff]
        %v195 = vld [vmem:[%s172 + $0x70] sm:$0xff]
        %v196 = vld [vmem:[%s172 + $0x78] sm:$0xff]
        %v197 = vld [vmem:[%s178] sm:$0xff]
        %v198 = vld [vmem:[%s178 + $0x8] sm:$0xff]
        %v199 = vld [vmem:[%s178 + $0x10] sm:$0xff]
        %v200 = vld [vmem:[%s178 + $0x18] sm:$0xff]
        %v201 = vld [vmem:[%s178 + $0x20] sm:$0xff]
        %v202 = vld [vmem:[%s178 + $0x28] sm:$0xff]
        %v203 = vld [vmem:[%s178 + $0x30] sm:$0xff]
        %v204 = vld [vmem:[%s178 + $0x38] sm:$0xff]
        %v205 = vld [vmem:[%s178 + $0x40] sm:$0xff]
        %v206 = vld [vmem:[%s178 + $0x48] sm:$0xff]
        %v207 = vld [vmem:[%s178 + $0x50] sm:$0xff]
        %v208 = vld [vmem:[%s178 + $0x58] sm:$0xff]
        %v209 = vld [vmem:[%s178 + $0x60] sm:$0xff]
        %v210 = vld [vmem:[%s178 + $0x68] sm:$0xff]
        %v211 = vld [vmem:[%s178 + $0x70] sm:$0xff]
        %v212 = vld [vmem:[%s178 + $0x78] sm:$0xff]
        %vm213 = vcmask 130048
        %v215 = vsel %vm213, %v181, 0
        %v218 = vsel %vm213, %v182, 0
        %v221 = vsel %vm213, %v183, 0
        %v224 = vsel %vm213, %v184, 0
        %v227 = vsel %vm213, %v185, 0
        %v230 = vsel %vm213, %v186, 0
        %v233 = vsel %vm213, %v187, 0
        %v236 = vsel %vm213, %v188, 0
        %v239 = vsel %vm213, %v189, 0
        %v242 = vsel %vm213, %v190, 0
        %v245 = vsel %vm213, %v191, 0
        %v248 = vsel %vm213, %v192, 0
        %v251 = vsel %vm213, %v193, 0
        %v254 = vsel %vm213, %v194, 0
        %v257 = vsel %vm213, %v195, 0
        %v260 = vsel %vm213, %v196, 0
        %v263 = vsel %vm213, %v197, 0
        %v266 = vsel %vm213, %v198, 0
        %v269 = vsel %vm213, %v199, 0
        %v272 = vsel %vm213, %v200, 0
        %v275 = vsel %vm213, %v201, 0
        %v278 = vsel %vm213, %v202, 0
        %v281 = vsel %vm213, %v203, 0
        %v284 = vsel %vm213, %v204, 0
        %v287 = vsel %vm213, %v205, 0
        %v290 = vsel %vm213, %v206, 0
        %v293 = vsel %vm213, %v207, 0
        %v296 = vsel %vm213, %v208, 0
        %v299 = vsel %vm213, %v209, 0
        %v302 = vsel %vm213, %v210, 0
        %v305 = vsel %vm213, %v211, 0
        %v308 = vsel %vm213, %v212, 0
        %310 = vmatprep.subr.mxu0 0.0
        %311 = vmatpush1.xpose.msra.mxu0 %v308
        %312 = vmatprep.subr.mxu0 0.0
        %313 = vmatpush1.xpose.msra.mxu0 %v305
        %314 = vmatprep.subr.mxu0 0.0
        %315 = vmatpush1.xpose.msra.mxu0 %v302
        %316 = vmatprep.subr.mxu0 0.0
        %317 = vmatpush1.xpose.msra.mxu0 %v299
        %318 = vmatprep.subr.mxu0 0.0
        %319 = vmatpush1.xpose.msra.mxu0 %v296
        %320 = vmatprep.subr.mxu0 0.0
        %321 = vmatpush1.xpose.msra.mxu0 %v293
        %322 = vmatprep.subr.mxu0 0.0
        %323 = vmatpush1.xpose.msra.mxu0 %v290
        %324 = vmatprep.subr.mxu0 0.0
        %325 = vmatpush1.xpose.msra.mxu0 %v287
        %326 = vmatprep.subr.mxu0 0.0
        %327 = vmatpush1.xpose.msra.mxu0 %v284
        %328 = vmatprep.subr.mxu0 0.0
        %329 = vmatpush1.xpose.msra.mxu0 %v281
        %330 = vmatprep.subr.mxu0 0.0
        %331 = vmatpush1.xpose.msra.mxu0 %v278
        %332 = vmatprep.subr.mxu0 0.0
        %333 = vmatpush1.xpose.msra.mxu0 %v275
        %334 = vmatprep.subr.mxu0 0.0
        %335 = vmatpush1.xpose.msra.mxu0 %v272
        %336 = vmatprep.subr.mxu0 0.0
        %337 = vmatpush1.xpose.msra.mxu0 %v269
        %338 = vmatprep.subr.mxu0 0.0
        %339 = vmatpush1.xpose.msra.mxu0 %v266
        %340 = vmatprep.subr.mxu0 0.0
        %341 = vmatpush1.xpose.msra.mxu0 %v263
        %342 = vmatprep.subr.mxu0 0.0
        %343 = vmatpush2.xpose.msra.mxu0 0.0
        %344 = vmatprep.subr.mxu0 0.0
        %345 = vmatpush2.xpose.msra.mxu0 0.0
        %346 = vmatprep.subr.mxu0 0.0
        %347 = vmatpush2.xpose.msra.mxu0 0.0
        %348 = vmatprep.subr.mxu0 0.0
        %349 = vmatpush2.xpose.msra.mxu0 0.0
        %350 = vmatprep.subr.mxu0 0.0
        %351 = vmatpush2.xpose.msra.mxu0 0.0
        %352 = vmatprep.subr.mxu0 0.0
        %353 = vmatpush2.xpose.msra.mxu0 0.0
        %354 = vmatprep.subr.mxu0 0.0
        %355 = vmatpush2.xpose.msra.mxu0 0.0
        %356 = vmatprep.subr.mxu0 0.0
        %357 = vmatpush2.xpose.msra.mxu0 0.0
        %358 = vmatprep.subr.mxu0 0.0
        %359 = vmatpush2.xpose.msra.mxu0 0.0
        %360 = vmatprep.subr.mxu0 0.0
        %361 = vmatpush2.xpose.msra.mxu0 0.0
        %362 = vmatprep.subr.mxu0 0.0
        %363 = vmatpush2.xpose.msra.mxu0 0.0
        %364 = vmatprep.subr.mxu0 0.0
        %365 = vmatpush2.xpose.msra.mxu0 0.0
        %366 = vmatprep.subr.mxu0 0.0
        %367 = vmatpush2.xpose.msra.mxu0 0.0
        %368 = vmatprep.subr.mxu0 0.0
        %369 = vmatpush2.xpose.msra.mxu0 0.0
        %370 = vmatprep.subr.mxu0 0.0
        %371 = vmatpush2.xpose.msra.mxu0 0.0
        %372 = vmatprep.subr.mxu0 0.0
        %373 = vmatpush2.xpose.msra.mxu0 0.0
        %374 = vmatprep.mubr.f32.mxu0 0.0
        %375 = vmatmul.mubr.f32.gmra.mxu0 %v215
        %v376 = vpop.f32.mrf.mxu0
        %v377 = vadd.f32 0.0, %v376
        %v378 = vpop.f32.mrf.mxu0
        %379 = vmatprep.mubr.f32.mxu0 0.0
        %380 = vmatmul.mubr.f32.gmra.mxu0 %v218
        %v381 = vpop.f32.mrf.mxu0
        %v382 = vadd.f32 0.0, %v381
        %v383 = vpop.f32.mrf.mxu0
        %384 = vmatprep.mubr.f32.mxu0 0.0
        %385 = vmatmul.mubr.f32.gmra.mxu0 %v221
        %v386 = vpop.f32.mrf.mxu0
        %v387 = vadd.f32 0.0, %v386
        %v388 = vpop.f32.mrf.mxu0
        %389 = vmatprep.mubr.f32.mxu0 0.0
        %390 = vmatmul.mubr.f32.gmra.mxu0 %v224
        %v391 = vpop.f32.mrf.mxu0
        %v392 = vadd.f32 0.0, %v391
        %v393 = vpop.f32.mrf.mxu0
        %394 = vmatprep.mubr.f32.mxu0 0.0
        %395 = vmatmul.mubr.f32.gmra.mxu0 %v227
        %v396 = vpop.f32.mrf.mxu0
        %v397 = vadd.f32 0.0, %v396
        %v398 = vpop.f32.mrf.mxu0
        %399 = vmatprep.mubr.f32.mxu0 0.0
        %400 = vmatmul.mubr.f32.gmra.mxu0 %v230
        %v401 = vpop.f32.mrf.mxu0
        %v402 = vadd.f32 0.0, %v401
        %v403 = vpop.f32.mrf.mxu0
        %404 = vmatprep.mubr.f32.mxu0 0.0
        %405 = vmatmul.mubr.f32.gmra.mxu0 %v233
        %v406 = vpop.f32.mrf.mxu0
        %v407 = vadd.f32 0.0, %v406
        %v408 = vpop.f32.mrf.mxu0
        %409 = vmatprep.mubr.f32.mxu0 0.0
        %410 = vmatmul.mubr.f32.gmra.mxu0 %v236
        %v411 = vpop.f32.mrf.mxu0
        %v412 = vadd.f32 0.0, %v411
        %v413 = vpop.f32.mrf.mxu0
        %414 = vmatprep.mubr.f32.mxu0 0.0
        %415 = vmatmul.mubr.f32.gmra.mxu0 %v239
        %v416 = vpop.f32.mrf.mxu0
        %v417 = vadd.f32 0.0, %v416
        %v418 = vpop.f32.mrf.mxu0
        %419 = vmatprep.mubr.f32.mxu0 0.0
        %420 = vmatmul.mubr.f32.gmra.mxu0 %v242
        %v421 = vpop.f32.mrf.mxu0
        %v422 = vadd.f32 0.0, %v421
        %v423 = vpop.f32.mrf.mxu0
        %424 = vmatprep.mubr.f32.mxu0 0.0
        %425 = vmatmul.mubr.f32.gmra.mxu0 %v245
        %v426 = vpop.f32.mrf.mxu0
        %v427 = vadd.f32 0.0, %v426
        %v428 = vpop.f32.mrf.mxu0
        %429 = vmatprep.mubr.f32.mxu0 0.0
        %430 = vmatmul.mubr.f32.gmra.mxu0 %v248
        %v431 = vpop.f32.mrf.mxu0
        %v432 = vadd.f32 0.0, %v431
        %v433 = vpop.f32.mrf.mxu0
        %434 = vmatprep.mubr.f32.mxu0 0.0
        %435 = vmatmul.mubr.f32.gmra.mxu0 %v251
        %v436 = vpop.f32.mrf.mxu0
        %v437 = vadd.f32 0.0, %v436
        %v438 = vpop.f32.mrf.mxu0
        %439 = vmatprep.mubr.f32.mxu0 0.0
        %440 = vmatmul.mubr.f32.gmra.mxu0 %v254
        %v441 = vpop.f32.mrf.mxu0
        %v442 = vadd.f32 0.0, %v441
        %v443 = vpop.f32.mrf.mxu0
        %444 = vmatprep.mubr.f32.mxu0 0.0
        %445 = vmatmul.mubr.f32.gmra.mxu0 %v257
        %v446 = vpop.f32.mrf.mxu0
        %v447 = vadd.f32 0.0, %v446
        %v448 = vpop.f32.mrf.mxu0
        %449 = vmatprep.mubr.f32.mxu0 0.0
        %450 = vmatmul.mubr.f32.gmra.mxu0 %v260
        %v451 = vpop.f32.mrf.mxu0
        %v452 = vadd.f32 0.0, %v451
        %v453 = vpop.f32.mrf.mxu0
        %454 = vdwg.mxu0
        %v455 = vxor.u32 %v377, 2147483648
        %v456 = vxor.u32 %v382, 2147483648
        %v457 = vxor.u32 %v387, 2147483648
        %v458 = vxor.u32 %v392, 2147483648
        %v459 = vxor.u32 %v397, 2147483648
        %v460 = vxor.u32 %v402, 2147483648
        %v461 = vxor.u32 %v407, 2147483648
        %v462 = vxor.u32 %v412, 2147483648
        %v463 = vxor.u32 %v417, 2147483648
        %v464 = vxor.u32 %v422, 2147483648
        %v465 = vxor.u32 %v427, 2147483648
        %v466 = vxor.u32 %v432, 2147483648
        %v467 = vxor.u32 %v437, 2147483648
        %v468 = vxor.u32 %v442, 2147483648
        %v469 = vxor.u32 %v447, 2147483648
        %v470 = vxor.u32 %v452, 2147483648
        %v471 = vmul.f32 %v455, 1.442695
        %v472 = vpow.pop %v471
        %v473 = vmul.f32 %v456, 1.442695
        %v474 = vpow.pop %v473
        %v475 = vmul.f32 %v457, 1.442695
        %v476 = vpow.pop %v475
        %v477 = vmul.f32 %v458, 1.442695
        %v478 = vpow.pop %v477
        %v479 = vmul.f32 %v459, 1.442695
        %v480 = vpow.pop %v479
        %v481 = vmul.f32 %v460, 1.442695
        %v482 = vpow.pop %v481
        %v483 = vmul.f32 %v461, 1.442695
        %v484 = vpow.pop %v483
        %v485 = vmul.f32 %v462, 1.442695
        %v486 = vpow.pop %v485
        %v487 = vmul.f32 %v463, 1.442695
        %v488 = vpow.pop %v487
        %v489 = vmul.f32 %v464, 1.442695
        %v490 = vpow.pop %v489
        %v491 = vmul.f32 %v465, 1.442695
        %v492 = vpow.pop %v491
        %v493 = vmul.f32 %v466, 1.442695
        %v494 = vpow.pop %v493
        %v495 = vmul.f32 %v467, 1.442695
        %v496 = vpow.pop %v495
        %v497 = vmul.f32 %v468, 1.442695
        %v498 = vpow.pop %v497
        %v499 = vmul.f32 %v469, 1.442695
        %v500 = vpow.pop %v499
        %v501 = vmul.f32 %v470, 1.442695
        %v502 = vpow.pop %v501
        %v503 = vadd.f32 %v472, 1.0
        %v504 = vadd.f32 %v474, 1.0
        %v505 = vadd.f32 %v476, 1.0
        %v506 = vadd.f32 %v478, 1.0
        %v507 = vadd.f32 %v480, 1.0
        %v508 = vadd.f32 %v482, 1.0
        %v509 = vadd.f32 %v484, 1.0
        %v510 = vadd.f32 %v486, 1.0
        %v511 = vadd.f32 %v488, 1.0
        %v512 = vadd.f32 %v490, 1.0
        %v513 = vadd.f32 %v492, 1.0
        %v514 = vadd.f32 %v494, 1.0
        %v515 = vadd.f32 %v496, 1.0
        %v516 = vadd.f32 %v498, 1.0
        %v517 = vadd.f32 %v500, 1.0
        %v518 = vadd.f32 %v502, 1.0
        %v519 = vrcp.pop %v503
        %v520 = vmul.f32 1.0, %v519
        %v521 = vrcp.pop %v504
        %v522 = vmul.f32 1.0, %v521
        %v523 = vrcp.pop %v505
        %v524 = vmul.f32 1.0, %v523
        %v525 = vrcp.pop %v506
        %v526 = vmul.f32 1.0, %v525
        %v527 = vrcp.pop %v507
        %v528 = vmul.f32 1.0, %v527
        %v529 = vrcp.pop %v508
        %v530 = vmul.f32 1.0, %v529
        %v531 = vrcp.pop %v509
        %v532 = vmul.f32 1.0, %v531
        %v533 = vrcp.pop %v510
        %v534 = vmul.f32 1.0, %v533
        %v535 = vrcp.pop %v511
        %v536 = vmul.f32 1.0, %v535
        %v537 = vrcp.pop %v512
        %v538 = vmul.f32 1.0, %v537
        %v539 = vrcp.pop %v513
        %v540 = vmul.f32 1.0, %v539
        %v541 = vrcp.pop %v514
        %v542 = vmul.f32 1.0, %v541
        %v543 = vrcp.pop %v515
        %v544 = vmul.f32 1.0, %v543
        %v545 = vrcp.pop %v516
        %v546 = vmul.f32 1.0, %v545
        %v547 = vrcp.pop %v517
        %v548 = vmul.f32 1.0, %v547
        %v549 = vrcp.pop %v518
        %v550 = vmul.f32 1.0, %v549
        %551 = vst [vmem:[%s167] sm:$0xff] %v520
        %552 = vst [vmem:[%s167 + $0x8] sm:$0xff] %v522
        %553 = vst [vmem:[%s167 + $0x10] sm:$0xff] %v524
        %554 = vst [vmem:[%s167 + $0x18] sm:$0xff] %v526
        %555 = vst [vmem:[%s167 + $0x20] sm:$0xff] %v528
        %556 = vst [vmem:[%s167 + $0x28] sm:$0xff] %v530
        %557 = vst [vmem:[%s167 + $0x30] sm:$0xff] %v532
        %558 = vst [vmem:[%s167 + $0x38] sm:$0xff] %v534
        %559 = vst [vmem:[%s167 + $0x40] sm:$0xff] %v536
        %560 = vst [vmem:[%s167 + $0x48] sm:$0xff] %v538
        %561 = vst [vmem:[%s167 + $0x50] sm:$0xff] %v540
        %562 = vst [vmem:[%s167 + $0x58] sm:$0xff] %v542
        %563 = vst [vmem:[%s167 + $0x60] sm:$0xff] %v544
        %564 = vst [vmem:[%s167 + $0x68] sm:$0xff] %v546
        %565 = vst [vmem:[%s167 + $0x70] sm:$0xff] %v548
        %566 = vst [vmem:[%s167 + $0x78] sm:$0xff] %v550
        %s567 = sand.u32 %s90, 1
        %s568 = scalar_lea.sflag [#allocation3], %s567
        %s569 = sand.u32 %s90, 1
        %s570 = smul.addr %s569, 128
        %s571 = scalar_lea.vmem [#allocation2], %s570
        // Predicated region
        $region29: #{dcp_dec_forward.12} parent=27 // pred_check
          %p572 = pneg %p100
        $region30: #{dcp_dec_forward.12} parent=27 // pred_check_branch
          %574 = sbr.rel (%p572) target = $region32
        $region31: #{dcp_dec_forward.12} parent=27 // pred_region
          %s575 = smul.u32 16, %s20
          %s577 = ssub.s32 2048, 2048
          %578 = vsyncadd %s568, %s577
          %s579 = smul.addr %s575, 2
          %s580 = sadd.s32 %s21, %s579
          %s581 = smul.addr %s580, 128
          %s582 = scalar_lea.hbm %s2, %s581
          %s583 = sshll.u32 %s571, 4
          %s584 = int_to_ptr.vmem [resolvable:$true] %s583
          %589 = dma.vmem_to_hbm [thread:$0]  %s584, 2048, %s582, %s568, 128, 256, 8
        $region32: #{dcp_dec_forward.12} parent=27 // pred_fallthru
          _
      $region28: #{dcp_dec_forward.12} parent=5 // pred_fallthru
        _
      %p590 = scmp.le.s32.totalorder 2, %s11
      // Predicated region
      $region33: #{dcp_dec_forward.12} parent=5 // pred_check
        %p591 = pneg %p590
      $region34: #{dcp_dec_forward.12} parent=5 // pred_check_branch
        %593 = sbr.rel (%p591) target = $region36
      $region35: #{dcp_dec_forward.12} parent=5 // pred_region
        %s594 = ssub.s32 %s11, 2
        // Predicated region
        $region37: #{dcp_dec_forward.12} parent=35 // pred_check
          %p595 = pneg %p106
        $region38: #{dcp_dec_forward.12} parent=35 // pred_check_branch
          %597 = sbr.rel (%p595) target = $region40
        $region39: #{dcp_dec_forward.12} parent=35 // pred_region
          %s598 = sand.u32 %s91, 1
          %s599 = scalar_lea.sflag [#allocation3], %s598
          %s600 = sand.u32 %s91, 1
          %s601 = smul.addr %s600, 128
          %s602 = scalar_lea.vmem [#allocation2], %s601
          %603 = dma.done %s599, 2048
        $region40: #{dcp_dec_forward.12} parent=35 // pred_fallthru
          _
      $region36: #{dcp_dec_forward.12} parent=5 // pred_fallthru
        _
    $region6: #{dcp_dec_forward.12} parent=1 // loop_footer
      %s15 = sadd.s32 1, %s11
    $region7: #{dcp_dec_forward.12} parent=1 // loop_footer_branch
      %10 = sbr.rel target = $region3
    $region8: #{dcp_dec_forward.12} parent=1 // loop_exit
      _
    %604 = vsyncpa [#allocation3], 1
    %s605 = scalar_lea.sflag [#allocation3], 1
    %606 = vsyncpa %s605, 1

// kernel: dcp_dec_forward.13
$region0: #{dcp_dec_forward.13}
  #allocation0 [shape = 'u32[]', space=smem, size = 0x4, offset = 0x4, fixed_abs, tag = 'smem constant byte address 0x4 - core index']
  #allocation1 [shape = 'u32[144,128]{1,0:T(1,128)}', space=vmem, size = 0x12000, scoped, tag = 'internal scratch']
  %s0 = inlined_call_operand.vmem [shape: f32[256,16], index: 0, kind: input, shape index: {}]
  %s1 = inlined_call_operand.vmem [shape: f32[4,16], index: 1, kind: input, shape index: {}]
  %s2 = inlined_call_operand.vmem [shape: f32[1,4], index: 2, kind: input, shape index: {}]
  %s3 = inlined_call_operand.vmem [shape: f32[256,4], index: 3, kind: output, shape index: {}]
  %s4 = sld [smem:[#allocation0]]
  $region45: #{dcp_dec_forward.13} parent=0
    _
  %s6 = ssub.s32 1, %s4
  %s7 = scalar_select 0, %s6, %s4
  loop: start=0, step=1, limit=4
  $region2: #{dcp_dec_forward.13} parent=0 // loop_pre_header
    _
  $region3: #{dcp_dec_forward.13} parent=0 // loop_header
    %s9 = sphi 0, %s13
    %p10 = scmp.ge.s32.totalorder %s9, 4
    %s19 = sphi 0, %s21
    %s22 = sphi 0, %s19
    %s23 = sphi 0, %s22
    %s39 = sphi 0, %s23
    %s43 = sphi 0, %s43
    %s45 = sphi 0, %s43
    %s46 = sphi 0, %s45
    %s60 = sphi 0, %s46
    %s64 = sphi 0, %s64
    %s66 = sphi 0, %s64
    %s67 = sphi 0, %s66
    %s81 = sphi 0, %s67
    %s87 = sphi 0, %s89
    %s90 = sphi 0, %s87
    %s91 = sphi 0, %s90
    %s107 = sphi 0, %s91
  $region4: #{dcp_dec_forward.13} parent=0 // loop_header_branch
    %12 = sbr.rel (%p10) target = $region8
  $region5: #{dcp_dec_forward.13} parent=0 // loop_body
    %s14 = ssub.s32 %s9, 1
    %s15 = ssub.s32 %s9, 2
    %s16 = sadd.s32 %s9, 1
    %s17 = ssub.s32 %s9, %s16
    %p18 = scmp.eq.s32.totalorder %s17, 0
    %s20 = sadd.s32 %s19, 1
    %s21 = scalar_select %p18, %s19, %s20
    %p24 = pneg %p18
    %p25 = scmp.eq.s32.totalorder %s9, 1
    %p26 = por %p24, %p25
    %p27 = scmp.ne.s32.totalorder %s19, %s22
    %p28 = scmp.eq.s32.totalorder %s9, 0
    %p29 = por %p27, %p28
    %p30 = scmp.ne.s32.totalorder %s19, %s22
    %p31 = scmp.eq.s32.totalorder %s14, 1
    %p32 = por %p30, %p31
    %p33 = scmp.ne.s32.totalorder %s22, %s23
    %p34 = scmp.eq.s32.totalorder %s14, 0
    %p35 = por %p33, %p34
    %p36 = scmp.ne.s32.totalorder %s22, %s23
    %p37 = scmp.eq.s32.totalorder %s15, 1
    %p38 = por %p36, %p37
    %p40 = scmp.ne.s32.totalorder %s23, %s39
    %p41 = scmp.eq.s32.totalorder %s15, 0
    %p42 = por %p40, %p41
    %s44 = sadd.s32 %s43, 1
    %p47 = scmp.eq.s32.totalorder %s9, 1
    %p48 = scmp.ne.s32.totalorder %s43, %s45
    %p49 = scmp.eq.s32.totalorder %s9, 0
    %p50 = por %p48, %p49
    %p51 = scmp.ne.s32.totalorder %s43, %s45
    %p52 = scmp.eq.s32.totalorder %s14, 1
    %p53 = por %p51, %p52
    %p54 = scmp.ne.s32.totalorder %s45, %s46
    %p55 = scmp.eq.s32.totalorder %s14, 0
    %p56 = por %p54, %p55
    %p57 = scmp.ne.s32.totalorder %s45, %s46
    %p58 = scmp.eq.s32.totalorder %s15, 1
    %p59 = por %p57, %p58
    %p61 = scmp.ne.s32.totalorder %s46, %s60
    %p62 = scmp.eq.s32.totalorder %s15, 0
    %p63 = por %p61, %p62
    %s65 = sadd.s32 %s64, 1
    %p68 = scmp.eq.s32.totalorder %s9, 1
    %p69 = scmp.ne.s32.totalorder %s64, %s66
    %p70 = scmp.eq.s32.totalorder %s9, 0
    %p71 = por %p69, %p70
    %p72 = scmp.ne.s32.totalorder %s64, %s66
    %p73 = scmp.eq.s32.totalorder %s14, 1
    %p74 = por %p72, %p73
    %p75 = scmp.ne.s32.totalorder %s66, %s67
    %p76 = scmp.eq.s32.totalorder %s14, 0
    %p77 = por %p75, %p76
    %p78 = scmp.ne.s32.totalorder %s66, %s67
    %p79 = scmp.eq.s32.totalorder %s15, 1
    %p80 = por %p78, %p79
    %p82 = scmp.ne.s32.totalorder %s67, %s81
    %p83 = scmp.eq.s32.totalorder %s15, 0
    %p84 = por %p82, %p83
    %s85 = ssub.s32 %s9, %s16
    %p86 = scmp.eq.s32.totalorder %s85, 0
    %s88 = sadd.s32 %s87, 1
    %s89 = scalar_select %p86, %s87, %s88
    %p92 = pneg %p86
    %p93 = scmp.eq.s32.totalorder %s9, 1
    %p94 = por %p92, %p93
    %p95 = scmp.ne.s32.totalorder %s87, %s90
    %p96 = scmp.eq.s32.totalorder %s9, 0
    %p97 = por %p95, %p96
    %p98 = scmp.ne.s32.totalorder %s87, %s90
    %p99 = scmp.eq.s32.totalorder %s14, 1
    %p100 = por %p98, %p99
    %p101 = scmp.ne.s32.totalorder %s90, %s91
    %p102 = scmp.eq.s32.totalorder %s14, 0
    %p103 = por %p101, %p102
    %p104 = scmp.ne.s32.totalorder %s90, %s91
    %p105 = scmp.eq.s32.totalorder %s15, 1
    %p106 = por %p104, %p105
    %p108 = scmp.ne.s32.totalorder %s91, %s107
    %p109 = scmp.eq.s32.totalorder %s15, 0
    %p110 = por %p108, %p109
    %p111 = scmp.le.s32.totalorder 1, %s9
    %p112 = scmp.lt.s32.totalorder %s9, 3
    %p113 = pnand %p111, %p112
    %p114 = pneg %p113
    // Predicated region
    $region9: #{dcp_dec_forward.13} parent=5 // pred_check
      _
    $region10: #{dcp_dec_forward.13} parent=5 // pred_check_branch
      %116 = sbr.rel (%p113) target = $region12
    $region11: #{dcp_dec_forward.13} parent=5 // pred_region
      %s117 = ssub.s32 %s9, 1
      // Predicated region
      $region13: #{dcp_dec_forward.13} parent=11 // pred_check
        %p118 = pneg %p56
      $region14: #{dcp_dec_forward.13} parent=11 // pred_check_branch
        %120 = sbr.rel (%p118) target = $region16
      $region15: #{dcp_dec_forward.13} parent=11 // pred_region
        _
      $region16: #{dcp_dec_forward.13} parent=11 // pred_fallthru
        _
      // Predicated region
      $region17: #{dcp_dec_forward.13} parent=11 // pred_check
        %p121 = pneg %p77
      $region18: #{dcp_dec_forward.13} parent=11 // pred_check_branch
        %123 = sbr.rel (%p121) target = $region20
      $region19: #{dcp_dec_forward.13} parent=11 // pred_region
        _
      $region20: #{dcp_dec_forward.13} parent=11 // pred_fallthru
        _
    $region12: #{dcp_dec_forward.13} parent=5 // pred_fallthru
      _
    %p124 = scmp.lt.s32.totalorder %s9, 2
    // Predicated region
    $region21: #{dcp_dec_forward.13} parent=5 // pred_check
      %p125 = pneg %p124
    $region22: #{dcp_dec_forward.13} parent=5 // pred_check_branch
      %127 = sbr.rel (%p125) target = $region24
    $region23: #{dcp_dec_forward.13} parent=5 // pred_region
      // Predicated region
      $region25: #{dcp_dec_forward.13} parent=23 // pred_check
        %p128 = pneg %p29
      $region26: #{dcp_dec_forward.13} parent=23 // pred_check_branch
        %130 = sbr.rel (%p128) target = $region28
      $region27: #{dcp_dec_forward.13} parent=23 // pred_region
        %s131 = smul.u32 16, %s9
        %p132 = scmp.lt.s32.totalorder %s131, 31
        %s133 = scalar_select %p132, %s131, 31
        %s134 = smul.addr %s133, 8
        %s135 = scalar_lea.vmem %s0, %s134
        %s136 = smul.u32 16, %s9
      $region28: #{dcp_dec_forward.13} parent=23 // pred_fallthru
        _
    $region24: #{dcp_dec_forward.13} parent=5 // pred_fallthru
      _
    %p137 = scmp.le.s32.totalorder 1, %s9
    %p138 = scmp.lt.s32.totalorder %s9, 3
    %p139 = pnand %p137, %p138
    %p140 = pneg %p139
    // Predicated region
    $region29: #{dcp_dec_forward.13} parent=5 // pred_check
      _
    $region30: #{dcp_dec_forward.13} parent=5 // pred_check_branch
      %142 = sbr.rel (%p139) target = $region32
    $region31: #{dcp_dec_forward.13} parent=5 // pred_region
      %s143 = ssub.s32 %s9, 1
      %s144 = smul.u32 16, %s14
      %p145 = scmp.lt.s32.totalorder %s144, 31
      %s146 = scalar_select %p145, %s144, 31
      %s147 = smul.addr %s146, 8
      %s148 = scalar_lea.vmem %s0, %s147
      %p149 = pneg %p35
      %p150 = pneg %p32
      %p151 = pneg %p56
      %p152 = pneg %p53
      %p153 = pneg %p77
      %p154 = pneg %p74
      %p155 = pneg %p103
      %p156 = pneg %p100
      %s157 = smul.u32 16, %s14
      %p158 = scmp.lt.s32.totalorder %s157, 31
      %s159 = scalar_select %p158, %s157, 31
      %s160 = smul.addr %s159, 8
      %s161 = scalar_lea.vmem %s3, %s160
      %s162 = smul.u32 16, %s14
      %p163 = scmp.lt.s32.totalorder %s162, 31
      %s164 = scalar_select %p163, %s162, 31
      %s165 = smul.addr %s164, 8
      %s166 = scalar_lea.vmem %s0, %s165
      %s167 = smul.u32 16, %s14
      %s168 = smul.u32 16, %s14
      %p169 = scmp.lt.s32.totalorder %s168, 31
      %s170 = scalar_select %p169, %s168, 31
      %s171 = smul.addr %s170, 8
      %s172 = scalar_lea.vmem %s3, %s171
      %s173 = smul.u32 16, %s14
      %v174 = vld [vmem:[%s166] sm:$0xff]
      %v175 = vld [vmem:[%s166 + $0x8] sm:$0xff]
      %v176 = vld [vmem:[%s166 + $0x10] sm:$0xff]
      %v177 = vld [vmem:[%s166 + $0x18] sm:$0xff]
      %v178 = vld [vmem:[%s166 + $0x20] sm:$0xff]
      %v179 = vld [vmem:[%s166 + $0x28] sm:$0xff]
      %v180 = vld [vmem:[%s166 + $0x30] sm:$0xff]
      %v181 = vld [vmem:[%s166 + $0x38] sm:$0xff]
      %v182 = vld [vmem:[%s166 + $0x40] sm:$0xff]
      %v183 = vld [vmem:[%s166 + $0x48] sm:$0xff]
      %v184 = vld [vmem:[%s166 + $0x50] sm:$0xff]
      %v185 = vld [vmem:[%s166 + $0x58] sm:$0xff]
      %v186 = vld [vmem:[%s166 + $0x60] sm:$0xff]
      %v187 = vld [vmem:[%s166 + $0x68] sm:$0xff]
      %v188 = vld [vmem:[%s166 + $0x70] sm:$0xff]
      %v189 = vld [vmem:[%s166 + $0x78] sm:$0xff]
      %v190 = vld [vmem:[%s1] sm:$0xf]
      %v191 = vld [vmem:[%s2] sm:$0x1]
      %v192 = vmul.f32 %v174, %v174
      %v193 = vmul.f32 %v175, %v175
      %v194 = vmul.f32 %v176, %v176
      %v195 = vmul.f32 %v177, %v177
      %v196 = vmul.f32 %v178, %v178
      %v197 = vmul.f32 %v179, %v179
      %v198 = vmul.f32 %v180, %v180
      %v199 = vmul.f32 %v181, %v181
      %v200 = vmul.f32 %v182, %v182
      %v201 = vmul.f32 %v183, %v183
      %v202 = vmul.f32 %v184, %v184
      %v203 = vmul.f32 %v185, %v185
      %v204 = vmul.f32 %v186, %v186
      %v205 = vmul.f32 %v187, %v187
      %v206 = vmul.f32 %v188, %v188
      %v207 = vmul.f32 %v189, %v189
      %vm208 = vcmask 130048
      %v209 = vsel %vm208, %v192, 0.0
      %210 = vadd.xlane.f32.xlu0 %v209
      %v211 = vpop.xlane.xlu0 %210
      %v212 = vsel %vm208, %v193, 0.0
      %213 = vadd.xlane.f32.xlu0 %v212
      %v214 = vpop.xlane.xlu0 %213
      %v215 = vsel %vm208, %v194, 0.0
      %216 = vadd.xlane.f32.xlu0 %v215
      %v217 = vpop.xlane.xlu0 %216
      %v218 = vsel %vm208, %v195, 0.0
      %219 = vadd.xlane.f32.xlu0 %v218
      %v220 = vpop.xlane.xlu0 %219
      %v221 = vsel %vm208, %v196, 0.0
      %222 = vadd.xlane.f32.xlu0 %v221
      %v223 = vpop.xlane.xlu0 %222
      %v224 = vsel %vm208, %v197, 0.0
      %225 = vadd.xlane.f32.xlu0 %v224
      %v226 = vpop.xlane.xlu0 %225
      %v227 = vsel %vm208, %v198, 0.0
      %228 = vadd.xlane.f32.xlu0 %v227
      %v229 = vpop.xlane.xlu0 %228
      %v230 = vsel %vm208, %v199, 0.0
      %231 = vadd.xlane.f32.xlu0 %v230
      %v232 = vpop.xlane.xlu0 %231
      %v233 = vsel %vm208, %v200, 0.0
      %234 = vadd.xlane.f32.xlu0 %v233
      %v235 = vpop.xlane.xlu0 %234
      %v236 = vsel %vm208, %v201, 0.0
      %237 = vadd.xlane.f32.xlu0 %v236
      %v238 = vpop.xlane.xlu0 %237
      %v239 = vsel %vm208, %v202, 0.0
      %240 = vadd.xlane.f32.xlu0 %v239
      %v241 = vpop.xlane.xlu0 %240
      %v242 = vsel %vm208, %v203, 0.0
      %243 = vadd.xlane.f32.xlu0 %v242
      %v244 = vpop.xlane.xlu0 %243
      %v245 = vsel %vm208, %v204, 0.0
      %246 = vadd.xlane.f32.xlu0 %v245
      %v247 = vpop.xlane.xlu0 %246
      %v248 = vsel %vm208, %v205, 0.0
      %249 = vadd.xlane.f32.xlu0 %v248
      %v250 = vpop.xlane.xlu0 %249
      %v251 = vsel %vm208, %v206, 0.0
      %252 = vadd.xlane.f32.xlu0 %v251
      %v253 = vpop.xlane.xlu0 %252
      %v254 = vsel %vm208, %v207, 0.0
      %255 = vadd.xlane.f32.xlu0 %v254
      %v256 = vpop.xlane.xlu0 %255
      %v258 = vsel %vm208, %v174, 0
      %v261 = vsel %vm208, %v175, 0
      %v264 = vsel %vm208, %v176, 0
      %v267 = vsel %vm208, %v177, 0
      %v270 = vsel %vm208, %v178, 0
      %v273 = vsel %vm208, %v179, 0
      %v276 = vsel %vm208, %v180, 0
      %v279 = vsel %vm208, %v181, 0
      %v282 = vsel %vm208, %v182, 0
      %v285 = vsel %vm208, %v183, 0
      %v288 = vsel %vm208, %v184, 0
      %v291 = vsel %vm208, %v185, 0
      %v294 = vsel %vm208, %v186, 0
      %v297 = vsel %vm208, %v187, 0
      %v300 = vsel %vm208, %v188, 0
      %v303 = vsel %vm208, %v189, 0
      %v306 = vsel %vm208, %v190, 0
      %308 = vmatprep.subr.mxu0 0.0
      %309 = vmatpush1.xpose.msra.mxu0 0.0
      %310 = vmatprep.subr.mxu0 0.0
      %311 = vmatpush1.xpose.msra.mxu0 0.0
      %312 = vmatprep.subr.mxu0 0.0
      %313 = vmatpush1.xpose.msra.mxu0 0.0
      %314 = vmatprep.subr.mxu0 0.0
      %315 = vmatpush1.xpose.msra.mxu0 0.0
      %316 = vmatprep.subr.mxu0 0.0
      %317 = vmatpush1.xpose.msra.mxu0 0.0
      %318 = vmatprep.subr.mxu0 0.0
      %319 = vmatpush1.xpose.msra.mxu0 0.0
      %320 = vmatprep.subr.mxu0 0.0
      %321 = vmatpush1.xpose.msra.mxu0 0.0
      %322 = vmatprep.subr.mxu0 0.0
      %323 = vmatpush1.xpose.msra.mxu0 0.0
      %324 = vmatprep.subr.mxu0 0.0
      %325 = vmatpush1.xpose.msra.mxu0 0.0
      %326 = vmatprep.subr.mxu0 0.0
      %327 = vmatpush1.xpose.msra.mxu0 0.0
      %328 = vmatprep.subr.mxu0 0.0
      %329 = vmatpush1.xpose.msra.mxu0 0.0
      %330 = vmatprep.subr.mxu0 0.0
      %331 = vmatpush1.xpose.msra.mxu0 0.0
      %332 = vmatprep.subr.mxu0 0.0
      %333 = vmatpush1.xpose.msra.mxu0 0.0
      %334 = vmatprep.subr.mxu0 0.0
      %335 = vmatpush1.xpose.msra.mxu0 0.0
      %336 = vmatprep.subr.mxu0 0.0
      %337 = vmatpush1.xpose.msra.mxu0 0.0
      %338 = vmatprep.subr.mxu0 0.0
      %339 = vmatpush1.xpose.msra.mxu0 %v306
      %340 = vmatprep.subr.mxu0 0.0
      %341 = vmatpush2.xpose.msra.mxu0 0.0
      %342 = vmatprep.subr.mxu0 0.0
      %343 = vmatpush2.xpose.msra.mxu0 0.0
      %344 = vmatprep.subr.mxu0 0.0
      %345 = vmatpush2.xpose.msra.mxu0 0.0
      %346 = vmatprep.subr.mxu0 0.0
      %347 = vmatpush2.xpose.msra.mxu0 0.0
      %348 = vmatprep.subr.mxu0 0.0
      %349 = vmatpush2.xpose.msra.mxu0 0.0
      %350 = vmatprep.subr.mxu0 0.0
      %351 = vmatpush2.xpose.msra.mxu0 0.0
      %352 = vmatprep.subr.mxu0 0.0
      %353 = vmatpush2.xpose.msra.mxu0 0.0
      %354 = vmatprep.subr.mxu0 0.0
      %355 = vmatpush2.xpose.msra.mxu0 0.0
      %356 = vmatprep.subr.mxu0 0.0
      %357 = vmatpush2.xpose.msra.mxu0 0.0
      %358 = vmatprep.subr.mxu0 0.0
      %359 = vmatpush2.xpose.msra.mxu0 0.0
      %360 = vmatprep.subr.mxu0 0.0
      %361 = vmatpush2.xpose.msra.mxu0 0.0
      %362 = vmatprep.subr.mxu0 0.0
      %363 = vmatpush2.xpose.msra.mxu0 0.0
      %364 = vmatprep.subr.mxu0 0.0
      %365 = vmatpush2.xpose.msra.mxu0 0.0
      %366 = vmatprep.subr.mxu0 0.0
      %367 = vmatpush2.xpose.msra.mxu0 0.0
      %368 = vmatprep.subr.mxu0 0.0
      %369 = vmatpush2.xpose.msra.mxu0 0.0
      %370 = vmatprep.subr.mxu0 0.0
      %371 = vmatpush2.xpose.msra.mxu0 0.0
      %372 = vmatprep.mubr.f32.mxu0 0.0
      %373 = vmatmul.mubr.f32.gmra.mxu0 %v258
      %v374 = vpop.f32.mrf.mxu0
      %v375 = vadd.f32 0.0, %v374
      %v376 = vpop.f32.mrf.mxu0
      %377 = vmatprep.mubr.f32.mxu0 0.0
      %378 = vmatmul.mubr.f32.gmra.mxu0 %v261
      %v379 = vpop.f32.mrf.mxu0
      %v380 = vadd.f32 0.0, %v379
      %v381 = vpop.f32.mrf.mxu0
      %382 = vmatprep.mubr.f32.mxu0 0.0
      %383 = vmatmul.mubr.f32.gmra.mxu0 %v264
      %v384 = vpop.f32.mrf.mxu0
      %v385 = vadd.f32 0.0, %v384
      %v386 = vpop.f32.mrf.mxu0
      %387 = vmatprep.mubr.f32.mxu0 0.0
      %388 = vmatmul.mubr.f32.gmra.mxu0 %v267
      %v389 = vpop.f32.mrf.mxu0
      %v390 = vadd.f32 0.0, %v389
      %v391 = vpop.f32.mrf.mxu0
      %392 = vmatprep.mubr.f32.mxu0 0.0
      %393 = vmatmul.mubr.f32.gmra.mxu0 %v270
      %v394 = vpop.f32.mrf.mxu0
      %v395 = vadd.f32 0.0, %v394
      %v396 = vpop.f32.mrf.mxu0
      %397 = vmatprep.mubr.f32.mxu0 0.0
      %398 = vmatmul.mubr.f32.gmra.mxu0 %v273
      %v399 = vpop.f32.mrf.mxu0
      %v400 = vadd.f32 0.0, %v399
      %v401 = vpop.f32.mrf.mxu0
      %402 = vmatprep.mubr.f32.mxu0 0.0
      %403 = vmatmul.mubr.f32.gmra.mxu0 %v276
      %v404 = vpop.f32.mrf.mxu0
      %v405 = vadd.f32 0.0, %v404
      %v406 = vpop.f32.mrf.mxu0
      %407 = vmatprep.mubr.f32.mxu0 0.0
      %408 = vmatmul.mubr.f32.gmra.mxu0 %v279
      %v409 = vpop.f32.mrf.mxu0
      %v410 = vadd.f32 0.0, %v409
      %v411 = vpop.f32.mrf.mxu0
      %412 = vmatprep.mubr.f32.mxu0 0.0
      %413 = vmatmul.mubr.f32.gmra.mxu0 %v282
      %v414 = vpop.f32.mrf.mxu0
      %v415 = vadd.f32 0.0, %v414
      %v416 = vpop.f32.mrf.mxu0
      %417 = vmatprep.mubr.f32.mxu0 0.0
      %418 = vmatmul.mubr.f32.gmra.mxu0 %v285
      %v419 = vpop.f32.mrf.mxu0
      %v420 = vadd.f32 0.0, %v419
      %v421 = vpop.f32.mrf.mxu0
      %422 = vmatprep.mubr.f32.mxu0 0.0
      %423 = vmatmul.mubr.f32.gmra.mxu0 %v288
      %v424 = vpop.f32.mrf.mxu0
      %v425 = vadd.f32 0.0, %v424
      %v426 = vpop.f32.mrf.mxu0
      %427 = vmatprep.mubr.f32.mxu0 0.0
      %428 = vmatmul.mubr.f32.gmra.mxu0 %v291
      %v429 = vpop.f32.mrf.mxu0
      %v430 = vadd.f32 0.0, %v429
      %v431 = vpop.f32.mrf.mxu0
      %432 = vmatprep.mubr.f32.mxu0 0.0
      %433 = vmatmul.mubr.f32.gmra.mxu0 %v294
      %v434 = vpop.f32.mrf.mxu0
      %v435 = vadd.f32 0.0, %v434
      %v436 = vpop.f32.mrf.mxu0
      %437 = vmatprep.mubr.f32.mxu0 0.0
      %438 = vmatmul.mubr.f32.gmra.mxu0 %v297
      %v439 = vpop.f32.mrf.mxu0
      %v440 = vadd.f32 0.0, %v439
      %v441 = vpop.f32.mrf.mxu0
      %442 = vmatprep.mubr.f32.mxu0 0.0
      %443 = vmatmul.mubr.f32.gmra.mxu0 %v300
      %v444 = vpop.f32.mrf.mxu0
      %v445 = vadd.f32 0.0, %v444
      %v446 = vpop.f32.mrf.mxu0
      %447 = vmatprep.mubr.f32.mxu0 0.0
      %448 = vmatmul.mubr.f32.gmra.mxu0 %v303
      %v449 = vpop.f32.mrf.mxu0
      %v450 = vadd.f32 0.0, %v449
      %v451 = vpop.f32.mrf.mxu0
      %452 = vdwg.mxu0
      %v454 = vlaneseq
      %v455 = vshrl.u32 %v454, 7
      %v456 = vsub.s32 0, %v455
      %v457 = vrot.slane %v191, %v456
      %v459 = vadd.f32 %v211, %v457
      %v460 = vadd.f32 %v214, %v457
      %v461 = vadd.f32 %v217, %v457
      %v462 = vadd.f32 %v220, %v457
      %v463 = vadd.f32 %v223, %v457
      %v464 = vadd.f32 %v226, %v457
      %v465 = vadd.f32 %v229, %v457
      %v466 = vadd.f32 %v232, %v457
      %v467 = vadd.f32 %v235, %v457
      %v468 = vadd.f32 %v238, %v457
      %v469 = vadd.f32 %v241, %v457
      %v470 = vadd.f32 %v244, %v457
      %v471 = vadd.f32 %v247, %v457
      %v472 = vadd.f32 %v250, %v457
      %v473 = vadd.f32 %v253, %v457
      %v474 = vadd.f32 %v256, %v457
      %v475 = vmul.f32 %v375, 2.0
      %v476 = vmul.f32 %v380, 2.0
      %v477 = vmul.f32 %v385, 2.0
      %v478 = vmul.f32 %v390, 2.0
      %v479 = vmul.f32 %v395, 2.0
      %v480 = vmul.f32 %v400, 2.0
      %v481 = vmul.f32 %v405, 2.0
      %v482 = vmul.f32 %v410, 2.0
      %v483 = vmul.f32 %v415, 2.0
      %v484 = vmul.f32 %v420, 2.0
      %v485 = vmul.f32 %v425, 2.0
      %v486 = vmul.f32 %v430, 2.0
      %v487 = vmul.f32 %v435, 2.0
      %v488 = vmul.f32 %v440, 2.0
      %v489 = vmul.f32 %v445, 2.0
      %v490 = vmul.f32 %v450, 2.0
      %v491 = vsub.f32 %v459, %v475
      %v492 = vsub.f32 %v460, %v476
      %v493 = vsub.f32 %v461, %v477
      %v494 = vsub.f32 %v462, %v478
      %v495 = vsub.f32 %v463, %v479
      %v496 = vsub.f32 %v464, %v480
      %v497 = vsub.f32 %v465, %v481
      %v498 = vsub.f32 %v466, %v482
      %v499 = vsub.f32 %v467, %v483
      %v500 = vsub.f32 %v468, %v484
      %v501 = vsub.f32 %v469, %v485
      %v502 = vsub.f32 %v470, %v486
      %v503 = vsub.f32 %v471, %v487
      %v504 = vsub.f32 %v472, %v488
      %v505 = vsub.f32 %v473, %v489
      %v506 = vsub.f32 %v474, %v490
      %v507 = vmax.f32 %v491, 0.0
      %v508 = vmax.f32 %v492, 0.0
      %v509 = vmax.f32 %v493, 0.0
      %v510 = vmax.f32 %v494, 0.0
      %v511 = vmax.f32 %v495, 0.0
      %v512 = vmax.f32 %v496, 0.0
      %v513 = vmax.f32 %v497, 0.0
      %v514 = vmax.f32 %v498, 0.0
      %v515 = vmax.f32 %v499, 0.0
      %v516 = vmax.f32 %v500, 0.0
      %v517 = vmax.f32 %v501, 0.0
      %v518 = vmax.f32 %v502, 0.0
      %v519 = vmax.f32 %v503, 0.0
      %v520 = vmax.f32 %v504, 0.0
      %v521 = vmax.f32 %v505, 0.0
      %v522 = vmax.f32 %v506, 0.0
      %v523 = vadd.f32 %v507, 1.0
      %v524 = vadd.f32 %v508, 1.0
      %v525 = vadd.f32 %v509, 1.0
      %v526 = vadd.f32 %v510, 1.0
      %v527 = vadd.f32 %v511, 1.0
      %v528 = vadd.f32 %v512, 1.0
      %v529 = vadd.f32 %v513, 1.0
      %v530 = vadd.f32 %v514, 1.0
      %v531 = vadd.f32 %v515, 1.0
      %v532 = vadd.f32 %v516, 1.0
      %v533 = vadd.f32 %v517, 1.0
      %v534 = vadd.f32 %v518, 1.0
      %v535 = vadd.f32 %v519, 1.0
      %v536 = vadd.f32 %v520, 1.0
      %v537 = vadd.f32 %v521, 1.0
      %v538 = vadd.f32 %v522, 1.0
      %v539 = vrcp.pop %v523
      %v540 = vmul.f32 1.0, %v539
      %v541 = vrcp.pop %v524
      %v542 = vmul.f32 1.0, %v541
      %v543 = vrcp.pop %v525
      %v544 = vmul.f32 1.0, %v543
      %v545 = vrcp.pop %v526
      %v546 = vmul.f32 1.0, %v545
      %v547 = vrcp.pop %v527
      %v548 = vmul.f32 1.0, %v547
      %v549 = vrcp.pop %v528
      %v550 = vmul.f32 1.0, %v549
      %v551 = vrcp.pop %v529
      %v552 = vmul.f32 1.0, %v551
      %v553 = vrcp.pop %v530
      %v554 = vmul.f32 1.0, %v553
      %v555 = vrcp.pop %v531
      %v556 = vmul.f32 1.0, %v555
      %v557 = vrcp.pop %v532
      %v558 = vmul.f32 1.0, %v557
      %v559 = vrcp.pop %v533
      %v560 = vmul.f32 1.0, %v559
      %v561 = vrcp.pop %v534
      %v562 = vmul.f32 1.0, %v561
      %v563 = vrcp.pop %v535
      %v564 = vmul.f32 1.0, %v563
      %v565 = vrcp.pop %v536
      %v566 = vmul.f32 1.0, %v565
      %v567 = vrcp.pop %v537
      %v568 = vmul.f32 1.0, %v567
      %v569 = vrcp.pop %v538
      %v570 = vmul.f32 1.0, %v569
      %vm571 = vcmask 31744
      %v572 = vsel %vm571, %v540, 0.0
      %573 = vadd.xlane.f32.xlu0 %v572
      %v574 = vpop.xlane.xlu0 %573
      %v575 = vsel %vm571, %v542, 0.0
      %576 = vadd.xlane.f32.xlu0 %v575
      %v577 = vpop.xlane.xlu0 %576
      %v578 = vsel %vm571, %v544, 0.0
      %579 = vadd.xlane.f32.xlu0 %v578
      %v580 = vpop.xlane.xlu0 %579
      %v581 = vsel %vm571, %v546, 0.0
      %582 = vadd.xlane.f32.xlu0 %v581
      %v583 = vpop.xlane.xlu0 %582
      %v584 = vsel %vm571, %v548, 0.0
      %585 = vadd.xlane.f32.xlu0 %v584
      %v586 = vpop.xlane.xlu0 %585
      %v587 = vsel %vm571, %v550, 0.0
      %588 = vadd.xlane.f32.xlu0 %v587
      %v589 = vpop.xlane.xlu0 %588
      %v590 = vsel %vm571, %v552, 0.0
      %591 = vadd.xlane.f32.xlu0 %v590
      %v592 = vpop.xlane.xlu0 %591
      %v593 = vsel %vm571, %v554, 0.0
      %594 = vadd.xlane.f32.xlu0 %v593
      %v595 = vpop.xlane.xlu0 %594
      %v596 = vsel %vm571, %v556, 0.0
      %597 = vadd.xlane.f32.xlu0 %v596
      %v598 = vpop.xlane.xlu0 %597
      %v599 = vsel %vm571, %v558, 0.0
      %600 = vadd.xlane.f32.xlu0 %v599
      %v601 = vpop.xlane.xlu0 %600
      %v602 = vsel %vm571, %v560, 0.0
      %603 = vadd.xlane.f32.xlu0 %v602
      %v604 = vpop.xlane.xlu0 %603
      %v605 = vsel %vm571, %v562, 0.0
      %606 = vadd.xlane.f32.xlu0 %v605
      %v607 = vpop.xlane.xlu0 %606
      %v608 = vsel %vm571, %v564, 0.0
      %609 = vadd.xlane.f32.xlu0 %v608
      %v610 = vpop.xlane.xlu0 %609
      %v611 = vsel %vm571, %v566, 0.0
      %612 = vadd.xlane.f32.xlu0 %v611
      %v613 = vpop.xlane.xlu0 %612
      %v614 = vsel %vm571, %v568, 0.0
      %615 = vadd.xlane.f32.xlu0 %v614
      %v616 = vpop.xlane.xlu0 %615
      %v617 = vsel %vm571, %v570, 0.0
      %618 = vadd.xlane.f32.xlu0 %v617
      %v619 = vpop.xlane.xlu0 %618
      %v620 = vrcp.pop %v574
      %v621 = vmul.f32 %v540, %v620
      %v622 = vrcp.pop %v577
      %v623 = vmul.f32 %v542, %v622
      %v624 = vrcp.pop %v580
      %v625 = vmul.f32 %v544, %v624
      %v626 = vrcp.pop %v583
      %v627 = vmul.f32 %v546, %v626
      %v628 = vrcp.pop %v586
      %v629 = vmul.f32 %v548, %v628
      %v630 = vrcp.pop %v589
      %v631 = vmul.f32 %v550, %v630
      %v632 = vrcp.pop %v592
      %v633 = vmul.f32 %v552, %v632
      %v634 = vrcp.pop %v595
      %v635 = vmul.f32 %v554, %v634
      %v636 = vrcp.pop %v598
      %v637 = vmul.f32 %v556, %v636
      %v638 = vrcp.pop %v601
      %v639 = vmul.f32 %v558, %v638
      %v640 = vrcp.pop %v604
      %v641 = vmul.f32 %v560, %v640
      %v642 = vrcp.pop %v607
      %v643 = vmul.f32 %v562, %v642
      %v644 = vrcp.pop %v610
      %v645 = vmul.f32 %v564, %v644
      %v646 = vrcp.pop %v613
      %v647 = vmul.f32 %v566, %v646
      %v648 = vrcp.pop %v616
      %v649 = vmul.f32 %v568, %v648
      %v650 = vrcp.pop %v619
      %v651 = vmul.f32 %v570, %v650
      %652 = vst.msk [vmem:[%s172] sm:$0xff] %vm571, %v621
      %653 = vst.msk [vmem:[%s172 + $0x8] sm:$0xff] %vm571, %v623
      %654 = vst.msk [vmem:[%s172 + $0x10] sm:$0xff] %vm571, %v625
      %655 = vst.msk [vmem:[%s172 + $0x18] sm:$0xff] %vm571, %v627
      %656 = vst.msk [vmem:[%s172 + $0x20] sm:$0xff] %vm571, %v629
      %657 = vst.msk [vmem:[%s172 + $0x28] sm:$0xff] %vm571, %v631
      %658 = vst.msk [vmem:[%s172 + $0x30] sm:$0xff] %vm571, %v633
      %659 = vst.msk [vmem:[%s172 + $0x38] sm:$0xff] %vm571, %v635
      %660 = vst.msk [vmem:[%s172 + $0x40] sm:$0xff] %vm571, %v637
      %661 = vst.msk [vmem:[%s172 + $0x48] sm:$0xff] %vm571, %v639
      %662 = vst.msk [vmem:[%s172 + $0x50] sm:$0xff] %vm571, %v641
      %663 = vst.msk [vmem:[%s172 + $0x58] sm:$0xff] %vm571, %v643
      %664 = vst.msk [vmem:[%s172 + $0x60] sm:$0xff] %vm571, %v645
      %665 = vst.msk [vmem:[%s172 + $0x68] sm:$0xff] %vm571, %v647
      %666 = vst.msk [vmem:[%s172 + $0x70] sm:$0xff] %vm571, %v649
      %667 = vst.msk [vmem:[%s172 + $0x78] sm:$0xff] %vm571, %v651
      %s668 = smul.u32 16, %s14
      %p669 = scmp.lt.s32.totalorder %s668, 31
      %s670 = scalar_select %p669, %s668, 31
      %s671 = smul.addr %s670, 8
      %s672 = scalar_lea.vmem %s3, %s671
      // Predicated region
      $region33: #{dcp_dec_forward.13} parent=31 // pred_check
        %p673 = pneg %p100
      $region34: #{dcp_dec_forward.13} parent=31 // pred_check_branch
        %675 = sbr.rel (%p673) target = $region36
      $region35: #{dcp_dec_forward.13} parent=31 // pred_region
        %s676 = smul.u32 16, %s14
      $region36: #{dcp_dec_forward.13} parent=31 // pred_fallthru
        _
    $region32: #{dcp_dec_forward.13} parent=5 // pred_fallthru
      _
    %p677 = scmp.le.s32.totalorder 2, %s9
    // Predicated region
    $region37: #{dcp_dec_forward.13} parent=5 // pred_check
      %p678 = pneg %p677
    $region38: #{dcp_dec_forward.13} parent=5 // pred_check_branch
      %680 = sbr.rel (%p678) target = $region40
    $region39: #{dcp_dec_forward.13} parent=5 // pred_region
      %s681 = ssub.s32 %s9, 2
      // Predicated region
      $region41: #{dcp_dec_forward.13} parent=39 // pred_check
        %p682 = pneg %p106
      $region42: #{dcp_dec_forward.13} parent=39 // pred_check_branch
        %684 = sbr.rel (%p682) target = $region44
      $region43: #{dcp_dec_forward.13} parent=39 // pred_region
        %s685 = smul.u32 16, %s15
        %p686 = scmp.lt.s32.totalorder %s685, 31
        %s687 = scalar_select %p686, %s685, 31
        %s688 = smul.addr %s687, 8
        %s689 = scalar_lea.vmem %s3, %s688
      $region44: #{dcp_dec_forward.13} parent=39 // pred_fallthru
        _
    $region40: #{dcp_dec_forward.13} parent=5 // pred_fallthru
      _
  $region6: #{dcp_dec_forward.13} parent=0 // loop_footer
    %s13 = sadd.s32 1, %s9
  $region7: #{dcp_dec_forward.13} parent=0 // loop_footer_branch
    %8 = sbr.rel target = $region3
  $region8: #{dcp_dec_forward.13} parent=0 // loop_exit
    _

</llo_original>
